<compile_context>
chip_gen: v7x
topology: tpu7x:2x2x1
jax: 0.10.0
libtpu: 0.0.40
codegen_flags: <defaults>
</compile_context>

<pallas_src>
import math

import jax
import jax.numpy as jnp
from jax import lax
from jax.experimental import pallas as pl
from jax.experimental.pallas import tpu as pltpu

HIDDEN = 768
NUM_HEADS = 4
HEAD_DIM = HIDDEN // NUM_HEADS      # 192
HEAD_PAD = 256                      # lane-aligned per-head block (zero padded)
HIDDEN_PAD = NUM_HEADS * HEAD_PAD   # 1024
PROJ_DIM = 256
LN_EPS = 1e-5


def bert_mlp_kernel(x_ref, xcls_ref,
                    wq_ref, bq_ref, wk_ref, bk_ref, wv_ref, bv_ref,
                    wo_ref, bo_ref,
                    ln_g_ref, ln_b_ref,
                    wp_ref, bp_ref,
                    w1_ref, b1_ref,
                    w2_ref, b2_ref,
                    w3a_ref, b3a_ref,
                    w3b_ref, b3b_ref,
                    out_ref):
    x = x_ref[...]                                  # (B, S, H) f32
    B, S, H = x.shape
    x_cls = xcls_ref[...]                           # (B, H) f32 (residual path)

    x_seq = x.reshape(B * S, H).astype(jnp.bfloat16)
    x_cls_b = x_cls.astype(jnp.bfloat16)

    # ---- nn.MultiheadAttention(q=k=v=x), eval mode ----
    # Only sequence position 0 (CLS) of the attention output is consumed, so
    # Q is computed for one row per batch element; K/V cover the sequence.
    k = (jnp.dot(x_seq, wk_ref[...], preferred_element_type=jnp.float32)
         + bk_ref[...]).reshape(B, S, HIDDEN_PAD)
    v = (jnp.dot(x_seq, wv_ref[...], preferred_element_type=jnp.float32)
         + bv_ref[...]).reshape(B, S, HIDDEN_PAD)
    q = (jnp.dot(x_cls_b, wq_ref[...], preferred_element_type=jnp.float32)
         + bq_ref[...]) * (1.0 / math.sqrt(HEAD_DIM))          # (B, HIDDEN_PAD)

    qk = k * q[:, None, :]                          # (B, S, HIDDEN_PAD)

    ctx_heads = []
    for h in range(NUM_HEADS):                      # static loop, aligned slices
        lo = h * HEAD_PAD
        vh = v[:, :, lo:lo + HEAD_PAD]              # (B, S, DP)
        s = jnp.sum(qk[:, :, lo:lo + HEAD_PAD], axis=-1, keepdims=True)  # (B,S,1)
        s = s - jnp.max(s, axis=1, keepdims=True)
        p = jnp.exp(s)
        p = p * pl.reciprocal(jnp.sum(p, axis=1, keepdims=True), approx=True)
        ctx_heads.append(jnp.sum(p * vh, axis=1))   # (B, DP)
    ctx = jnp.concatenate(ctx_heads, axis=-1)       # (B, HIDDEN_PAD)

    attn_out = jnp.dot(ctx.astype(jnp.bfloat16), wo_ref[...],
                       preferred_element_type=jnp.float32) + bo_ref[...]  # (B, H)

    # ---- residual + LayerNorm on the CLS rows only (dropout = identity) ----
    y = x_cls + attn_out
    mu = jnp.mean(y, axis=-1, keepdims=True)
    var = jnp.mean((y - mu) ** 2, axis=-1, keepdims=True)
    yn = (y - mu) * lax.rsqrt(var + LN_EPS)
    yn = yn * ln_g_ref[...] + ln_b_ref[...]         # (B, H) f32

    # ---- MLP head (bf16 weights, f32 accumulate) ----
    proj = jnp.maximum(
        jnp.dot(yn.astype(jnp.bfloat16), wp_ref[...],
                preferred_element_type=jnp.float32) + bp_ref[...], 0.0)
    h1 = jnp.maximum(
        jnp.dot(proj.astype(jnp.bfloat16), w1_ref[...],
                preferred_element_type=jnp.float32) + b1_ref[...], 0.0)
    h2 = jnp.maximum(
        jnp.dot(h1.astype(jnp.bfloat16), w2_ref[...],
                preferred_element_type=jnp.float32) + b2_ref[...], 0.0)
    # last two layers are tiny (64x32, 32x1): keep f32, no DMA benefit from bf16
    h3 = jnp.dot(h2, w3a_ref[...], preferred_element_type=jnp.float32) + b3a_ref[...]
    logits = jnp.dot(h3, w3b_ref[...], preferred_element_type=jnp.float32) + b3b_ref[...]

    out_ref[...] = logits.astype(out_ref.dtype)     # (B, 1)


def _linear_init(key, fan_in, fan_out):
    """Deterministic PyTorch-style Linear init: U(-1/sqrt(fan_in), 1/sqrt(fan_in))."""
    kw, kb = jax.random.split(key)
    bound = 1.0 / math.sqrt(fan_in)
    w = jax.random.uniform(kw, (fan_out, fan_in), jnp.float32, -bound, bound)
    b = jax.random.uniform(kb, (fan_out,), jnp.float32, -bound, bound)
    return w, b


def init_params(key, vocab_size=128):
    ks = jax.random.split(key, 9)
    params = {}
    # stand-in for frozen BERT: deterministic embedding table
    params["bert_embed"] = 0.02 * jax.random.normal(ks[0], (vocab_size, HIDDEN), jnp.float32)
    # MultiheadAttention: in_proj (3H, H) + bias, out_proj (H, H) + bias
    params["in_proj_w"], params["in_proj_b"] = _linear_init(ks[1], HIDDEN, 3 * HIDDEN)
    params["out_proj_w"], params["out_proj_b"] = _linear_init(ks[2], HIDDEN, HIDDEN)
    # LayerNorm(768)
    params["ln_g"] = jnp.ones((HIDDEN,), jnp.float32)
    params["ln_b"] = jnp.zeros((HIDDEN,), jnp.float32)
    # projection / fc1 / fc2 / fc3
    params["proj_w"], params["proj_b"] = _linear_init(ks[3], HIDDEN, PROJ_DIM)
    params["fc1_w"], params["fc1_b"] = _linear_init(ks[4], PROJ_DIM, 256)
    params["fc2_w"], params["fc2_b"] = _linear_init(ks[5], 256, 64)
    params["fc3a_w"], params["fc3a_b"] = _linear_init(ks[6], 64, 32)
    params["fc3b_w"], params["fc3b_b"] = _linear_init(ks[7], 32, 1)
    return params


def _pad_head_cols(w_t, b):
    """(in, NH*192)/(NH*192,) -> zero-pad each head's 192 output cols to 256."""
    in_dim = w_t.shape[0]
    w = w_t.reshape(in_dim, NUM_HEADS, HEAD_DIM)
    w = jnp.pad(w, ((0, 0), (0, 0), (0, HEAD_PAD - HEAD_DIM)))
    b = jnp.pad(b.reshape(NUM_HEADS, HEAD_DIM), ((0, 0), (0, HEAD_PAD - HEAD_DIM)))
    return w.reshape(in_dim, HIDDEN_PAD), b.reshape(HIDDEN_PAD)


def _pad_head_rows(w_t):
    """(NH*192, out) -> zero-pad each head's 192 input rows to 256 (zero rows)."""
    out_dim = w_t.shape[1]
    w = w_t.reshape(NUM_HEADS, HEAD_DIM, out_dim)
    w = jnp.pad(w, ((0, 0), (0, HEAD_PAD - HEAD_DIM), (0, 0)))
    return w.reshape(HIDDEN_PAD, out_dim)


def bert_mlp_forward(input_ids, attention_mask, params):
    # TODO(synk): the frozen BERT encoder itself has no clean Pallas equivalent
    # here; last_hidden_state is simulated with a deterministic embedding lookup
    # and attention_mask is unused downstream (as in the original head).
    del attention_mask
    x = params["bert_embed"][input_ids]              # (B, S, 768) plain-JAX glue
    B, S, _ = x.shape
    x_cls = x[:, 0, :]                               # (B, 768)

    def row(v):  # 1-D bias -> (1, N) for TPU-friendly layout
        return v.reshape(1, -1)

    H = HIDDEN
    bf16 = jnp.bfloat16
    ipw, ipb = params["in_proj_w"], params["in_proj_b"]
    wq, bq = _pad_head_cols(ipw[:H].T, ipb[:H])
    wk, bk = _pad_head_cols(ipw[H:2 * H].T, ipb[H:2 * H])
    wv, bv = _pad_head_cols(ipw[2 * H:].T, ipb[2 * H:])
    wo = _pad_head_rows(params["out_proj_w"].T)

    args = (
        x, x_cls,
        wq.astype(bf16), row(bq),
        wk.astype(bf16), row(bk),
        wv.astype(bf16), row(bv),
        wo.astype(bf16), row(params["out_proj_b"]),
        row(params["ln_g"]), row(params["ln_b"]),
        params["proj_w"].T.astype(bf16), row(params["proj_b"]),
        params["fc1_w"].T.astype(bf16), row(params["fc1_b"]),
        params["fc2_w"].T.astype(bf16), row(params["fc2_b"]),
        params["fc3a_w"].T, row(params["fc3a_b"]),
        params["fc3b_w"].T, row(params["fc3b_b"]),
    )

    vmem_spec = pl.BlockSpec(memory_space=pltpu.MemorySpace.VMEM)
    out = pl.pallas_call(
        bert_mlp_kernel,
        out_shape=jax.ShapeDtypeStruct((B, 1), jnp.float32),
        in_specs=[vmem_spec] * len(args),
        out_specs=vmem_spec,
        # bf16 weights + activations need ~8 MiB; 32 MiB fits comfortably on
        # v5e/v6e (128 MiB VMEM) and v7x (64 MiB VMEM per TensorCore).
        compiler_params=pltpu.CompilerParams(vmem_limit_bytes=32 * 1024 * 1024),
    )(*args)
    return out


if __name__ == "__main__":
    key = jax.random.PRNGKey(0)
    pkey, dkey = jax.random.split(key)

    B, S, VOCAB = 2, 8, 128
    params = init_params(pkey, vocab_size=VOCAB)

    input_ids = jax.random.randint(dkey, (B, S), 0, VOCAB, dtype=jnp.int32)
    attention_mask = jnp.ones((B, S), dtype=jnp.int32)

    logits = bert_mlp_forward(input_ids, attention_mask, params)
    jax.block_until_ready(logits)
    assert logits.shape == (B, 1), logits.shape
    print("KERNEL_OK")
</pallas_src>

<mosaic_0001>
module attributes {stable_mosaic.version = 11 : i64} {
  func.func @bert_mlp_kernel(%arg0: memref<2x8x768xf32, #tpu.memory_space<vmem>>, %arg1: memref<2x768xf32, #tpu.memory_space<vmem>>, %arg2: memref<768x1024xbf16, #tpu.memory_space<vmem>>, %arg3: memref<1x1024xf32, #tpu.memory_space<vmem>>, %arg4: memref<768x1024xbf16, #tpu.memory_space<vmem>>, %arg5: memref<1x1024xf32, #tpu.memory_space<vmem>>, %arg6: memref<768x1024xbf16, #tpu.memory_space<vmem>>, %arg7: memref<1x1024xf32, #tpu.memory_space<vmem>>, %arg8: memref<1024x768xbf16, #tpu.memory_space<vmem>>, %arg9: memref<1x768xf32, #tpu.memory_space<vmem>>, %arg10: memref<1x768xf32, #tpu.memory_space<vmem>>, %arg11: memref<1x768xf32, #tpu.memory_space<vmem>>, %arg12: memref<768x256xbf16, #tpu.memory_space<vmem>>, %arg13: memref<1x256xf32, #tpu.memory_space<vmem>>, %arg14: memref<256x256xbf16, #tpu.memory_space<vmem>>, %arg15: memref<1x256xf32, #tpu.memory_space<vmem>>, %arg16: memref<256x64xbf16, #tpu.memory_space<vmem>>, %arg17: memref<1x64xf32, #tpu.memory_space<vmem>>, %arg18: memref<64x32xf32, #tpu.memory_space<vmem>>, %arg19: memref<1x32xf32, #tpu.memory_space<vmem>>, %arg20: memref<32x1xf32, #tpu.memory_space<vmem>>, %arg21: memref<1x1xf32, #tpu.memory_space<vmem>>, %arg22: memref<2x1xf32, #tpu.memory_space<vmem>>) attributes {dimension_semantics = [], scalar_prefetch = 0 : i64, scratch_operands = 0 : i64, tpu.core_type = #tpu.core_type<tc>} {
    %c0 = arith.constant 0 : index
    %c0_0 = arith.constant 0 : index
    %c0_1 = arith.constant 0 : index
    %0 = vector.load %arg0[%c0, %c0_0, %c0_1] : memref<2x8x768xf32, #tpu.memory_space<vmem>>, vector<2x8x768xf32>
    %c0_2 = arith.constant 0 : index
    %c0_3 = arith.constant 0 : index
    %1 = vector.load %arg1[%c0_2, %c0_3] : memref<2x768xf32, #tpu.memory_space<vmem>>, vector<2x768xf32>
    %2 = vector.shape_cast %0 : vector<2x8x768xf32> to vector<16x768xf32>
    %3 = arith.truncf %2 : vector<16x768xf32> to vector<16x768xbf16>
    %4 = arith.truncf %1 : vector<2x768xf32> to vector<2x768xbf16>
    %c0_4 = arith.constant 0 : index
    %c0_5 = arith.constant 0 : index
    %5 = vector.load %arg4[%c0_4, %c0_5] : memref<768x1024xbf16, #tpu.memory_space<vmem>>, vector<768x1024xbf16>
    %cst = arith.constant dense<0.000000e+00> : vector<16x1024xf32>
    %6 = tpu.matmul %3, %5, %cst {dimension_numbers = #tpu.dot_dimension_numbers<[1], [0], [0], [1], [0, 0, 1, 1], [], []>} : vector<16x768xbf16>, vector<768x1024xbf16>, vector<16x1024xf32> -> vector<16x1024xf32>
    %c0_6 = arith.constant 0 : index
    %c0_7 = arith.constant 0 : index
    %7 = vector.load %arg5[%c0_6, %c0_7] : memref<1x1024xf32, #tpu.memory_space<vmem>>, vector<1x1024xf32>
    %8 = vector.broadcast %7 : vector<1x1024xf32> to vector<16x1024xf32>
    %9 = arith.addf %6, %8 : vector<16x1024xf32>
    %10 = vector.shape_cast %9 : vector<16x1024xf32> to vector<2x8x1024xf32>
    %c0_8 = arith.constant 0 : index
    %c0_9 = arith.constant 0 : index
    %11 = vector.load %arg6[%c0_8, %c0_9] : memref<768x1024xbf16, #tpu.memory_space<vmem>>, vector<768x1024xbf16>
    %cst_10 = arith.constant dense<0.000000e+00> : vector<16x1024xf32>
    %12 = tpu.matmul %3, %11, %cst_10 {dimension_numbers = #tpu.dot_dimension_numbers<[1], [0], [0], [1], [0, 0, 1, 1], [], []>} : vector<16x768xbf16>, vector<768x1024xbf16>, vector<16x1024xf32> -> vector<16x1024xf32>
    %c0_11 = arith.constant 0 : index
    %c0_12 = arith.constant 0 : index
    %13 = vector.load %arg7[%c0_11, %c0_12] : memref<1x1024xf32, #tpu.memory_space<vmem>>, vector<1x1024xf32>
    %14 = vector.broadcast %13 : vector<1x1024xf32> to vector<16x1024xf32>
    %15 = arith.addf %12, %14 : vector<16x1024xf32>
    %16 = vector.shape_cast %15 : vector<16x1024xf32> to vector<2x8x1024xf32>
    %c0_13 = arith.constant 0 : index
    %c0_14 = arith.constant 0 : index
    %17 = vector.load %arg2[%c0_13, %c0_14] : memref<768x1024xbf16, #tpu.memory_space<vmem>>, vector<768x1024xbf16>
    %cst_15 = arith.constant dense<0.000000e+00> : vector<2x1024xf32>
    %18 = tpu.matmul %4, %17, %cst_15 {dimension_numbers = #tpu.dot_dimension_numbers<[1], [0], [0], [1], [0, 0, 1, 1], [], []>} : vector<2x768xbf16>, vector<768x1024xbf16>, vector<2x1024xf32> -> vector<2x1024xf32>
    %c0_16 = arith.constant 0 : index
    %c0_17 = arith.constant 0 : index
    %19 = vector.load %arg3[%c0_16, %c0_17] : memref<1x1024xf32, #tpu.memory_space<vmem>>, vector<1x1024xf32>
    %20 = vector.broadcast %19 : vector<1x1024xf32> to vector<2x1024xf32>
    %21 = arith.addf %18, %20 : vector<2x1024xf32>
    %cst_18 = arith.constant 0.0721687824 : f32
    %22 = vector.broadcast %cst_18 : f32 to vector<2x1024xf32>
    %23 = arith.mulf %21, %22 : vector<2x1024xf32>
    %24 = vector.shape_cast %23 : vector<2x1024xf32> to vector<2x1x1024xf32>
    %25 = vector.broadcast %24 : vector<2x1x1024xf32> to vector<2x8x1024xf32>
    %26 = arith.mulf %10, %25 : vector<2x8x1024xf32>
    %27 = vector.extract_strided_slice %16 {offsets = [0, 0, 0], sizes = [2, 8, 256], strides = [1, 1, 1]} : vector<2x8x1024xf32> to vector<2x8x256xf32>
    %28 = vector.extract_strided_slice %26 {offsets = [0, 0, 0], sizes = [2, 8, 256], strides = [1, 1, 1]} : vector<2x8x1024xf32> to vector<2x8x256xf32>
    %cst_19 = arith.constant dense<0.000000e+00> : vector<2x8xf32>
    %29 = vector.multi_reduction <add>, %28, %cst_19 [2] : vector<2x8x256xf32> to vector<2x8xf32>
    %30 = vector.shape_cast %29 : vector<2x8xf32> to vector<2x8x1xf32>
    %cst_20 = arith.constant dense<0xFF800000> : vector<2x1xf32>
    %31 = vector.multi_reduction <maximumf>, %30, %cst_20 [1] : vector<2x8x1xf32> to vector<2x1xf32>
    %32 = vector.shape_cast %31 : vector<2x1xf32> to vector<2x1x1xf32>
    %33 = vector.broadcast %32 : vector<2x1x1xf32> to vector<2x8x1xf32>
    %34 = arith.subf %30, %33 : vector<2x8x1xf32>
    %35 = math.exp %34 : vector<2x8x1xf32>
    %cst_21 = arith.constant dense<0.000000e+00> : vector<2x1xf32>
    %36 = vector.multi_reduction <add>, %35, %cst_21 [1] : vector<2x8x1xf32> to vector<2x1xf32>
    %37 = vector.shape_cast %36 : vector<2x1xf32> to vector<2x1x1xf32>
    %38 = tpu.reciprocal %37 {approx = true} : vector<2x1x1xf32> -> vector<2x1x1xf32>
    %39 = vector.broadcast %38 : vector<2x1x1xf32> to vector<2x8x1xf32>
    %40 = arith.mulf %35, %39 : vector<2x8x1xf32>
    %41 = vector.broadcast %40 : vector<2x8x1xf32> to vector<2x8x256xf32>
    %42 = arith.mulf %41, %27 : vector<2x8x256xf32>
    %cst_22 = arith.constant dense<0.000000e+00> : vector<2x256xf32>
    %43 = vector.multi_reduction <add>, %42, %cst_22 [1] : vector<2x8x256xf32> to vector<2x256xf32>
    %44 = vector.extract_strided_slice %16 {offsets = [0, 0, 256], sizes = [2, 8, 256], strides = [1, 1, 1]} : vector<2x8x1024xf32> to vector<2x8x256xf32>
    %45 = vector.extract_strided_slice %26 {offsets = [0, 0, 256], sizes = [2, 8, 256], strides = [1, 1, 1]} : vector<2x8x1024xf32> to vector<2x8x256xf32>
    %cst_23 = arith.constant dense<0.000000e+00> : vector<2x8xf32>
    %46 = vector.multi_reduction <add>, %45, %cst_23 [2] : vector<2x8x256xf32> to vector<2x8xf32>
    %47 = vector.shape_cast %46 : vector<2x8xf32> to vector<2x8x1xf32>
    %cst_24 = arith.constant dense<0xFF800000> : vector<2x1xf32>
    %48 = vector.multi_reduction <maximumf>, %47, %cst_24 [1] : vector<2x8x1xf32> to vector<2x1xf32>
    %49 = vector.shape_cast %48 : vector<2x1xf32> to vector<2x1x1xf32>
    %50 = vector.broadcast %49 : vector<2x1x1xf32> to vector<2x8x1xf32>
    %51 = arith.subf %47, %50 : vector<2x8x1xf32>
    %52 = math.exp %51 : vector<2x8x1xf32>
    %cst_25 = arith.constant dense<0.000000e+00> : vector<2x1xf32>
    %53 = vector.multi_reduction <add>, %52, %cst_25 [1] : vector<2x8x1xf32> to vector<2x1xf32>
    %54 = vector.shape_cast %53 : vector<2x1xf32> to vector<2x1x1xf32>
    %55 = tpu.reciprocal %54 {approx = true} : vector<2x1x1xf32> -> vector<2x1x1xf32>
    %56 = vector.broadcast %55 : vector<2x1x1xf32> to vector<2x8x1xf32>
    %57 = arith.mulf %52, %56 : vector<2x8x1xf32>
    %58 = vector.broadcast %57 : vector<2x8x1xf32> to vector<2x8x256xf32>
    %59 = arith.mulf %58, %44 : vector<2x8x256xf32>
    %cst_26 = arith.constant dense<0.000000e+00> : vector<2x256xf32>
    %60 = vector.multi_reduction <add>, %59, %cst_26 [1] : vector<2x8x256xf32> to vector<2x256xf32>
    %61 = vector.extract_strided_slice %16 {offsets = [0, 0, 512], sizes = [2, 8, 256], strides = [1, 1, 1]} : vector<2x8x1024xf32> to vector<2x8x256xf32>
    %62 = vector.extract_strided_slice %26 {offsets = [0, 0, 512], sizes = [2, 8, 256], strides = [1, 1, 1]} : vector<2x8x1024xf32> to vector<2x8x256xf32>
    %cst_27 = arith.constant dense<0.000000e+00> : vector<2x8xf32>
    %63 = vector.multi_reduction <add>, %62, %cst_27 [2] : vector<2x8x256xf32> to vector<2x8xf32>
    %64 = vector.shape_cast %63 : vector<2x8xf32> to vector<2x8x1xf32>
    %cst_28 = arith.constant dense<0xFF800000> : vector<2x1xf32>
    %65 = vector.multi_reduction <maximumf>, %64, %cst_28 [1] : vector<2x8x1xf32> to vector<2x1xf32>
    %66 = vector.shape_cast %65 : vector<2x1xf32> to vector<2x1x1xf32>
    %67 = vector.broadcast %66 : vector<2x1x1xf32> to vector<2x8x1xf32>
    %68 = arith.subf %64, %67 : vector<2x8x1xf32>
    %69 = math.exp %68 : vector<2x8x1xf32>
    %cst_29 = arith.constant dense<0.000000e+00> : vector<2x1xf32>
    %70 = vector.multi_reduction <add>, %69, %cst_29 [1] : vector<2x8x1xf32> to vector<2x1xf32>
    %71 = vector.shape_cast %70 : vector<2x1xf32> to vector<2x1x1xf32>
    %72 = tpu.reciprocal %71 {approx = true} : vector<2x1x1xf32> -> vector<2x1x1xf32>
    %73 = vector.broadcast %72 : vector<2x1x1xf32> to vector<2x8x1xf32>
    %74 = arith.mulf %69, %73 : vector<2x8x1xf32>
    %75 = vector.broadcast %74 : vector<2x8x1xf32> to vector<2x8x256xf32>
    %76 = arith.mulf %75, %61 : vector<2x8x256xf32>
    %cst_30 = arith.constant dense<0.000000e+00> : vector<2x256xf32>
    %77 = vector.multi_reduction <add>, %76, %cst_30 [1] : vector<2x8x256xf32> to vector<2x256xf32>
    %78 = vector.extract_strided_slice %16 {offsets = [0, 0, 768], sizes = [2, 8, 256], strides = [1, 1, 1]} : vector<2x8x1024xf32> to vector<2x8x256xf32>
    %79 = vector.extract_strided_slice %26 {offsets = [0, 0, 768], sizes = [2, 8, 256], strides = [1, 1, 1]} : vector<2x8x1024xf32> to vector<2x8x256xf32>
    %cst_31 = arith.constant dense<0.000000e+00> : vector<2x8xf32>
    %80 = vector.multi_reduction <add>, %79, %cst_31 [2] : vector<2x8x256xf32> to vector<2x8xf32>
    %81 = vector.shape_cast %80 : vector<2x8xf32> to vector<2x8x1xf32>
    %cst_32 = arith.constant dense<0xFF800000> : vector<2x1xf32>
    %82 = vector.multi_reduction <maximumf>, %81, %cst_32 [1] : vector<2x8x1xf32> to vector<2x1xf32>
    %83 = vector.shape_cast %82 : vector<2x1xf32> to vector<2x1x1xf32>
    %84 = vector.broadcast %83 : vector<2x1x1xf32> to vector<2x8x1xf32>
    %85 = arith.subf %81, %84 : vector<2x8x1xf32>
    %86 = math.exp %85 : vector<2x8x1xf32>
    %cst_33 = arith.constant dense<0.000000e+00> : vector<2x1xf32>
    %87 = vector.multi_reduction <add>, %86, %cst_33 [1] : vector<2x8x1xf32> to vector<2x1xf32>
    %88 = vector.shape_cast %87 : vector<2x1xf32> to vector<2x1x1xf32>
    %89 = tpu.reciprocal %88 {approx = true} : vector<2x1x1xf32> -> vector<2x1x1xf32>
    %90 = vector.broadcast %89 : vector<2x1x1xf32> to vector<2x8x1xf32>
    %91 = arith.mulf %86, %90 : vector<2x8x1xf32>
    %92 = vector.broadcast %91 : vector<2x8x1xf32> to vector<2x8x256xf32>
    %93 = arith.mulf %92, %78 : vector<2x8x256xf32>
    %cst_34 = arith.constant dense<0.000000e+00> : vector<2x256xf32>
    %94 = vector.multi_reduction <add>, %93, %cst_34 [1] : vector<2x8x256xf32> to vector<2x256xf32>
    %95 = tpu.concatenate %43, %60, %77, %94 in 1 : vector<2x256xf32>, vector<2x256xf32>, vector<2x256xf32>, vector<2x256xf32> -> vector<2x1024xf32>
    %96 = arith.truncf %95 : vector<2x1024xf32> to vector<2x1024xbf16>
    %c0_35 = arith.constant 0 : index
    %c0_36 = arith.constant 0 : index
    %97 = vector.load %arg8[%c0_35, %c0_36] : memref<1024x768xbf16, #tpu.memory_space<vmem>>, vector<1024x768xbf16>
    %cst_37 = arith.constant dense<0.000000e+00> : vector<2x768xf32>
    %98 = tpu.matmul %96, %97, %cst_37 {dimension_numbers = #tpu.dot_dimension_numbers<[1], [0], [0], [1], [0, 0, 1, 1], [], []>} : vector<2x1024xbf16>, vector<1024x768xbf16>, vector<2x768xf32> -> vector<2x768xf32>
    %c0_38 = arith.constant 0 : index
    %c0_39 = arith.constant 0 : index
    %99 = vector.load %arg9[%c0_38, %c0_39] : memref<1x768xf32, #tpu.memory_space<vmem>>, vector<1x768xf32>
    %100 = vector.broadcast %99 : vector<1x768xf32> to vector<2x768xf32>
    %101 = arith.addf %98, %100 : vector<2x768xf32>
    %102 = arith.addf %1, %101 : vector<2x768xf32>
    %cst_40 = arith.constant dense<0.000000e+00> : vector<2xf32>
    %103 = vector.multi_reduction <add>, %102, %cst_40 [1] : vector<2x768xf32> to vector<2xf32>
    %104 = vector.shape_cast %103 : vector<2xf32> to vector<2x1xf32>
    %cst_41 = arith.constant 7.680000e+02 : f32
    %105 = vector.broadcast %cst_41 : f32 to vector<2x1xf32>
    %106 = arith.divf %104, %105 : vector<2x1xf32>
    %107 = vector.broadcast %106 : vector<2x1xf32> to vector<2x768xf32>
    %108 = arith.subf %102, %107 : vector<2x768xf32>
    %109 = arith.mulf %108, %108 : vector<2x768xf32>
    %cst_42 = arith.constant dense<0.000000e+00> : vector<2xf32>
    %110 = vector.multi_reduction <add>, %109, %cst_42 [1] : vector<2x768xf32> to vector<2xf32>
    %111 = vector.shape_cast %110 : vector<2xf32> to vector<2x1xf32>
    %cst_43 = arith.constant 7.680000e+02 : f32
    %112 = vector.broadcast %cst_43 : f32 to vector<2x1xf32>
    %113 = arith.divf %111, %112 : vector<2x1xf32>
    %114 = vector.broadcast %106 : vector<2x1xf32> to vector<2x768xf32>
    %115 = arith.subf %102, %114 : vector<2x768xf32>
    %cst_44 = arith.constant 9.99999974E-6 : f32
    %116 = vector.broadcast %cst_44 : f32 to vector<2x1xf32>
    %117 = arith.addf %113, %116 : vector<2x1xf32>
    %118 = math.rsqrt %117 : vector<2x1xf32>
    %119 = vector.broadcast %118 : vector<2x1xf32> to vector<2x768xf32>
    %120 = arith.mulf %115, %119 : vector<2x768xf32>
    %c0_45 = arith.constant 0 : index
    %c0_46 = arith.constant 0 : index
    %121 = vector.load %arg10[%c0_45, %c0_46] : memref<1x768xf32, #tpu.memory_space<vmem>>, vector<1x768xf32>
    %122 = vector.broadcast %121 : vector<1x768xf32> to vector<2x768xf32>
    %123 = arith.mulf %120, %122 : vector<2x768xf32>
    %c0_47 = arith.constant 0 : index
    %c0_48 = arith.constant 0 : index
    %124 = vector.load %arg11[%c0_47, %c0_48] : memref<1x768xf32, #tpu.memory_space<vmem>>, vector<1x768xf32>
    %125 = vector.broadcast %124 : vector<1x768xf32> to vector<2x768xf32>
    %126 = arith.addf %123, %125 : vector<2x768xf32>
    %127 = arith.truncf %126 : vector<2x768xf32> to vector<2x768xbf16>
    %c0_49 = arith.constant 0 : index
    %c0_50 = arith.constant 0 : index
    %128 = vector.load %arg12[%c0_49, %c0_50] : memref<768x256xbf16, #tpu.memory_space<vmem>>, vector<768x256xbf16>
    %cst_51 = arith.constant dense<0.000000e+00> : vector<2x256xf32>
    %129 = tpu.matmul %127, %128, %cst_51 {dimension_numbers = #tpu.dot_dimension_numbers<[1], [0], [0], [1], [0, 0, 1, 1], [], []>} : vector<2x768xbf16>, vector<768x256xbf16>, vector<2x256xf32> -> vector<2x256xf32>
    %c0_52 = arith.constant 0 : index
    %c0_53 = arith.constant 0 : index
    %130 = vector.load %arg13[%c0_52, %c0_53] : memref<1x256xf32, #tpu.memory_space<vmem>>, vector<1x256xf32>
    %131 = vector.broadcast %130 : vector<1x256xf32> to vector<2x256xf32>
    %132 = arith.addf %129, %131 : vector<2x256xf32>
    %cst_54 = arith.constant 0.000000e+00 : f32
    %133 = vector.broadcast %cst_54 : f32 to vector<2x256xf32>
    %134 = arith.maximumf %132, %133 : vector<2x256xf32>
    %135 = arith.truncf %134 : vector<2x256xf32> to vector<2x256xbf16>
    %c0_55 = arith.constant 0 : index
    %c0_56 = arith.constant 0 : index
    %136 = vector.load %arg14[%c0_55, %c0_56] : memref<256x256xbf16, #tpu.memory_space<vmem>>, vector<256x256xbf16>
    %cst_57 = arith.constant dense<0.000000e+00> : vector<2x256xf32>
    %137 = tpu.matmul %135, %136, %cst_57 {dimension_numbers = #tpu.dot_dimension_numbers<[1], [0], [0], [1], [0, 0, 1, 1], [], []>} : vector<2x256xbf16>, vector<256x256xbf16>, vector<2x256xf32> -> vector<2x256xf32>
    %c0_58 = arith.constant 0 : index
    %c0_59 = arith.constant 0 : index
    %138 = vector.load %arg15[%c0_58, %c0_59] : memref<1x256xf32, #tpu.memory_space<vmem>>, vector<1x256xf32>
    %139 = vector.broadcast %138 : vector<1x256xf32> to vector<2x256xf32>
    %140 = arith.addf %137, %139 : vector<2x256xf32>
    %cst_60 = arith.constant 0.000000e+00 : f32
    %141 = vector.broadcast %cst_60 : f32 to vector<2x256xf32>
    %142 = arith.maximumf %140, %141 : vector<2x256xf32>
    %143 = arith.truncf %142 : vector<2x256xf32> to vector<2x256xbf16>
    %c0_61 = arith.constant 0 : index
    %c0_62 = arith.constant 0 : index
    %144 = vector.load %arg16[%c0_61, %c0_62] : memref<256x64xbf16, #tpu.memory_space<vmem>>, vector<256x64xbf16>
    %cst_63 = arith.constant dense<0.000000e+00> : vector<2x64xf32>
    %145 = tpu.matmul %143, %144, %cst_63 {dimension_numbers = #tpu.dot_dimension_numbers<[1], [0], [0], [1], [0, 0, 1, 1], [], []>} : vector<2x256xbf16>, vector<256x64xbf16>, vector<2x64xf32> -> vector<2x64xf32>
    %c0_64 = arith.constant 0 : index
    %c0_65 = arith.constant 0 : index
    %146 = vector.load %arg17[%c0_64, %c0_65] : memref<1x64xf32, #tpu.memory_space<vmem>>, vector<1x64xf32>
    %147 = vector.broadcast %146 : vector<1x64xf32> to vector<2x64xf32>
    %148 = arith.addf %145, %147 : vector<2x64xf32>
    %cst_66 = arith.constant 0.000000e+00 : f32
    %149 = vector.broadcast %cst_66 : f32 to vector<2x64xf32>
    %150 = arith.maximumf %148, %149 : vector<2x64xf32>
    %c0_67 = arith.constant 0 : index
    %c0_68 = arith.constant 0 : index
    %151 = vector.load %arg18[%c0_67, %c0_68] : memref<64x32xf32, #tpu.memory_space<vmem>>, vector<64x32xf32>
    %cst_69 = arith.constant dense<0.000000e+00> : vector<2x32xf32>
    %152 = tpu.matmul %150, %151, %cst_69 {dimension_numbers = #tpu.dot_dimension_numbers<[1], [0], [0], [1], [0, 0, 1, 1], [], []>} : vector<2x64xf32>, vector<64x32xf32>, vector<2x32xf32> -> vector<2x32xf32>
    %c0_70 = arith.constant 0 : index
    %c0_71 = arith.constant 0 : index
    %153 = vector.load %arg19[%c0_70, %c0_71] : memref<1x32xf32, #tpu.memory_space<vmem>>, vector<1x32xf32>
    %154 = vector.broadcast %153 : vector<1x32xf32> to vector<2x32xf32>
    %155 = arith.addf %152, %154 : vector<2x32xf32>
    %c0_72 = arith.constant 0 : index
    %c0_73 = arith.constant 0 : index
    %156 = vector.load %arg20[%c0_72, %c0_73] : memref<32x1xf32, #tpu.memory_space<vmem>>, vector<32x1xf32>
    %cst_74 = arith.constant dense<0.000000e+00> : vector<2x1xf32>
    %157 = tpu.matmul %155, %156, %cst_74 {dimension_numbers = #tpu.dot_dimension_numbers<[1], [0], [0], [1], [0, 0, 1, 1], [], []>} : vector<2x32xf32>, vector<32x1xf32>, vector<2x1xf32> -> vector<2x1xf32>
    %c0_75 = arith.constant 0 : index
    %c0_76 = arith.constant 0 : index
    %158 = vector.load %arg21[%c0_75, %c0_76] : memref<1x1xf32, #tpu.memory_space<vmem>>, vector<1x1xf32>
    %159 = vector.broadcast %158 : vector<1x1xf32> to vector<2x1xf32>
    %160 = arith.addf %157, %159 : vector<2x1xf32>
    %c0_77 = arith.constant 0 : index
    %c0_78 = arith.constant 0 : index
    %161 = vector.load %arg22[%c0_77, %c0_78] : memref<2x1xf32, #tpu.memory_space<vmem>>, vector<2x1xf32>
    tpu.vector_store %arg22[%c0_77, %c0_78], %160 {strides = array<i32>} : memref<2x1xf32, #tpu.memory_space<vmem>>, vector<2x1xf32>,
    return
  }
}

</mosaic_0001>

<llo_original>
// kernel: tpu_custom_call.1
$region0: #{tpu_custom_call.1}
  #allocation0 [shape = 'u32[]', space=smem, size = 0x4, offset = 0x4, fixed_abs, tag = 'smem constant byte address 0x4 - core index']
  #allocation1 [shape = 'u32[144,128]{1,0:T(1,128)}', space=vmem, size = 0x12000, scoped, tag = 'internal scratch']
  #allocation2 [shape = 'f32[1,1]{1,0:T(1,128)S(1)}', space=vmem, size = 0x200, scoped, tag = 'scoped memory for tpu_custom_call.1']
  %s0 = inlined_call_operand.hbm [shape: f32[2,8,768], index: 0, kind: input, shape index: {}]
  %s1 = inlined_call_operand.hbm [shape: f32[2,768], index: 1, kind: input, shape index: {}]
  %s2 = inlined_call_operand.hbm [shape: bf16[768,1024], index: 2, kind: input, shape index: {}]
  %s3 = inlined_call_operand.hbm [shape: f32[1,1024], index: 3, kind: input, shape index: {}]
  %s4 = inlined_call_operand.hbm [shape: bf16[768,1024], index: 4, kind: input, shape index: {}]
  %s5 = inlined_call_operand.hbm [shape: f32[1,1024], index: 5, kind: input, shape index: {}]
  %s6 = inlined_call_operand.hbm [shape: bf16[768,1024], index: 6, kind: input, shape index: {}]
  %s7 = inlined_call_operand.hbm [shape: f32[1,1024], index: 7, kind: input, shape index: {}]
  %s8 = inlined_call_operand.hbm [shape: bf16[1024,768], index: 8, kind: input, shape index: {}]
  %s9 = inlined_call_operand.hbm [shape: f32[1,768], index: 9, kind: input, shape index: {}]
  %s10 = inlined_call_operand.hbm [shape: f32[1,768], index: 10, kind: input, shape index: {}]
  %s11 = inlined_call_operand.hbm [shape: f32[1,768], index: 11, kind: input, shape index: {}]
  %s12 = inlined_call_operand.hbm [shape: bf16[768,256], index: 12, kind: input, shape index: {}]
  %s13 = inlined_call_operand.hbm [shape: f32[1,256], index: 13, kind: input, shape index: {}]
  %s14 = inlined_call_operand.hbm [shape: bf16[256,256], index: 14, kind: input, shape index: {}]
  %s15 = inlined_call_operand.hbm [shape: f32[1,256], index: 15, kind: input, shape index: {}]
  %s16 = inlined_call_operand.vmem [shape: bf16[256,64], index: 16, kind: input, shape index: {}]
  %s17 = inlined_call_operand.hbm [shape: f32[1,64], index: 17, kind: input, shape index: {}]
  %s18 = inlined_call_operand.vmem [shape: f32[64,32], index: 18, kind: input, shape index: {}]
  %s19 = inlined_call_operand.hbm [shape: f32[1,32], index: 19, kind: input, shape index: {}]
  %s20 = inlined_call_operand.vmem [shape: f32[32,1], index: 20, kind: input, shape index: {}]
  %s21 = inlined_call_operand.<no memory space> [shape: f32[1,1], index: 21, kind: input, shape index: {}]
  %s22 = inlined_call_operand.vmem [shape: f32[2,1], index: 22, kind: output, shape index: {}]
  %s23 = sld [smem:[#allocation0]]
  $region170: #{tpu_custom_call.1} parent=0
    _
  %s25 = ssub.s32 1, %s23
  %s26 = scalar_select 0, %s25, %s23
  %v27 = vstv %s21
  %28 = vst [vmem:[#allocation2] sm:$0x1] %v27
  $region1: #{tpu_custom_call.1} parent=0
    #allocation3 [shape = 'u8[49152]{0}', space=vmem, size = 0xc000, scoped, tag = 'input window, operand 0, single buffered']
    #allocation4 [shape = 's32[1]{0}', space=sflag, size = 0x4, scoped, tag = 'scoped memory for tpu_custom_call.1']
    #allocation5 [shape = 'u8[6144]{0}', space=vmem, size = 0x1800, scoped, tag = 'input window, operand 1, single buffered']
    #allocation6 [shape = 's32[1]{0}', space=sflag, size = 0x4, scoped, tag = 'scoped memory for tpu_custom_call.1']
    #allocation7 [shape = 'u8[1572864]{0}', space=vmem, size = 0x180000, scoped, tag = 'input window, operand 2, single buffered']
    #allocation8 [shape = 'u8[4096]{0}', space=vmem, size = 0x1000, scoped, tag = 'input window, operand 3, single buffered']
    #allocation9 [shape = 's32[1]{0}', space=sflag, size = 0x4, scoped, tag = 'scoped memory for tpu_custom_call.1']
    #allocation10 [shape = 'u8[1572864]{0}', space=vmem, size = 0x180000, scoped, tag = 'input window, operand 4, single buffered']
    #allocation11 [shape = 'u8[4096]{0}', space=vmem, size = 0x1000, scoped, tag = 'input window, operand 5, single buffered']
    #allocation12 [shape = 's32[1]{0}', space=sflag, size = 0x4, scoped, tag = 'scoped memory for tpu_custom_call.1']
    #allocation13 [shape = 'u8[1572864]{0}', space=vmem, size = 0x180000, scoped, tag = 'input window, operand 6, single buffered']
    #allocation14 [shape = 'u8[4096]{0}', space=vmem, size = 0x1000, scoped, tag = 'input window, operand 7, single buffered']
    #allocation15 [shape = 's32[1]{0}', space=sflag, size = 0x4, scoped, tag = 'scoped memory for tpu_custom_call.1']
    #allocation16 [shape = 'u8[1572864]{0}', space=vmem, size = 0x180000, scoped, tag = 'input window, operand 8, single buffered']
    #allocation17 [shape = 'u8[3072]{0}', space=vmem, size = 0xc00, scoped, tag = 'input window, operand 9, single buffered']
    #allocation18 [shape = 's32[1]{0}', space=sflag, size = 0x4, scoped, tag = 'scoped memory for tpu_custom_call.1']
    #allocation19 [shape = 'u8[3072]{0}', space=vmem, size = 0xc00, scoped, tag = 'input window, operand 10, single buffered']
    #allocation20 [shape = 'u8[3072]{0}', space=vmem, size = 0xc00, scoped, tag = 'input window, operand 11, single buffered']
    #allocation21 [shape = 's32[1]{0}', space=sflag, size = 0x4, scoped, tag = 'scoped memory for tpu_custom_call.1']
    #allocation22 [shape = 'u8[393216]{0}', space=vmem, size = 0x60000, scoped, tag = 'input window, operand 12, single buffered']
    #allocation23 [shape = 'u8[1024]{0}', space=vmem, size = 0x400, scoped, tag = 'input window, operand 13, single buffered']
    #allocation24 [shape = 's32[1]{0}', space=sflag, size = 0x4, scoped, tag = 'scoped memory for tpu_custom_call.1']
    #allocation25 [shape = 'u8[131072]{0}', space=vmem, size = 0x20000, scoped, tag = 'input window, operand 14, single buffered']
    #allocation26 [shape = 'u8[1024]{0}', space=vmem, size = 0x400, scoped, tag = 'input window, operand 15, single buffered']
    #allocation27 [shape = 's32[1]{0}', space=sflag, size = 0x4, scoped, tag = 'scoped memory for tpu_custom_call.1']
    #allocation28 [shape = 'u8[512]{0}', space=vmem, size = 0x400, scoped, tag = 'input window, operand 17, single buffered']
    #allocation29 [shape = 'u8[512]{0}', space=vmem, size = 0x400, scoped, tag = 'input window, operand 19, single buffered']
    #allocation30 [shape = 's32[1]{0}', space=sflag, size = 0x4, scoped, tag = 'scoped memory for tpu_custom_call.1']
    %29 = vsyncpa [#allocation4], 0
    %30 = vsyncpa [#allocation6], 0
    %31 = vsyncpa [#allocation9], 0
    %32 = vsyncpa [#allocation12], 0
    %33 = vsyncpa [#allocation15], 0
    %34 = vsyncpa [#allocation18], 0
    %35 = vsyncpa [#allocation21], 0
    %36 = vsyncpa [#allocation24], 0
    %37 = vsyncpa [#allocation27], 0
    %38 = vsyncpa [#allocation30], 0
    // Predicated region
    $region2: #{tpu_custom_call.1} parent=1 // pred_check
      _
    $region3: #{tpu_custom_call.1} parent=1 // pred_check_branch
      %40 = sbr.rel (0) target = $region5
    $region4: #{tpu_custom_call.1} parent=1 // pred_region
      %s42 = ssub.s32 1536, 1536
      %43 = vsyncadd [#allocation4], %s42
      %s44 = sshll.u32 [#allocation3], 4
      %s45 = int_to_ptr.vmem [resolvable:$true] %s44
      %50 = dma.hbm_to_vmem [thread:$0]  %s0, 1536, %s45, [#allocation4], 768, 768, 48
    $region5: #{tpu_custom_call.1} parent=1 // pred_fallthru
      _
    // Predicated region
    $region6: #{tpu_custom_call.1} parent=1 // pred_check
      _
    $region7: #{tpu_custom_call.1} parent=1 // pred_check_branch
      %52 = sbr.rel (0) target = $region9
    $region8: #{tpu_custom_call.1} parent=1 // pred_region
      %s54 = ssub.s32 192, 192
      %55 = vsyncadd [#allocation6], %s54
      %s57 = sshll.u32 [#allocation5], 4
      %s58 = int_to_ptr.vmem [resolvable:$true] %s57
      %60 = dma.hbm_to_vmem [thread:$0]  %s1, 192, %s58, [#allocation6]
    $region9: #{tpu_custom_call.1} parent=1 // pred_fallthru
      _
    // Predicated region
    $region10: #{tpu_custom_call.1} parent=1 // pred_check
      _
    $region11: #{tpu_custom_call.1} parent=1 // pred_check_branch
      %62 = sbr.rel (0) target = $region13
    $region12: #{tpu_custom_call.1} parent=1 // pred_region
      %s64 = ssub.s32 49152, 49152
      %65 = vsyncadd [#allocation6], %s64
      %s66 = sshll.u32 [#allocation7], 4
      %s67 = int_to_ptr.vmem [resolvable:$true] %s66
      %72 = dma.hbm_to_vmem [thread:$0]  %s2, 49152, %s67, [#allocation6], 512, 512, 32
    $region13: #{tpu_custom_call.1} parent=1 // pred_fallthru
      _
    // Predicated region
    $region14: #{tpu_custom_call.1} parent=1 // pred_check
      _
    $region15: #{tpu_custom_call.1} parent=1 // pred_check_branch
      %74 = sbr.rel (0) target = $region17
    $region16: #{tpu_custom_call.1} parent=1 // pred_region
      %s76 = ssub.s32 128, 128
      %77 = vsyncadd [#allocation9], %s76
      %s79 = sshll.u32 [#allocation8], 4
      %s80 = int_to_ptr.vmem [resolvable:$true] %s79
      %82 = dma.hbm_to_vmem [thread:$0]  %s3, 128, %s80, [#allocation9]
    $region17: #{tpu_custom_call.1} parent=1 // pred_fallthru
      _
    // Predicated region
    $region18: #{tpu_custom_call.1} parent=1 // pred_check
      _
    $region19: #{tpu_custom_call.1} parent=1 // pred_check_branch
      %84 = sbr.rel (0) target = $region21
    $region20: #{tpu_custom_call.1} parent=1 // pred_region
      %s86 = ssub.s32 49152, 49152
      %87 = vsyncadd [#allocation9], %s86
      %s88 = sshll.u32 [#allocation10], 4
      %s89 = int_to_ptr.vmem [resolvable:$true] %s88
      %94 = dma.hbm_to_vmem [thread:$0]  %s4, 49152, %s89, [#allocation9], 512, 512, 32
    $region21: #{tpu_custom_call.1} parent=1 // pred_fallthru
      _
    // Predicated region
    $region22: #{tpu_custom_call.1} parent=1 // pred_check
      _
    $region23: #{tpu_custom_call.1} parent=1 // pred_check_branch
      %96 = sbr.rel (0) target = $region25
    $region24: #{tpu_custom_call.1} parent=1 // pred_region
      %s98 = ssub.s32 128, 128
      %99 = vsyncadd [#allocation12], %s98
      %s101 = sshll.u32 [#allocation11], 4
      %s102 = int_to_ptr.vmem [resolvable:$true] %s101
      %104 = dma.hbm_to_vmem [thread:$0]  %s5, 128, %s102, [#allocation12]
    $region25: #{tpu_custom_call.1} parent=1 // pred_fallthru
      _
    // Predicated region
    $region26: #{tpu_custom_call.1} parent=1 // pred_check
      _
    $region27: #{tpu_custom_call.1} parent=1 // pred_check_branch
      %106 = sbr.rel (0) target = $region29
    $region28: #{tpu_custom_call.1} parent=1 // pred_region
      %s108 = ssub.s32 49152, 49152
      %109 = vsyncadd [#allocation12], %s108
      %s110 = sshll.u32 [#allocation13], 4
      %s111 = int_to_ptr.vmem [resolvable:$true] %s110
      %116 = dma.hbm_to_vmem [thread:$0]  %s6, 49152, %s111, [#allocation12], 512, 512, 32
    $region29: #{tpu_custom_call.1} parent=1 // pred_fallthru
      _
    // Predicated region
    $region30: #{tpu_custom_call.1} parent=1 // pred_check
      _
    $region31: #{tpu_custom_call.1} parent=1 // pred_check_branch
      %118 = sbr.rel (0) target = $region33
    $region32: #{tpu_custom_call.1} parent=1 // pred_region
      %s120 = ssub.s32 128, 128
      %121 = vsyncadd [#allocation15], %s120
      %s123 = sshll.u32 [#allocation14], 4
      %s124 = int_to_ptr.vmem [resolvable:$true] %s123
      %126 = dma.hbm_to_vmem [thread:$0]  %s7, 128, %s124, [#allocation15]
    $region33: #{tpu_custom_call.1} parent=1 // pred_fallthru
      _
    // Predicated region
    $region34: #{tpu_custom_call.1} parent=1 // pred_check
      _
    $region35: #{tpu_custom_call.1} parent=1 // pred_check_branch
      %128 = sbr.rel (0) target = $region37
    $region36: #{tpu_custom_call.1} parent=1 // pred_region
      %s130 = ssub.s32 49152, 49152
      %131 = vsyncadd [#allocation15], %s130
      %s132 = sshll.u32 [#allocation16], 4
      %s133 = int_to_ptr.vmem [resolvable:$true] %s132
      %138 = dma.hbm_to_vmem [thread:$0]  %s8, 49152, %s133, [#allocation15], 384, 384, 24
    $region37: #{tpu_custom_call.1} parent=1 // pred_fallthru
      _
    // Predicated region
    $region38: #{tpu_custom_call.1} parent=1 // pred_check
      _
    $region39: #{tpu_custom_call.1} parent=1 // pred_check_branch
      %140 = sbr.rel (0) target = $region41
    $region40: #{tpu_custom_call.1} parent=1 // pred_region
      %s142 = ssub.s32 96, 96
      %143 = vsyncadd [#allocation18], %s142
      %s145 = sshll.u32 [#allocation17], 4
      %s146 = int_to_ptr.vmem [resolvable:$true] %s145
      %148 = dma.hbm_to_vmem [thread:$0]  %s9, 96, %s146, [#allocation18]
    $region41: #{tpu_custom_call.1} parent=1 // pred_fallthru
      _
    // Predicated region
    $region42: #{tpu_custom_call.1} parent=1 // pred_check
      _
    $region43: #{tpu_custom_call.1} parent=1 // pred_check_branch
      %150 = sbr.rel (0) target = $region45
    $region44: #{tpu_custom_call.1} parent=1 // pred_region
      %s152 = ssub.s32 96, 96
      %153 = vsyncadd [#allocation18], %s152
      %s155 = sshll.u32 [#allocation19], 4
      %s156 = int_to_ptr.vmem [resolvable:$true] %s155
      %158 = dma.hbm_to_vmem [thread:$0]  %s10, 96, %s156, [#allocation18]
    $region45: #{tpu_custom_call.1} parent=1 // pred_fallthru
      _
    // Predicated region
    $region46: #{tpu_custom_call.1} parent=1 // pred_check
      _
    $region47: #{tpu_custom_call.1} parent=1 // pred_check_branch
      %160 = sbr.rel (0) target = $region49
    $region48: #{tpu_custom_call.1} parent=1 // pred_region
      %s162 = ssub.s32 96, 96
      %163 = vsyncadd [#allocation21], %s162
      %s165 = sshll.u32 [#allocation20], 4
      %s166 = int_to_ptr.vmem [resolvable:$true] %s165
      %168 = dma.hbm_to_vmem [thread:$0]  %s11, 96, %s166, [#allocation21]
    $region49: #{tpu_custom_call.1} parent=1 // pred_fallthru
      _
    // Predicated region
    $region50: #{tpu_custom_call.1} parent=1 // pred_check
      _
    $region51: #{tpu_custom_call.1} parent=1 // pred_check_branch
      %170 = sbr.rel (0) target = $region53
    $region52: #{tpu_custom_call.1} parent=1 // pred_region
      %s172 = ssub.s32 12288, 12288
      %173 = vsyncadd [#allocation21], %s172
      %s174 = sshll.u32 [#allocation22], 4
      %s175 = int_to_ptr.vmem [resolvable:$true] %s174
      %180 = dma.hbm_to_vmem [thread:$0]  %s12, 12288, %s175, [#allocation21], 128, 128, 8
    $region53: #{tpu_custom_call.1} parent=1 // pred_fallthru
      _
    // Predicated region
    $region54: #{tpu_custom_call.1} parent=1 // pred_check
      _
    $region55: #{tpu_custom_call.1} parent=1 // pred_check_branch
      %182 = sbr.rel (0) target = $region57
    $region56: #{tpu_custom_call.1} parent=1 // pred_region
      %s184 = ssub.s32 32, 32
      %185 = vsyncadd [#allocation24], %s184
      %s187 = sshll.u32 [#allocation23], 4
      %s188 = int_to_ptr.vmem [resolvable:$true] %s187
      %190 = dma.hbm_to_vmem [thread:$0]  %s13, 32, %s188, [#allocation24]
    $region57: #{tpu_custom_call.1} parent=1 // pred_fallthru
      _
    // Predicated region
    $region58: #{tpu_custom_call.1} parent=1 // pred_check
      _
    $region59: #{tpu_custom_call.1} parent=1 // pred_check_branch
      %192 = sbr.rel (0) target = $region61
    $region60: #{tpu_custom_call.1} parent=1 // pred_region
      %s194 = ssub.s32 4096, 4096
      %195 = vsyncadd [#allocation24], %s194
      %s196 = sshll.u32 [#allocation25], 4
      %s197 = int_to_ptr.vmem [resolvable:$true] %s196
      %202 = dma.hbm_to_vmem [thread:$0]  %s14, 4096, %s197, [#allocation24], 128, 128, 8
    $region61: #{tpu_custom_call.1} parent=1 // pred_fallthru
      _
    // Predicated region
    $region62: #{tpu_custom_call.1} parent=1 // pred_check
      _
    $region63: #{tpu_custom_call.1} parent=1 // pred_check_branch
      %204 = sbr.rel (0) target = $region65
    $region64: #{tpu_custom_call.1} parent=1 // pred_region
      %s206 = ssub.s32 32, 32
      %207 = vsyncadd [#allocation27], %s206
      %s209 = sshll.u32 [#allocation26], 4
      %s210 = int_to_ptr.vmem [resolvable:$true] %s209
      %212 = dma.hbm_to_vmem [thread:$0]  %s15, 32, %s210, [#allocation27]
    $region65: #{tpu_custom_call.1} parent=1 // pred_fallthru
      _
    // Predicated region
    $region66: #{tpu_custom_call.1} parent=1 // pred_check
      _
    $region67: #{tpu_custom_call.1} parent=1 // pred_check_branch
      %214 = sbr.rel (0) target = $region69
    $region68: #{tpu_custom_call.1} parent=1 // pred_region
      _
    $region69: #{tpu_custom_call.1} parent=1 // pred_fallthru
      _
    // Predicated region
    $region70: #{tpu_custom_call.1} parent=1 // pred_check
      _
    $region71: #{tpu_custom_call.1} parent=1 // pred_check_branch
      %216 = sbr.rel (0) target = $region73
    $region72: #{tpu_custom_call.1} parent=1 // pred_region
      %s218 = ssub.s32 16, 16
      %219 = vsyncadd [#allocation27], %s218
      %s221 = sshll.u32 [#allocation28], 4
      %s222 = int_to_ptr.vmem [resolvable:$true] %s221
      %224 = dma.hbm_to_vmem [thread:$0]  %s17, 16, %s222, [#allocation27]
    $region73: #{tpu_custom_call.1} parent=1 // pred_fallthru
      _
    // Predicated region
    $region74: #{tpu_custom_call.1} parent=1 // pred_check
      _
    $region75: #{tpu_custom_call.1} parent=1 // pred_check_branch
      %226 = sbr.rel (0) target = $region77
    $region76: #{tpu_custom_call.1} parent=1 // pred_region
      _
    $region77: #{tpu_custom_call.1} parent=1 // pred_fallthru
      _
    // Predicated region
    $region78: #{tpu_custom_call.1} parent=1 // pred_check
      _
    $region79: #{tpu_custom_call.1} parent=1 // pred_check_branch
      %228 = sbr.rel (0) target = $region81
    $region80: #{tpu_custom_call.1} parent=1 // pred_region
      %s230 = ssub.s32 16, 16
      %231 = vsyncadd [#allocation30], %s230
      %s233 = sshll.u32 [#allocation29], 4
      %s234 = int_to_ptr.vmem [resolvable:$true] %s233
      %236 = dma.hbm_to_vmem [thread:$0]  %s19, 16, %s234, [#allocation30]
    $region81: #{tpu_custom_call.1} parent=1 // pred_fallthru
      _
    // Predicated region
    $region82: #{tpu_custom_call.1} parent=1 // pred_check
      _
    $region83: #{tpu_custom_call.1} parent=1 // pred_check_branch
      %238 = sbr.rel (0) target = $region85
    $region84: #{tpu_custom_call.1} parent=1 // pred_region
      _
    $region85: #{tpu_custom_call.1} parent=1 // pred_fallthru
      _
    // Predicated region
    $region86: #{tpu_custom_call.1} parent=1 // pred_check
      _
    $region87: #{tpu_custom_call.1} parent=1 // pred_check_branch
      %240 = sbr.rel (0) target = $region89
    $region88: #{tpu_custom_call.1} parent=1 // pred_region
      _
    $region89: #{tpu_custom_call.1} parent=1 // pred_fallthru
      _
    // Predicated region
    $region90: #{tpu_custom_call.1} parent=1 // pred_check
      _
    $region91: #{tpu_custom_call.1} parent=1 // pred_check_branch
      %242 = sbr.rel (0) target = $region93
    $region92: #{tpu_custom_call.1} parent=1 // pred_region
      %243 = dma.done [#allocation4], 1536
    $region93: #{tpu_custom_call.1} parent=1 // pred_fallthru
      _
    // Predicated region
    $region94: #{tpu_custom_call.1} parent=1 // pred_check
      _
    $region95: #{tpu_custom_call.1} parent=1 // pred_check_branch
      %245 = sbr.rel (0) target = $region97
    $region96: #{tpu_custom_call.1} parent=1 // pred_region
      %246 = dma.done [#allocation6], 192
    $region97: #{tpu_custom_call.1} parent=1 // pred_fallthru
      _
    // Predicated region
    $region98: #{tpu_custom_call.1} parent=1 // pred_check
      _
    $region99: #{tpu_custom_call.1} parent=1 // pred_check_branch
      %248 = sbr.rel (0) target = $region101
    $region100: #{tpu_custom_call.1} parent=1 // pred_region
      %249 = dma.done [#allocation6], 49152
    $region101: #{tpu_custom_call.1} parent=1 // pred_fallthru
      _
    // Predicated region
    $region102: #{tpu_custom_call.1} parent=1 // pred_check
      _
    $region103: #{tpu_custom_call.1} parent=1 // pred_check_branch
      %251 = sbr.rel (0) target = $region105
    $region104: #{tpu_custom_call.1} parent=1 // pred_region
      %252 = dma.done [#allocation9], 128
    $region105: #{tpu_custom_call.1} parent=1 // pred_fallthru
      _
    // Predicated region
    $region106: #{tpu_custom_call.1} parent=1 // pred_check
      _
    $region107: #{tpu_custom_call.1} parent=1 // pred_check_branch
      %254 = sbr.rel (0) target = $region109
    $region108: #{tpu_custom_call.1} parent=1 // pred_region
      %255 = dma.done [#allocation9], 49152
    $region109: #{tpu_custom_call.1} parent=1 // pred_fallthru
      _
    // Predicated region
    $region110: #{tpu_custom_call.1} parent=1 // pred_check
      _
    $region111: #{tpu_custom_call.1} parent=1 // pred_check_branch
      %257 = sbr.rel (0) target = $region113
    $region112: #{tpu_custom_call.1} parent=1 // pred_region
      %258 = dma.done [#allocation12], 128
    $region113: #{tpu_custom_call.1} parent=1 // pred_fallthru
      _
    // Predicated region
    $region114: #{tpu_custom_call.1} parent=1 // pred_check
      _
    $region115: #{tpu_custom_call.1} parent=1 // pred_check_branch
      %260 = sbr.rel (0) target = $region117
    $region116: #{tpu_custom_call.1} parent=1 // pred_region
      %261 = dma.done [#allocation12], 49152
    $region117: #{tpu_custom_call.1} parent=1 // pred_fallthru
      _
    // Predicated region
    $region118: #{tpu_custom_call.1} parent=1 // pred_check
      _
    $region119: #{tpu_custom_call.1} parent=1 // pred_check_branch
      %263 = sbr.rel (0) target = $region121
    $region120: #{tpu_custom_call.1} parent=1 // pred_region
      %264 = dma.done [#allocation15], 128
    $region121: #{tpu_custom_call.1} parent=1 // pred_fallthru
      _
    // Predicated region
    $region122: #{tpu_custom_call.1} parent=1 // pred_check
      _
    $region123: #{tpu_custom_call.1} parent=1 // pred_check_branch
      %266 = sbr.rel (0) target = $region125
    $region124: #{tpu_custom_call.1} parent=1 // pred_region
      %267 = dma.done [#allocation15], 49152
    $region125: #{tpu_custom_call.1} parent=1 // pred_fallthru
      _
    // Predicated region
    $region126: #{tpu_custom_call.1} parent=1 // pred_check
      _
    $region127: #{tpu_custom_call.1} parent=1 // pred_check_branch
      %269 = sbr.rel (0) target = $region129
    $region128: #{tpu_custom_call.1} parent=1 // pred_region
      %270 = dma.done [#allocation18], 96
    $region129: #{tpu_custom_call.1} parent=1 // pred_fallthru
      _
    // Predicated region
    $region130: #{tpu_custom_call.1} parent=1 // pred_check
      _
    $region131: #{tpu_custom_call.1} parent=1 // pred_check_branch
      %272 = sbr.rel (0) target = $region133
    $region132: #{tpu_custom_call.1} parent=1 // pred_region
      %273 = dma.done [#allocation18], 96
    $region133: #{tpu_custom_call.1} parent=1 // pred_fallthru
      _
    // Predicated region
    $region134: #{tpu_custom_call.1} parent=1 // pred_check
      _
    $region135: #{tpu_custom_call.1} parent=1 // pred_check_branch
      %275 = sbr.rel (0) target = $region137
    $region136: #{tpu_custom_call.1} parent=1 // pred_region
      %276 = dma.done [#allocation21], 96
    $region137: #{tpu_custom_call.1} parent=1 // pred_fallthru
      _
    // Predicated region
    $region138: #{tpu_custom_call.1} parent=1 // pred_check
      _
    $region139: #{tpu_custom_call.1} parent=1 // pred_check_branch
      %278 = sbr.rel (0) target = $region141
    $region140: #{tpu_custom_call.1} parent=1 // pred_region
      %279 = dma.done [#allocation21], 12288
    $region141: #{tpu_custom_call.1} parent=1 // pred_fallthru
      _
    // Predicated region
    $region142: #{tpu_custom_call.1} parent=1 // pred_check
      _
    $region143: #{tpu_custom_call.1} parent=1 // pred_check_branch
      %281 = sbr.rel (0) target = $region145
    $region144: #{tpu_custom_call.1} parent=1 // pred_region
      %282 = dma.done [#allocation24], 32
    $region145: #{tpu_custom_call.1} parent=1 // pred_fallthru
      _
    // Predicated region
    $region146: #{tpu_custom_call.1} parent=1 // pred_check
      _
    $region147: #{tpu_custom_call.1} parent=1 // pred_check_branch
      %284 = sbr.rel (0) target = $region149
    $region148: #{tpu_custom_call.1} parent=1 // pred_region
      %285 = dma.done [#allocation24], 4096
    $region149: #{tpu_custom_call.1} parent=1 // pred_fallthru
      _
    // Predicated region
    $region150: #{tpu_custom_call.1} parent=1 // pred_check
      _
    $region151: #{tpu_custom_call.1} parent=1 // pred_check_branch
      %287 = sbr.rel (0) target = $region153
    $region152: #{tpu_custom_call.1} parent=1 // pred_region
      %288 = dma.done [#allocation27], 32
    $region153: #{tpu_custom_call.1} parent=1 // pred_fallthru
      _
    // Predicated region
    $region154: #{tpu_custom_call.1} parent=1 // pred_check
      _
    $region155: #{tpu_custom_call.1} parent=1 // pred_check_branch
      %290 = sbr.rel (0) target = $region157
    $region156: #{tpu_custom_call.1} parent=1 // pred_region
      %291 = dma.done [#allocation27], 16
    $region157: #{tpu_custom_call.1} parent=1 // pred_fallthru
      _
    // Predicated region
    $region158: #{tpu_custom_call.1} parent=1 // pred_check
      _
    $region159: #{tpu_custom_call.1} parent=1 // pred_check_branch
      %293 = sbr.rel (0) target = $region161
    $region160: #{tpu_custom_call.1} parent=1 // pred_region
      %294 = dma.done [#allocation30], 16
    $region161: #{tpu_custom_call.1} parent=1 // pred_fallthru
      _
    %v296 = vld [vmem:[#allocation3] sm:$0xff]
    %v297 = vld [vmem:[#allocation3 + $0x8] sm:$0xff]
    %v298 = vld [vmem:[#allocation3 + $0x10] sm:$0xff]
    %v299 = vld [vmem:[#allocation3 + $0x18] sm:$0xff]
    %v300 = vld [vmem:[#allocation3 + $0x20] sm:$0xff]
    %v301 = vld [vmem:[#allocation3 + $0x28] sm:$0xff]
    %v302 = vld [vmem:[#allocation3 + $0x30] sm:$0xff]
    %v303 = vld [vmem:[#allocation3 + $0x38] sm:$0xff]
    %v304 = vld [vmem:[#allocation3 + $0x40] sm:$0xff]
    %v305 = vld [vmem:[#allocation3 + $0x48] sm:$0xff]
    %v306 = vld [vmem:[#allocation3 + $0x50] sm:$0xff]
    %v307 = vld [vmem:[#allocation3 + $0x58] sm:$0xff]
    %v308 = vld [vmem:[#allocation5] sm:$0xff]
    %v309 = vld [vmem:[#allocation5 + $0x8] sm:$0xf]
    %v310 = vpack.c.bf16 %v302, %v296
    %v311 = vpack.c.bf16 %v303, %v297
    %v312 = vpack.c.bf16 %v304, %v298
    %v313 = vpack.c.bf16 %v305, %v299
    %v314 = vpack.c.bf16 %v306, %v300
    %v315 = vpack.c.bf16 %v307, %v301
    %v318 = vcombine.high %v308, %v308
    %v320 = vunpack.c.l.s4 1983009808
    %v321 = vunpack.c.0.s8 %v320
    %v322 = vlaneseq
    %v323 = vshrl.u32 %v322, 7
    %v324 = vsub.s32 %v321, %v323
    %v325 = vrot.slane %v308, %v324
    %v327 = vunpack.c.l.s4 1983009808
    %v328 = vunpack.c.0.s8 %v327
    %v329 = vlaneseq
    %v330 = vshrl.u32 %v329, 7
    %v331 = vsub.s32 %v328, %v330
    %v332 = vrot.slane %v318, %v331
    %v333 = vcombine.high %v325, %v325
    %v334 = vcombine.high %v332, %v332
    %v336 = vunpack.c.l.s4 1983009808
    %v337 = vunpack.c.0.s8 %v336
    %v338 = vlaneseq
    %v339 = vshrl.u32 %v338, 7
    %v340 = vsub.s32 %v337, %v339
    %v341 = vrot.slane %v309, %v340
    %v342 = vcombine.high %v341, %v341
    %v349 = vpack.c.bf16 %v325, %v325
    %v350 = vpack.c.bf16 %v333, %v333
    %v351 = vpack.c.bf16 %v332, %v332
    %v352 = vpack.c.bf16 %v334, %v334
    %v353 = vpack.c.bf16 %v341, %v341
    %v354 = vpack.c.bf16 %v342, %v342
    %v355 = vld [vmem:[#allocation10] sm:$0xff]
    %v356 = vld [vmem:[#allocation10 + $0x8] sm:$0xff]
    %v357 = vld [vmem:[#allocation10 + $0x10] sm:$0xff]
    %v358 = vld [vmem:[#allocation10 + $0x18] sm:$0xff]
    %v359 = vld [vmem:[#allocation10 + $0x20] sm:$0xff]
    %v360 = vld [vmem:[#allocation10 + $0x28] sm:$0xff]
    %v361 = vld [vmem:[#allocation10 + $0x30] sm:$0xff]
    %v362 = vld [vmem:[#allocation10 + $0x38] sm:$0xff]
    %v363 = vld [vmem:[#allocation10 + $0x40] sm:$0xff]
    %v364 = vld [vmem:[#allocation10 + $0x48] sm:$0xff]
    %v365 = vld [vmem:[#allocation10 + $0x50] sm:$0xff]
    %v366 = vld [vmem:[#allocation10 + $0x58] sm:$0xff]
    %v367 = vld [vmem:[#allocation10 + $0x60] sm:$0xff]
    %v368 = vld [vmem:[#allocation10 + $0x68] sm:$0xff]
    %v369 = vld [vmem:[#allocation10 + $0x70] sm:$0xff]
    %v370 = vld [vmem:[#allocation10 + $0x78] sm:$0xff]
    %v371 = vld [vmem:[#allocation10 + $0x80] sm:$0xff]
    %v372 = vld [vmem:[#allocation10 + $0x88] sm:$0xff]
    %v373 = vld [vmem:[#allocation10 + $0x90] sm:$0xff]
    %v374 = vld [vmem:[#allocation10 + $0x98] sm:$0xff]
    %v375 = vld [vmem:[#allocation10 + $0xa0] sm:$0xff]
    %v376 = vld [vmem:[#allocation10 + $0xa8] sm:$0xff]
    %v377 = vld [vmem:[#allocation10 + $0xb0] sm:$0xff]
    %v378 = vld [vmem:[#allocation10 + $0xb8] sm:$0xff]
    %v379 = vld [vmem:[#allocation10 + $0xc0] sm:$0xff]
    %v380 = vld [vmem:[#allocation10 + $0xc8] sm:$0xff]
    %v381 = vld [vmem:[#allocation10 + $0xd0] sm:$0xff]
    %v382 = vld [vmem:[#allocation10 + $0xd8] sm:$0xff]
    %v383 = vld [vmem:[#allocation10 + $0xe0] sm:$0xff]
    %v384 = vld [vmem:[#allocation10 + $0xe8] sm:$0xff]
    %v385 = vld [vmem:[#allocation10 + $0xf0] sm:$0xff]
    %v386 = vld [vmem:[#allocation10 + $0xf8] sm:$0xff]
    %v387 = vld [vmem:[#allocation10 + $0x100] sm:$0xff]
    %v388 = vld [vmem:[#allocation10 + $0x108] sm:$0xff]
    %v389 = vld [vmem:[#allocation10 + $0x110] sm:$0xff]
    %v390 = vld [vmem:[#allocation10 + $0x118] sm:$0xff]
    %v391 = vld [vmem:[#allocation10 + $0x120] sm:$0xff]
    %v392 = vld [vmem:[#allocation10 + $0x128] sm:$0xff]
    %v393 = vld [vmem:[#allocation10 + $0x130] sm:$0xff]
    %v394 = vld [vmem:[#allocation10 + $0x138] sm:$0xff]
    %v395 = vld [vmem:[#allocation10 + $0x140] sm:$0xff]
    %v396 = vld [vmem:[#allocation10 + $0x148] sm:$0xff]
    %v397 = vld [vmem:[#allocation10 + $0x150] sm:$0xff]
    %v398 = vld [vmem:[#allocation10 + $0x158] sm:$0xff]
    %v399 = vld [vmem:[#allocation10 + $0x160] sm:$0xff]
    %v400 = vld [vmem:[#allocation10 + $0x168] sm:$0xff]
    %v401 = vld [vmem:[#allocation10 + $0x170] sm:$0xff]
    %v402 = vld [vmem:[#allocation10 + $0x178] sm:$0xff]
    %v403 = vld [vmem:[#allocation10 + $0x180] sm:$0xff]
    %v404 = vld [vmem:[#allocation10 + $0x188] sm:$0xff]
    %v405 = vld [vmem:[#allocation10 + $0x190] sm:$0xff]
    %v406 = vld [vmem:[#allocation10 + $0x198] sm:$0xff]
    %v407 = vld [vmem:[#allocation10 + $0x1a0] sm:$0xff]
    %v408 = vld [vmem:[#allocation10 + $0x1a8] sm:$0xff]
    %v409 = vld [vmem:[#allocation10 + $0x1b0] sm:$0xff]
    %v410 = vld [vmem:[#allocation10 + $0x1b8] sm:$0xff]
    %v411 = vld [vmem:[#allocation10 + $0x1c0] sm:$0xff]
    %v412 = vld [vmem:[#allocation10 + $0x1c8] sm:$0xff]
    %v413 = vld [vmem:[#allocation10 + $0x1d0] sm:$0xff]
    %v414 = vld [vmem:[#allocation10 + $0x1d8] sm:$0xff]
    %v415 = vld [vmem:[#allocation10 + $0x1e0] sm:$0xff]
    %v416 = vld [vmem:[#allocation10 + $0x1e8] sm:$0xff]
    %v417 = vld [vmem:[#allocation10 + $0x1f0] sm:$0xff]
    %v418 = vld [vmem:[#allocation10 + $0x1f8] sm:$0xff]
    %v419 = vld [vmem:[#allocation10 + $0x200] sm:$0xff]
    %v420 = vld [vmem:[#allocation10 + $0x208] sm:$0xff]
    %v421 = vld [vmem:[#allocation10 + $0x210] sm:$0xff]
    %v422 = vld [vmem:[#allocation10 + $0x218] sm:$0xff]
    %v423 = vld [vmem:[#allocation10 + $0x220] sm:$0xff]
    %v424 = vld [vmem:[#allocation10 + $0x228] sm:$0xff]
    %v425 = vld [vmem:[#allocation10 + $0x230] sm:$0xff]
    %v426 = vld [vmem:[#allocation10 + $0x238] sm:$0xff]
    %v427 = vld [vmem:[#allocation10 + $0x240] sm:$0xff]
    %v428 = vld [vmem:[#allocation10 + $0x248] sm:$0xff]
    %v429 = vld [vmem:[#allocation10 + $0x250] sm:$0xff]
    %v430 = vld [vmem:[#allocation10 + $0x258] sm:$0xff]
    %v431 = vld [vmem:[#allocation10 + $0x260] sm:$0xff]
    %v432 = vld [vmem:[#allocation10 + $0x268] sm:$0xff]
    %v433 = vld [vmem:[#allocation10 + $0x270] sm:$0xff]
    %v434 = vld [vmem:[#allocation10 + $0x278] sm:$0xff]
    %v435 = vld [vmem:[#allocation10 + $0x280] sm:$0xff]
    %v436 = vld [vmem:[#allocation10 + $0x288] sm:$0xff]
    %v437 = vld [vmem:[#allocation10 + $0x290] sm:$0xff]
    %v438 = vld [vmem:[#allocation10 + $0x298] sm:$0xff]
    %v439 = vld [vmem:[#allocation10 + $0x2a0] sm:$0xff]
    %v440 = vld [vmem:[#allocation10 + $0x2a8] sm:$0xff]
    %v441 = vld [vmem:[#allocation10 + $0x2b0] sm:$0xff]
    %v442 = vld [vmem:[#allocation10 + $0x2b8] sm:$0xff]
    %v443 = vld [vmem:[#allocation10 + $0x2c0] sm:$0xff]
    %v444 = vld [vmem:[#allocation10 + $0x2c8] sm:$0xff]
    %v445 = vld [vmem:[#allocation10 + $0x2d0] sm:$0xff]
    %v446 = vld [vmem:[#allocation10 + $0x2d8] sm:$0xff]
    %v447 = vld [vmem:[#allocation10 + $0x2e0] sm:$0xff]
    %v448 = vld [vmem:[#allocation10 + $0x2e8] sm:$0xff]
    %v449 = vld [vmem:[#allocation10 + $0x2f0] sm:$0xff]
    %v450 = vld [vmem:[#allocation10 + $0x2f8] sm:$0xff]
    %v451 = vld [vmem:[#allocation10 + $0x300] sm:$0xff]
    %v452 = vld [vmem:[#allocation10 + $0x308] sm:$0xff]
    %v453 = vld [vmem:[#allocation10 + $0x310] sm:$0xff]
    %v454 = vld [vmem:[#allocation10 + $0x318] sm:$0xff]
    %v455 = vld [vmem:[#allocation10 + $0x320] sm:$0xff]
    %v456 = vld [vmem:[#allocation10 + $0x328] sm:$0xff]
    %v457 = vld [vmem:[#allocation10 + $0x330] sm:$0xff]
    %v458 = vld [vmem:[#allocation10 + $0x338] sm:$0xff]
    %v459 = vld [vmem:[#allocation10 + $0x340] sm:$0xff]
    %v460 = vld [vmem:[#allocation10 + $0x348] sm:$0xff]
    %v461 = vld [vmem:[#allocation10 + $0x350] sm:$0xff]
    %v462 = vld [vmem:[#allocation10 + $0x358] sm:$0xff]
    %v463 = vld [vmem:[#allocation10 + $0x360] sm:$0xff]
    %v464 = vld [vmem:[#allocation10 + $0x368] sm:$0xff]
    %v465 = vld [vmem:[#allocation10 + $0x370] sm:$0xff]
    %v466 = vld [vmem:[#allocation10 + $0x378] sm:$0xff]
    %v467 = vld [vmem:[#allocation10 + $0x380] sm:$0xff]
    %v468 = vld [vmem:[#allocation10 + $0x388] sm:$0xff]
    %v469 = vld [vmem:[#allocation10 + $0x390] sm:$0xff]
    %v470 = vld [vmem:[#allocation10 + $0x398] sm:$0xff]
    %v471 = vld [vmem:[#allocation10 + $0x3a0] sm:$0xff]
    %v472 = vld [vmem:[#allocation10 + $0x3a8] sm:$0xff]
    %v473 = vld [vmem:[#allocation10 + $0x3b0] sm:$0xff]
    %v474 = vld [vmem:[#allocation10 + $0x3b8] sm:$0xff]
    %v475 = vld [vmem:[#allocation10 + $0x3c0] sm:$0xff]
    %v476 = vld [vmem:[#allocation10 + $0x3c8] sm:$0xff]
    %v477 = vld [vmem:[#allocation10 + $0x3d0] sm:$0xff]
    %v478 = vld [vmem:[#allocation10 + $0x3d8] sm:$0xff]
    %v479 = vld [vmem:[#allocation10 + $0x3e0] sm:$0xff]
    %v480 = vld [vmem:[#allocation10 + $0x3e8] sm:$0xff]
    %v481 = vld [vmem:[#allocation10 + $0x3f0] sm:$0xff]
    %v482 = vld [vmem:[#allocation10 + $0x3f8] sm:$0xff]
    %v483 = vld [vmem:[#allocation10 + $0x400] sm:$0xff]
    %v484 = vld [vmem:[#allocation10 + $0x408] sm:$0xff]
    %v485 = vld [vmem:[#allocation10 + $0x410] sm:$0xff]
    %v486 = vld [vmem:[#allocation10 + $0x418] sm:$0xff]
    %v487 = vld [vmem:[#allocation10 + $0x420] sm:$0xff]
    %v488 = vld [vmem:[#allocation10 + $0x428] sm:$0xff]
    %v489 = vld [vmem:[#allocation10 + $0x430] sm:$0xff]
    %v490 = vld [vmem:[#allocation10 + $0x438] sm:$0xff]
    %v491 = vld [vmem:[#allocation10 + $0x440] sm:$0xff]
    %v492 = vld [vmem:[#allocation10 + $0x448] sm:$0xff]
    %v493 = vld [vmem:[#allocation10 + $0x450] sm:$0xff]
    %v494 = vld [vmem:[#allocation10 + $0x458] sm:$0xff]
    %v495 = vld [vmem:[#allocation10 + $0x460] sm:$0xff]
    %v496 = vld [vmem:[#allocation10 + $0x468] sm:$0xff]
    %v497 = vld [vmem:[#allocation10 + $0x470] sm:$0xff]
    %v498 = vld [vmem:[#allocation10 + $0x478] sm:$0xff]
    %v499 = vld [vmem:[#allocation10 + $0x480] sm:$0xff]
    %v500 = vld [vmem:[#allocation10 + $0x488] sm:$0xff]
    %v501 = vld [vmem:[#allocation10 + $0x490] sm:$0xff]
    %v502 = vld [vmem:[#allocation10 + $0x498] sm:$0xff]
    %v503 = vld [vmem:[#allocation10 + $0x4a0] sm:$0xff]
    %v504 = vld [vmem:[#allocation10 + $0x4a8] sm:$0xff]
    %v505 = vld [vmem:[#allocation10 + $0x4b0] sm:$0xff]
    %v506 = vld [vmem:[#allocation10 + $0x4b8] sm:$0xff]
    %v507 = vld [vmem:[#allocation10 + $0x4c0] sm:$0xff]
    %v508 = vld [vmem:[#allocation10 + $0x4c8] sm:$0xff]
    %v509 = vld [vmem:[#allocation10 + $0x4d0] sm:$0xff]
    %v510 = vld [vmem:[#allocation10 + $0x4d8] sm:$0xff]
    %v511 = vld [vmem:[#allocation10 + $0x4e0] sm:$0xff]
    %v512 = vld [vmem:[#allocation10 + $0x4e8] sm:$0xff]
    %v513 = vld [vmem:[#allocation10 + $0x4f0] sm:$0xff]
    %v514 = vld [vmem:[#allocation10 + $0x4f8] sm:$0xff]
    %v515 = vld [vmem:[#allocation10 + $0x500] sm:$0xff]
    %v516 = vld [vmem:[#allocation10 + $0x508] sm:$0xff]
    %v517 = vld [vmem:[#allocation10 + $0x510] sm:$0xff]
    %v518 = vld [vmem:[#allocation10 + $0x518] sm:$0xff]
    %v519 = vld [vmem:[#allocation10 + $0x520] sm:$0xff]
    %v520 = vld [vmem:[#allocation10 + $0x528] sm:$0xff]
    %v521 = vld [vmem:[#allocation10 + $0x530] sm:$0xff]
    %v522 = vld [vmem:[#allocation10 + $0x538] sm:$0xff]
    %v523 = vld [vmem:[#allocation10 + $0x540] sm:$0xff]
    %v524 = vld [vmem:[#allocation10 + $0x548] sm:$0xff]
    %v525 = vld [vmem:[#allocation10 + $0x550] sm:$0xff]
    %v526 = vld [vmem:[#allocation10 + $0x558] sm:$0xff]
    %v527 = vld [vmem:[#allocation10 + $0x560] sm:$0xff]
    %v528 = vld [vmem:[#allocation10 + $0x568] sm:$0xff]
    %v529 = vld [vmem:[#allocation10 + $0x570] sm:$0xff]
    %v530 = vld [vmem:[#allocation10 + $0x578] sm:$0xff]
    %v531 = vld [vmem:[#allocation10 + $0x580] sm:$0xff]
    %v532 = vld [vmem:[#allocation10 + $0x588] sm:$0xff]
    %v533 = vld [vmem:[#allocation10 + $0x590] sm:$0xff]
    %v534 = vld [vmem:[#allocation10 + $0x598] sm:$0xff]
    %v535 = vld [vmem:[#allocation10 + $0x5a0] sm:$0xff]
    %v536 = vld [vmem:[#allocation10 + $0x5a8] sm:$0xff]
    %v537 = vld [vmem:[#allocation10 + $0x5b0] sm:$0xff]
    %v538 = vld [vmem:[#allocation10 + $0x5b8] sm:$0xff]
    %v539 = vld [vmem:[#allocation10 + $0x5c0] sm:$0xff]
    %v540 = vld [vmem:[#allocation10 + $0x5c8] sm:$0xff]
    %v541 = vld [vmem:[#allocation10 + $0x5d0] sm:$0xff]
    %v542 = vld [vmem:[#allocation10 + $0x5d8] sm:$0xff]
    %v543 = vld [vmem:[#allocation10 + $0x5e0] sm:$0xff]
    %v544 = vld [vmem:[#allocation10 + $0x5e8] sm:$0xff]
    %v545 = vld [vmem:[#allocation10 + $0x5f0] sm:$0xff]
    %v546 = vld [vmem:[#allocation10 + $0x5f8] sm:$0xff]
    %v547 = vld [vmem:[#allocation10 + $0x600] sm:$0xff]
    %v548 = vld [vmem:[#allocation10 + $0x608] sm:$0xff]
    %v549 = vld [vmem:[#allocation10 + $0x610] sm:$0xff]
    %v550 = vld [vmem:[#allocation10 + $0x618] sm:$0xff]
    %v551 = vld [vmem:[#allocation10 + $0x620] sm:$0xff]
    %v552 = vld [vmem:[#allocation10 + $0x628] sm:$0xff]
    %v553 = vld [vmem:[#allocation10 + $0x630] sm:$0xff]
    %v554 = vld [vmem:[#allocation10 + $0x638] sm:$0xff]
    %v555 = vld [vmem:[#allocation10 + $0x640] sm:$0xff]
    %v556 = vld [vmem:[#allocation10 + $0x648] sm:$0xff]
    %v557 = vld [vmem:[#allocation10 + $0x650] sm:$0xff]
    %v558 = vld [vmem:[#allocation10 + $0x658] sm:$0xff]
    %v559 = vld [vmem:[#allocation10 + $0x660] sm:$0xff]
    %v560 = vld [vmem:[#allocation10 + $0x668] sm:$0xff]
    %v561 = vld [vmem:[#allocation10 + $0x670] sm:$0xff]
    %v562 = vld [vmem:[#allocation10 + $0x678] sm:$0xff]
    %v563 = vld [vmem:[#allocation10 + $0x680] sm:$0xff]
    %v564 = vld [vmem:[#allocation10 + $0x688] sm:$0xff]
    %v565 = vld [vmem:[#allocation10 + $0x690] sm:$0xff]
    %v566 = vld [vmem:[#allocation10 + $0x698] sm:$0xff]
    %v567 = vld [vmem:[#allocation10 + $0x6a0] sm:$0xff]
    %v568 = vld [vmem:[#allocation10 + $0x6a8] sm:$0xff]
    %v569 = vld [vmem:[#allocation10 + $0x6b0] sm:$0xff]
    %v570 = vld [vmem:[#allocation10 + $0x6b8] sm:$0xff]
    %v571 = vld [vmem:[#allocation10 + $0x6c0] sm:$0xff]
    %v572 = vld [vmem:[#allocation10 + $0x6c8] sm:$0xff]
    %v573 = vld [vmem:[#allocation10 + $0x6d0] sm:$0xff]
    %v574 = vld [vmem:[#allocation10 + $0x6d8] sm:$0xff]
    %v575 = vld [vmem:[#allocation10 + $0x6e0] sm:$0xff]
    %v576 = vld [vmem:[#allocation10 + $0x6e8] sm:$0xff]
    %v577 = vld [vmem:[#allocation10 + $0x6f0] sm:$0xff]
    %v578 = vld [vmem:[#allocation10 + $0x6f8] sm:$0xff]
    %v579 = vld [vmem:[#allocation10 + $0x700] sm:$0xff]
    %v580 = vld [vmem:[#allocation10 + $0x708] sm:$0xff]
    %v581 = vld [vmem:[#allocation10 + $0x710] sm:$0xff]
    %v582 = vld [vmem:[#allocation10 + $0x718] sm:$0xff]
    %v583 = vld [vmem:[#allocation10 + $0x720] sm:$0xff]
    %v584 = vld [vmem:[#allocation10 + $0x728] sm:$0xff]
    %v585 = vld [vmem:[#allocation10 + $0x730] sm:$0xff]
    %v586 = vld [vmem:[#allocation10 + $0x738] sm:$0xff]
    %v587 = vld [vmem:[#allocation10 + $0x740] sm:$0xff]
    %v588 = vld [vmem:[#allocation10 + $0x748] sm:$0xff]
    %v589 = vld [vmem:[#allocation10 + $0x750] sm:$0xff]
    %v590 = vld [vmem:[#allocation10 + $0x758] sm:$0xff]
    %v591 = vld [vmem:[#allocation10 + $0x760] sm:$0xff]
    %v592 = vld [vmem:[#allocation10 + $0x768] sm:$0xff]
    %v593 = vld [vmem:[#allocation10 + $0x770] sm:$0xff]
    %v594 = vld [vmem:[#allocation10 + $0x778] sm:$0xff]
    %v595 = vld [vmem:[#allocation10 + $0x780] sm:$0xff]
    %v596 = vld [vmem:[#allocation10 + $0x788] sm:$0xff]
    %v597 = vld [vmem:[#allocation10 + $0x790] sm:$0xff]
    %v598 = vld [vmem:[#allocation10 + $0x798] sm:$0xff]
    %v599 = vld [vmem:[#allocation10 + $0x7a0] sm:$0xff]
    %v600 = vld [vmem:[#allocation10 + $0x7a8] sm:$0xff]
    %v601 = vld [vmem:[#allocation10 + $0x7b0] sm:$0xff]
    %v602 = vld [vmem:[#allocation10 + $0x7b8] sm:$0xff]
    %v603 = vld [vmem:[#allocation10 + $0x7c0] sm:$0xff]
    %v604 = vld [vmem:[#allocation10 + $0x7c8] sm:$0xff]
    %v605 = vld [vmem:[#allocation10 + $0x7d0] sm:$0xff]
    %v606 = vld [vmem:[#allocation10 + $0x7d8] sm:$0xff]
    %v607 = vld [vmem:[#allocation10 + $0x7e0] sm:$0xff]
    %v608 = vld [vmem:[#allocation10 + $0x7e8] sm:$0xff]
    %v609 = vld [vmem:[#allocation10 + $0x7f0] sm:$0xff]
    %v610 = vld [vmem:[#allocation10 + $0x7f8] sm:$0xff]
    %v611 = vld [vmem:[#allocation10 + $0x800] sm:$0xff]
    %v612 = vld [vmem:[#allocation10 + $0x808] sm:$0xff]
    %v613 = vld [vmem:[#allocation10 + $0x810] sm:$0xff]
    %v614 = vld [vmem:[#allocation10 + $0x818] sm:$0xff]
    %v615 = vld [vmem:[#allocation10 + $0x820] sm:$0xff]
    %v616 = vld [vmem:[#allocation10 + $0x828] sm:$0xff]
    %v617 = vld [vmem:[#allocation10 + $0x830] sm:$0xff]
    %v618 = vld [vmem:[#allocation10 + $0x838] sm:$0xff]
    %v619 = vld [vmem:[#allocation10 + $0x840] sm:$0xff]
    %v620 = vld [vmem:[#allocation10 + $0x848] sm:$0xff]
    %v621 = vld [vmem:[#allocation10 + $0x850] sm:$0xff]
    %v622 = vld [vmem:[#allocation10 + $0x858] sm:$0xff]
    %v623 = vld [vmem:[#allocation10 + $0x860] sm:$0xff]
    %v624 = vld [vmem:[#allocation10 + $0x868] sm:$0xff]
    %v625 = vld [vmem:[#allocation10 + $0x870] sm:$0xff]
    %v626 = vld [vmem:[#allocation10 + $0x878] sm:$0xff]
    %v627 = vld [vmem:[#allocation10 + $0x880] sm:$0xff]
    %v628 = vld [vmem:[#allocation10 + $0x888] sm:$0xff]
    %v629 = vld [vmem:[#allocation10 + $0x890] sm:$0xff]
    %v630 = vld [vmem:[#allocation10 + $0x898] sm:$0xff]
    %v631 = vld [vmem:[#allocation10 + $0x8a0] sm:$0xff]
    %v632 = vld [vmem:[#allocation10 + $0x8a8] sm:$0xff]
    %v633 = vld [vmem:[#allocation10 + $0x8b0] sm:$0xff]
    %v634 = vld [vmem:[#allocation10 + $0x8b8] sm:$0xff]
    %v635 = vld [vmem:[#allocation10 + $0x8c0] sm:$0xff]
    %v636 = vld [vmem:[#allocation10 + $0x8c8] sm:$0xff]
    %v637 = vld [vmem:[#allocation10 + $0x8d0] sm:$0xff]
    %v638 = vld [vmem:[#allocation10 + $0x8d8] sm:$0xff]
    %v639 = vld [vmem:[#allocation10 + $0x8e0] sm:$0xff]
    %v640 = vld [vmem:[#allocation10 + $0x8e8] sm:$0xff]
    %v641 = vld [vmem:[#allocation10 + $0x8f0] sm:$0xff]
    %v642 = vld [vmem:[#allocation10 + $0x8f8] sm:$0xff]
    %v643 = vld [vmem:[#allocation10 + $0x900] sm:$0xff]
    %v644 = vld [vmem:[#allocation10 + $0x908] sm:$0xff]
    %v645 = vld [vmem:[#allocation10 + $0x910] sm:$0xff]
    %v646 = vld [vmem:[#allocation10 + $0x918] sm:$0xff]
    %v647 = vld [vmem:[#allocation10 + $0x920] sm:$0xff]
    %v648 = vld [vmem:[#allocation10 + $0x928] sm:$0xff]
    %v649 = vld [vmem:[#allocation10 + $0x930] sm:$0xff]
    %v650 = vld [vmem:[#allocation10 + $0x938] sm:$0xff]
    %v651 = vld [vmem:[#allocation10 + $0x940] sm:$0xff]
    %v652 = vld [vmem:[#allocation10 + $0x948] sm:$0xff]
    %v653 = vld [vmem:[#allocation10 + $0x950] sm:$0xff]
    %v654 = vld [vmem:[#allocation10 + $0x958] sm:$0xff]
    %v655 = vld [vmem:[#allocation10 + $0x960] sm:$0xff]
    %v656 = vld [vmem:[#allocation10 + $0x968] sm:$0xff]
    %v657 = vld [vmem:[#allocation10 + $0x970] sm:$0xff]
    %v658 = vld [vmem:[#allocation10 + $0x978] sm:$0xff]
    %v659 = vld [vmem:[#allocation10 + $0x980] sm:$0xff]
    %v660 = vld [vmem:[#allocation10 + $0x988] sm:$0xff]
    %v661 = vld [vmem:[#allocation10 + $0x990] sm:$0xff]
    %v662 = vld [vmem:[#allocation10 + $0x998] sm:$0xff]
    %v663 = vld [vmem:[#allocation10 + $0x9a0] sm:$0xff]
    %v664 = vld [vmem:[#allocation10 + $0x9a8] sm:$0xff]
    %v665 = vld [vmem:[#allocation10 + $0x9b0] sm:$0xff]
    %v666 = vld [vmem:[#allocation10 + $0x9b8] sm:$0xff]
    %v667 = vld [vmem:[#allocation10 + $0x9c0] sm:$0xff]
    %v668 = vld [vmem:[#allocation10 + $0x9c8] sm:$0xff]
    %v669 = vld [vmem:[#allocation10 + $0x9d0] sm:$0xff]
    %v670 = vld [vmem:[#allocation10 + $0x9d8] sm:$0xff]
    %v671 = vld [vmem:[#allocation10 + $0x9e0] sm:$0xff]
    %v672 = vld [vmem:[#allocation10 + $0x9e8] sm:$0xff]
    %v673 = vld [vmem:[#allocation10 + $0x9f0] sm:$0xff]
    %v674 = vld [vmem:[#allocation10 + $0x9f8] sm:$0xff]
    %v675 = vld [vmem:[#allocation10 + $0xa00] sm:$0xff]
    %v676 = vld [vmem:[#allocation10 + $0xa08] sm:$0xff]
    %v677 = vld [vmem:[#allocation10 + $0xa10] sm:$0xff]
    %v678 = vld [vmem:[#allocation10 + $0xa18] sm:$0xff]
    %v679 = vld [vmem:[#allocation10 + $0xa20] sm:$0xff]
    %v680 = vld [vmem:[#allocation10 + $0xa28] sm:$0xff]
    %v681 = vld [vmem:[#allocation10 + $0xa30] sm:$0xff]
    %v682 = vld [vmem:[#allocation10 + $0xa38] sm:$0xff]
    %v683 = vld [vmem:[#allocation10 + $0xa40] sm:$0xff]
    %v684 = vld [vmem:[#allocation10 + $0xa48] sm:$0xff]
    %v685 = vld [vmem:[#allocation10 + $0xa50] sm:$0xff]
    %v686 = vld [vmem:[#allocation10 + $0xa58] sm:$0xff]
    %v687 = vld [vmem:[#allocation10 + $0xa60] sm:$0xff]
    %v688 = vld [vmem:[#allocation10 + $0xa68] sm:$0xff]
    %v689 = vld [vmem:[#allocation10 + $0xa70] sm:$0xff]
    %v690 = vld [vmem:[#allocation10 + $0xa78] sm:$0xff]
    %v691 = vld [vmem:[#allocation10 + $0xa80] sm:$0xff]
    %v692 = vld [vmem:[#allocation10 + $0xa88] sm:$0xff]
    %v693 = vld [vmem:[#allocation10 + $0xa90] sm:$0xff]
    %v694 = vld [vmem:[#allocation10 + $0xa98] sm:$0xff]
    %v695 = vld [vmem:[#allocation10 + $0xaa0] sm:$0xff]
    %v696 = vld [vmem:[#allocation10 + $0xaa8] sm:$0xff]
    %v697 = vld [vmem:[#allocation10 + $0xab0] sm:$0xff]
    %v698 = vld [vmem:[#allocation10 + $0xab8] sm:$0xff]
    %v699 = vld [vmem:[#allocation10 + $0xac0] sm:$0xff]
    %v700 = vld [vmem:[#allocation10 + $0xac8] sm:$0xff]
    %v701 = vld [vmem:[#allocation10 + $0xad0] sm:$0xff]
    %v702 = vld [vmem:[#allocation10 + $0xad8] sm:$0xff]
    %v703 = vld [vmem:[#allocation10 + $0xae0] sm:$0xff]
    %v704 = vld [vmem:[#allocation10 + $0xae8] sm:$0xff]
    %v705 = vld [vmem:[#allocation10 + $0xaf0] sm:$0xff]
    %v706 = vld [vmem:[#allocation10 + $0xaf8] sm:$0xff]
    %v707 = vld [vmem:[#allocation10 + $0xb00] sm:$0xff]
    %v708 = vld [vmem:[#allocation10 + $0xb08] sm:$0xff]
    %v709 = vld [vmem:[#allocation10 + $0xb10] sm:$0xff]
    %v710 = vld [vmem:[#allocation10 + $0xb18] sm:$0xff]
    %v711 = vld [vmem:[#allocation10 + $0xb20] sm:$0xff]
    %v712 = vld [vmem:[#allocation10 + $0xb28] sm:$0xff]
    %v713 = vld [vmem:[#allocation10 + $0xb30] sm:$0xff]
    %v714 = vld [vmem:[#allocation10 + $0xb38] sm:$0xff]
    %v715 = vld [vmem:[#allocation10 + $0xb40] sm:$0xff]
    %v716 = vld [vmem:[#allocation10 + $0xb48] sm:$0xff]
    %v717 = vld [vmem:[#allocation10 + $0xb50] sm:$0xff]
    %v718 = vld [vmem:[#allocation10 + $0xb58] sm:$0xff]
    %v719 = vld [vmem:[#allocation10 + $0xb60] sm:$0xff]
    %v720 = vld [vmem:[#allocation10 + $0xb68] sm:$0xff]
    %v721 = vld [vmem:[#allocation10 + $0xb70] sm:$0xff]
    %v722 = vld [vmem:[#allocation10 + $0xb78] sm:$0xff]
    %v723 = vld [vmem:[#allocation10 + $0xb80] sm:$0xff]
    %v724 = vld [vmem:[#allocation10 + $0xb88] sm:$0xff]
    %v725 = vld [vmem:[#allocation10 + $0xb90] sm:$0xff]
    %v726 = vld [vmem:[#allocation10 + $0xb98] sm:$0xff]
    %v727 = vld [vmem:[#allocation10 + $0xba0] sm:$0xff]
    %v728 = vld [vmem:[#allocation10 + $0xba8] sm:$0xff]
    %v729 = vld [vmem:[#allocation10 + $0xbb0] sm:$0xff]
    %v730 = vld [vmem:[#allocation10 + $0xbb8] sm:$0xff]
    %v731 = vld [vmem:[#allocation10 + $0xbc0] sm:$0xff]
    %v732 = vld [vmem:[#allocation10 + $0xbc8] sm:$0xff]
    %v733 = vld [vmem:[#allocation10 + $0xbd0] sm:$0xff]
    %v734 = vld [vmem:[#allocation10 + $0xbd8] sm:$0xff]
    %v735 = vld [vmem:[#allocation10 + $0xbe0] sm:$0xff]
    %v736 = vld [vmem:[#allocation10 + $0xbe8] sm:$0xff]
    %v737 = vld [vmem:[#allocation10 + $0xbf0] sm:$0xff]
    %v738 = vld [vmem:[#allocation10 + $0xbf8] sm:$0xff]
    %v739 = vld [vmem:[#allocation11] sm:$0xff]
    %v741 = vlaneseq
    %v742 = vshrl.u32 %v741, 7
    %v743 = vsub.s32 0, %v742
    %v744 = vrot.slane %v739, %v743
    %v745 = vlaneseq
    %v746 = vshrl.u32 %v745, 7
    %v747 = vsub.s32 1, %v746
    %v748 = vrot.slane %v739, %v747
    %v749 = vlaneseq
    %v750 = vshrl.u32 %v749, 7
    %v751 = vsub.s32 2, %v750
    %v752 = vrot.slane %v739, %v751
    %v753 = vlaneseq
    %v754 = vshrl.u32 %v753, 7
    %v755 = vsub.s32 3, %v754
    %v756 = vrot.slane %v739, %v755
    %v757 = vlaneseq
    %v758 = vshrl.u32 %v757, 7
    %v759 = vsub.s32 4, %v758
    %v760 = vrot.slane %v739, %v759
    %v761 = vlaneseq
    %v762 = vshrl.u32 %v761, 7
    %v763 = vsub.s32 5, %v762
    %v764 = vrot.slane %v739, %v763
    %v765 = vlaneseq
    %v766 = vshrl.u32 %v765, 7
    %v767 = vsub.s32 6, %v766
    %v768 = vrot.slane %v739, %v767
    %v769 = vlaneseq
    %v770 = vshrl.u32 %v769, 7
    %v771 = vsub.s32 7, %v770
    %v772 = vrot.slane %v739, %v771
    %v1165 = vunpack.c.l.b16 %v355
    %v1166 = vunpack.c.h.b16 %v355
    %v1167 = vunpack.c.l.b16 %v356
    %v1168 = vunpack.c.h.b16 %v356
    %v1169 = vunpack.c.l.b16 %v357
    %v1170 = vunpack.c.h.b16 %v357
    %v1171 = vunpack.c.l.b16 %v358
    %v1172 = vunpack.c.h.b16 %v358
    %v1173 = vunpack.c.l.b16 %v359
    %v1174 = vunpack.c.h.b16 %v359
    %v1175 = vunpack.c.l.b16 %v360
    %v1176 = vunpack.c.h.b16 %v360
    %v1177 = vunpack.c.l.b16 %v361
    %v1178 = vunpack.c.h.b16 %v361
    %v1179 = vunpack.c.l.b16 %v362
    %v1180 = vunpack.c.h.b16 %v362
    %v1181 = vunpack.c.l.b16 %v363
    %v1182 = vunpack.c.h.b16 %v363
    %v1183 = vunpack.c.l.b16 %v364
    %v1184 = vunpack.c.h.b16 %v364
    %v1185 = vunpack.c.l.b16 %v365
    %v1186 = vunpack.c.h.b16 %v365
    %v1187 = vunpack.c.l.b16 %v366
    %v1188 = vunpack.c.h.b16 %v366
    %v1189 = vunpack.c.l.b16 %v367
    %v1190 = vunpack.c.h.b16 %v367
    %v1191 = vunpack.c.l.b16 %v368
    %v1192 = vunpack.c.h.b16 %v368
    %v1193 = vunpack.c.l.b16 %v369
    %v1194 = vunpack.c.h.b16 %v369
    %v1195 = vunpack.c.l.b16 %v370
    %v1196 = vunpack.c.h.b16 %v370
    %v1197 = vunpack.c.l.b16 %v371
    %v1198 = vunpack.c.h.b16 %v371
    %v1199 = vunpack.c.l.b16 %v372
    %v1200 = vunpack.c.h.b16 %v372
    %v1201 = vunpack.c.l.b16 %v373
    %v1202 = vunpack.c.h.b16 %v373
    %v1203 = vunpack.c.l.b16 %v374
    %v1204 = vunpack.c.h.b16 %v374
    %v1205 = vunpack.c.l.b16 %v375
    %v1206 = vunpack.c.h.b16 %v375
    %v1207 = vunpack.c.l.b16 %v376
    %v1208 = vunpack.c.h.b16 %v376
    %v1209 = vunpack.c.l.b16 %v377
    %v1210 = vunpack.c.h.b16 %v377
    %v1211 = vunpack.c.l.b16 %v378
    %v1212 = vunpack.c.h.b16 %v378
    %v1213 = vunpack.c.l.b16 %v379
    %v1214 = vunpack.c.h.b16 %v379
    %v1215 = vunpack.c.l.b16 %v380
    %v1216 = vunpack.c.h.b16 %v380
    %v1217 = vunpack.c.l.b16 %v381
    %v1218 = vunpack.c.h.b16 %v381
    %v1219 = vunpack.c.l.b16 %v382
    %v1220 = vunpack.c.h.b16 %v382
    %v1221 = vunpack.c.l.b16 %v383
    %v1222 = vunpack.c.h.b16 %v383
    %v1223 = vunpack.c.l.b16 %v384
    %v1224 = vunpack.c.h.b16 %v384
    %v1225 = vunpack.c.l.b16 %v385
    %v1226 = vunpack.c.h.b16 %v385
    %v1227 = vunpack.c.l.b16 %v386
    %v1228 = vunpack.c.h.b16 %v386
    %v1229 = vunpack.c.l.b16 %v387
    %v1230 = vunpack.c.h.b16 %v387
    %v1231 = vunpack.c.l.b16 %v388
    %v1232 = vunpack.c.h.b16 %v388
    %v1233 = vunpack.c.l.b16 %v389
    %v1234 = vunpack.c.h.b16 %v389
    %v1235 = vunpack.c.l.b16 %v390
    %v1236 = vunpack.c.h.b16 %v390
    %v1237 = vunpack.c.l.b16 %v391
    %v1238 = vunpack.c.h.b16 %v391
    %v1239 = vunpack.c.l.b16 %v392
    %v1240 = vunpack.c.h.b16 %v392
    %v1241 = vunpack.c.l.b16 %v393
    %v1242 = vunpack.c.h.b16 %v393
    %v1243 = vunpack.c.l.b16 %v394
    %v1244 = vunpack.c.h.b16 %v394
    %v1245 = vunpack.c.l.b16 %v395
    %v1246 = vunpack.c.h.b16 %v395
    %v1247 = vunpack.c.l.b16 %v396
    %v1248 = vunpack.c.h.b16 %v396
    %v1249 = vunpack.c.l.b16 %v397
    %v1250 = vunpack.c.h.b16 %v397
    %v1251 = vunpack.c.l.b16 %v398
    %v1252 = vunpack.c.h.b16 %v398
    %v1253 = vunpack.c.l.b16 %v399
    %v1254 = vunpack.c.h.b16 %v399
    %v1255 = vunpack.c.l.b16 %v400
    %v1256 = vunpack.c.h.b16 %v400
    %v1257 = vunpack.c.l.b16 %v401
    %v1258 = vunpack.c.h.b16 %v401
    %v1259 = vunpack.c.l.b16 %v402
    %v1260 = vunpack.c.h.b16 %v402
    %v1261 = vunpack.c.l.b16 %v403
    %v1262 = vunpack.c.h.b16 %v403
    %v1263 = vunpack.c.l.b16 %v404
    %v1264 = vunpack.c.h.b16 %v404
    %v1265 = vunpack.c.l.b16 %v405
    %v1266 = vunpack.c.h.b16 %v405
    %v1267 = vunpack.c.l.b16 %v406
    %v1268 = vunpack.c.h.b16 %v406
    %v1269 = vunpack.c.l.b16 %v407
    %v1270 = vunpack.c.h.b16 %v407
    %v1271 = vunpack.c.l.b16 %v408
    %v1272 = vunpack.c.h.b16 %v408
    %v1273 = vunpack.c.l.b16 %v409
    %v1274 = vunpack.c.h.b16 %v409
    %v1275 = vunpack.c.l.b16 %v410
    %v1276 = vunpack.c.h.b16 %v410
    %v1277 = vunpack.c.l.b16 %v411
    %v1278 = vunpack.c.h.b16 %v411
    %v1279 = vunpack.c.l.b16 %v412
    %v1280 = vunpack.c.h.b16 %v412
    %v1281 = vunpack.c.l.b16 %v413
    %v1282 = vunpack.c.h.b16 %v413
    %v1283 = vunpack.c.l.b16 %v414
    %v1284 = vunpack.c.h.b16 %v414
    %v1285 = vunpack.c.l.b16 %v415
    %v1286 = vunpack.c.h.b16 %v415
    %v1287 = vunpack.c.l.b16 %v416
    %v1288 = vunpack.c.h.b16 %v416
    %v1289 = vunpack.c.l.b16 %v417
    %v1290 = vunpack.c.h.b16 %v417
    %v1291 = vunpack.c.l.b16 %v418
    %v1292 = vunpack.c.h.b16 %v418
    %v1293 = vunpack.c.l.b16 %v419
    %v1294 = vunpack.c.h.b16 %v419
    %v1295 = vunpack.c.l.b16 %v420
    %v1296 = vunpack.c.h.b16 %v420
    %v1297 = vunpack.c.l.b16 %v421
    %v1298 = vunpack.c.h.b16 %v421
    %v1299 = vunpack.c.l.b16 %v422
    %v1300 = vunpack.c.h.b16 %v422
    %v1301 = vunpack.c.l.b16 %v423
    %v1302 = vunpack.c.h.b16 %v423
    %v1303 = vunpack.c.l.b16 %v424
    %v1304 = vunpack.c.h.b16 %v424
    %v1305 = vunpack.c.l.b16 %v425
    %v1306 = vunpack.c.h.b16 %v425
    %v1307 = vunpack.c.l.b16 %v426
    %v1308 = vunpack.c.h.b16 %v426
    %v1309 = vunpack.c.l.b16 %v427
    %v1310 = vunpack.c.h.b16 %v427
    %v1311 = vunpack.c.l.b16 %v428
    %v1312 = vunpack.c.h.b16 %v428
    %v1313 = vunpack.c.l.b16 %v429
    %v1314 = vunpack.c.h.b16 %v429
    %v1315 = vunpack.c.l.b16 %v430
    %v1316 = vunpack.c.h.b16 %v430
    %v1317 = vunpack.c.l.b16 %v431
    %v1318 = vunpack.c.h.b16 %v431
    %v1319 = vunpack.c.l.b16 %v432
    %v1320 = vunpack.c.h.b16 %v432
    %v1321 = vunpack.c.l.b16 %v433
    %v1322 = vunpack.c.h.b16 %v433
    %v1323 = vunpack.c.l.b16 %v434
    %v1324 = vunpack.c.h.b16 %v434
    %v1325 = vunpack.c.l.b16 %v435
    %v1326 = vunpack.c.h.b16 %v435
    %v1327 = vunpack.c.l.b16 %v436
    %v1328 = vunpack.c.h.b16 %v436
    %v1329 = vunpack.c.l.b16 %v437
    %v1330 = vunpack.c.h.b16 %v437
    %v1331 = vunpack.c.l.b16 %v438
    %v1332 = vunpack.c.h.b16 %v438
    %v1333 = vunpack.c.l.b16 %v439
    %v1334 = vunpack.c.h.b16 %v439
    %v1335 = vunpack.c.l.b16 %v440
    %v1336 = vunpack.c.h.b16 %v440
    %v1337 = vunpack.c.l.b16 %v441
    %v1338 = vunpack.c.h.b16 %v441
    %v1339 = vunpack.c.l.b16 %v442
    %v1340 = vunpack.c.h.b16 %v442
    %v1341 = vunpack.c.l.b16 %v443
    %v1342 = vunpack.c.h.b16 %v443
    %v1343 = vunpack.c.l.b16 %v444
    %v1344 = vunpack.c.h.b16 %v444
    %v1345 = vunpack.c.l.b16 %v445
    %v1346 = vunpack.c.h.b16 %v445
    %v1347 = vunpack.c.l.b16 %v446
    %v1348 = vunpack.c.h.b16 %v446
    %v1349 = vunpack.c.l.b16 %v447
    %v1350 = vunpack.c.h.b16 %v447
    %v1351 = vunpack.c.l.b16 %v448
    %v1352 = vunpack.c.h.b16 %v448
    %v1353 = vunpack.c.l.b16 %v449
    %v1354 = vunpack.c.h.b16 %v449
    %v1355 = vunpack.c.l.b16 %v450
    %v1356 = vunpack.c.h.b16 %v450
    %v1357 = vunpack.c.l.b16 %v451
    %v1358 = vunpack.c.h.b16 %v451
    %v1359 = vunpack.c.l.b16 %v452
    %v1360 = vunpack.c.h.b16 %v452
    %v1361 = vunpack.c.l.b16 %v453
    %v1362 = vunpack.c.h.b16 %v453
    %v1363 = vunpack.c.l.b16 %v454
    %v1364 = vunpack.c.h.b16 %v454
    %v1365 = vunpack.c.l.b16 %v455
    %v1366 = vunpack.c.h.b16 %v455
    %v1367 = vunpack.c.l.b16 %v456
    %v1368 = vunpack.c.h.b16 %v456
    %v1369 = vunpack.c.l.b16 %v457
    %v1370 = vunpack.c.h.b16 %v457
    %v1371 = vunpack.c.l.b16 %v458
    %v1372 = vunpack.c.h.b16 %v458
    %v1373 = vunpack.c.l.b16 %v459
    %v1374 = vunpack.c.h.b16 %v459
    %v1375 = vunpack.c.l.b16 %v460
    %v1376 = vunpack.c.h.b16 %v460
    %v1377 = vunpack.c.l.b16 %v461
    %v1378 = vunpack.c.h.b16 %v461
    %v1379 = vunpack.c.l.b16 %v462
    %v1380 = vunpack.c.h.b16 %v462
    %v1381 = vunpack.c.l.b16 %v463
    %v1382 = vunpack.c.h.b16 %v463
    %v1383 = vunpack.c.l.b16 %v464
    %v1384 = vunpack.c.h.b16 %v464
    %v1385 = vunpack.c.l.b16 %v465
    %v1386 = vunpack.c.h.b16 %v465
    %v1387 = vunpack.c.l.b16 %v466
    %v1388 = vunpack.c.h.b16 %v466
    %v1389 = vunpack.c.l.b16 %v467
    %v1390 = vunpack.c.h.b16 %v467
    %v1391 = vunpack.c.l.b16 %v468
    %v1392 = vunpack.c.h.b16 %v468
    %v1393 = vunpack.c.l.b16 %v469
    %v1394 = vunpack.c.h.b16 %v469
    %v1395 = vunpack.c.l.b16 %v470
    %v1396 = vunpack.c.h.b16 %v470
    %v1397 = vunpack.c.l.b16 %v471
    %v1398 = vunpack.c.h.b16 %v471
    %v1399 = vunpack.c.l.b16 %v472
    %v1400 = vunpack.c.h.b16 %v472
    %v1401 = vunpack.c.l.b16 %v473
    %v1402 = vunpack.c.h.b16 %v473
    %v1403 = vunpack.c.l.b16 %v474
    %v1404 = vunpack.c.h.b16 %v474
    %v1405 = vunpack.c.l.b16 %v475
    %v1406 = vunpack.c.h.b16 %v475
    %v1407 = vunpack.c.l.b16 %v476
    %v1408 = vunpack.c.h.b16 %v476
    %v1409 = vunpack.c.l.b16 %v477
    %v1410 = vunpack.c.h.b16 %v477
    %v1411 = vunpack.c.l.b16 %v478
    %v1412 = vunpack.c.h.b16 %v478
    %v1413 = vunpack.c.l.b16 %v479
    %v1414 = vunpack.c.h.b16 %v479
    %v1415 = vunpack.c.l.b16 %v480
    %v1416 = vunpack.c.h.b16 %v480
    %v1417 = vunpack.c.l.b16 %v481
    %v1418 = vunpack.c.h.b16 %v481
    %v1419 = vunpack.c.l.b16 %v482
    %v1420 = vunpack.c.h.b16 %v482
    %v1421 = vunpack.c.l.b16 %v483
    %v1422 = vunpack.c.h.b16 %v483
    %v1423 = vunpack.c.l.b16 %v484
    %v1424 = vunpack.c.h.b16 %v484
    %v1425 = vunpack.c.l.b16 %v485
    %v1426 = vunpack.c.h.b16 %v485
    %v1427 = vunpack.c.l.b16 %v486
    %v1428 = vunpack.c.h.b16 %v486
    %v1429 = vunpack.c.l.b16 %v487
    %v1430 = vunpack.c.h.b16 %v487
    %v1431 = vunpack.c.l.b16 %v488
    %v1432 = vunpack.c.h.b16 %v488
    %v1433 = vunpack.c.l.b16 %v489
    %v1434 = vunpack.c.h.b16 %v489
    %v1435 = vunpack.c.l.b16 %v490
    %v1436 = vunpack.c.h.b16 %v490
    %v1437 = vunpack.c.l.b16 %v491
    %v1438 = vunpack.c.h.b16 %v491
    %v1439 = vunpack.c.l.b16 %v492
    %v1440 = vunpack.c.h.b16 %v492
    %v1441 = vunpack.c.l.b16 %v493
    %v1442 = vunpack.c.h.b16 %v493
    %v1443 = vunpack.c.l.b16 %v494
    %v1444 = vunpack.c.h.b16 %v494
    %v1445 = vunpack.c.l.b16 %v495
    %v1446 = vunpack.c.h.b16 %v495
    %v1447 = vunpack.c.l.b16 %v496
    %v1448 = vunpack.c.h.b16 %v496
    %v1449 = vunpack.c.l.b16 %v497
    %v1450 = vunpack.c.h.b16 %v497
    %v1451 = vunpack.c.l.b16 %v498
    %v1452 = vunpack.c.h.b16 %v498
    %v1453 = vunpack.c.l.b16 %v499
    %v1454 = vunpack.c.h.b16 %v499
    %v1455 = vunpack.c.l.b16 %v500
    %v1456 = vunpack.c.h.b16 %v500
    %v1457 = vunpack.c.l.b16 %v501
    %v1458 = vunpack.c.h.b16 %v501
    %v1459 = vunpack.c.l.b16 %v502
    %v1460 = vunpack.c.h.b16 %v502
    %v1461 = vunpack.c.l.b16 %v503
    %v1462 = vunpack.c.h.b16 %v503
    %v1463 = vunpack.c.l.b16 %v504
    %v1464 = vunpack.c.h.b16 %v504
    %v1465 = vunpack.c.l.b16 %v505
    %v1466 = vunpack.c.h.b16 %v505
    %v1467 = vunpack.c.l.b16 %v506
    %v1468 = vunpack.c.h.b16 %v506
    %v1469 = vunpack.c.l.b16 %v507
    %v1470 = vunpack.c.h.b16 %v507
    %v1471 = vunpack.c.l.b16 %v508
    %v1472 = vunpack.c.h.b16 %v508
    %v1473 = vunpack.c.l.b16 %v509
    %v1474 = vunpack.c.h.b16 %v509
    %v1475 = vunpack.c.l.b16 %v510
    %v1476 = vunpack.c.h.b16 %v510
    %v1477 = vunpack.c.l.b16 %v511
    %v1478 = vunpack.c.h.b16 %v511
    %v1479 = vunpack.c.l.b16 %v512
    %v1480 = vunpack.c.h.b16 %v512
    %v1481 = vunpack.c.l.b16 %v513
    %v1482 = vunpack.c.h.b16 %v513
    %v1483 = vunpack.c.l.b16 %v514
    %v1484 = vunpack.c.h.b16 %v514
    %v1485 = vunpack.c.l.b16 %v515
    %v1486 = vunpack.c.h.b16 %v515
    %v1487 = vunpack.c.l.b16 %v516
    %v1488 = vunpack.c.h.b16 %v516
    %v1489 = vunpack.c.l.b16 %v517
    %v1490 = vunpack.c.h.b16 %v517
    %v1491 = vunpack.c.l.b16 %v518
    %v1492 = vunpack.c.h.b16 %v518
    %v1493 = vunpack.c.l.b16 %v519
    %v1494 = vunpack.c.h.b16 %v519
    %v1495 = vunpack.c.l.b16 %v520
    %v1496 = vunpack.c.h.b16 %v520
    %v1497 = vunpack.c.l.b16 %v521
    %v1498 = vunpack.c.h.b16 %v521
    %v1499 = vunpack.c.l.b16 %v522
    %v1500 = vunpack.c.h.b16 %v522
    %v1501 = vunpack.c.l.b16 %v523
    %v1502 = vunpack.c.h.b16 %v523
    %v1503 = vunpack.c.l.b16 %v524
    %v1504 = vunpack.c.h.b16 %v524
    %v1505 = vunpack.c.l.b16 %v525
    %v1506 = vunpack.c.h.b16 %v525
    %v1507 = vunpack.c.l.b16 %v526
    %v1508 = vunpack.c.h.b16 %v526
    %v1509 = vunpack.c.l.b16 %v527
    %v1510 = vunpack.c.h.b16 %v527
    %v1511 = vunpack.c.l.b16 %v528
    %v1512 = vunpack.c.h.b16 %v528
    %v1513 = vunpack.c.l.b16 %v529
    %v1514 = vunpack.c.h.b16 %v529
    %v1515 = vunpack.c.l.b16 %v530
    %v1516 = vunpack.c.h.b16 %v530
    %v1517 = vunpack.c.l.b16 %v531
    %v1518 = vunpack.c.h.b16 %v531
    %v1519 = vunpack.c.l.b16 %v532
    %v1520 = vunpack.c.h.b16 %v532
    %v1521 = vunpack.c.l.b16 %v533
    %v1522 = vunpack.c.h.b16 %v533
    %v1523 = vunpack.c.l.b16 %v534
    %v1524 = vunpack.c.h.b16 %v534
    %v1525 = vunpack.c.l.b16 %v535
    %v1526 = vunpack.c.h.b16 %v535
    %v1527 = vunpack.c.l.b16 %v536
    %v1528 = vunpack.c.h.b16 %v536
    %v1529 = vunpack.c.l.b16 %v537
    %v1530 = vunpack.c.h.b16 %v537
    %v1531 = vunpack.c.l.b16 %v538
    %v1532 = vunpack.c.h.b16 %v538
    %v1533 = vunpack.c.l.b16 %v539
    %v1534 = vunpack.c.h.b16 %v539
    %v1535 = vunpack.c.l.b16 %v540
    %v1536 = vunpack.c.h.b16 %v540
    %v1537 = vunpack.c.l.b16 %v541
    %v1538 = vunpack.c.h.b16 %v541
    %v1539 = vunpack.c.l.b16 %v542
    %v1540 = vunpack.c.h.b16 %v542
    %v1541 = vunpack.c.l.b16 %v543
    %v1542 = vunpack.c.h.b16 %v543
    %v1543 = vunpack.c.l.b16 %v544
    %v1544 = vunpack.c.h.b16 %v544
    %v1545 = vunpack.c.l.b16 %v545
    %v1546 = vunpack.c.h.b16 %v545
    %v1547 = vunpack.c.l.b16 %v546
    %v1548 = vunpack.c.h.b16 %v546
    %v1549 = vunpack.c.l.b16 %v547
    %v1550 = vunpack.c.h.b16 %v547
    %v1551 = vunpack.c.l.b16 %v548
    %v1552 = vunpack.c.h.b16 %v548
    %v1553 = vunpack.c.l.b16 %v549
    %v1554 = vunpack.c.h.b16 %v549
    %v1555 = vunpack.c.l.b16 %v550
    %v1556 = vunpack.c.h.b16 %v550
    %v1557 = vunpack.c.l.b16 %v551
    %v1558 = vunpack.c.h.b16 %v551
    %v1559 = vunpack.c.l.b16 %v552
    %v1560 = vunpack.c.h.b16 %v552
    %v1561 = vunpack.c.l.b16 %v553
    %v1562 = vunpack.c.h.b16 %v553
    %v1563 = vunpack.c.l.b16 %v554
    %v1564 = vunpack.c.h.b16 %v554
    %v1565 = vunpack.c.l.b16 %v555
    %v1566 = vunpack.c.h.b16 %v555
    %v1567 = vunpack.c.l.b16 %v556
    %v1568 = vunpack.c.h.b16 %v556
    %v1569 = vunpack.c.l.b16 %v557
    %v1570 = vunpack.c.h.b16 %v557
    %v1571 = vunpack.c.l.b16 %v558
    %v1572 = vunpack.c.h.b16 %v558
    %v1573 = vunpack.c.l.b16 %v559
    %v1574 = vunpack.c.h.b16 %v559
    %v1575 = vunpack.c.l.b16 %v560
    %v1576 = vunpack.c.h.b16 %v560
    %v1577 = vunpack.c.l.b16 %v561
    %v1578 = vunpack.c.h.b16 %v561
    %v1579 = vunpack.c.l.b16 %v562
    %v1580 = vunpack.c.h.b16 %v562
    %v1581 = vunpack.c.l.b16 %v563
    %v1582 = vunpack.c.h.b16 %v563
    %v1583 = vunpack.c.l.b16 %v564
    %v1584 = vunpack.c.h.b16 %v564
    %v1585 = vunpack.c.l.b16 %v565
    %v1586 = vunpack.c.h.b16 %v565
    %v1587 = vunpack.c.l.b16 %v566
    %v1588 = vunpack.c.h.b16 %v566
    %v1589 = vunpack.c.l.b16 %v567
    %v1590 = vunpack.c.h.b16 %v567
    %v1591 = vunpack.c.l.b16 %v568
    %v1592 = vunpack.c.h.b16 %v568
    %v1593 = vunpack.c.l.b16 %v569
    %v1594 = vunpack.c.h.b16 %v569
    %v1595 = vunpack.c.l.b16 %v570
    %v1596 = vunpack.c.h.b16 %v570
    %v1597 = vunpack.c.l.b16 %v571
    %v1598 = vunpack.c.h.b16 %v571
    %v1599 = vunpack.c.l.b16 %v572
    %v1600 = vunpack.c.h.b16 %v572
    %v1601 = vunpack.c.l.b16 %v573
    %v1602 = vunpack.c.h.b16 %v573
    %v1603 = vunpack.c.l.b16 %v574
    %v1604 = vunpack.c.h.b16 %v574
    %v1605 = vunpack.c.l.b16 %v575
    %v1606 = vunpack.c.h.b16 %v575
    %v1607 = vunpack.c.l.b16 %v576
    %v1608 = vunpack.c.h.b16 %v576
    %v1609 = vunpack.c.l.b16 %v577
    %v1610 = vunpack.c.h.b16 %v577
    %v1611 = vunpack.c.l.b16 %v578
    %v1612 = vunpack.c.h.b16 %v578
    %v1613 = vunpack.c.l.b16 %v579
    %v1614 = vunpack.c.h.b16 %v579
    %v1615 = vunpack.c.l.b16 %v580
    %v1616 = vunpack.c.h.b16 %v580
    %v1617 = vunpack.c.l.b16 %v581
    %v1618 = vunpack.c.h.b16 %v581
    %v1619 = vunpack.c.l.b16 %v582
    %v1620 = vunpack.c.h.b16 %v582
    %v1621 = vunpack.c.l.b16 %v583
    %v1622 = vunpack.c.h.b16 %v583
    %v1623 = vunpack.c.l.b16 %v584
    %v1624 = vunpack.c.h.b16 %v584
    %v1625 = vunpack.c.l.b16 %v585
    %v1626 = vunpack.c.h.b16 %v585
    %v1627 = vunpack.c.l.b16 %v586
    %v1628 = vunpack.c.h.b16 %v586
    %v1629 = vunpack.c.l.b16 %v587
    %v1630 = vunpack.c.h.b16 %v587
    %v1631 = vunpack.c.l.b16 %v588
    %v1632 = vunpack.c.h.b16 %v588
    %v1633 = vunpack.c.l.b16 %v589
    %v1634 = vunpack.c.h.b16 %v589
    %v1635 = vunpack.c.l.b16 %v590
    %v1636 = vunpack.c.h.b16 %v590
    %v1637 = vunpack.c.l.b16 %v591
    %v1638 = vunpack.c.h.b16 %v591
    %v1639 = vunpack.c.l.b16 %v592
    %v1640 = vunpack.c.h.b16 %v592
    %v1641 = vunpack.c.l.b16 %v593
    %v1642 = vunpack.c.h.b16 %v593
    %v1643 = vunpack.c.l.b16 %v594
    %v1644 = vunpack.c.h.b16 %v594
    %v1645 = vunpack.c.l.b16 %v595
    %v1646 = vunpack.c.h.b16 %v595
    %v1647 = vunpack.c.l.b16 %v596
    %v1648 = vunpack.c.h.b16 %v596
    %v1649 = vunpack.c.l.b16 %v597
    %v1650 = vunpack.c.h.b16 %v597
    %v1651 = vunpack.c.l.b16 %v598
    %v1652 = vunpack.c.h.b16 %v598
    %v1653 = vunpack.c.l.b16 %v599
    %v1654 = vunpack.c.h.b16 %v599
    %v1655 = vunpack.c.l.b16 %v600
    %v1656 = vunpack.c.h.b16 %v600
    %v1657 = vunpack.c.l.b16 %v601
    %v1658 = vunpack.c.h.b16 %v601
    %v1659 = vunpack.c.l.b16 %v602
    %v1660 = vunpack.c.h.b16 %v602
    %v1661 = vunpack.c.l.b16 %v603
    %v1662 = vunpack.c.h.b16 %v603
    %v1663 = vunpack.c.l.b16 %v604
    %v1664 = vunpack.c.h.b16 %v604
    %v1665 = vunpack.c.l.b16 %v605
    %v1666 = vunpack.c.h.b16 %v605
    %v1667 = vunpack.c.l.b16 %v606
    %v1668 = vunpack.c.h.b16 %v606
    %v1669 = vunpack.c.l.b16 %v607
    %v1670 = vunpack.c.h.b16 %v607
    %v1671 = vunpack.c.l.b16 %v608
    %v1672 = vunpack.c.h.b16 %v608
    %v1673 = vunpack.c.l.b16 %v609
    %v1674 = vunpack.c.h.b16 %v609
    %v1675 = vunpack.c.l.b16 %v610
    %v1676 = vunpack.c.h.b16 %v610
    %v1677 = vunpack.c.l.b16 %v611
    %v1678 = vunpack.c.h.b16 %v611
    %v1679 = vunpack.c.l.b16 %v612
    %v1680 = vunpack.c.h.b16 %v612
    %v1681 = vunpack.c.l.b16 %v613
    %v1682 = vunpack.c.h.b16 %v613
    %v1683 = vunpack.c.l.b16 %v614
    %v1684 = vunpack.c.h.b16 %v614
    %v1685 = vunpack.c.l.b16 %v615
    %v1686 = vunpack.c.h.b16 %v615
    %v1687 = vunpack.c.l.b16 %v616
    %v1688 = vunpack.c.h.b16 %v616
    %v1689 = vunpack.c.l.b16 %v617
    %v1690 = vunpack.c.h.b16 %v617
    %v1691 = vunpack.c.l.b16 %v618
    %v1692 = vunpack.c.h.b16 %v618
    %v1693 = vunpack.c.l.b16 %v619
    %v1694 = vunpack.c.h.b16 %v619
    %v1695 = vunpack.c.l.b16 %v620
    %v1696 = vunpack.c.h.b16 %v620
    %v1697 = vunpack.c.l.b16 %v621
    %v1698 = vunpack.c.h.b16 %v621
    %v1699 = vunpack.c.l.b16 %v622
    %v1700 = vunpack.c.h.b16 %v622
    %v1701 = vunpack.c.l.b16 %v623
    %v1702 = vunpack.c.h.b16 %v623
    %v1703 = vunpack.c.l.b16 %v624
    %v1704 = vunpack.c.h.b16 %v624
    %v1705 = vunpack.c.l.b16 %v625
    %v1706 = vunpack.c.h.b16 %v625
    %v1707 = vunpack.c.l.b16 %v626
    %v1708 = vunpack.c.h.b16 %v626
    %v1709 = vunpack.c.l.b16 %v627
    %v1710 = vunpack.c.h.b16 %v627
    %v1711 = vunpack.c.l.b16 %v628
    %v1712 = vunpack.c.h.b16 %v628
    %v1713 = vunpack.c.l.b16 %v629
    %v1714 = vunpack.c.h.b16 %v629
    %v1715 = vunpack.c.l.b16 %v630
    %v1716 = vunpack.c.h.b16 %v630
    %v1717 = vunpack.c.l.b16 %v631
    %v1718 = vunpack.c.h.b16 %v631
    %v1719 = vunpack.c.l.b16 %v632
    %v1720 = vunpack.c.h.b16 %v632
    %v1721 = vunpack.c.l.b16 %v633
    %v1722 = vunpack.c.h.b16 %v633
    %v1723 = vunpack.c.l.b16 %v634
    %v1724 = vunpack.c.h.b16 %v634
    %v1725 = vunpack.c.l.b16 %v635
    %v1726 = vunpack.c.h.b16 %v635
    %v1727 = vunpack.c.l.b16 %v636
    %v1728 = vunpack.c.h.b16 %v636
    %v1729 = vunpack.c.l.b16 %v637
    %v1730 = vunpack.c.h.b16 %v637
    %v1731 = vunpack.c.l.b16 %v638
    %v1732 = vunpack.c.h.b16 %v638
    %v1733 = vunpack.c.l.b16 %v639
    %v1734 = vunpack.c.h.b16 %v639
    %v1735 = vunpack.c.l.b16 %v640
    %v1736 = vunpack.c.h.b16 %v640
    %v1737 = vunpack.c.l.b16 %v641
    %v1738 = vunpack.c.h.b16 %v641
    %v1739 = vunpack.c.l.b16 %v642
    %v1740 = vunpack.c.h.b16 %v642
    %v1741 = vunpack.c.l.b16 %v643
    %v1742 = vunpack.c.h.b16 %v643
    %v1743 = vunpack.c.l.b16 %v644
    %v1744 = vunpack.c.h.b16 %v644
    %v1745 = vunpack.c.l.b16 %v645
    %v1746 = vunpack.c.h.b16 %v645
    %v1747 = vunpack.c.l.b16 %v646
    %v1748 = vunpack.c.h.b16 %v646
    %v1749 = vunpack.c.l.b16 %v647
    %v1750 = vunpack.c.h.b16 %v647
    %v1751 = vunpack.c.l.b16 %v648
    %v1752 = vunpack.c.h.b16 %v648
    %v1753 = vunpack.c.l.b16 %v649
    %v1754 = vunpack.c.h.b16 %v649
    %v1755 = vunpack.c.l.b16 %v650
    %v1756 = vunpack.c.h.b16 %v650
    %v1757 = vunpack.c.l.b16 %v651
    %v1758 = vunpack.c.h.b16 %v651
    %v1759 = vunpack.c.l.b16 %v652
    %v1760 = vunpack.c.h.b16 %v652
    %v1761 = vunpack.c.l.b16 %v653
    %v1762 = vunpack.c.h.b16 %v653
    %v1763 = vunpack.c.l.b16 %v654
    %v1764 = vunpack.c.h.b16 %v654
    %v1765 = vunpack.c.l.b16 %v655
    %v1766 = vunpack.c.h.b16 %v655
    %v1767 = vunpack.c.l.b16 %v656
    %v1768 = vunpack.c.h.b16 %v656
    %v1769 = vunpack.c.l.b16 %v657
    %v1770 = vunpack.c.h.b16 %v657
    %v1771 = vunpack.c.l.b16 %v658
    %v1772 = vunpack.c.h.b16 %v658
    %v1773 = vunpack.c.l.b16 %v659
    %v1774 = vunpack.c.h.b16 %v659
    %v1775 = vunpack.c.l.b16 %v660
    %v1776 = vunpack.c.h.b16 %v660
    %v1777 = vunpack.c.l.b16 %v661
    %v1778 = vunpack.c.h.b16 %v661
    %v1779 = vunpack.c.l.b16 %v662
    %v1780 = vunpack.c.h.b16 %v662
    %v1781 = vunpack.c.l.b16 %v663
    %v1782 = vunpack.c.h.b16 %v663
    %v1783 = vunpack.c.l.b16 %v664
    %v1784 = vunpack.c.h.b16 %v664
    %v1785 = vunpack.c.l.b16 %v665
    %v1786 = vunpack.c.h.b16 %v665
    %v1787 = vunpack.c.l.b16 %v666
    %v1788 = vunpack.c.h.b16 %v666
    %v1789 = vunpack.c.l.b16 %v667
    %v1790 = vunpack.c.h.b16 %v667
    %v1791 = vunpack.c.l.b16 %v668
    %v1792 = vunpack.c.h.b16 %v668
    %v1793 = vunpack.c.l.b16 %v669
    %v1794 = vunpack.c.h.b16 %v669
    %v1795 = vunpack.c.l.b16 %v670
    %v1796 = vunpack.c.h.b16 %v670
    %v1797 = vunpack.c.l.b16 %v671
    %v1798 = vunpack.c.h.b16 %v671
    %v1799 = vunpack.c.l.b16 %v672
    %v1800 = vunpack.c.h.b16 %v672
    %v1801 = vunpack.c.l.b16 %v673
    %v1802 = vunpack.c.h.b16 %v673
    %v1803 = vunpack.c.l.b16 %v674
    %v1804 = vunpack.c.h.b16 %v674
    %v1805 = vunpack.c.l.b16 %v675
    %v1806 = vunpack.c.h.b16 %v675
    %v1807 = vunpack.c.l.b16 %v676
    %v1808 = vunpack.c.h.b16 %v676
    %v1809 = vunpack.c.l.b16 %v677
    %v1810 = vunpack.c.h.b16 %v677
    %v1811 = vunpack.c.l.b16 %v678
    %v1812 = vunpack.c.h.b16 %v678
    %v1813 = vunpack.c.l.b16 %v679
    %v1814 = vunpack.c.h.b16 %v679
    %v1815 = vunpack.c.l.b16 %v680
    %v1816 = vunpack.c.h.b16 %v680
    %v1817 = vunpack.c.l.b16 %v681
    %v1818 = vunpack.c.h.b16 %v681
    %v1819 = vunpack.c.l.b16 %v682
    %v1820 = vunpack.c.h.b16 %v682
    %v1821 = vunpack.c.l.b16 %v683
    %v1822 = vunpack.c.h.b16 %v683
    %v1823 = vunpack.c.l.b16 %v684
    %v1824 = vunpack.c.h.b16 %v684
    %v1825 = vunpack.c.l.b16 %v685
    %v1826 = vunpack.c.h.b16 %v685
    %v1827 = vunpack.c.l.b16 %v686
    %v1828 = vunpack.c.h.b16 %v686
    %v1829 = vunpack.c.l.b16 %v687
    %v1830 = vunpack.c.h.b16 %v687
    %v1831 = vunpack.c.l.b16 %v688
    %v1832 = vunpack.c.h.b16 %v688
    %v1833 = vunpack.c.l.b16 %v689
    %v1834 = vunpack.c.h.b16 %v689
    %v1835 = vunpack.c.l.b16 %v690
    %v1836 = vunpack.c.h.b16 %v690
    %v1837 = vunpack.c.l.b16 %v691
    %v1838 = vunpack.c.h.b16 %v691
    %v1839 = vunpack.c.l.b16 %v692
    %v1840 = vunpack.c.h.b16 %v692
    %v1841 = vunpack.c.l.b16 %v693
    %v1842 = vunpack.c.h.b16 %v693
    %v1843 = vunpack.c.l.b16 %v694
    %v1844 = vunpack.c.h.b16 %v694
    %v1845 = vunpack.c.l.b16 %v695
    %v1846 = vunpack.c.h.b16 %v695
    %v1847 = vunpack.c.l.b16 %v696
    %v1848 = vunpack.c.h.b16 %v696
    %v1849 = vunpack.c.l.b16 %v697
    %v1850 = vunpack.c.h.b16 %v697
    %v1851 = vunpack.c.l.b16 %v698
    %v1852 = vunpack.c.h.b16 %v698
    %v1853 = vunpack.c.l.b16 %v699
    %v1854 = vunpack.c.h.b16 %v699
    %v1855 = vunpack.c.l.b16 %v700
    %v1856 = vunpack.c.h.b16 %v700
    %v1857 = vunpack.c.l.b16 %v701
    %v1858 = vunpack.c.h.b16 %v701
    %v1859 = vunpack.c.l.b16 %v702
    %v1860 = vunpack.c.h.b16 %v702
    %v1861 = vunpack.c.l.b16 %v703
    %v1862 = vunpack.c.h.b16 %v703
    %v1863 = vunpack.c.l.b16 %v704
    %v1864 = vunpack.c.h.b16 %v704
    %v1865 = vunpack.c.l.b16 %v705
    %v1866 = vunpack.c.h.b16 %v705
    %v1867 = vunpack.c.l.b16 %v706
    %v1868 = vunpack.c.h.b16 %v706
    %v1869 = vunpack.c.l.b16 %v707
    %v1870 = vunpack.c.h.b16 %v707
    %v1871 = vunpack.c.l.b16 %v708
    %v1872 = vunpack.c.h.b16 %v708
    %v1873 = vunpack.c.l.b16 %v709
    %v1874 = vunpack.c.h.b16 %v709
    %v1875 = vunpack.c.l.b16 %v710
    %v1876 = vunpack.c.h.b16 %v710
    %v1877 = vunpack.c.l.b16 %v711
    %v1878 = vunpack.c.h.b16 %v711
    %v1879 = vunpack.c.l.b16 %v712
    %v1880 = vunpack.c.h.b16 %v712
    %v1881 = vunpack.c.l.b16 %v713
    %v1882 = vunpack.c.h.b16 %v713
    %v1883 = vunpack.c.l.b16 %v714
    %v1884 = vunpack.c.h.b16 %v714
    %v1885 = vunpack.c.l.b16 %v715
    %v1886 = vunpack.c.h.b16 %v715
    %v1887 = vunpack.c.l.b16 %v716
    %v1888 = vunpack.c.h.b16 %v716
    %v1889 = vunpack.c.l.b16 %v717
    %v1890 = vunpack.c.h.b16 %v717
    %v1891 = vunpack.c.l.b16 %v718
    %v1892 = vunpack.c.h.b16 %v718
    %v1893 = vunpack.c.l.b16 %v719
    %v1894 = vunpack.c.h.b16 %v719
    %v1895 = vunpack.c.l.b16 %v720
    %v1896 = vunpack.c.h.b16 %v720
    %v1897 = vunpack.c.l.b16 %v721
    %v1898 = vunpack.c.h.b16 %v721
    %v1899 = vunpack.c.l.b16 %v722
    %v1900 = vunpack.c.h.b16 %v722
    %v1901 = vunpack.c.l.b16 %v723
    %v1902 = vunpack.c.h.b16 %v723
    %v1903 = vunpack.c.l.b16 %v724
    %v1904 = vunpack.c.h.b16 %v724
    %v1905 = vunpack.c.l.b16 %v725
    %v1906 = vunpack.c.h.b16 %v725
    %v1907 = vunpack.c.l.b16 %v726
    %v1908 = vunpack.c.h.b16 %v726
    %v1909 = vunpack.c.l.b16 %v727
    %v1910 = vunpack.c.h.b16 %v727
    %v1911 = vunpack.c.l.b16 %v728
    %v1912 = vunpack.c.h.b16 %v728
    %v1913 = vunpack.c.l.b16 %v729
    %v1914 = vunpack.c.h.b16 %v729
    %v1915 = vunpack.c.l.b16 %v730
    %v1916 = vunpack.c.h.b16 %v730
    %v1917 = vunpack.c.l.b16 %v731
    %v1918 = vunpack.c.h.b16 %v731
    %v1919 = vunpack.c.l.b16 %v732
    %v1920 = vunpack.c.h.b16 %v732
    %v1921 = vunpack.c.l.b16 %v733
    %v1922 = vunpack.c.h.b16 %v733
    %v1923 = vunpack.c.l.b16 %v734
    %v1924 = vunpack.c.h.b16 %v734
    %v1925 = vunpack.c.l.b16 %v735
    %v1926 = vunpack.c.h.b16 %v735
    %v1927 = vunpack.c.l.b16 %v736
    %v1928 = vunpack.c.h.b16 %v736
    %v1929 = vunpack.c.l.b16 %v737
    %v1930 = vunpack.c.h.b16 %v737
    %v1931 = vunpack.c.l.b16 %v738
    %v1932 = vunpack.c.h.b16 %v738
    %v1933 = vpack.c.b16 %v1173, %v1165
    %v1934 = vpack.c.b16 %v1174, %v1166
    %v1935 = vpack.c.b16 %v1175, %v1167
    %v1936 = vpack.c.b16 %v1176, %v1168
    %v1937 = vpack.c.b16 %v1177, %v1169
    %v1938 = vpack.c.b16 %v1178, %v1170
    %v1939 = vpack.c.b16 %v1179, %v1171
    %v1940 = vpack.c.b16 %v1180, %v1172
    %v1941 = vpack.c.b16 %v1189, %v1181
    %v1942 = vpack.c.b16 %v1190, %v1182
    %v1943 = vpack.c.b16 %v1191, %v1183
    %v1944 = vpack.c.b16 %v1192, %v1184
    %v1945 = vpack.c.b16 %v1193, %v1185
    %v1946 = vpack.c.b16 %v1194, %v1186
    %v1947 = vpack.c.b16 %v1195, %v1187
    %v1948 = vpack.c.b16 %v1196, %v1188
    %v1949 = vpack.c.b16 %v1205, %v1197
    %v1950 = vpack.c.b16 %v1206, %v1198
    %v1951 = vpack.c.b16 %v1207, %v1199
    %v1952 = vpack.c.b16 %v1208, %v1200
    %v1953 = vpack.c.b16 %v1209, %v1201
    %v1954 = vpack.c.b16 %v1210, %v1202
    %v1955 = vpack.c.b16 %v1211, %v1203
    %v1956 = vpack.c.b16 %v1212, %v1204
    %v1957 = vpack.c.b16 %v1221, %v1213
    %v1958 = vpack.c.b16 %v1222, %v1214
    %v1959 = vpack.c.b16 %v1223, %v1215
    %v1960 = vpack.c.b16 %v1224, %v1216
    %v1961 = vpack.c.b16 %v1225, %v1217
    %v1962 = vpack.c.b16 %v1226, %v1218
    %v1963 = vpack.c.b16 %v1227, %v1219
    %v1964 = vpack.c.b16 %v1228, %v1220
    %v1965 = vpack.c.b16 %v1237, %v1229
    %v1966 = vpack.c.b16 %v1238, %v1230
    %v1967 = vpack.c.b16 %v1239, %v1231
    %v1968 = vpack.c.b16 %v1240, %v1232
    %v1969 = vpack.c.b16 %v1241, %v1233
    %v1970 = vpack.c.b16 %v1242, %v1234
    %v1971 = vpack.c.b16 %v1243, %v1235
    %v1972 = vpack.c.b16 %v1244, %v1236
    %v1973 = vpack.c.b16 %v1253, %v1245
    %v1974 = vpack.c.b16 %v1254, %v1246
    %v1975 = vpack.c.b16 %v1255, %v1247
    %v1976 = vpack.c.b16 %v1256, %v1248
    %v1977 = vpack.c.b16 %v1257, %v1249
    %v1978 = vpack.c.b16 %v1258, %v1250
    %v1979 = vpack.c.b16 %v1259, %v1251
    %v1980 = vpack.c.b16 %v1260, %v1252
    %v1981 = vpack.c.b16 %v1269, %v1261
    %v1982 = vpack.c.b16 %v1270, %v1262
    %v1983 = vpack.c.b16 %v1271, %v1263
    %v1984 = vpack.c.b16 %v1272, %v1264
    %v1985 = vpack.c.b16 %v1273, %v1265
    %v1986 = vpack.c.b16 %v1274, %v1266
    %v1987 = vpack.c.b16 %v1275, %v1267
    %v1988 = vpack.c.b16 %v1276, %v1268
    %v1989 = vpack.c.b16 %v1285, %v1277
    %v1990 = vpack.c.b16 %v1286, %v1278
    %v1991 = vpack.c.b16 %v1287, %v1279
    %v1992 = vpack.c.b16 %v1288, %v1280
    %v1993 = vpack.c.b16 %v1289, %v1281
    %v1994 = vpack.c.b16 %v1290, %v1282
    %v1995 = vpack.c.b16 %v1291, %v1283
    %v1996 = vpack.c.b16 %v1292, %v1284
    %v1997 = vpack.c.b16 %v1301, %v1293
    %v1998 = vpack.c.b16 %v1302, %v1294
    %v1999 = vpack.c.b16 %v1303, %v1295
    %v2000 = vpack.c.b16 %v1304, %v1296
    %v2001 = vpack.c.b16 %v1305, %v1297
    %v2002 = vpack.c.b16 %v1306, %v1298
    %v2003 = vpack.c.b16 %v1307, %v1299
    %v2004 = vpack.c.b16 %v1308, %v1300
    %v2005 = vpack.c.b16 %v1317, %v1309
    %v2006 = vpack.c.b16 %v1318, %v1310
    %v2007 = vpack.c.b16 %v1319, %v1311
    %v2008 = vpack.c.b16 %v1320, %v1312
    %v2009 = vpack.c.b16 %v1321, %v1313
    %v2010 = vpack.c.b16 %v1322, %v1314
    %v2011 = vpack.c.b16 %v1323, %v1315
    %v2012 = vpack.c.b16 %v1324, %v1316
    %v2013 = vpack.c.b16 %v1333, %v1325
    %v2014 = vpack.c.b16 %v1334, %v1326
    %v2015 = vpack.c.b16 %v1335, %v1327
    %v2016 = vpack.c.b16 %v1336, %v1328
    %v2017 = vpack.c.b16 %v1337, %v1329
    %v2018 = vpack.c.b16 %v1338, %v1330
    %v2019 = vpack.c.b16 %v1339, %v1331
    %v2020 = vpack.c.b16 %v1340, %v1332
    %v2021 = vpack.c.b16 %v1349, %v1341
    %v2022 = vpack.c.b16 %v1350, %v1342
    %v2023 = vpack.c.b16 %v1351, %v1343
    %v2024 = vpack.c.b16 %v1352, %v1344
    %v2025 = vpack.c.b16 %v1353, %v1345
    %v2026 = vpack.c.b16 %v1354, %v1346
    %v2027 = vpack.c.b16 %v1355, %v1347
    %v2028 = vpack.c.b16 %v1356, %v1348
    %v2029 = vpack.c.b16 %v1365, %v1357
    %v2030 = vpack.c.b16 %v1366, %v1358
    %v2031 = vpack.c.b16 %v1367, %v1359
    %v2032 = vpack.c.b16 %v1368, %v1360
    %v2033 = vpack.c.b16 %v1369, %v1361
    %v2034 = vpack.c.b16 %v1370, %v1362
    %v2035 = vpack.c.b16 %v1371, %v1363
    %v2036 = vpack.c.b16 %v1372, %v1364
    %v2037 = vpack.c.b16 %v1381, %v1373
    %v2038 = vpack.c.b16 %v1382, %v1374
    %v2039 = vpack.c.b16 %v1383, %v1375
    %v2040 = vpack.c.b16 %v1384, %v1376
    %v2041 = vpack.c.b16 %v1385, %v1377
    %v2042 = vpack.c.b16 %v1386, %v1378
    %v2043 = vpack.c.b16 %v1387, %v1379
    %v2044 = vpack.c.b16 %v1388, %v1380
    %v2045 = vpack.c.b16 %v1397, %v1389
    %v2046 = vpack.c.b16 %v1398, %v1390
    %v2047 = vpack.c.b16 %v1399, %v1391
    %v2048 = vpack.c.b16 %v1400, %v1392
    %v2049 = vpack.c.b16 %v1401, %v1393
    %v2050 = vpack.c.b16 %v1402, %v1394
    %v2051 = vpack.c.b16 %v1403, %v1395
    %v2052 = vpack.c.b16 %v1404, %v1396
    %v2053 = vpack.c.b16 %v1413, %v1405
    %v2054 = vpack.c.b16 %v1414, %v1406
    %v2055 = vpack.c.b16 %v1415, %v1407
    %v2056 = vpack.c.b16 %v1416, %v1408
    %v2057 = vpack.c.b16 %v1417, %v1409
    %v2058 = vpack.c.b16 %v1418, %v1410
    %v2059 = vpack.c.b16 %v1419, %v1411
    %v2060 = vpack.c.b16 %v1420, %v1412
    %v2061 = vpack.c.b16 %v1429, %v1421
    %v2062 = vpack.c.b16 %v1430, %v1422
    %v2063 = vpack.c.b16 %v1431, %v1423
    %v2064 = vpack.c.b16 %v1432, %v1424
    %v2065 = vpack.c.b16 %v1433, %v1425
    %v2066 = vpack.c.b16 %v1434, %v1426
    %v2067 = vpack.c.b16 %v1435, %v1427
    %v2068 = vpack.c.b16 %v1436, %v1428
    %v2069 = vpack.c.b16 %v1445, %v1437
    %v2070 = vpack.c.b16 %v1446, %v1438
    %v2071 = vpack.c.b16 %v1447, %v1439
    %v2072 = vpack.c.b16 %v1448, %v1440
    %v2073 = vpack.c.b16 %v1449, %v1441
    %v2074 = vpack.c.b16 %v1450, %v1442
    %v2075 = vpack.c.b16 %v1451, %v1443
    %v2076 = vpack.c.b16 %v1452, %v1444
    %v2077 = vpack.c.b16 %v1461, %v1453
    %v2078 = vpack.c.b16 %v1462, %v1454
    %v2079 = vpack.c.b16 %v1463, %v1455
    %v2080 = vpack.c.b16 %v1464, %v1456
    %v2081 = vpack.c.b16 %v1465, %v1457
    %v2082 = vpack.c.b16 %v1466, %v1458
    %v2083 = vpack.c.b16 %v1467, %v1459
    %v2084 = vpack.c.b16 %v1468, %v1460
    %v2085 = vpack.c.b16 %v1477, %v1469
    %v2086 = vpack.c.b16 %v1478, %v1470
    %v2087 = vpack.c.b16 %v1479, %v1471
    %v2088 = vpack.c.b16 %v1480, %v1472
    %v2089 = vpack.c.b16 %v1481, %v1473
    %v2090 = vpack.c.b16 %v1482, %v1474
    %v2091 = vpack.c.b16 %v1483, %v1475
    %v2092 = vpack.c.b16 %v1484, %v1476
    %v2093 = vpack.c.b16 %v1493, %v1485
    %v2094 = vpack.c.b16 %v1494, %v1486
    %v2095 = vpack.c.b16 %v1495, %v1487
    %v2096 = vpack.c.b16 %v1496, %v1488
    %v2097 = vpack.c.b16 %v1497, %v1489
    %v2098 = vpack.c.b16 %v1498, %v1490
    %v2099 = vpack.c.b16 %v1499, %v1491
    %v2100 = vpack.c.b16 %v1500, %v1492
    %v2101 = vpack.c.b16 %v1509, %v1501
    %v2102 = vpack.c.b16 %v1510, %v1502
    %v2103 = vpack.c.b16 %v1511, %v1503
    %v2104 = vpack.c.b16 %v1512, %v1504
    %v2105 = vpack.c.b16 %v1513, %v1505
    %v2106 = vpack.c.b16 %v1514, %v1506
    %v2107 = vpack.c.b16 %v1515, %v1507
    %v2108 = vpack.c.b16 %v1516, %v1508
    %v2109 = vpack.c.b16 %v1525, %v1517
    %v2110 = vpack.c.b16 %v1526, %v1518
    %v2111 = vpack.c.b16 %v1527, %v1519
    %v2112 = vpack.c.b16 %v1528, %v1520
    %v2113 = vpack.c.b16 %v1529, %v1521
    %v2114 = vpack.c.b16 %v1530, %v1522
    %v2115 = vpack.c.b16 %v1531, %v1523
    %v2116 = vpack.c.b16 %v1532, %v1524
    %v2117 = vpack.c.b16 %v1541, %v1533
    %v2118 = vpack.c.b16 %v1542, %v1534
    %v2119 = vpack.c.b16 %v1543, %v1535
    %v2120 = vpack.c.b16 %v1544, %v1536
    %v2121 = vpack.c.b16 %v1545, %v1537
    %v2122 = vpack.c.b16 %v1546, %v1538
    %v2123 = vpack.c.b16 %v1547, %v1539
    %v2124 = vpack.c.b16 %v1548, %v1540
    %v2125 = vpack.c.b16 %v1557, %v1549
    %v2126 = vpack.c.b16 %v1558, %v1550
    %v2127 = vpack.c.b16 %v1559, %v1551
    %v2128 = vpack.c.b16 %v1560, %v1552
    %v2129 = vpack.c.b16 %v1561, %v1553
    %v2130 = vpack.c.b16 %v1562, %v1554
    %v2131 = vpack.c.b16 %v1563, %v1555
    %v2132 = vpack.c.b16 %v1564, %v1556
    %v2133 = vpack.c.b16 %v1573, %v1565
    %v2134 = vpack.c.b16 %v1574, %v1566
    %v2135 = vpack.c.b16 %v1575, %v1567
    %v2136 = vpack.c.b16 %v1576, %v1568
    %v2137 = vpack.c.b16 %v1577, %v1569
    %v2138 = vpack.c.b16 %v1578, %v1570
    %v2139 = vpack.c.b16 %v1579, %v1571
    %v2140 = vpack.c.b16 %v1580, %v1572
    %v2141 = vpack.c.b16 %v1589, %v1581
    %v2142 = vpack.c.b16 %v1590, %v1582
    %v2143 = vpack.c.b16 %v1591, %v1583
    %v2144 = vpack.c.b16 %v1592, %v1584
    %v2145 = vpack.c.b16 %v1593, %v1585
    %v2146 = vpack.c.b16 %v1594, %v1586
    %v2147 = vpack.c.b16 %v1595, %v1587
    %v2148 = vpack.c.b16 %v1596, %v1588
    %v2149 = vpack.c.b16 %v1605, %v1597
    %v2150 = vpack.c.b16 %v1606, %v1598
    %v2151 = vpack.c.b16 %v1607, %v1599
    %v2152 = vpack.c.b16 %v1608, %v1600
    %v2153 = vpack.c.b16 %v1609, %v1601
    %v2154 = vpack.c.b16 %v1610, %v1602
    %v2155 = vpack.c.b16 %v1611, %v1603
    %v2156 = vpack.c.b16 %v1612, %v1604
    %v2157 = vpack.c.b16 %v1621, %v1613
    %v2158 = vpack.c.b16 %v1622, %v1614
    %v2159 = vpack.c.b16 %v1623, %v1615
    %v2160 = vpack.c.b16 %v1624, %v1616
    %v2161 = vpack.c.b16 %v1625, %v1617
    %v2162 = vpack.c.b16 %v1626, %v1618
    %v2163 = vpack.c.b16 %v1627, %v1619
    %v2164 = vpack.c.b16 %v1628, %v1620
    %v2165 = vpack.c.b16 %v1637, %v1629
    %v2166 = vpack.c.b16 %v1638, %v1630
    %v2167 = vpack.c.b16 %v1639, %v1631
    %v2168 = vpack.c.b16 %v1640, %v1632
    %v2169 = vpack.c.b16 %v1641, %v1633
    %v2170 = vpack.c.b16 %v1642, %v1634
    %v2171 = vpack.c.b16 %v1643, %v1635
    %v2172 = vpack.c.b16 %v1644, %v1636
    %v2173 = vpack.c.b16 %v1653, %v1645
    %v2174 = vpack.c.b16 %v1654, %v1646
    %v2175 = vpack.c.b16 %v1655, %v1647
    %v2176 = vpack.c.b16 %v1656, %v1648
    %v2177 = vpack.c.b16 %v1657, %v1649
    %v2178 = vpack.c.b16 %v1658, %v1650
    %v2179 = vpack.c.b16 %v1659, %v1651
    %v2180 = vpack.c.b16 %v1660, %v1652
    %v2181 = vpack.c.b16 %v1669, %v1661
    %v2182 = vpack.c.b16 %v1670, %v1662
    %v2183 = vpack.c.b16 %v1671, %v1663
    %v2184 = vpack.c.b16 %v1672, %v1664
    %v2185 = vpack.c.b16 %v1673, %v1665
    %v2186 = vpack.c.b16 %v1674, %v1666
    %v2187 = vpack.c.b16 %v1675, %v1667
    %v2188 = vpack.c.b16 %v1676, %v1668
    %v2189 = vpack.c.b16 %v1685, %v1677
    %v2190 = vpack.c.b16 %v1686, %v1678
    %v2191 = vpack.c.b16 %v1687, %v1679
    %v2192 = vpack.c.b16 %v1688, %v1680
    %v2193 = vpack.c.b16 %v1689, %v1681
    %v2194 = vpack.c.b16 %v1690, %v1682
    %v2195 = vpack.c.b16 %v1691, %v1683
    %v2196 = vpack.c.b16 %v1692, %v1684
    %v2197 = vpack.c.b16 %v1701, %v1693
    %v2198 = vpack.c.b16 %v1702, %v1694
    %v2199 = vpack.c.b16 %v1703, %v1695
    %v2200 = vpack.c.b16 %v1704, %v1696
    %v2201 = vpack.c.b16 %v1705, %v1697
    %v2202 = vpack.c.b16 %v1706, %v1698
    %v2203 = vpack.c.b16 %v1707, %v1699
    %v2204 = vpack.c.b16 %v1708, %v1700
    %v2205 = vpack.c.b16 %v1717, %v1709
    %v2206 = vpack.c.b16 %v1718, %v1710
    %v2207 = vpack.c.b16 %v1719, %v1711
    %v2208 = vpack.c.b16 %v1720, %v1712
    %v2209 = vpack.c.b16 %v1721, %v1713
    %v2210 = vpack.c.b16 %v1722, %v1714
    %v2211 = vpack.c.b16 %v1723, %v1715
    %v2212 = vpack.c.b16 %v1724, %v1716
    %v2213 = vpack.c.b16 %v1733, %v1725
    %v2214 = vpack.c.b16 %v1734, %v1726
    %v2215 = vpack.c.b16 %v1735, %v1727
    %v2216 = vpack.c.b16 %v1736, %v1728
    %v2217 = vpack.c.b16 %v1737, %v1729
    %v2218 = vpack.c.b16 %v1738, %v1730
    %v2219 = vpack.c.b16 %v1739, %v1731
    %v2220 = vpack.c.b16 %v1740, %v1732
    %v2221 = vpack.c.b16 %v1749, %v1741
    %v2222 = vpack.c.b16 %v1750, %v1742
    %v2223 = vpack.c.b16 %v1751, %v1743
    %v2224 = vpack.c.b16 %v1752, %v1744
    %v2225 = vpack.c.b16 %v1753, %v1745
    %v2226 = vpack.c.b16 %v1754, %v1746
    %v2227 = vpack.c.b16 %v1755, %v1747
    %v2228 = vpack.c.b16 %v1756, %v1748
    %v2229 = vpack.c.b16 %v1765, %v1757
    %v2230 = vpack.c.b16 %v1766, %v1758
    %v2231 = vpack.c.b16 %v1767, %v1759
    %v2232 = vpack.c.b16 %v1768, %v1760
    %v2233 = vpack.c.b16 %v1769, %v1761
    %v2234 = vpack.c.b16 %v1770, %v1762
    %v2235 = vpack.c.b16 %v1771, %v1763
    %v2236 = vpack.c.b16 %v1772, %v1764
    %v2237 = vpack.c.b16 %v1781, %v1773
    %v2238 = vpack.c.b16 %v1782, %v1774
    %v2239 = vpack.c.b16 %v1783, %v1775
    %v2240 = vpack.c.b16 %v1784, %v1776
    %v2241 = vpack.c.b16 %v1785, %v1777
    %v2242 = vpack.c.b16 %v1786, %v1778
    %v2243 = vpack.c.b16 %v1787, %v1779
    %v2244 = vpack.c.b16 %v1788, %v1780
    %v2245 = vpack.c.b16 %v1797, %v1789
    %v2246 = vpack.c.b16 %v1798, %v1790
    %v2247 = vpack.c.b16 %v1799, %v1791
    %v2248 = vpack.c.b16 %v1800, %v1792
    %v2249 = vpack.c.b16 %v1801, %v1793
    %v2250 = vpack.c.b16 %v1802, %v1794
    %v2251 = vpack.c.b16 %v1803, %v1795
    %v2252 = vpack.c.b16 %v1804, %v1796
    %v2253 = vpack.c.b16 %v1813, %v1805
    %v2254 = vpack.c.b16 %v1814, %v1806
    %v2255 = vpack.c.b16 %v1815, %v1807
    %v2256 = vpack.c.b16 %v1816, %v1808
    %v2257 = vpack.c.b16 %v1817, %v1809
    %v2258 = vpack.c.b16 %v1818, %v1810
    %v2259 = vpack.c.b16 %v1819, %v1811
    %v2260 = vpack.c.b16 %v1820, %v1812
    %v2261 = vpack.c.b16 %v1829, %v1821
    %v2262 = vpack.c.b16 %v1830, %v1822
    %v2263 = vpack.c.b16 %v1831, %v1823
    %v2264 = vpack.c.b16 %v1832, %v1824
    %v2265 = vpack.c.b16 %v1833, %v1825
    %v2266 = vpack.c.b16 %v1834, %v1826
    %v2267 = vpack.c.b16 %v1835, %v1827
    %v2268 = vpack.c.b16 %v1836, %v1828
    %v2269 = vpack.c.b16 %v1845, %v1837
    %v2270 = vpack.c.b16 %v1846, %v1838
    %v2271 = vpack.c.b16 %v1847, %v1839
    %v2272 = vpack.c.b16 %v1848, %v1840
    %v2273 = vpack.c.b16 %v1849, %v1841
    %v2274 = vpack.c.b16 %v1850, %v1842
    %v2275 = vpack.c.b16 %v1851, %v1843
    %v2276 = vpack.c.b16 %v1852, %v1844
    %v2277 = vpack.c.b16 %v1861, %v1853
    %v2278 = vpack.c.b16 %v1862, %v1854
    %v2279 = vpack.c.b16 %v1863, %v1855
    %v2280 = vpack.c.b16 %v1864, %v1856
    %v2281 = vpack.c.b16 %v1865, %v1857
    %v2282 = vpack.c.b16 %v1866, %v1858
    %v2283 = vpack.c.b16 %v1867, %v1859
    %v2284 = vpack.c.b16 %v1868, %v1860
    %v2285 = vpack.c.b16 %v1877, %v1869
    %v2286 = vpack.c.b16 %v1878, %v1870
    %v2287 = vpack.c.b16 %v1879, %v1871
    %v2288 = vpack.c.b16 %v1880, %v1872
    %v2289 = vpack.c.b16 %v1881, %v1873
    %v2290 = vpack.c.b16 %v1882, %v1874
    %v2291 = vpack.c.b16 %v1883, %v1875
    %v2292 = vpack.c.b16 %v1884, %v1876
    %v2293 = vpack.c.b16 %v1893, %v1885
    %v2294 = vpack.c.b16 %v1894, %v1886
    %v2295 = vpack.c.b16 %v1895, %v1887
    %v2296 = vpack.c.b16 %v1896, %v1888
    %v2297 = vpack.c.b16 %v1897, %v1889
    %v2298 = vpack.c.b16 %v1898, %v1890
    %v2299 = vpack.c.b16 %v1899, %v1891
    %v2300 = vpack.c.b16 %v1900, %v1892
    %v2301 = vpack.c.b16 %v1909, %v1901
    %v2302 = vpack.c.b16 %v1910, %v1902
    %v2303 = vpack.c.b16 %v1911, %v1903
    %v2304 = vpack.c.b16 %v1912, %v1904
    %v2305 = vpack.c.b16 %v1913, %v1905
    %v2306 = vpack.c.b16 %v1914, %v1906
    %v2307 = vpack.c.b16 %v1915, %v1907
    %v2308 = vpack.c.b16 %v1916, %v1908
    %v2309 = vpack.c.b16 %v1925, %v1917
    %v2310 = vpack.c.b16 %v1926, %v1918
    %v2311 = vpack.c.b16 %v1927, %v1919
    %v2312 = vpack.c.b16 %v1928, %v1920
    %v2313 = vpack.c.b16 %v1929, %v1921
    %v2314 = vpack.c.b16 %v1930, %v1922
    %v2315 = vpack.c.b16 %v1931, %v1923
    %v2316 = vpack.c.b16 %v1932, %v1924
    %2701 = vmatprep.subr.bf16.mxu0 %v1934
    %2702 = vmatpush1.bf16.msra.mxu0 %v1933
    %2703 = vmatprep.subr.bf16.mxu0 %v1942
    %2704 = vmatpush1.bf16.msra.mxu0 %v1941
    %2705 = vmatprep.subr.bf16.mxu0 %v1950
    %2706 = vmatpush1.bf16.msra.mxu0 %v1949
    %2707 = vmatprep.subr.bf16.mxu0 %v1958
    %2708 = vmatpush1.bf16.msra.mxu0 %v1957
    %2709 = vmatprep.subr.bf16.mxu0 %v1966
    %2710 = vmatpush1.bf16.msra.mxu0 %v1965
    %2711 = vmatprep.subr.bf16.mxu0 %v1974
    %2712 = vmatpush1.bf16.msra.mxu0 %v1973
    %2713 = vmatprep.subr.bf16.mxu0 %v1982
    %2714 = vmatpush1.bf16.msra.mxu0 %v1981
    %2715 = vmatprep.subr.bf16.mxu0 %v1990
    %2716 = vmatpush1.bf16.msra.mxu0 %v1989
    %2717 = vmatprep.subr.bf16.mxu0 %v1998
    %2718 = vmatpush1.bf16.msra.mxu0 %v1997
    %2719 = vmatprep.subr.bf16.mxu0 %v2006
    %2720 = vmatpush1.bf16.msra.mxu0 %v2005
    %2721 = vmatprep.subr.bf16.mxu0 %v2014
    %2722 = vmatpush1.bf16.msra.mxu0 %v2013
    %2723 = vmatprep.subr.bf16.mxu0 %v2022
    %2724 = vmatpush1.bf16.msra.mxu0 %v2021
    %2725 = vmatprep.subr.bf16.mxu0 %v2030
    %2726 = vmatpush1.bf16.msra.mxu0 %v2029
    %2727 = vmatprep.subr.bf16.mxu0 %v2038
    %2728 = vmatpush1.bf16.msra.mxu0 %v2037
    %2729 = vmatprep.subr.bf16.mxu0 %v2046
    %2730 = vmatpush1.bf16.msra.mxu0 %v2045
    %2731 = vmatprep.subr.bf16.mxu0 %v2054
    %2732 = vmatpush1.bf16.msra.mxu0 %v2053
    %2733 = vmatprep.mubr.bf16.mxu0 %v311
    %2734 = vmatmul.mubr.bf16.gmra.mrb[0].mxu0 %v310
    %v2735 = vpop.f32.mrb[0].mxu0
    %v2736 = vadd.f32 %v744, %v2735
    %v2737 = vpop.f32.mrb[0].mxu0
    %v2738 = vadd.f32 %v748, %v2737
    %v2739 = vpop.f32.mrb[0].mxu0
    %v2740 = vadd.f32 %v744, %v2739
    %v2741 = vpop.f32.mrb[0].mxu0
    %v2742 = vadd.f32 %v748, %v2741
    %2743 = vdwg.mxu0
    %2744 = vmatprep.subr.bf16.mxu0 %v2062
    %2745 = vmatpush1.bf16.msra.mxu0 %v2061
    %2746 = vmatprep.subr.bf16.mxu0 %v2070
    %2747 = vmatpush1.bf16.msra.mxu0 %v2069
    %2748 = vmatprep.subr.bf16.mxu0 %v2078
    %2749 = vmatpush1.bf16.msra.mxu0 %v2077
    %2750 = vmatprep.subr.bf16.mxu0 %v2086
    %2751 = vmatpush1.bf16.msra.mxu0 %v2085
    %2752 = vmatprep.subr.bf16.mxu0 %v2094
    %2753 = vmatpush1.bf16.msra.mxu0 %v2093
    %2754 = vmatprep.subr.bf16.mxu0 %v2102
    %2755 = vmatpush1.bf16.msra.mxu0 %v2101
    %2756 = vmatprep.subr.bf16.mxu0 %v2110
    %2757 = vmatpush1.bf16.msra.mxu0 %v2109
    %2758 = vmatprep.subr.bf16.mxu0 %v2118
    %2759 = vmatpush1.bf16.msra.mxu0 %v2117
    %2760 = vmatprep.subr.bf16.mxu0 %v2126
    %2761 = vmatpush1.bf16.msra.mxu0 %v2125
    %2762 = vmatprep.subr.bf16.mxu0 %v2134
    %2763 = vmatpush1.bf16.msra.mxu0 %v2133
    %2764 = vmatprep.subr.bf16.mxu0 %v2142
    %2765 = vmatpush1.bf16.msra.mxu0 %v2141
    %2766 = vmatprep.subr.bf16.mxu0 %v2150
    %2767 = vmatpush1.bf16.msra.mxu0 %v2149
    %2768 = vmatprep.subr.bf16.mxu0 %v2158
    %2769 = vmatpush1.bf16.msra.mxu0 %v2157
    %2770 = vmatprep.subr.bf16.mxu0 %v2166
    %2771 = vmatpush1.bf16.msra.mxu0 %v2165
    %2772 = vmatprep.subr.bf16.mxu0 %v2174
    %2773 = vmatpush1.bf16.msra.mxu0 %v2173
    %2774 = vmatprep.subr.bf16.mxu0 %v2182
    %2775 = vmatpush1.bf16.msra.mxu0 %v2181
    %2776 = vmatprep.mubr.bf16.mxu0 %v313
    %2777 = vmatmul.mubr.bf16.gmra.mrb[0].mxu0 %v312
    %v2778 = vpop.f32.mrb[0].mxu0
    %v2779 = vadd.f32 %v2736, %v2778
    %v2780 = vpop.f32.mrb[0].mxu0
    %v2781 = vadd.f32 %v2738, %v2780
    %v2782 = vpop.f32.mrb[0].mxu0
    %v2783 = vadd.f32 %v2740, %v2782
    %v2784 = vpop.f32.mrb[0].mxu0
    %v2785 = vadd.f32 %v2742, %v2784
    %2786 = vdwg.mxu0
    %2787 = vmatprep.subr.bf16.mxu0 %v2190
    %2788 = vmatpush1.bf16.msra.mxu0 %v2189
    %2789 = vmatprep.subr.bf16.mxu0 %v2198
    %2790 = vmatpush1.bf16.msra.mxu0 %v2197
    %2791 = vmatprep.subr.bf16.mxu0 %v2206
    %2792 = vmatpush1.bf16.msra.mxu0 %v2205
    %2793 = vmatprep.subr.bf16.mxu0 %v2214
    %2794 = vmatpush1.bf16.msra.mxu0 %v2213
    %2795 = vmatprep.subr.bf16.mxu0 %v2222
    %2796 = vmatpush1.bf16.msra.mxu0 %v2221
    %2797 = vmatprep.subr.bf16.mxu0 %v2230
    %2798 = vmatpush1.bf16.msra.mxu0 %v2229
    %2799 = vmatprep.subr.bf16.mxu0 %v2238
    %2800 = vmatpush1.bf16.msra.mxu0 %v2237
    %2801 = vmatprep.subr.bf16.mxu0 %v2246
    %2802 = vmatpush1.bf16.msra.mxu0 %v2245
    %2803 = vmatprep.subr.bf16.mxu0 %v2254
    %2804 = vmatpush1.bf16.msra.mxu0 %v2253
    %2805 = vmatprep.subr.bf16.mxu0 %v2262
    %2806 = vmatpush1.bf16.msra.mxu0 %v2261
    %2807 = vmatprep.subr.bf16.mxu0 %v2270
    %2808 = vmatpush1.bf16.msra.mxu0 %v2269
    %2809 = vmatprep.subr.bf16.mxu0 %v2278
    %2810 = vmatpush1.bf16.msra.mxu0 %v2277
    %2811 = vmatprep.subr.bf16.mxu0 %v2286
    %2812 = vmatpush1.bf16.msra.mxu0 %v2285
    %2813 = vmatprep.subr.bf16.mxu0 %v2294
    %2814 = vmatpush1.bf16.msra.mxu0 %v2293
    %2815 = vmatprep.subr.bf16.mxu0 %v2302
    %2816 = vmatpush1.bf16.msra.mxu0 %v2301
    %2817 = vmatprep.subr.bf16.mxu0 %v2310
    %2818 = vmatpush1.bf16.msra.mxu0 %v2309
    %2819 = vmatprep.mubr.bf16.mxu0 %v315
    %2820 = vmatmul.mubr.bf16.gmra.mrb[0].mxu0 %v314
    %v2821 = vpop.f32.mrb[0].mxu0
    %v2822 = vadd.f32 %v2779, %v2821
    %v2823 = vpop.f32.mrb[0].mxu0
    %v2824 = vadd.f32 %v2781, %v2823
    %v2825 = vpop.f32.mrb[0].mxu0
    %v2826 = vadd.f32 %v2783, %v2825
    %v2827 = vpop.f32.mrb[0].mxu0
    %v2828 = vadd.f32 %v2785, %v2827
    %2829 = vdwg.mxu0
    %2830 = vmatprep.subr.bf16.mxu0 %v1936
    %2831 = vmatpush1.bf16.msra.mxu0 %v1935
    %2832 = vmatprep.subr.bf16.mxu0 %v1944
    %2833 = vmatpush1.bf16.msra.mxu0 %v1943
    %2834 = vmatprep.subr.bf16.mxu0 %v1952
    %2835 = vmatpush1.bf16.msra.mxu0 %v1951
    %2836 = vmatprep.subr.bf16.mxu0 %v1960
    %2837 = vmatpush1.bf16.msra.mxu0 %v1959
    %2838 = vmatprep.subr.bf16.mxu0 %v1968
    %2839 = vmatpush1.bf16.msra.mxu0 %v1967
    %2840 = vmatprep.subr.bf16.mxu0 %v1976
    %2841 = vmatpush1.bf16.msra.mxu0 %v1975
    %2842 = vmatprep.subr.bf16.mxu0 %v1984
    %2843 = vmatpush1.bf16.msra.mxu0 %v1983
    %2844 = vmatprep.subr.bf16.mxu0 %v1992
    %2845 = vmatpush1.bf16.msra.mxu0 %v1991
    %2846 = vmatprep.subr.bf16.mxu0 %v2000
    %2847 = vmatpush1.bf16.msra.mxu0 %v1999
    %2848 = vmatprep.subr.bf16.mxu0 %v2008
    %2849 = vmatpush1.bf16.msra.mxu0 %v2007
    %2850 = vmatprep.subr.bf16.mxu0 %v2016
    %2851 = vmatpush1.bf16.msra.mxu0 %v2015
    %2852 = vmatprep.subr.bf16.mxu0 %v2024
    %2853 = vmatpush1.bf16.msra.mxu0 %v2023
    %2854 = vmatprep.subr.bf16.mxu0 %v2032
    %2855 = vmatpush1.bf16.msra.mxu0 %v2031
    %2856 = vmatprep.subr.bf16.mxu0 %v2040
    %2857 = vmatpush1.bf16.msra.mxu0 %v2039
    %2858 = vmatprep.subr.bf16.mxu0 %v2048
    %2859 = vmatpush1.bf16.msra.mxu0 %v2047
    %2860 = vmatprep.subr.bf16.mxu0 %v2056
    %2861 = vmatpush1.bf16.msra.mxu0 %v2055
    %2862 = vmatprep.mubr.bf16.mxu0 %v311
    %2863 = vmatmul.mubr.bf16.gmra.mrb[0].mxu0 %v310
    %v2864 = vpop.f32.mrb[0].mxu0
    %v2865 = vadd.f32 %v752, %v2864
    %v2866 = vpop.f32.mrb[0].mxu0
    %v2867 = vadd.f32 %v756, %v2866
    %v2868 = vpop.f32.mrb[0].mxu0
    %v2869 = vadd.f32 %v752, %v2868
    %v2870 = vpop.f32.mrb[0].mxu0
    %v2871 = vadd.f32 %v756, %v2870
    %2872 = vdwg.mxu0
    %2873 = vmatprep.subr.bf16.mxu0 %v2064
    %2874 = vmatpush1.bf16.msra.mxu0 %v2063
    %2875 = vmatprep.subr.bf16.mxu0 %v2072
    %2876 = vmatpush1.bf16.msra.mxu0 %v2071
    %2877 = vmatprep.subr.bf16.mxu0 %v2080
    %2878 = vmatpush1.bf16.msra.mxu0 %v2079
    %2879 = vmatprep.subr.bf16.mxu0 %v2088
    %2880 = vmatpush1.bf16.msra.mxu0 %v2087
    %2881 = vmatprep.subr.bf16.mxu0 %v2096
    %2882 = vmatpush1.bf16.msra.mxu0 %v2095
    %2883 = vmatprep.subr.bf16.mxu0 %v2104
    %2884 = vmatpush1.bf16.msra.mxu0 %v2103
    %2885 = vmatprep.subr.bf16.mxu0 %v2112
    %2886 = vmatpush1.bf16.msra.mxu0 %v2111
    %2887 = vmatprep.subr.bf16.mxu0 %v2120
    %2888 = vmatpush1.bf16.msra.mxu0 %v2119
    %2889 = vmatprep.subr.bf16.mxu0 %v2128
    %2890 = vmatpush1.bf16.msra.mxu0 %v2127
    %2891 = vmatprep.subr.bf16.mxu0 %v2136
    %2892 = vmatpush1.bf16.msra.mxu0 %v2135
    %2893 = vmatprep.subr.bf16.mxu0 %v2144
    %2894 = vmatpush1.bf16.msra.mxu0 %v2143
    %2895 = vmatprep.subr.bf16.mxu0 %v2152
    %2896 = vmatpush1.bf16.msra.mxu0 %v2151
    %2897 = vmatprep.subr.bf16.mxu0 %v2160
    %2898 = vmatpush1.bf16.msra.mxu0 %v2159
    %2899 = vmatprep.subr.bf16.mxu0 %v2168
    %2900 = vmatpush1.bf16.msra.mxu0 %v2167
    %2901 = vmatprep.subr.bf16.mxu0 %v2176
    %2902 = vmatpush1.bf16.msra.mxu0 %v2175
    %2903 = vmatprep.subr.bf16.mxu0 %v2184
    %2904 = vmatpush1.bf16.msra.mxu0 %v2183
    %2905 = vmatprep.mubr.bf16.mxu0 %v313
    %2906 = vmatmul.mubr.bf16.gmra.mrb[0].mxu0 %v312
    %v2907 = vpop.f32.mrb[0].mxu0
    %v2908 = vadd.f32 %v2865, %v2907
    %v2909 = vpop.f32.mrb[0].mxu0
    %v2910 = vadd.f32 %v2867, %v2909
    %v2911 = vpop.f32.mrb[0].mxu0
    %v2912 = vadd.f32 %v2869, %v2911
    %v2913 = vpop.f32.mrb[0].mxu0
    %v2914 = vadd.f32 %v2871, %v2913
    %2915 = vdwg.mxu0
    %2916 = vmatprep.subr.bf16.mxu0 %v2192
    %2917 = vmatpush1.bf16.msra.mxu0 %v2191
    %2918 = vmatprep.subr.bf16.mxu0 %v2200
    %2919 = vmatpush1.bf16.msra.mxu0 %v2199
    %2920 = vmatprep.subr.bf16.mxu0 %v2208
    %2921 = vmatpush1.bf16.msra.mxu0 %v2207
    %2922 = vmatprep.subr.bf16.mxu0 %v2216
    %2923 = vmatpush1.bf16.msra.mxu0 %v2215
    %2924 = vmatprep.subr.bf16.mxu0 %v2224
    %2925 = vmatpush1.bf16.msra.mxu0 %v2223
    %2926 = vmatprep.subr.bf16.mxu0 %v2232
    %2927 = vmatpush1.bf16.msra.mxu0 %v2231
    %2928 = vmatprep.subr.bf16.mxu0 %v2240
    %2929 = vmatpush1.bf16.msra.mxu0 %v2239
    %2930 = vmatprep.subr.bf16.mxu0 %v2248
    %2931 = vmatpush1.bf16.msra.mxu0 %v2247
    %2932 = vmatprep.subr.bf16.mxu0 %v2256
    %2933 = vmatpush1.bf16.msra.mxu0 %v2255
    %2934 = vmatprep.subr.bf16.mxu0 %v2264
    %2935 = vmatpush1.bf16.msra.mxu0 %v2263
    %2936 = vmatprep.subr.bf16.mxu0 %v2272
    %2937 = vmatpush1.bf16.msra.mxu0 %v2271
    %2938 = vmatprep.subr.bf16.mxu0 %v2280
    %2939 = vmatpush1.bf16.msra.mxu0 %v2279
    %2940 = vmatprep.subr.bf16.mxu0 %v2288
    %2941 = vmatpush1.bf16.msra.mxu0 %v2287
    %2942 = vmatprep.subr.bf16.mxu0 %v2296
    %2943 = vmatpush1.bf16.msra.mxu0 %v2295
    %2944 = vmatprep.subr.bf16.mxu0 %v2304
    %2945 = vmatpush1.bf16.msra.mxu0 %v2303
    %2946 = vmatprep.subr.bf16.mxu0 %v2312
    %2947 = vmatpush1.bf16.msra.mxu0 %v2311
    %2948 = vmatprep.mubr.bf16.mxu0 %v315
    %2949 = vmatmul.mubr.bf16.gmra.mrb[0].mxu0 %v314
    %v2950 = vpop.f32.mrb[0].mxu0
    %v2951 = vadd.f32 %v2908, %v2950
    %v2952 = vpop.f32.mrb[0].mxu0
    %v2953 = vadd.f32 %v2910, %v2952
    %v2954 = vpop.f32.mrb[0].mxu0
    %v2955 = vadd.f32 %v2912, %v2954
    %v2956 = vpop.f32.mrb[0].mxu0
    %v2957 = vadd.f32 %v2914, %v2956
    %2958 = vdwg.mxu0
    %2959 = vmatprep.subr.bf16.mxu0 %v1938
    %2960 = vmatpush1.bf16.msra.mxu0 %v1937
    %2961 = vmatprep.subr.bf16.mxu0 %v1946
    %2962 = vmatpush1.bf16.msra.mxu0 %v1945
    %2963 = vmatprep.subr.bf16.mxu0 %v1954
    %2964 = vmatpush1.bf16.msra.mxu0 %v1953
    %2965 = vmatprep.subr.bf16.mxu0 %v1962
    %2966 = vmatpush1.bf16.msra.mxu0 %v1961
    %2967 = vmatprep.subr.bf16.mxu0 %v1970
    %2968 = vmatpush1.bf16.msra.mxu0 %v1969
    %2969 = vmatprep.subr.bf16.mxu0 %v1978
    %2970 = vmatpush1.bf16.msra.mxu0 %v1977
    %2971 = vmatprep.subr.bf16.mxu0 %v1986
    %2972 = vmatpush1.bf16.msra.mxu0 %v1985
    %2973 = vmatprep.subr.bf16.mxu0 %v1994
    %2974 = vmatpush1.bf16.msra.mxu0 %v1993
    %2975 = vmatprep.subr.bf16.mxu0 %v2002
    %2976 = vmatpush1.bf16.msra.mxu0 %v2001
    %2977 = vmatprep.subr.bf16.mxu0 %v2010
    %2978 = vmatpush1.bf16.msra.mxu0 %v2009
    %2979 = vmatprep.subr.bf16.mxu0 %v2018
    %2980 = vmatpush1.bf16.msra.mxu0 %v2017
    %2981 = vmatprep.subr.bf16.mxu0 %v2026
    %2982 = vmatpush1.bf16.msra.mxu0 %v2025
    %2983 = vmatprep.subr.bf16.mxu0 %v2034
    %2984 = vmatpush1.bf16.msra.mxu0 %v2033
    %2985 = vmatprep.subr.bf16.mxu0 %v2042
    %2986 = vmatpush1.bf16.msra.mxu0 %v2041
    %2987 = vmatprep.subr.bf16.mxu0 %v2050
    %2988 = vmatpush1.bf16.msra.mxu0 %v2049
    %2989 = vmatprep.subr.bf16.mxu0 %v2058
    %2990 = vmatpush1.bf16.msra.mxu0 %v2057
    %2991 = vmatprep.mubr.bf16.mxu0 %v311
    %2992 = vmatmul.mubr.bf16.gmra.mrb[0].mxu0 %v310
    %v2993 = vpop.f32.mrb[0].mxu0
    %v2994 = vadd.f32 %v760, %v2993
    %v2995 = vpop.f32.mrb[0].mxu0
    %v2996 = vadd.f32 %v764, %v2995
    %v2997 = vpop.f32.mrb[0].mxu0
    %v2998 = vadd.f32 %v760, %v2997
    %v2999 = vpop.f32.mrb[0].mxu0
    %v3000 = vadd.f32 %v764, %v2999
    %3001 = vdwg.mxu0
    %3002 = vmatprep.subr.bf16.mxu0 %v2066
    %3003 = vmatpush1.bf16.msra.mxu0 %v2065
    %3004 = vmatprep.subr.bf16.mxu0 %v2074
    %3005 = vmatpush1.bf16.msra.mxu0 %v2073
    %3006 = vmatprep.subr.bf16.mxu0 %v2082
    %3007 = vmatpush1.bf16.msra.mxu0 %v2081
    %3008 = vmatprep.subr.bf16.mxu0 %v2090
    %3009 = vmatpush1.bf16.msra.mxu0 %v2089
    %3010 = vmatprep.subr.bf16.mxu0 %v2098
    %3011 = vmatpush1.bf16.msra.mxu0 %v2097
    %3012 = vmatprep.subr.bf16.mxu0 %v2106
    %3013 = vmatpush1.bf16.msra.mxu0 %v2105
    %3014 = vmatprep.subr.bf16.mxu0 %v2114
    %3015 = vmatpush1.bf16.msra.mxu0 %v2113
    %3016 = vmatprep.subr.bf16.mxu0 %v2122
    %3017 = vmatpush1.bf16.msra.mxu0 %v2121
    %3018 = vmatprep.subr.bf16.mxu0 %v2130
    %3019 = vmatpush1.bf16.msra.mxu0 %v2129
    %3020 = vmatprep.subr.bf16.mxu0 %v2138
    %3021 = vmatpush1.bf16.msra.mxu0 %v2137
    %3022 = vmatprep.subr.bf16.mxu0 %v2146
    %3023 = vmatpush1.bf16.msra.mxu0 %v2145
    %3024 = vmatprep.subr.bf16.mxu0 %v2154
    %3025 = vmatpush1.bf16.msra.mxu0 %v2153
    %3026 = vmatprep.subr.bf16.mxu0 %v2162
    %3027 = vmatpush1.bf16.msra.mxu0 %v2161
    %3028 = vmatprep.subr.bf16.mxu0 %v2170
    %3029 = vmatpush1.bf16.msra.mxu0 %v2169
    %3030 = vmatprep.subr.bf16.mxu0 %v2178
    %3031 = vmatpush1.bf16.msra.mxu0 %v2177
    %3032 = vmatprep.subr.bf16.mxu0 %v2186
    %3033 = vmatpush1.bf16.msra.mxu0 %v2185
    %3034 = vmatprep.mubr.bf16.mxu0 %v313
    %3035 = vmatmul.mubr.bf16.gmra.mrb[0].mxu0 %v312
    %v3036 = vpop.f32.mrb[0].mxu0
    %v3037 = vadd.f32 %v2994, %v3036
    %v3038 = vpop.f32.mrb[0].mxu0
    %v3039 = vadd.f32 %v2996, %v3038
    %v3040 = vpop.f32.mrb[0].mxu0
    %v3041 = vadd.f32 %v2998, %v3040
    %v3042 = vpop.f32.mrb[0].mxu0
    %v3043 = vadd.f32 %v3000, %v3042
    %3044 = vdwg.mxu0
    %3045 = vmatprep.subr.bf16.mxu0 %v2194
    %3046 = vmatpush1.bf16.msra.mxu0 %v2193
    %3047 = vmatprep.subr.bf16.mxu0 %v2202
    %3048 = vmatpush1.bf16.msra.mxu0 %v2201
    %3049 = vmatprep.subr.bf16.mxu0 %v2210
    %3050 = vmatpush1.bf16.msra.mxu0 %v2209
    %3051 = vmatprep.subr.bf16.mxu0 %v2218
    %3052 = vmatpush1.bf16.msra.mxu0 %v2217
    %3053 = vmatprep.subr.bf16.mxu0 %v2226
    %3054 = vmatpush1.bf16.msra.mxu0 %v2225
    %3055 = vmatprep.subr.bf16.mxu0 %v2234
    %3056 = vmatpush1.bf16.msra.mxu0 %v2233
    %3057 = vmatprep.subr.bf16.mxu0 %v2242
    %3058 = vmatpush1.bf16.msra.mxu0 %v2241
    %3059 = vmatprep.subr.bf16.mxu0 %v2250
    %3060 = vmatpush1.bf16.msra.mxu0 %v2249
    %3061 = vmatprep.subr.bf16.mxu0 %v2258
    %3062 = vmatpush1.bf16.msra.mxu0 %v2257
    %3063 = vmatprep.subr.bf16.mxu0 %v2266
    %3064 = vmatpush1.bf16.msra.mxu0 %v2265
    %3065 = vmatprep.subr.bf16.mxu0 %v2274
    %3066 = vmatpush1.bf16.msra.mxu0 %v2273
    %3067 = vmatprep.subr.bf16.mxu0 %v2282
    %3068 = vmatpush1.bf16.msra.mxu0 %v2281
    %3069 = vmatprep.subr.bf16.mxu0 %v2290
    %3070 = vmatpush1.bf16.msra.mxu0 %v2289
    %3071 = vmatprep.subr.bf16.mxu0 %v2298
    %3072 = vmatpush1.bf16.msra.mxu0 %v2297
    %3073 = vmatprep.subr.bf16.mxu0 %v2306
    %3074 = vmatpush1.bf16.msra.mxu0 %v2305
    %3075 = vmatprep.subr.bf16.mxu0 %v2314
    %3076 = vmatpush1.bf16.msra.mxu0 %v2313
    %3077 = vmatprep.mubr.bf16.mxu0 %v315
    %3078 = vmatmul.mubr.bf16.gmra.mrb[0].mxu0 %v314
    %v3079 = vpop.f32.mrb[0].mxu0
    %v3080 = vadd.f32 %v3037, %v3079
    %v3081 = vpop.f32.mrb[0].mxu0
    %v3082 = vadd.f32 %v3039, %v3081
    %v3083 = vpop.f32.mrb[0].mxu0
    %v3084 = vadd.f32 %v3041, %v3083
    %v3085 = vpop.f32.mrb[0].mxu0
    %v3086 = vadd.f32 %v3043, %v3085
    %3087 = vdwg.mxu0
    %3088 = vmatprep.subr.bf16.mxu0 %v1940
    %3089 = vmatpush1.bf16.msra.mxu0 %v1939
    %3090 = vmatprep.subr.bf16.mxu0 %v1948
    %3091 = vmatpush1.bf16.msra.mxu0 %v1947
    %3092 = vmatprep.subr.bf16.mxu0 %v1956
    %3093 = vmatpush1.bf16.msra.mxu0 %v1955
    %3094 = vmatprep.subr.bf16.mxu0 %v1964
    %3095 = vmatpush1.bf16.msra.mxu0 %v1963
    %3096 = vmatprep.subr.bf16.mxu0 %v1972
    %3097 = vmatpush1.bf16.msra.mxu0 %v1971
    %3098 = vmatprep.subr.bf16.mxu0 %v1980
    %3099 = vmatpush1.bf16.msra.mxu0 %v1979
    %3100 = vmatprep.subr.bf16.mxu0 %v1988
    %3101 = vmatpush1.bf16.msra.mxu0 %v1987
    %3102 = vmatprep.subr.bf16.mxu0 %v1996
    %3103 = vmatpush1.bf16.msra.mxu0 %v1995
    %3104 = vmatprep.subr.bf16.mxu0 %v2004
    %3105 = vmatpush1.bf16.msra.mxu0 %v2003
    %3106 = vmatprep.subr.bf16.mxu0 %v2012
    %3107 = vmatpush1.bf16.msra.mxu0 %v2011
    %3108 = vmatprep.subr.bf16.mxu0 %v2020
    %3109 = vmatpush1.bf16.msra.mxu0 %v2019
    %3110 = vmatprep.subr.bf16.mxu0 %v2028
    %3111 = vmatpush1.bf16.msra.mxu0 %v2027
    %3112 = vmatprep.subr.bf16.mxu0 %v2036
    %3113 = vmatpush1.bf16.msra.mxu0 %v2035
    %3114 = vmatprep.subr.bf16.mxu0 %v2044
    %3115 = vmatpush1.bf16.msra.mxu0 %v2043
    %3116 = vmatprep.subr.bf16.mxu0 %v2052
    %3117 = vmatpush1.bf16.msra.mxu0 %v2051
    %3118 = vmatprep.subr.bf16.mxu0 %v2060
    %3119 = vmatpush1.bf16.msra.mxu0 %v2059
    %3120 = vmatprep.mubr.bf16.mxu0 %v311
    %3121 = vmatmul.mubr.bf16.gmra.mrb[0].mxu0 %v310
    %v3122 = vpop.f32.mrb[0].mxu0
    %v3123 = vadd.f32 %v768, %v3122
    %v3124 = vpop.f32.mrb[0].mxu0
    %v3125 = vadd.f32 %v772, %v3124
    %v3126 = vpop.f32.mrb[0].mxu0
    %v3127 = vadd.f32 %v768, %v3126
    %v3128 = vpop.f32.mrb[0].mxu0
    %v3129 = vadd.f32 %v772, %v3128
    %3130 = vdwg.mxu0
    %3131 = vmatprep.subr.bf16.mxu0 %v2068
    %3132 = vmatpush1.bf16.msra.mxu0 %v2067
    %3133 = vmatprep.subr.bf16.mxu0 %v2076
    %3134 = vmatpush1.bf16.msra.mxu0 %v2075
    %3135 = vmatprep.subr.bf16.mxu0 %v2084
    %3136 = vmatpush1.bf16.msra.mxu0 %v2083
    %3137 = vmatprep.subr.bf16.mxu0 %v2092
    %3138 = vmatpush1.bf16.msra.mxu0 %v2091
    %3139 = vmatprep.subr.bf16.mxu0 %v2100
    %3140 = vmatpush1.bf16.msra.mxu0 %v2099
    %3141 = vmatprep.subr.bf16.mxu0 %v2108
    %3142 = vmatpush1.bf16.msra.mxu0 %v2107
    %3143 = vmatprep.subr.bf16.mxu0 %v2116
    %3144 = vmatpush1.bf16.msra.mxu0 %v2115
    %3145 = vmatprep.subr.bf16.mxu0 %v2124
    %3146 = vmatpush1.bf16.msra.mxu0 %v2123
    %3147 = vmatprep.subr.bf16.mxu0 %v2132
    %3148 = vmatpush1.bf16.msra.mxu0 %v2131
    %3149 = vmatprep.subr.bf16.mxu0 %v2140
    %3150 = vmatpush1.bf16.msra.mxu0 %v2139
    %3151 = vmatprep.subr.bf16.mxu0 %v2148
    %3152 = vmatpush1.bf16.msra.mxu0 %v2147
    %3153 = vmatprep.subr.bf16.mxu0 %v2156
    %3154 = vmatpush1.bf16.msra.mxu0 %v2155
    %3155 = vmatprep.subr.bf16.mxu0 %v2164
    %3156 = vmatpush1.bf16.msra.mxu0 %v2163
    %3157 = vmatprep.subr.bf16.mxu0 %v2172
    %3158 = vmatpush1.bf16.msra.mxu0 %v2171
    %3159 = vmatprep.subr.bf16.mxu0 %v2180
    %3160 = vmatpush1.bf16.msra.mxu0 %v2179
    %3161 = vmatprep.subr.bf16.mxu0 %v2188
    %3162 = vmatpush1.bf16.msra.mxu0 %v2187
    %3163 = vmatprep.mubr.bf16.mxu0 %v313
    %3164 = vmatmul.mubr.bf16.gmra.mrb[0].mxu0 %v312
    %v3165 = vpop.f32.mrb[0].mxu0
    %v3166 = vadd.f32 %v3123, %v3165
    %v3167 = vpop.f32.mrb[0].mxu0
    %v3168 = vadd.f32 %v3125, %v3167
    %v3169 = vpop.f32.mrb[0].mxu0
    %v3170 = vadd.f32 %v3127, %v3169
    %v3171 = vpop.f32.mrb[0].mxu0
    %v3172 = vadd.f32 %v3129, %v3171
    %3173 = vdwg.mxu0
    %3174 = vmatprep.subr.bf16.mxu0 %v2196
    %3175 = vmatpush1.bf16.msra.mxu0 %v2195
    %3176 = vmatprep.subr.bf16.mxu0 %v2204
    %3177 = vmatpush1.bf16.msra.mxu0 %v2203
    %3178 = vmatprep.subr.bf16.mxu0 %v2212
    %3179 = vmatpush1.bf16.msra.mxu0 %v2211
    %3180 = vmatprep.subr.bf16.mxu0 %v2220
    %3181 = vmatpush1.bf16.msra.mxu0 %v2219
    %3182 = vmatprep.subr.bf16.mxu0 %v2228
    %3183 = vmatpush1.bf16.msra.mxu0 %v2227
    %3184 = vmatprep.subr.bf16.mxu0 %v2236
    %3185 = vmatpush1.bf16.msra.mxu0 %v2235
    %3186 = vmatprep.subr.bf16.mxu0 %v2244
    %3187 = vmatpush1.bf16.msra.mxu0 %v2243
    %3188 = vmatprep.subr.bf16.mxu0 %v2252
    %3189 = vmatpush1.bf16.msra.mxu0 %v2251
    %3190 = vmatprep.subr.bf16.mxu0 %v2260
    %3191 = vmatpush1.bf16.msra.mxu0 %v2259
    %3192 = vmatprep.subr.bf16.mxu0 %v2268
    %3193 = vmatpush1.bf16.msra.mxu0 %v2267
    %3194 = vmatprep.subr.bf16.mxu0 %v2276
    %3195 = vmatpush1.bf16.msra.mxu0 %v2275
    %3196 = vmatprep.subr.bf16.mxu0 %v2284
    %3197 = vmatpush1.bf16.msra.mxu0 %v2283
    %3198 = vmatprep.subr.bf16.mxu0 %v2292
    %3199 = vmatpush1.bf16.msra.mxu0 %v2291
    %3200 = vmatprep.subr.bf16.mxu0 %v2300
    %3201 = vmatpush1.bf16.msra.mxu0 %v2299
    %3202 = vmatprep.subr.bf16.mxu0 %v2308
    %3203 = vmatpush1.bf16.msra.mxu0 %v2307
    %3204 = vmatprep.subr.bf16.mxu0 %v2316
    %3205 = vmatpush1.bf16.msra.mxu0 %v2315
    %3206 = vmatprep.mubr.bf16.mxu0 %v315
    %3207 = vmatmul.mubr.bf16.gmra.mrb[0].mxu0 %v314
    %v3208 = vpop.f32.mrb[0].mxu0
    %v3209 = vadd.f32 %v3166, %v3208
    %v3210 = vpop.f32.mrb[0].mxu0
    %v3211 = vadd.f32 %v3168, %v3210
    %v3212 = vpop.f32.mrb[0].mxu0
    %v3213 = vadd.f32 %v3170, %v3212
    %v3214 = vpop.f32.mrb[0].mxu0
    %v3215 = vadd.f32 %v3172, %v3214
    %3216 = vdwg.mxu0
    %v3217 = vld [vmem:[#allocation13] sm:$0xff]
    %v3218 = vld [vmem:[#allocation13 + $0x8] sm:$0xff]
    %v3219 = vld [vmem:[#allocation13 + $0x10] sm:$0xff]
    %v3220 = vld [vmem:[#allocation13 + $0x18] sm:$0xff]
    %v3221 = vld [vmem:[#allocation13 + $0x20] sm:$0xff]
    %v3222 = vld [vmem:[#allocation13 + $0x28] sm:$0xff]
    %v3223 = vld [vmem:[#allocation13 + $0x30] sm:$0xff]
    %v3224 = vld [vmem:[#allocation13 + $0x38] sm:$0xff]
    %v3225 = vld [vmem:[#allocation13 + $0x40] sm:$0xff]
    %v3226 = vld [vmem:[#allocation13 + $0x48] sm:$0xff]
    %v3227 = vld [vmem:[#allocation13 + $0x50] sm:$0xff]
    %v3228 = vld [vmem:[#allocation13 + $0x58] sm:$0xff]
    %v3229 = vld [vmem:[#allocation13 + $0x60] sm:$0xff]
    %v3230 = vld [vmem:[#allocation13 + $0x68] sm:$0xff]
    %v3231 = vld [vmem:[#allocation13 + $0x70] sm:$0xff]
    %v3232 = vld [vmem:[#allocation13 + $0x78] sm:$0xff]
    %v3233 = vld [vmem:[#allocation13 + $0x80] sm:$0xff]
    %v3234 = vld [vmem:[#allocation13 + $0x88] sm:$0xff]
    %v3235 = vld [vmem:[#allocation13 + $0x90] sm:$0xff]
    %v3236 = vld [vmem:[#allocation13 + $0x98] sm:$0xff]
    %v3237 = vld [vmem:[#allocation13 + $0xa0] sm:$0xff]
    %v3238 = vld [vmem:[#allocation13 + $0xa8] sm:$0xff]
    %v3239 = vld [vmem:[#allocation13 + $0xb0] sm:$0xff]
    %v3240 = vld [vmem:[#allocation13 + $0xb8] sm:$0xff]
    %v3241 = vld [vmem:[#allocation13 + $0xc0] sm:$0xff]
    %v3242 = vld [vmem:[#allocation13 + $0xc8] sm:$0xff]
    %v3243 = vld [vmem:[#allocation13 + $0xd0] sm:$0xff]
    %v3244 = vld [vmem:[#allocation13 + $0xd8] sm:$0xff]
    %v3245 = vld [vmem:[#allocation13 + $0xe0] sm:$0xff]
    %v3246 = vld [vmem:[#allocation13 + $0xe8] sm:$0xff]
    %v3247 = vld [vmem:[#allocation13 + $0xf0] sm:$0xff]
    %v3248 = vld [vmem:[#allocation13 + $0xf8] sm:$0xff]
    %v3249 = vld [vmem:[#allocation13 + $0x100] sm:$0xff]
    %v3250 = vld [vmem:[#allocation13 + $0x108] sm:$0xff]
    %v3251 = vld [vmem:[#allocation13 + $0x110] sm:$0xff]
    %v3252 = vld [vmem:[#allocation13 + $0x118] sm:$0xff]
    %v3253 = vld [vmem:[#allocation13 + $0x120] sm:$0xff]
    %v3254 = vld [vmem:[#allocation13 + $0x128] sm:$0xff]
    %v3255 = vld [vmem:[#allocation13 + $0x130] sm:$0xff]
    %v3256 = vld [vmem:[#allocation13 + $0x138] sm:$0xff]
    %v3257 = vld [vmem:[#allocation13 + $0x140] sm:$0xff]
    %v3258 = vld [vmem:[#allocation13 + $0x148] sm:$0xff]
    %v3259 = vld [vmem:[#allocation13 + $0x150] sm:$0xff]
    %v3260 = vld [vmem:[#allocation13 + $0x158] sm:$0xff]
    %v3261 = vld [vmem:[#allocation13 + $0x160] sm:$0xff]
    %v3262 = vld [vmem:[#allocation13 + $0x168] sm:$0xff]
    %v3263 = vld [vmem:[#allocation13 + $0x170] sm:$0xff]
    %v3264 = vld [vmem:[#allocation13 + $0x178] sm:$0xff]
    %v3265 = vld [vmem:[#allocation13 + $0x180] sm:$0xff]
    %v3266 = vld [vmem:[#allocation13 + $0x188] sm:$0xff]
    %v3267 = vld [vmem:[#allocation13 + $0x190] sm:$0xff]
    %v3268 = vld [vmem:[#allocation13 + $0x198] sm:$0xff]
    %v3269 = vld [vmem:[#allocation13 + $0x1a0] sm:$0xff]
    %v3270 = vld [vmem:[#allocation13 + $0x1a8] sm:$0xff]
    %v3271 = vld [vmem:[#allocation13 + $0x1b0] sm:$0xff]
    %v3272 = vld [vmem:[#allocation13 + $0x1b8] sm:$0xff]
    %v3273 = vld [vmem:[#allocation13 + $0x1c0] sm:$0xff]
    %v3274 = vld [vmem:[#allocation13 + $0x1c8] sm:$0xff]
    %v3275 = vld [vmem:[#allocation13 + $0x1d0] sm:$0xff]
    %v3276 = vld [vmem:[#allocation13 + $0x1d8] sm:$0xff]
    %v3277 = vld [vmem:[#allocation13 + $0x1e0] sm:$0xff]
    %v3278 = vld [vmem:[#allocation13 + $0x1e8] sm:$0xff]
    %v3279 = vld [vmem:[#allocation13 + $0x1f0] sm:$0xff]
    %v3280 = vld [vmem:[#allocation13 + $0x1f8] sm:$0xff]
    %v3281 = vld [vmem:[#allocation13 + $0x200] sm:$0xff]
    %v3282 = vld [vmem:[#allocation13 + $0x208] sm:$0xff]
    %v3283 = vld [vmem:[#allocation13 + $0x210] sm:$0xff]
    %v3284 = vld [vmem:[#allocation13 + $0x218] sm:$0xff]
    %v3285 = vld [vmem:[#allocation13 + $0x220] sm:$0xff]
    %v3286 = vld [vmem:[#allocation13 + $0x228] sm:$0xff]
    %v3287 = vld [vmem:[#allocation13 + $0x230] sm:$0xff]
    %v3288 = vld [vmem:[#allocation13 + $0x238] sm:$0xff]
    %v3289 = vld [vmem:[#allocation13 + $0x240] sm:$0xff]
    %v3290 = vld [vmem:[#allocation13 + $0x248] sm:$0xff]
    %v3291 = vld [vmem:[#allocation13 + $0x250] sm:$0xff]
    %v3292 = vld [vmem:[#allocation13 + $0x258] sm:$0xff]
    %v3293 = vld [vmem:[#allocation13 + $0x260] sm:$0xff]
    %v3294 = vld [vmem:[#allocation13 + $0x268] sm:$0xff]
    %v3295 = vld [vmem:[#allocation13 + $0x270] sm:$0xff]
    %v3296 = vld [vmem:[#allocation13 + $0x278] sm:$0xff]
    %v3297 = vld [vmem:[#allocation13 + $0x280] sm:$0xff]
    %v3298 = vld [vmem:[#allocation13 + $0x288] sm:$0xff]
    %v3299 = vld [vmem:[#allocation13 + $0x290] sm:$0xff]
    %v3300 = vld [vmem:[#allocation13 + $0x298] sm:$0xff]
    %v3301 = vld [vmem:[#allocation13 + $0x2a0] sm:$0xff]
    %v3302 = vld [vmem:[#allocation13 + $0x2a8] sm:$0xff]
    %v3303 = vld [vmem:[#allocation13 + $0x2b0] sm:$0xff]
    %v3304 = vld [vmem:[#allocation13 + $0x2b8] sm:$0xff]
    %v3305 = vld [vmem:[#allocation13 + $0x2c0] sm:$0xff]
    %v3306 = vld [vmem:[#allocation13 + $0x2c8] sm:$0xff]
    %v3307 = vld [vmem:[#allocation13 + $0x2d0] sm:$0xff]
    %v3308 = vld [vmem:[#allocation13 + $0x2d8] sm:$0xff]
    %v3309 = vld [vmem:[#allocation13 + $0x2e0] sm:$0xff]
    %v3310 = vld [vmem:[#allocation13 + $0x2e8] sm:$0xff]
    %v3311 = vld [vmem:[#allocation13 + $0x2f0] sm:$0xff]
    %v3312 = vld [vmem:[#allocation13 + $0x2f8] sm:$0xff]
    %v3313 = vld [vmem:[#allocation13 + $0x300] sm:$0xff]
    %v3314 = vld [vmem:[#allocation13 + $0x308] sm:$0xff]
    %v3315 = vld [vmem:[#allocation13 + $0x310] sm:$0xff]
    %v3316 = vld [vmem:[#allocation13 + $0x318] sm:$0xff]
    %v3317 = vld [vmem:[#allocation13 + $0x320] sm:$0xff]
    %v3318 = vld [vmem:[#allocation13 + $0x328] sm:$0xff]
    %v3319 = vld [vmem:[#allocation13 + $0x330] sm:$0xff]
    %v3320 = vld [vmem:[#allocation13 + $0x338] sm:$0xff]
    %v3321 = vld [vmem:[#allocation13 + $0x340] sm:$0xff]
    %v3322 = vld [vmem:[#allocation13 + $0x348] sm:$0xff]
    %v3323 = vld [vmem:[#allocation13 + $0x350] sm:$0xff]
    %v3324 = vld [vmem:[#allocation13 + $0x358] sm:$0xff]
    %v3325 = vld [vmem:[#allocation13 + $0x360] sm:$0xff]
    %v3326 = vld [vmem:[#allocation13 + $0x368] sm:$0xff]
    %v3327 = vld [vmem:[#allocation13 + $0x370] sm:$0xff]
    %v3328 = vld [vmem:[#allocation13 + $0x378] sm:$0xff]
    %v3329 = vld [vmem:[#allocation13 + $0x380] sm:$0xff]
    %v3330 = vld [vmem:[#allocation13 + $0x388] sm:$0xff]
    %v3331 = vld [vmem:[#allocation13 + $0x390] sm:$0xff]
    %v3332 = vld [vmem:[#allocation13 + $0x398] sm:$0xff]
    %v3333 = vld [vmem:[#allocation13 + $0x3a0] sm:$0xff]
    %v3334 = vld [vmem:[#allocation13 + $0x3a8] sm:$0xff]
    %v3335 = vld [vmem:[#allocation13 + $0x3b0] sm:$0xff]
    %v3336 = vld [vmem:[#allocation13 + $0x3b8] sm:$0xff]
    %v3337 = vld [vmem:[#allocation13 + $0x3c0] sm:$0xff]
    %v3338 = vld [vmem:[#allocation13 + $0x3c8] sm:$0xff]
    %v3339 = vld [vmem:[#allocation13 + $0x3d0] sm:$0xff]
    %v3340 = vld [vmem:[#allocation13 + $0x3d8] sm:$0xff]
    %v3341 = vld [vmem:[#allocation13 + $0x3e0] sm:$0xff]
    %v3342 = vld [vmem:[#allocation13 + $0x3e8] sm:$0xff]
    %v3343 = vld [vmem:[#allocation13 + $0x3f0] sm:$0xff]
    %v3344 = vld [vmem:[#allocation13 + $0x3f8] sm:$0xff]
    %v3345 = vld [vmem:[#allocation13 + $0x400] sm:$0xff]
    %v3346 = vld [vmem:[#allocation13 + $0x408] sm:$0xff]
    %v3347 = vld [vmem:[#allocation13 + $0x410] sm:$0xff]
    %v3348 = vld [vmem:[#allocation13 + $0x418] sm:$0xff]
    %v3349 = vld [vmem:[#allocation13 + $0x420] sm:$0xff]
    %v3350 = vld [vmem:[#allocation13 + $0x428] sm:$0xff]
    %v3351 = vld [vmem:[#allocation13 + $0x430] sm:$0xff]
    %v3352 = vld [vmem:[#allocation13 + $0x438] sm:$0xff]
    %v3353 = vld [vmem:[#allocation13 + $0x440] sm:$0xff]
    %v3354 = vld [vmem:[#allocation13 + $0x448] sm:$0xff]
    %v3355 = vld [vmem:[#allocation13 + $0x450] sm:$0xff]
    %v3356 = vld [vmem:[#allocation13 + $0x458] sm:$0xff]
    %v3357 = vld [vmem:[#allocation13 + $0x460] sm:$0xff]
    %v3358 = vld [vmem:[#allocation13 + $0x468] sm:$0xff]
    %v3359 = vld [vmem:[#allocation13 + $0x470] sm:$0xff]
    %v3360 = vld [vmem:[#allocation13 + $0x478] sm:$0xff]
    %v3361 = vld [vmem:[#allocation13 + $0x480] sm:$0xff]
    %v3362 = vld [vmem:[#allocation13 + $0x488] sm:$0xff]
    %v3363 = vld [vmem:[#allocation13 + $0x490] sm:$0xff]
    %v3364 = vld [vmem:[#allocation13 + $0x498] sm:$0xff]
    %v3365 = vld [vmem:[#allocation13 + $0x4a0] sm:$0xff]
    %v3366 = vld [vmem:[#allocation13 + $0x4a8] sm:$0xff]
    %v3367 = vld [vmem:[#allocation13 + $0x4b0] sm:$0xff]
    %v3368 = vld [vmem:[#allocation13 + $0x4b8] sm:$0xff]
    %v3369 = vld [vmem:[#allocation13 + $0x4c0] sm:$0xff]
    %v3370 = vld [vmem:[#allocation13 + $0x4c8] sm:$0xff]
    %v3371 = vld [vmem:[#allocation13 + $0x4d0] sm:$0xff]
    %v3372 = vld [vmem:[#allocation13 + $0x4d8] sm:$0xff]
    %v3373 = vld [vmem:[#allocation13 + $0x4e0] sm:$0xff]
    %v3374 = vld [vmem:[#allocation13 + $0x4e8] sm:$0xff]
    %v3375 = vld [vmem:[#allocation13 + $0x4f0] sm:$0xff]
    %v3376 = vld [vmem:[#allocation13 + $0x4f8] sm:$0xff]
    %v3377 = vld [vmem:[#allocation13 + $0x500] sm:$0xff]
    %v3378 = vld [vmem:[#allocation13 + $0x508] sm:$0xff]
    %v3379 = vld [vmem:[#allocation13 + $0x510] sm:$0xff]
    %v3380 = vld [vmem:[#allocation13 + $0x518] sm:$0xff]
    %v3381 = vld [vmem:[#allocation13 + $0x520] sm:$0xff]
    %v3382 = vld [vmem:[#allocation13 + $0x528] sm:$0xff]
    %v3383 = vld [vmem:[#allocation13 + $0x530] sm:$0xff]
    %v3384 = vld [vmem:[#allocation13 + $0x538] sm:$0xff]
    %v3385 = vld [vmem:[#allocation13 + $0x540] sm:$0xff]
    %v3386 = vld [vmem:[#allocation13 + $0x548] sm:$0xff]
    %v3387 = vld [vmem:[#allocation13 + $0x550] sm:$0xff]
    %v3388 = vld [vmem:[#allocation13 + $0x558] sm:$0xff]
    %v3389 = vld [vmem:[#allocation13 + $0x560] sm:$0xff]
    %v3390 = vld [vmem:[#allocation13 + $0x568] sm:$0xff]
    %v3391 = vld [vmem:[#allocation13 + $0x570] sm:$0xff]
    %v3392 = vld [vmem:[#allocation13 + $0x578] sm:$0xff]
    %v3393 = vld [vmem:[#allocation13 + $0x580] sm:$0xff]
    %v3394 = vld [vmem:[#allocation13 + $0x588] sm:$0xff]
    %v3395 = vld [vmem:[#allocation13 + $0x590] sm:$0xff]
    %v3396 = vld [vmem:[#allocation13 + $0x598] sm:$0xff]
    %v3397 = vld [vmem:[#allocation13 + $0x5a0] sm:$0xff]
    %v3398 = vld [vmem:[#allocation13 + $0x5a8] sm:$0xff]
    %v3399 = vld [vmem:[#allocation13 + $0x5b0] sm:$0xff]
    %v3400 = vld [vmem:[#allocation13 + $0x5b8] sm:$0xff]
    %v3401 = vld [vmem:[#allocation13 + $0x5c0] sm:$0xff]
    %v3402 = vld [vmem:[#allocation13 + $0x5c8] sm:$0xff]
    %v3403 = vld [vmem:[#allocation13 + $0x5d0] sm:$0xff]
    %v3404 = vld [vmem:[#allocation13 + $0x5d8] sm:$0xff]
    %v3405 = vld [vmem:[#allocation13 + $0x5e0] sm:$0xff]
    %v3406 = vld [vmem:[#allocation13 + $0x5e8] sm:$0xff]
    %v3407 = vld [vmem:[#allocation13 + $0x5f0] sm:$0xff]
    %v3408 = vld [vmem:[#allocation13 + $0x5f8] sm:$0xff]
    %v3409 = vld [vmem:[#allocation13 + $0x600] sm:$0xff]
    %v3410 = vld [vmem:[#allocation13 + $0x608] sm:$0xff]
    %v3411 = vld [vmem:[#allocation13 + $0x610] sm:$0xff]
    %v3412 = vld [vmem:[#allocation13 + $0x618] sm:$0xff]
    %v3413 = vld [vmem:[#allocation13 + $0x620] sm:$0xff]
    %v3414 = vld [vmem:[#allocation13 + $0x628] sm:$0xff]
    %v3415 = vld [vmem:[#allocation13 + $0x630] sm:$0xff]
    %v3416 = vld [vmem:[#allocation13 + $0x638] sm:$0xff]
    %v3417 = vld [vmem:[#allocation13 + $0x640] sm:$0xff]
    %v3418 = vld [vmem:[#allocation13 + $0x648] sm:$0xff]
    %v3419 = vld [vmem:[#allocation13 + $0x650] sm:$0xff]
    %v3420 = vld [vmem:[#allocation13 + $0x658] sm:$0xff]
    %v3421 = vld [vmem:[#allocation13 + $0x660] sm:$0xff]
    %v3422 = vld [vmem:[#allocation13 + $0x668] sm:$0xff]
    %v3423 = vld [vmem:[#allocation13 + $0x670] sm:$0xff]
    %v3424 = vld [vmem:[#allocation13 + $0x678] sm:$0xff]
    %v3425 = vld [vmem:[#allocation13 + $0x680] sm:$0xff]
    %v3426 = vld [vmem:[#allocation13 + $0x688] sm:$0xff]
    %v3427 = vld [vmem:[#allocation13 + $0x690] sm:$0xff]
    %v3428 = vld [vmem:[#allocation13 + $0x698] sm:$0xff]
    %v3429 = vld [vmem:[#allocation13 + $0x6a0] sm:$0xff]
    %v3430 = vld [vmem:[#allocation13 + $0x6a8] sm:$0xff]
    %v3431 = vld [vmem:[#allocation13 + $0x6b0] sm:$0xff]
    %v3432 = vld [vmem:[#allocation13 + $0x6b8] sm:$0xff]
    %v3433 = vld [vmem:[#allocation13 + $0x6c0] sm:$0xff]
    %v3434 = vld [vmem:[#allocation13 + $0x6c8] sm:$0xff]
    %v3435 = vld [vmem:[#allocation13 + $0x6d0] sm:$0xff]
    %v3436 = vld [vmem:[#allocation13 + $0x6d8] sm:$0xff]
    %v3437 = vld [vmem:[#allocation13 + $0x6e0] sm:$0xff]
    %v3438 = vld [vmem:[#allocation13 + $0x6e8] sm:$0xff]
    %v3439 = vld [vmem:[#allocation13 + $0x6f0] sm:$0xff]
    %v3440 = vld [vmem:[#allocation13 + $0x6f8] sm:$0xff]
    %v3441 = vld [vmem:[#allocation13 + $0x700] sm:$0xff]
    %v3442 = vld [vmem:[#allocation13 + $0x708] sm:$0xff]
    %v3443 = vld [vmem:[#allocation13 + $0x710] sm:$0xff]
    %v3444 = vld [vmem:[#allocation13 + $0x718] sm:$0xff]
    %v3445 = vld [vmem:[#allocation13 + $0x720] sm:$0xff]
    %v3446 = vld [vmem:[#allocation13 + $0x728] sm:$0xff]
    %v3447 = vld [vmem:[#allocation13 + $0x730] sm:$0xff]
    %v3448 = vld [vmem:[#allocation13 + $0x738] sm:$0xff]
    %v3449 = vld [vmem:[#allocation13 + $0x740] sm:$0xff]
    %v3450 = vld [vmem:[#allocation13 + $0x748] sm:$0xff]
    %v3451 = vld [vmem:[#allocation13 + $0x750] sm:$0xff]
    %v3452 = vld [vmem:[#allocation13 + $0x758] sm:$0xff]
    %v3453 = vld [vmem:[#allocation13 + $0x760] sm:$0xff]
    %v3454 = vld [vmem:[#allocation13 + $0x768] sm:$0xff]
    %v3455 = vld [vmem:[#allocation13 + $0x770] sm:$0xff]
    %v3456 = vld [vmem:[#allocation13 + $0x778] sm:$0xff]
    %v3457 = vld [vmem:[#allocation13 + $0x780] sm:$0xff]
    %v3458 = vld [vmem:[#allocation13 + $0x788] sm:$0xff]
    %v3459 = vld [vmem:[#allocation13 + $0x790] sm:$0xff]
    %v3460 = vld [vmem:[#allocation13 + $0x798] sm:$0xff]
    %v3461 = vld [vmem:[#allocation13 + $0x7a0] sm:$0xff]
    %v3462 = vld [vmem:[#allocation13 + $0x7a8] sm:$0xff]
    %v3463 = vld [vmem:[#allocation13 + $0x7b0] sm:$0xff]
    %v3464 = vld [vmem:[#allocation13 + $0x7b8] sm:$0xff]
    %v3465 = vld [vmem:[#allocation13 + $0x7c0] sm:$0xff]
    %v3466 = vld [vmem:[#allocation13 + $0x7c8] sm:$0xff]
    %v3467 = vld [vmem:[#allocation13 + $0x7d0] sm:$0xff]
    %v3468 = vld [vmem:[#allocation13 + $0x7d8] sm:$0xff]
    %v3469 = vld [vmem:[#allocation13 + $0x7e0] sm:$0xff]
    %v3470 = vld [vmem:[#allocation13 + $0x7e8] sm:$0xff]
    %v3471 = vld [vmem:[#allocation13 + $0x7f0] sm:$0xff]
    %v3472 = vld [vmem:[#allocation13 + $0x7f8] sm:$0xff]
    %v3473 = vld [vmem:[#allocation13 + $0x800] sm:$0xff]
    %v3474 = vld [vmem:[#allocation13 + $0x808] sm:$0xff]
    %v3475 = vld [vmem:[#allocation13 + $0x810] sm:$0xff]
    %v3476 = vld [vmem:[#allocation13 + $0x818] sm:$0xff]
    %v3477 = vld [vmem:[#allocation13 + $0x820] sm:$0xff]
    %v3478 = vld [vmem:[#allocation13 + $0x828] sm:$0xff]
    %v3479 = vld [vmem:[#allocation13 + $0x830] sm:$0xff]
    %v3480 = vld [vmem:[#allocation13 + $0x838] sm:$0xff]
    %v3481 = vld [vmem:[#allocation13 + $0x840] sm:$0xff]
    %v3482 = vld [vmem:[#allocation13 + $0x848] sm:$0xff]
    %v3483 = vld [vmem:[#allocation13 + $0x850] sm:$0xff]
    %v3484 = vld [vmem:[#allocation13 + $0x858] sm:$0xff]
    %v3485 = vld [vmem:[#allocation13 + $0x860] sm:$0xff]
    %v3486 = vld [vmem:[#allocation13 + $0x868] sm:$0xff]
    %v3487 = vld [vmem:[#allocation13 + $0x870] sm:$0xff]
    %v3488 = vld [vmem:[#allocation13 + $0x878] sm:$0xff]
    %v3489 = vld [vmem:[#allocation13 + $0x880] sm:$0xff]
    %v3490 = vld [vmem:[#allocation13 + $0x888] sm:$0xff]
    %v3491 = vld [vmem:[#allocation13 + $0x890] sm:$0xff]
    %v3492 = vld [vmem:[#allocation13 + $0x898] sm:$0xff]
    %v3493 = vld [vmem:[#allocation13 + $0x8a0] sm:$0xff]
    %v3494 = vld [vmem:[#allocation13 + $0x8a8] sm:$0xff]
    %v3495 = vld [vmem:[#allocation13 + $0x8b0] sm:$0xff]
    %v3496 = vld [vmem:[#allocation13 + $0x8b8] sm:$0xff]
    %v3497 = vld [vmem:[#allocation13 + $0x8c0] sm:$0xff]
    %v3498 = vld [vmem:[#allocation13 + $0x8c8] sm:$0xff]
    %v3499 = vld [vmem:[#allocation13 + $0x8d0] sm:$0xff]
    %v3500 = vld [vmem:[#allocation13 + $0x8d8] sm:$0xff]
    %v3501 = vld [vmem:[#allocation13 + $0x8e0] sm:$0xff]
    %v3502 = vld [vmem:[#allocation13 + $0x8e8] sm:$0xff]
    %v3503 = vld [vmem:[#allocation13 + $0x8f0] sm:$0xff]
    %v3504 = vld [vmem:[#allocation13 + $0x8f8] sm:$0xff]
    %v3505 = vld [vmem:[#allocation13 + $0x900] sm:$0xff]
    %v3506 = vld [vmem:[#allocation13 + $0x908] sm:$0xff]
    %v3507 = vld [vmem:[#allocation13 + $0x910] sm:$0xff]
    %v3508 = vld [vmem:[#allocation13 + $0x918] sm:$0xff]
    %v3509 = vld [vmem:[#allocation13 + $0x920] sm:$0xff]
    %v3510 = vld [vmem:[#allocation13 + $0x928] sm:$0xff]
    %v3511 = vld [vmem:[#allocation13 + $0x930] sm:$0xff]
    %v3512 = vld [vmem:[#allocation13 + $0x938] sm:$0xff]
    %v3513 = vld [vmem:[#allocation13 + $0x940] sm:$0xff]
    %v3514 = vld [vmem:[#allocation13 + $0x948] sm:$0xff]
    %v3515 = vld [vmem:[#allocation13 + $0x950] sm:$0xff]
    %v3516 = vld [vmem:[#allocation13 + $0x958] sm:$0xff]
    %v3517 = vld [vmem:[#allocation13 + $0x960] sm:$0xff]
    %v3518 = vld [vmem:[#allocation13 + $0x968] sm:$0xff]
    %v3519 = vld [vmem:[#allocation13 + $0x970] sm:$0xff]
    %v3520 = vld [vmem:[#allocation13 + $0x978] sm:$0xff]
    %v3521 = vld [vmem:[#allocation13 + $0x980] sm:$0xff]
    %v3522 = vld [vmem:[#allocation13 + $0x988] sm:$0xff]
    %v3523 = vld [vmem:[#allocation13 + $0x990] sm:$0xff]
    %v3524 = vld [vmem:[#allocation13 + $0x998] sm:$0xff]
    %v3525 = vld [vmem:[#allocation13 + $0x9a0] sm:$0xff]
    %v3526 = vld [vmem:[#allocation13 + $0x9a8] sm:$0xff]
    %v3527 = vld [vmem:[#allocation13 + $0x9b0] sm:$0xff]
    %v3528 = vld [vmem:[#allocation13 + $0x9b8] sm:$0xff]
    %v3529 = vld [vmem:[#allocation13 + $0x9c0] sm:$0xff]
    %v3530 = vld [vmem:[#allocation13 + $0x9c8] sm:$0xff]
    %v3531 = vld [vmem:[#allocation13 + $0x9d0] sm:$0xff]
    %v3532 = vld [vmem:[#allocation13 + $0x9d8] sm:$0xff]
    %v3533 = vld [vmem:[#allocation13 + $0x9e0] sm:$0xff]
    %v3534 = vld [vmem:[#allocation13 + $0x9e8] sm:$0xff]
    %v3535 = vld [vmem:[#allocation13 + $0x9f0] sm:$0xff]
    %v3536 = vld [vmem:[#allocation13 + $0x9f8] sm:$0xff]
    %v3537 = vld [vmem:[#allocation13 + $0xa00] sm:$0xff]
    %v3538 = vld [vmem:[#allocation13 + $0xa08] sm:$0xff]
    %v3539 = vld [vmem:[#allocation13 + $0xa10] sm:$0xff]
    %v3540 = vld [vmem:[#allocation13 + $0xa18] sm:$0xff]
    %v3541 = vld [vmem:[#allocation13 + $0xa20] sm:$0xff]
    %v3542 = vld [vmem:[#allocation13 + $0xa28] sm:$0xff]
    %v3543 = vld [vmem:[#allocation13 + $0xa30] sm:$0xff]
    %v3544 = vld [vmem:[#allocation13 + $0xa38] sm:$0xff]
    %v3545 = vld [vmem:[#allocation13 + $0xa40] sm:$0xff]
    %v3546 = vld [vmem:[#allocation13 + $0xa48] sm:$0xff]
    %v3547 = vld [vmem:[#allocation13 + $0xa50] sm:$0xff]
    %v3548 = vld [vmem:[#allocation13 + $0xa58] sm:$0xff]
    %v3549 = vld [vmem:[#allocation13 + $0xa60] sm:$0xff]
    %v3550 = vld [vmem:[#allocation13 + $0xa68] sm:$0xff]
    %v3551 = vld [vmem:[#allocation13 + $0xa70] sm:$0xff]
    %v3552 = vld [vmem:[#allocation13 + $0xa78] sm:$0xff]
    %v3553 = vld [vmem:[#allocation13 + $0xa80] sm:$0xff]
    %v3554 = vld [vmem:[#allocation13 + $0xa88] sm:$0xff]
    %v3555 = vld [vmem:[#allocation13 + $0xa90] sm:$0xff]
    %v3556 = vld [vmem:[#allocation13 + $0xa98] sm:$0xff]
    %v3557 = vld [vmem:[#allocation13 + $0xaa0] sm:$0xff]
    %v3558 = vld [vmem:[#allocation13 + $0xaa8] sm:$0xff]
    %v3559 = vld [vmem:[#allocation13 + $0xab0] sm:$0xff]
    %v3560 = vld [vmem:[#allocation13 + $0xab8] sm:$0xff]
    %v3561 = vld [vmem:[#allocation13 + $0xac0] sm:$0xff]
    %v3562 = vld [vmem:[#allocation13 + $0xac8] sm:$0xff]
    %v3563 = vld [vmem:[#allocation13 + $0xad0] sm:$0xff]
    %v3564 = vld [vmem:[#allocation13 + $0xad8] sm:$0xff]
    %v3565 = vld [vmem:[#allocation13 + $0xae0] sm:$0xff]
    %v3566 = vld [vmem:[#allocation13 + $0xae8] sm:$0xff]
    %v3567 = vld [vmem:[#allocation13 + $0xaf0] sm:$0xff]
    %v3568 = vld [vmem:[#allocation13 + $0xaf8] sm:$0xff]
    %v3569 = vld [vmem:[#allocation13 + $0xb00] sm:$0xff]
    %v3570 = vld [vmem:[#allocation13 + $0xb08] sm:$0xff]
    %v3571 = vld [vmem:[#allocation13 + $0xb10] sm:$0xff]
    %v3572 = vld [vmem:[#allocation13 + $0xb18] sm:$0xff]
    %v3573 = vld [vmem:[#allocation13 + $0xb20] sm:$0xff]
    %v3574 = vld [vmem:[#allocation13 + $0xb28] sm:$0xff]
    %v3575 = vld [vmem:[#allocation13 + $0xb30] sm:$0xff]
    %v3576 = vld [vmem:[#allocation13 + $0xb38] sm:$0xff]
    %v3577 = vld [vmem:[#allocation13 + $0xb40] sm:$0xff]
    %v3578 = vld [vmem:[#allocation13 + $0xb48] sm:$0xff]
    %v3579 = vld [vmem:[#allocation13 + $0xb50] sm:$0xff]
    %v3580 = vld [vmem:[#allocation13 + $0xb58] sm:$0xff]
    %v3581 = vld [vmem:[#allocation13 + $0xb60] sm:$0xff]
    %v3582 = vld [vmem:[#allocation13 + $0xb68] sm:$0xff]
    %v3583 = vld [vmem:[#allocation13 + $0xb70] sm:$0xff]
    %v3584 = vld [vmem:[#allocation13 + $0xb78] sm:$0xff]
    %v3585 = vld [vmem:[#allocation13 + $0xb80] sm:$0xff]
    %v3586 = vld [vmem:[#allocation13 + $0xb88] sm:$0xff]
    %v3587 = vld [vmem:[#allocation13 + $0xb90] sm:$0xff]
    %v3588 = vld [vmem:[#allocation13 + $0xb98] sm:$0xff]
    %v3589 = vld [vmem:[#allocation13 + $0xba0] sm:$0xff]
    %v3590 = vld [vmem:[#allocation13 + $0xba8] sm:$0xff]
    %v3591 = vld [vmem:[#allocation13 + $0xbb0] sm:$0xff]
    %v3592 = vld [vmem:[#allocation13 + $0xbb8] sm:$0xff]
    %v3593 = vld [vmem:[#allocation13 + $0xbc0] sm:$0xff]
    %v3594 = vld [vmem:[#allocation13 + $0xbc8] sm:$0xff]
    %v3595 = vld [vmem:[#allocation13 + $0xbd0] sm:$0xff]
    %v3596 = vld [vmem:[#allocation13 + $0xbd8] sm:$0xff]
    %v3597 = vld [vmem:[#allocation13 + $0xbe0] sm:$0xff]
    %v3598 = vld [vmem:[#allocation13 + $0xbe8] sm:$0xff]
    %v3599 = vld [vmem:[#allocation13 + $0xbf0] sm:$0xff]
    %v3600 = vld [vmem:[#allocation13 + $0xbf8] sm:$0xff]
    %v3601 = vld [vmem:[#allocation14] sm:$0xff]
    %v3603 = vlaneseq
    %v3604 = vshrl.u32 %v3603, 7
    %v3605 = vsub.s32 0, %v3604
    %v3606 = vrot.slane %v3601, %v3605
    %v3607 = vlaneseq
    %v3608 = vshrl.u32 %v3607, 7
    %v3609 = vsub.s32 1, %v3608
    %v3610 = vrot.slane %v3601, %v3609
    %v3611 = vlaneseq
    %v3612 = vshrl.u32 %v3611, 7
    %v3613 = vsub.s32 2, %v3612
    %v3614 = vrot.slane %v3601, %v3613
    %v3615 = vlaneseq
    %v3616 = vshrl.u32 %v3615, 7
    %v3617 = vsub.s32 3, %v3616
    %v3618 = vrot.slane %v3601, %v3617
    %v3619 = vlaneseq
    %v3620 = vshrl.u32 %v3619, 7
    %v3621 = vsub.s32 4, %v3620
    %v3622 = vrot.slane %v3601, %v3621
    %v3623 = vlaneseq
    %v3624 = vshrl.u32 %v3623, 7
    %v3625 = vsub.s32 5, %v3624
    %v3626 = vrot.slane %v3601, %v3625
    %v3627 = vlaneseq
    %v3628 = vshrl.u32 %v3627, 7
    %v3629 = vsub.s32 6, %v3628
    %v3630 = vrot.slane %v3601, %v3629
    %v3631 = vlaneseq
    %v3632 = vshrl.u32 %v3631, 7
    %v3633 = vsub.s32 7, %v3632
    %v3634 = vrot.slane %v3601, %v3633
    %v4027 = vunpack.c.l.b16 %v3217
    %v4028 = vunpack.c.h.b16 %v3217
    %v4029 = vunpack.c.l.b16 %v3218
    %v4030 = vunpack.c.h.b16 %v3218
    %v4031 = vunpack.c.l.b16 %v3219
    %v4032 = vunpack.c.h.b16 %v3219
    %v4033 = vunpack.c.l.b16 %v3220
    %v4034 = vunpack.c.h.b16 %v3220
    %v4035 = vunpack.c.l.b16 %v3221
    %v4036 = vunpack.c.h.b16 %v3221
    %v4037 = vunpack.c.l.b16 %v3222
    %v4038 = vunpack.c.h.b16 %v3222
    %v4039 = vunpack.c.l.b16 %v3223
    %v4040 = vunpack.c.h.b16 %v3223
    %v4041 = vunpack.c.l.b16 %v3224
    %v4042 = vunpack.c.h.b16 %v3224
    %v4043 = vunpack.c.l.b16 %v3225
    %v4044 = vunpack.c.h.b16 %v3225
    %v4045 = vunpack.c.l.b16 %v3226
    %v4046 = vunpack.c.h.b16 %v3226
    %v4047 = vunpack.c.l.b16 %v3227
    %v4048 = vunpack.c.h.b16 %v3227
    %v4049 = vunpack.c.l.b16 %v3228
    %v4050 = vunpack.c.h.b16 %v3228
    %v4051 = vunpack.c.l.b16 %v3229
    %v4052 = vunpack.c.h.b16 %v3229
    %v4053 = vunpack.c.l.b16 %v3230
    %v4054 = vunpack.c.h.b16 %v3230
    %v4055 = vunpack.c.l.b16 %v3231
    %v4056 = vunpack.c.h.b16 %v3231
    %v4057 = vunpack.c.l.b16 %v3232
    %v4058 = vunpack.c.h.b16 %v3232
    %v4059 = vunpack.c.l.b16 %v3233
    %v4060 = vunpack.c.h.b16 %v3233
    %v4061 = vunpack.c.l.b16 %v3234
    %v4062 = vunpack.c.h.b16 %v3234
    %v4063 = vunpack.c.l.b16 %v3235
    %v4064 = vunpack.c.h.b16 %v3235
    %v4065 = vunpack.c.l.b16 %v3236
    %v4066 = vunpack.c.h.b16 %v3236
    %v4067 = vunpack.c.l.b16 %v3237
    %v4068 = vunpack.c.h.b16 %v3237
    %v4069 = vunpack.c.l.b16 %v3238
    %v4070 = vunpack.c.h.b16 %v3238
    %v4071 = vunpack.c.l.b16 %v3239
    %v4072 = vunpack.c.h.b16 %v3239
    %v4073 = vunpack.c.l.b16 %v3240
    %v4074 = vunpack.c.h.b16 %v3240
    %v4075 = vunpack.c.l.b16 %v3241
    %v4076 = vunpack.c.h.b16 %v3241
    %v4077 = vunpack.c.l.b16 %v3242
    %v4078 = vunpack.c.h.b16 %v3242
    %v4079 = vunpack.c.l.b16 %v3243
    %v4080 = vunpack.c.h.b16 %v3243
    %v4081 = vunpack.c.l.b16 %v3244
    %v4082 = vunpack.c.h.b16 %v3244
    %v4083 = vunpack.c.l.b16 %v3245
    %v4084 = vunpack.c.h.b16 %v3245
    %v4085 = vunpack.c.l.b16 %v3246
    %v4086 = vunpack.c.h.b16 %v3246
    %v4087 = vunpack.c.l.b16 %v3247
    %v4088 = vunpack.c.h.b16 %v3247
    %v4089 = vunpack.c.l.b16 %v3248
    %v4090 = vunpack.c.h.b16 %v3248
    %v4091 = vunpack.c.l.b16 %v3249
    %v4092 = vunpack.c.h.b16 %v3249
    %v4093 = vunpack.c.l.b16 %v3250
    %v4094 = vunpack.c.h.b16 %v3250
    %v4095 = vunpack.c.l.b16 %v3251
    %v4096 = vunpack.c.h.b16 %v3251
    %v4097 = vunpack.c.l.b16 %v3252
    %v4098 = vunpack.c.h.b16 %v3252
    %v4099 = vunpack.c.l.b16 %v3253
    %v4100 = vunpack.c.h.b16 %v3253
    %v4101 = vunpack.c.l.b16 %v3254
    %v4102 = vunpack.c.h.b16 %v3254
    %v4103 = vunpack.c.l.b16 %v3255
    %v4104 = vunpack.c.h.b16 %v3255
    %v4105 = vunpack.c.l.b16 %v3256
    %v4106 = vunpack.c.h.b16 %v3256
    %v4107 = vunpack.c.l.b16 %v3257
    %v4108 = vunpack.c.h.b16 %v3257
    %v4109 = vunpack.c.l.b16 %v3258
    %v4110 = vunpack.c.h.b16 %v3258
    %v4111 = vunpack.c.l.b16 %v3259
    %v4112 = vunpack.c.h.b16 %v3259
    %v4113 = vunpack.c.l.b16 %v3260
    %v4114 = vunpack.c.h.b16 %v3260
    %v4115 = vunpack.c.l.b16 %v3261
    %v4116 = vunpack.c.h.b16 %v3261
    %v4117 = vunpack.c.l.b16 %v3262
    %v4118 = vunpack.c.h.b16 %v3262
    %v4119 = vunpack.c.l.b16 %v3263
    %v4120 = vunpack.c.h.b16 %v3263
    %v4121 = vunpack.c.l.b16 %v3264
    %v4122 = vunpack.c.h.b16 %v3264
    %v4123 = vunpack.c.l.b16 %v3265
    %v4124 = vunpack.c.h.b16 %v3265
    %v4125 = vunpack.c.l.b16 %v3266
    %v4126 = vunpack.c.h.b16 %v3266
    %v4127 = vunpack.c.l.b16 %v3267
    %v4128 = vunpack.c.h.b16 %v3267
    %v4129 = vunpack.c.l.b16 %v3268
    %v4130 = vunpack.c.h.b16 %v3268
    %v4131 = vunpack.c.l.b16 %v3269
    %v4132 = vunpack.c.h.b16 %v3269
    %v4133 = vunpack.c.l.b16 %v3270
    %v4134 = vunpack.c.h.b16 %v3270
    %v4135 = vunpack.c.l.b16 %v3271
    %v4136 = vunpack.c.h.b16 %v3271
    %v4137 = vunpack.c.l.b16 %v3272
    %v4138 = vunpack.c.h.b16 %v3272
    %v4139 = vunpack.c.l.b16 %v3273
    %v4140 = vunpack.c.h.b16 %v3273
    %v4141 = vunpack.c.l.b16 %v3274
    %v4142 = vunpack.c.h.b16 %v3274
    %v4143 = vunpack.c.l.b16 %v3275
    %v4144 = vunpack.c.h.b16 %v3275
    %v4145 = vunpack.c.l.b16 %v3276
    %v4146 = vunpack.c.h.b16 %v3276
    %v4147 = vunpack.c.l.b16 %v3277
    %v4148 = vunpack.c.h.b16 %v3277
    %v4149 = vunpack.c.l.b16 %v3278
    %v4150 = vunpack.c.h.b16 %v3278
    %v4151 = vunpack.c.l.b16 %v3279
    %v4152 = vunpack.c.h.b16 %v3279
    %v4153 = vunpack.c.l.b16 %v3280
    %v4154 = vunpack.c.h.b16 %v3280
    %v4155 = vunpack.c.l.b16 %v3281
    %v4156 = vunpack.c.h.b16 %v3281
    %v4157 = vunpack.c.l.b16 %v3282
    %v4158 = vunpack.c.h.b16 %v3282
    %v4159 = vunpack.c.l.b16 %v3283
    %v4160 = vunpack.c.h.b16 %v3283
    %v4161 = vunpack.c.l.b16 %v3284
    %v4162 = vunpack.c.h.b16 %v3284
    %v4163 = vunpack.c.l.b16 %v3285
    %v4164 = vunpack.c.h.b16 %v3285
    %v4165 = vunpack.c.l.b16 %v3286
    %v4166 = vunpack.c.h.b16 %v3286
    %v4167 = vunpack.c.l.b16 %v3287
    %v4168 = vunpack.c.h.b16 %v3287
    %v4169 = vunpack.c.l.b16 %v3288
    %v4170 = vunpack.c.h.b16 %v3288
    %v4171 = vunpack.c.l.b16 %v3289
    %v4172 = vunpack.c.h.b16 %v3289
    %v4173 = vunpack.c.l.b16 %v3290
    %v4174 = vunpack.c.h.b16 %v3290
    %v4175 = vunpack.c.l.b16 %v3291
    %v4176 = vunpack.c.h.b16 %v3291
    %v4177 = vunpack.c.l.b16 %v3292
    %v4178 = vunpack.c.h.b16 %v3292
    %v4179 = vunpack.c.l.b16 %v3293
    %v4180 = vunpack.c.h.b16 %v3293
    %v4181 = vunpack.c.l.b16 %v3294
    %v4182 = vunpack.c.h.b16 %v3294
    %v4183 = vunpack.c.l.b16 %v3295
    %v4184 = vunpack.c.h.b16 %v3295
    %v4185 = vunpack.c.l.b16 %v3296
    %v4186 = vunpack.c.h.b16 %v3296
    %v4187 = vunpack.c.l.b16 %v3297
    %v4188 = vunpack.c.h.b16 %v3297
    %v4189 = vunpack.c.l.b16 %v3298
    %v4190 = vunpack.c.h.b16 %v3298
    %v4191 = vunpack.c.l.b16 %v3299
    %v4192 = vunpack.c.h.b16 %v3299
    %v4193 = vunpack.c.l.b16 %v3300
    %v4194 = vunpack.c.h.b16 %v3300
    %v4195 = vunpack.c.l.b16 %v3301
    %v4196 = vunpack.c.h.b16 %v3301
    %v4197 = vunpack.c.l.b16 %v3302
    %v4198 = vunpack.c.h.b16 %v3302
    %v4199 = vunpack.c.l.b16 %v3303
    %v4200 = vunpack.c.h.b16 %v3303
    %v4201 = vunpack.c.l.b16 %v3304
    %v4202 = vunpack.c.h.b16 %v3304
    %v4203 = vunpack.c.l.b16 %v3305
    %v4204 = vunpack.c.h.b16 %v3305
    %v4205 = vunpack.c.l.b16 %v3306
    %v4206 = vunpack.c.h.b16 %v3306
    %v4207 = vunpack.c.l.b16 %v3307
    %v4208 = vunpack.c.h.b16 %v3307
    %v4209 = vunpack.c.l.b16 %v3308
    %v4210 = vunpack.c.h.b16 %v3308
    %v4211 = vunpack.c.l.b16 %v3309
    %v4212 = vunpack.c.h.b16 %v3309
    %v4213 = vunpack.c.l.b16 %v3310
    %v4214 = vunpack.c.h.b16 %v3310
    %v4215 = vunpack.c.l.b16 %v3311
    %v4216 = vunpack.c.h.b16 %v3311
    %v4217 = vunpack.c.l.b16 %v3312
    %v4218 = vunpack.c.h.b16 %v3312
    %v4219 = vunpack.c.l.b16 %v3313
    %v4220 = vunpack.c.h.b16 %v3313
    %v4221 = vunpack.c.l.b16 %v3314
    %v4222 = vunpack.c.h.b16 %v3314
    %v4223 = vunpack.c.l.b16 %v3315
    %v4224 = vunpack.c.h.b16 %v3315
    %v4225 = vunpack.c.l.b16 %v3316
    %v4226 = vunpack.c.h.b16 %v3316
    %v4227 = vunpack.c.l.b16 %v3317
    %v4228 = vunpack.c.h.b16 %v3317
    %v4229 = vunpack.c.l.b16 %v3318
    %v4230 = vunpack.c.h.b16 %v3318
    %v4231 = vunpack.c.l.b16 %v3319
    %v4232 = vunpack.c.h.b16 %v3319
    %v4233 = vunpack.c.l.b16 %v3320
    %v4234 = vunpack.c.h.b16 %v3320
    %v4235 = vunpack.c.l.b16 %v3321
    %v4236 = vunpack.c.h.b16 %v3321
    %v4237 = vunpack.c.l.b16 %v3322
    %v4238 = vunpack.c.h.b16 %v3322
    %v4239 = vunpack.c.l.b16 %v3323
    %v4240 = vunpack.c.h.b16 %v3323
    %v4241 = vunpack.c.l.b16 %v3324
    %v4242 = vunpack.c.h.b16 %v3324
    %v4243 = vunpack.c.l.b16 %v3325
    %v4244 = vunpack.c.h.b16 %v3325
    %v4245 = vunpack.c.l.b16 %v3326
    %v4246 = vunpack.c.h.b16 %v3326
    %v4247 = vunpack.c.l.b16 %v3327
    %v4248 = vunpack.c.h.b16 %v3327
    %v4249 = vunpack.c.l.b16 %v3328
    %v4250 = vunpack.c.h.b16 %v3328
    %v4251 = vunpack.c.l.b16 %v3329
    %v4252 = vunpack.c.h.b16 %v3329
    %v4253 = vunpack.c.l.b16 %v3330
    %v4254 = vunpack.c.h.b16 %v3330
    %v4255 = vunpack.c.l.b16 %v3331
    %v4256 = vunpack.c.h.b16 %v3331
    %v4257 = vunpack.c.l.b16 %v3332
    %v4258 = vunpack.c.h.b16 %v3332
    %v4259 = vunpack.c.l.b16 %v3333
    %v4260 = vunpack.c.h.b16 %v3333
    %v4261 = vunpack.c.l.b16 %v3334
    %v4262 = vunpack.c.h.b16 %v3334
    %v4263 = vunpack.c.l.b16 %v3335
    %v4264 = vunpack.c.h.b16 %v3335
    %v4265 = vunpack.c.l.b16 %v3336
    %v4266 = vunpack.c.h.b16 %v3336
    %v4267 = vunpack.c.l.b16 %v3337
    %v4268 = vunpack.c.h.b16 %v3337
    %v4269 = vunpack.c.l.b16 %v3338
    %v4270 = vunpack.c.h.b16 %v3338
    %v4271 = vunpack.c.l.b16 %v3339
    %v4272 = vunpack.c.h.b16 %v3339
    %v4273 = vunpack.c.l.b16 %v3340
    %v4274 = vunpack.c.h.b16 %v3340
    %v4275 = vunpack.c.l.b16 %v3341
    %v4276 = vunpack.c.h.b16 %v3341
    %v4277 = vunpack.c.l.b16 %v3342
    %v4278 = vunpack.c.h.b16 %v3342
    %v4279 = vunpack.c.l.b16 %v3343
    %v4280 = vunpack.c.h.b16 %v3343
    %v4281 = vunpack.c.l.b16 %v3344
    %v4282 = vunpack.c.h.b16 %v3344
    %v4283 = vunpack.c.l.b16 %v3345
    %v4284 = vunpack.c.h.b16 %v3345
    %v4285 = vunpack.c.l.b16 %v3346
    %v4286 = vunpack.c.h.b16 %v3346
    %v4287 = vunpack.c.l.b16 %v3347
    %v4288 = vunpack.c.h.b16 %v3347
    %v4289 = vunpack.c.l.b16 %v3348
    %v4290 = vunpack.c.h.b16 %v3348
    %v4291 = vunpack.c.l.b16 %v3349
    %v4292 = vunpack.c.h.b16 %v3349
    %v4293 = vunpack.c.l.b16 %v3350
    %v4294 = vunpack.c.h.b16 %v3350
    %v4295 = vunpack.c.l.b16 %v3351
    %v4296 = vunpack.c.h.b16 %v3351
    %v4297 = vunpack.c.l.b16 %v3352
    %v4298 = vunpack.c.h.b16 %v3352
    %v4299 = vunpack.c.l.b16 %v3353
    %v4300 = vunpack.c.h.b16 %v3353
    %v4301 = vunpack.c.l.b16 %v3354
    %v4302 = vunpack.c.h.b16 %v3354
    %v4303 = vunpack.c.l.b16 %v3355
    %v4304 = vunpack.c.h.b16 %v3355
    %v4305 = vunpack.c.l.b16 %v3356
    %v4306 = vunpack.c.h.b16 %v3356
    %v4307 = vunpack.c.l.b16 %v3357
    %v4308 = vunpack.c.h.b16 %v3357
    %v4309 = vunpack.c.l.b16 %v3358
    %v4310 = vunpack.c.h.b16 %v3358
    %v4311 = vunpack.c.l.b16 %v3359
    %v4312 = vunpack.c.h.b16 %v3359
    %v4313 = vunpack.c.l.b16 %v3360
    %v4314 = vunpack.c.h.b16 %v3360
    %v4315 = vunpack.c.l.b16 %v3361
    %v4316 = vunpack.c.h.b16 %v3361
    %v4317 = vunpack.c.l.b16 %v3362
    %v4318 = vunpack.c.h.b16 %v3362
    %v4319 = vunpack.c.l.b16 %v3363
    %v4320 = vunpack.c.h.b16 %v3363
    %v4321 = vunpack.c.l.b16 %v3364
    %v4322 = vunpack.c.h.b16 %v3364
    %v4323 = vunpack.c.l.b16 %v3365
    %v4324 = vunpack.c.h.b16 %v3365
    %v4325 = vunpack.c.l.b16 %v3366
    %v4326 = vunpack.c.h.b16 %v3366
    %v4327 = vunpack.c.l.b16 %v3367
    %v4328 = vunpack.c.h.b16 %v3367
    %v4329 = vunpack.c.l.b16 %v3368
    %v4330 = vunpack.c.h.b16 %v3368
    %v4331 = vunpack.c.l.b16 %v3369
    %v4332 = vunpack.c.h.b16 %v3369
    %v4333 = vunpack.c.l.b16 %v3370
    %v4334 = vunpack.c.h.b16 %v3370
    %v4335 = vunpack.c.l.b16 %v3371
    %v4336 = vunpack.c.h.b16 %v3371
    %v4337 = vunpack.c.l.b16 %v3372
    %v4338 = vunpack.c.h.b16 %v3372
    %v4339 = vunpack.c.l.b16 %v3373
    %v4340 = vunpack.c.h.b16 %v3373
    %v4341 = vunpack.c.l.b16 %v3374
    %v4342 = vunpack.c.h.b16 %v3374
    %v4343 = vunpack.c.l.b16 %v3375
    %v4344 = vunpack.c.h.b16 %v3375
    %v4345 = vunpack.c.l.b16 %v3376
    %v4346 = vunpack.c.h.b16 %v3376
    %v4347 = vunpack.c.l.b16 %v3377
    %v4348 = vunpack.c.h.b16 %v3377
    %v4349 = vunpack.c.l.b16 %v3378
    %v4350 = vunpack.c.h.b16 %v3378
    %v4351 = vunpack.c.l.b16 %v3379
    %v4352 = vunpack.c.h.b16 %v3379
    %v4353 = vunpack.c.l.b16 %v3380
    %v4354 = vunpack.c.h.b16 %v3380
    %v4355 = vunpack.c.l.b16 %v3381
    %v4356 = vunpack.c.h.b16 %v3381
    %v4357 = vunpack.c.l.b16 %v3382
    %v4358 = vunpack.c.h.b16 %v3382
    %v4359 = vunpack.c.l.b16 %v3383
    %v4360 = vunpack.c.h.b16 %v3383
    %v4361 = vunpack.c.l.b16 %v3384
    %v4362 = vunpack.c.h.b16 %v3384
    %v4363 = vunpack.c.l.b16 %v3385
    %v4364 = vunpack.c.h.b16 %v3385
    %v4365 = vunpack.c.l.b16 %v3386
    %v4366 = vunpack.c.h.b16 %v3386
    %v4367 = vunpack.c.l.b16 %v3387
    %v4368 = vunpack.c.h.b16 %v3387
    %v4369 = vunpack.c.l.b16 %v3388
    %v4370 = vunpack.c.h.b16 %v3388
    %v4371 = vunpack.c.l.b16 %v3389
    %v4372 = vunpack.c.h.b16 %v3389
    %v4373 = vunpack.c.l.b16 %v3390
    %v4374 = vunpack.c.h.b16 %v3390
    %v4375 = vunpack.c.l.b16 %v3391
    %v4376 = vunpack.c.h.b16 %v3391
    %v4377 = vunpack.c.l.b16 %v3392
    %v4378 = vunpack.c.h.b16 %v3392
    %v4379 = vunpack.c.l.b16 %v3393
    %v4380 = vunpack.c.h.b16 %v3393
    %v4381 = vunpack.c.l.b16 %v3394
    %v4382 = vunpack.c.h.b16 %v3394
    %v4383 = vunpack.c.l.b16 %v3395
    %v4384 = vunpack.c.h.b16 %v3395
    %v4385 = vunpack.c.l.b16 %v3396
    %v4386 = vunpack.c.h.b16 %v3396
    %v4387 = vunpack.c.l.b16 %v3397
    %v4388 = vunpack.c.h.b16 %v3397
    %v4389 = vunpack.c.l.b16 %v3398
    %v4390 = vunpack.c.h.b16 %v3398
    %v4391 = vunpack.c.l.b16 %v3399
    %v4392 = vunpack.c.h.b16 %v3399
    %v4393 = vunpack.c.l.b16 %v3400
    %v4394 = vunpack.c.h.b16 %v3400
    %v4395 = vunpack.c.l.b16 %v3401
    %v4396 = vunpack.c.h.b16 %v3401
    %v4397 = vunpack.c.l.b16 %v3402
    %v4398 = vunpack.c.h.b16 %v3402
    %v4399 = vunpack.c.l.b16 %v3403
    %v4400 = vunpack.c.h.b16 %v3403
    %v4401 = vunpack.c.l.b16 %v3404
    %v4402 = vunpack.c.h.b16 %v3404
    %v4403 = vunpack.c.l.b16 %v3405
    %v4404 = vunpack.c.h.b16 %v3405
    %v4405 = vunpack.c.l.b16 %v3406
    %v4406 = vunpack.c.h.b16 %v3406
    %v4407 = vunpack.c.l.b16 %v3407
    %v4408 = vunpack.c.h.b16 %v3407
    %v4409 = vunpack.c.l.b16 %v3408
    %v4410 = vunpack.c.h.b16 %v3408
    %v4411 = vunpack.c.l.b16 %v3409
    %v4412 = vunpack.c.h.b16 %v3409
    %v4413 = vunpack.c.l.b16 %v3410
    %v4414 = vunpack.c.h.b16 %v3410
    %v4415 = vunpack.c.l.b16 %v3411
    %v4416 = vunpack.c.h.b16 %v3411
    %v4417 = vunpack.c.l.b16 %v3412
    %v4418 = vunpack.c.h.b16 %v3412
    %v4419 = vunpack.c.l.b16 %v3413
    %v4420 = vunpack.c.h.b16 %v3413
    %v4421 = vunpack.c.l.b16 %v3414
    %v4422 = vunpack.c.h.b16 %v3414
    %v4423 = vunpack.c.l.b16 %v3415
    %v4424 = vunpack.c.h.b16 %v3415
    %v4425 = vunpack.c.l.b16 %v3416
    %v4426 = vunpack.c.h.b16 %v3416
    %v4427 = vunpack.c.l.b16 %v3417
    %v4428 = vunpack.c.h.b16 %v3417
    %v4429 = vunpack.c.l.b16 %v3418
    %v4430 = vunpack.c.h.b16 %v3418
    %v4431 = vunpack.c.l.b16 %v3419
    %v4432 = vunpack.c.h.b16 %v3419
    %v4433 = vunpack.c.l.b16 %v3420
    %v4434 = vunpack.c.h.b16 %v3420
    %v4435 = vunpack.c.l.b16 %v3421
    %v4436 = vunpack.c.h.b16 %v3421
    %v4437 = vunpack.c.l.b16 %v3422
    %v4438 = vunpack.c.h.b16 %v3422
    %v4439 = vunpack.c.l.b16 %v3423
    %v4440 = vunpack.c.h.b16 %v3423
    %v4441 = vunpack.c.l.b16 %v3424
    %v4442 = vunpack.c.h.b16 %v3424
    %v4443 = vunpack.c.l.b16 %v3425
    %v4444 = vunpack.c.h.b16 %v3425
    %v4445 = vunpack.c.l.b16 %v3426
    %v4446 = vunpack.c.h.b16 %v3426
    %v4447 = vunpack.c.l.b16 %v3427
    %v4448 = vunpack.c.h.b16 %v3427
    %v4449 = vunpack.c.l.b16 %v3428
    %v4450 = vunpack.c.h.b16 %v3428
    %v4451 = vunpack.c.l.b16 %v3429
    %v4452 = vunpack.c.h.b16 %v3429
    %v4453 = vunpack.c.l.b16 %v3430
    %v4454 = vunpack.c.h.b16 %v3430
    %v4455 = vunpack.c.l.b16 %v3431
    %v4456 = vunpack.c.h.b16 %v3431
    %v4457 = vunpack.c.l.b16 %v3432
    %v4458 = vunpack.c.h.b16 %v3432
    %v4459 = vunpack.c.l.b16 %v3433
    %v4460 = vunpack.c.h.b16 %v3433
    %v4461 = vunpack.c.l.b16 %v3434
    %v4462 = vunpack.c.h.b16 %v3434
    %v4463 = vunpack.c.l.b16 %v3435
    %v4464 = vunpack.c.h.b16 %v3435
    %v4465 = vunpack.c.l.b16 %v3436
    %v4466 = vunpack.c.h.b16 %v3436
    %v4467 = vunpack.c.l.b16 %v3437
    %v4468 = vunpack.c.h.b16 %v3437
    %v4469 = vunpack.c.l.b16 %v3438
    %v4470 = vunpack.c.h.b16 %v3438
    %v4471 = vunpack.c.l.b16 %v3439
    %v4472 = vunpack.c.h.b16 %v3439
    %v4473 = vunpack.c.l.b16 %v3440
    %v4474 = vunpack.c.h.b16 %v3440
    %v4475 = vunpack.c.l.b16 %v3441
    %v4476 = vunpack.c.h.b16 %v3441
    %v4477 = vunpack.c.l.b16 %v3442
    %v4478 = vunpack.c.h.b16 %v3442
    %v4479 = vunpack.c.l.b16 %v3443
    %v4480 = vunpack.c.h.b16 %v3443
    %v4481 = vunpack.c.l.b16 %v3444
    %v4482 = vunpack.c.h.b16 %v3444
    %v4483 = vunpack.c.l.b16 %v3445
    %v4484 = vunpack.c.h.b16 %v3445
    %v4485 = vunpack.c.l.b16 %v3446
    %v4486 = vunpack.c.h.b16 %v3446
    %v4487 = vunpack.c.l.b16 %v3447
    %v4488 = vunpack.c.h.b16 %v3447
    %v4489 = vunpack.c.l.b16 %v3448
    %v4490 = vunpack.c.h.b16 %v3448
    %v4491 = vunpack.c.l.b16 %v3449
    %v4492 = vunpack.c.h.b16 %v3449
    %v4493 = vunpack.c.l.b16 %v3450
    %v4494 = vunpack.c.h.b16 %v3450
    %v4495 = vunpack.c.l.b16 %v3451
    %v4496 = vunpack.c.h.b16 %v3451
    %v4497 = vunpack.c.l.b16 %v3452
    %v4498 = vunpack.c.h.b16 %v3452
    %v4499 = vunpack.c.l.b16 %v3453
    %v4500 = vunpack.c.h.b16 %v3453
    %v4501 = vunpack.c.l.b16 %v3454
    %v4502 = vunpack.c.h.b16 %v3454
    %v4503 = vunpack.c.l.b16 %v3455
    %v4504 = vunpack.c.h.b16 %v3455
    %v4505 = vunpack.c.l.b16 %v3456
    %v4506 = vunpack.c.h.b16 %v3456
    %v4507 = vunpack.c.l.b16 %v3457
    %v4508 = vunpack.c.h.b16 %v3457
    %v4509 = vunpack.c.l.b16 %v3458
    %v4510 = vunpack.c.h.b16 %v3458
    %v4511 = vunpack.c.l.b16 %v3459
    %v4512 = vunpack.c.h.b16 %v3459
    %v4513 = vunpack.c.l.b16 %v3460
    %v4514 = vunpack.c.h.b16 %v3460
    %v4515 = vunpack.c.l.b16 %v3461
    %v4516 = vunpack.c.h.b16 %v3461
    %v4517 = vunpack.c.l.b16 %v3462
    %v4518 = vunpack.c.h.b16 %v3462
    %v4519 = vunpack.c.l.b16 %v3463
    %v4520 = vunpack.c.h.b16 %v3463
    %v4521 = vunpack.c.l.b16 %v3464
    %v4522 = vunpack.c.h.b16 %v3464
    %v4523 = vunpack.c.l.b16 %v3465
    %v4524 = vunpack.c.h.b16 %v3465
    %v4525 = vunpack.c.l.b16 %v3466
    %v4526 = vunpack.c.h.b16 %v3466
    %v4527 = vunpack.c.l.b16 %v3467
    %v4528 = vunpack.c.h.b16 %v3467
    %v4529 = vunpack.c.l.b16 %v3468
    %v4530 = vunpack.c.h.b16 %v3468
    %v4531 = vunpack.c.l.b16 %v3469
    %v4532 = vunpack.c.h.b16 %v3469
    %v4533 = vunpack.c.l.b16 %v3470
    %v4534 = vunpack.c.h.b16 %v3470
    %v4535 = vunpack.c.l.b16 %v3471
    %v4536 = vunpack.c.h.b16 %v3471
    %v4537 = vunpack.c.l.b16 %v3472
    %v4538 = vunpack.c.h.b16 %v3472
    %v4539 = vunpack.c.l.b16 %v3473
    %v4540 = vunpack.c.h.b16 %v3473
    %v4541 = vunpack.c.l.b16 %v3474
    %v4542 = vunpack.c.h.b16 %v3474
    %v4543 = vunpack.c.l.b16 %v3475
    %v4544 = vunpack.c.h.b16 %v3475
    %v4545 = vunpack.c.l.b16 %v3476
    %v4546 = vunpack.c.h.b16 %v3476
    %v4547 = vunpack.c.l.b16 %v3477
    %v4548 = vunpack.c.h.b16 %v3477
    %v4549 = vunpack.c.l.b16 %v3478
    %v4550 = vunpack.c.h.b16 %v3478
    %v4551 = vunpack.c.l.b16 %v3479
    %v4552 = vunpack.c.h.b16 %v3479
    %v4553 = vunpack.c.l.b16 %v3480
    %v4554 = vunpack.c.h.b16 %v3480
    %v4555 = vunpack.c.l.b16 %v3481
    %v4556 = vunpack.c.h.b16 %v3481
    %v4557 = vunpack.c.l.b16 %v3482
    %v4558 = vunpack.c.h.b16 %v3482
    %v4559 = vunpack.c.l.b16 %v3483
    %v4560 = vunpack.c.h.b16 %v3483
    %v4561 = vunpack.c.l.b16 %v3484
    %v4562 = vunpack.c.h.b16 %v3484
    %v4563 = vunpack.c.l.b16 %v3485
    %v4564 = vunpack.c.h.b16 %v3485
    %v4565 = vunpack.c.l.b16 %v3486
    %v4566 = vunpack.c.h.b16 %v3486
    %v4567 = vunpack.c.l.b16 %v3487
    %v4568 = vunpack.c.h.b16 %v3487
    %v4569 = vunpack.c.l.b16 %v3488
    %v4570 = vunpack.c.h.b16 %v3488
    %v4571 = vunpack.c.l.b16 %v3489
    %v4572 = vunpack.c.h.b16 %v3489
    %v4573 = vunpack.c.l.b16 %v3490
    %v4574 = vunpack.c.h.b16 %v3490
    %v4575 = vunpack.c.l.b16 %v3491
    %v4576 = vunpack.c.h.b16 %v3491
    %v4577 = vunpack.c.l.b16 %v3492
    %v4578 = vunpack.c.h.b16 %v3492
    %v4579 = vunpack.c.l.b16 %v3493
    %v4580 = vunpack.c.h.b16 %v3493
    %v4581 = vunpack.c.l.b16 %v3494
    %v4582 = vunpack.c.h.b16 %v3494
    %v4583 = vunpack.c.l.b16 %v3495
    %v4584 = vunpack.c.h.b16 %v3495
    %v4585 = vunpack.c.l.b16 %v3496
    %v4586 = vunpack.c.h.b16 %v3496
    %v4587 = vunpack.c.l.b16 %v3497
    %v4588 = vunpack.c.h.b16 %v3497
    %v4589 = vunpack.c.l.b16 %v3498
    %v4590 = vunpack.c.h.b16 %v3498
    %v4591 = vunpack.c.l.b16 %v3499
    %v4592 = vunpack.c.h.b16 %v3499
    %v4593 = vunpack.c.l.b16 %v3500
    %v4594 = vunpack.c.h.b16 %v3500
    %v4595 = vunpack.c.l.b16 %v3501
    %v4596 = vunpack.c.h.b16 %v3501
    %v4597 = vunpack.c.l.b16 %v3502
    %v4598 = vunpack.c.h.b16 %v3502
    %v4599 = vunpack.c.l.b16 %v3503
    %v4600 = vunpack.c.h.b16 %v3503
    %v4601 = vunpack.c.l.b16 %v3504
    %v4602 = vunpack.c.h.b16 %v3504
    %v4603 = vunpack.c.l.b16 %v3505
    %v4604 = vunpack.c.h.b16 %v3505
    %v4605 = vunpack.c.l.b16 %v3506
    %v4606 = vunpack.c.h.b16 %v3506
    %v4607 = vunpack.c.l.b16 %v3507
    %v4608 = vunpack.c.h.b16 %v3507
    %v4609 = vunpack.c.l.b16 %v3508
    %v4610 = vunpack.c.h.b16 %v3508
    %v4611 = vunpack.c.l.b16 %v3509
    %v4612 = vunpack.c.h.b16 %v3509
    %v4613 = vunpack.c.l.b16 %v3510
    %v4614 = vunpack.c.h.b16 %v3510
    %v4615 = vunpack.c.l.b16 %v3511
    %v4616 = vunpack.c.h.b16 %v3511
    %v4617 = vunpack.c.l.b16 %v3512
    %v4618 = vunpack.c.h.b16 %v3512
    %v4619 = vunpack.c.l.b16 %v3513
    %v4620 = vunpack.c.h.b16 %v3513
    %v4621 = vunpack.c.l.b16 %v3514
    %v4622 = vunpack.c.h.b16 %v3514
    %v4623 = vunpack.c.l.b16 %v3515
    %v4624 = vunpack.c.h.b16 %v3515
    %v4625 = vunpack.c.l.b16 %v3516
    %v4626 = vunpack.c.h.b16 %v3516
    %v4627 = vunpack.c.l.b16 %v3517
    %v4628 = vunpack.c.h.b16 %v3517
    %v4629 = vunpack.c.l.b16 %v3518
    %v4630 = vunpack.c.h.b16 %v3518
    %v4631 = vunpack.c.l.b16 %v3519
    %v4632 = vunpack.c.h.b16 %v3519
    %v4633 = vunpack.c.l.b16 %v3520
    %v4634 = vunpack.c.h.b16 %v3520
    %v4635 = vunpack.c.l.b16 %v3521
    %v4636 = vunpack.c.h.b16 %v3521
    %v4637 = vunpack.c.l.b16 %v3522
    %v4638 = vunpack.c.h.b16 %v3522
    %v4639 = vunpack.c.l.b16 %v3523
    %v4640 = vunpack.c.h.b16 %v3523
    %v4641 = vunpack.c.l.b16 %v3524
    %v4642 = vunpack.c.h.b16 %v3524
    %v4643 = vunpack.c.l.b16 %v3525
    %v4644 = vunpack.c.h.b16 %v3525
    %v4645 = vunpack.c.l.b16 %v3526
    %v4646 = vunpack.c.h.b16 %v3526
    %v4647 = vunpack.c.l.b16 %v3527
    %v4648 = vunpack.c.h.b16 %v3527
    %v4649 = vunpack.c.l.b16 %v3528
    %v4650 = vunpack.c.h.b16 %v3528
    %v4651 = vunpack.c.l.b16 %v3529
    %v4652 = vunpack.c.h.b16 %v3529
    %v4653 = vunpack.c.l.b16 %v3530
    %v4654 = vunpack.c.h.b16 %v3530
    %v4655 = vunpack.c.l.b16 %v3531
    %v4656 = vunpack.c.h.b16 %v3531
    %v4657 = vunpack.c.l.b16 %v3532
    %v4658 = vunpack.c.h.b16 %v3532
    %v4659 = vunpack.c.l.b16 %v3533
    %v4660 = vunpack.c.h.b16 %v3533
    %v4661 = vunpack.c.l.b16 %v3534
    %v4662 = vunpack.c.h.b16 %v3534
    %v4663 = vunpack.c.l.b16 %v3535
    %v4664 = vunpack.c.h.b16 %v3535
    %v4665 = vunpack.c.l.b16 %v3536
    %v4666 = vunpack.c.h.b16 %v3536
    %v4667 = vunpack.c.l.b16 %v3537
    %v4668 = vunpack.c.h.b16 %v3537
    %v4669 = vunpack.c.l.b16 %v3538
    %v4670 = vunpack.c.h.b16 %v3538
    %v4671 = vunpack.c.l.b16 %v3539
    %v4672 = vunpack.c.h.b16 %v3539
    %v4673 = vunpack.c.l.b16 %v3540
    %v4674 = vunpack.c.h.b16 %v3540
    %v4675 = vunpack.c.l.b16 %v3541
    %v4676 = vunpack.c.h.b16 %v3541
    %v4677 = vunpack.c.l.b16 %v3542
    %v4678 = vunpack.c.h.b16 %v3542
    %v4679 = vunpack.c.l.b16 %v3543
    %v4680 = vunpack.c.h.b16 %v3543
    %v4681 = vunpack.c.l.b16 %v3544
    %v4682 = vunpack.c.h.b16 %v3544
    %v4683 = vunpack.c.l.b16 %v3545
    %v4684 = vunpack.c.h.b16 %v3545
    %v4685 = vunpack.c.l.b16 %v3546
    %v4686 = vunpack.c.h.b16 %v3546
    %v4687 = vunpack.c.l.b16 %v3547
    %v4688 = vunpack.c.h.b16 %v3547
    %v4689 = vunpack.c.l.b16 %v3548
    %v4690 = vunpack.c.h.b16 %v3548
    %v4691 = vunpack.c.l.b16 %v3549
    %v4692 = vunpack.c.h.b16 %v3549
    %v4693 = vunpack.c.l.b16 %v3550
    %v4694 = vunpack.c.h.b16 %v3550
    %v4695 = vunpack.c.l.b16 %v3551
    %v4696 = vunpack.c.h.b16 %v3551
    %v4697 = vunpack.c.l.b16 %v3552
    %v4698 = vunpack.c.h.b16 %v3552
    %v4699 = vunpack.c.l.b16 %v3553
    %v4700 = vunpack.c.h.b16 %v3553
    %v4701 = vunpack.c.l.b16 %v3554
    %v4702 = vunpack.c.h.b16 %v3554
    %v4703 = vunpack.c.l.b16 %v3555
    %v4704 = vunpack.c.h.b16 %v3555
    %v4705 = vunpack.c.l.b16 %v3556
    %v4706 = vunpack.c.h.b16 %v3556
    %v4707 = vunpack.c.l.b16 %v3557
    %v4708 = vunpack.c.h.b16 %v3557
    %v4709 = vunpack.c.l.b16 %v3558
    %v4710 = vunpack.c.h.b16 %v3558
    %v4711 = vunpack.c.l.b16 %v3559
    %v4712 = vunpack.c.h.b16 %v3559
    %v4713 = vunpack.c.l.b16 %v3560
    %v4714 = vunpack.c.h.b16 %v3560
    %v4715 = vunpack.c.l.b16 %v3561
    %v4716 = vunpack.c.h.b16 %v3561
    %v4717 = vunpack.c.l.b16 %v3562
    %v4718 = vunpack.c.h.b16 %v3562
    %v4719 = vunpack.c.l.b16 %v3563
    %v4720 = vunpack.c.h.b16 %v3563
    %v4721 = vunpack.c.l.b16 %v3564
    %v4722 = vunpack.c.h.b16 %v3564
    %v4723 = vunpack.c.l.b16 %v3565
    %v4724 = vunpack.c.h.b16 %v3565
    %v4725 = vunpack.c.l.b16 %v3566
    %v4726 = vunpack.c.h.b16 %v3566
    %v4727 = vunpack.c.l.b16 %v3567
    %v4728 = vunpack.c.h.b16 %v3567
    %v4729 = vunpack.c.l.b16 %v3568
    %v4730 = vunpack.c.h.b16 %v3568
    %v4731 = vunpack.c.l.b16 %v3569
    %v4732 = vunpack.c.h.b16 %v3569
    %v4733 = vunpack.c.l.b16 %v3570
    %v4734 = vunpack.c.h.b16 %v3570
    %v4735 = vunpack.c.l.b16 %v3571
    %v4736 = vunpack.c.h.b16 %v3571
    %v4737 = vunpack.c.l.b16 %v3572
    %v4738 = vunpack.c.h.b16 %v3572
    %v4739 = vunpack.c.l.b16 %v3573
    %v4740 = vunpack.c.h.b16 %v3573
    %v4741 = vunpack.c.l.b16 %v3574
    %v4742 = vunpack.c.h.b16 %v3574
    %v4743 = vunpack.c.l.b16 %v3575
    %v4744 = vunpack.c.h.b16 %v3575
    %v4745 = vunpack.c.l.b16 %v3576
    %v4746 = vunpack.c.h.b16 %v3576
    %v4747 = vunpack.c.l.b16 %v3577
    %v4748 = vunpack.c.h.b16 %v3577
    %v4749 = vunpack.c.l.b16 %v3578
    %v4750 = vunpack.c.h.b16 %v3578
    %v4751 = vunpack.c.l.b16 %v3579
    %v4752 = vunpack.c.h.b16 %v3579
    %v4753 = vunpack.c.l.b16 %v3580
    %v4754 = vunpack.c.h.b16 %v3580
    %v4755 = vunpack.c.l.b16 %v3581
    %v4756 = vunpack.c.h.b16 %v3581
    %v4757 = vunpack.c.l.b16 %v3582
    %v4758 = vunpack.c.h.b16 %v3582
    %v4759 = vunpack.c.l.b16 %v3583
    %v4760 = vunpack.c.h.b16 %v3583
    %v4761 = vunpack.c.l.b16 %v3584
    %v4762 = vunpack.c.h.b16 %v3584
    %v4763 = vunpack.c.l.b16 %v3585
    %v4764 = vunpack.c.h.b16 %v3585
    %v4765 = vunpack.c.l.b16 %v3586
    %v4766 = vunpack.c.h.b16 %v3586
    %v4767 = vunpack.c.l.b16 %v3587
    %v4768 = vunpack.c.h.b16 %v3587
    %v4769 = vunpack.c.l.b16 %v3588
    %v4770 = vunpack.c.h.b16 %v3588
    %v4771 = vunpack.c.l.b16 %v3589
    %v4772 = vunpack.c.h.b16 %v3589
    %v4773 = vunpack.c.l.b16 %v3590
    %v4774 = vunpack.c.h.b16 %v3590
    %v4775 = vunpack.c.l.b16 %v3591
    %v4776 = vunpack.c.h.b16 %v3591
    %v4777 = vunpack.c.l.b16 %v3592
    %v4778 = vunpack.c.h.b16 %v3592
    %v4779 = vunpack.c.l.b16 %v3593
    %v4780 = vunpack.c.h.b16 %v3593
    %v4781 = vunpack.c.l.b16 %v3594
    %v4782 = vunpack.c.h.b16 %v3594
    %v4783 = vunpack.c.l.b16 %v3595
    %v4784 = vunpack.c.h.b16 %v3595
    %v4785 = vunpack.c.l.b16 %v3596
    %v4786 = vunpack.c.h.b16 %v3596
    %v4787 = vunpack.c.l.b16 %v3597
    %v4788 = vunpack.c.h.b16 %v3597
    %v4789 = vunpack.c.l.b16 %v3598
    %v4790 = vunpack.c.h.b16 %v3598
    %v4791 = vunpack.c.l.b16 %v3599
    %v4792 = vunpack.c.h.b16 %v3599
    %v4793 = vunpack.c.l.b16 %v3600
    %v4794 = vunpack.c.h.b16 %v3600
    %v4795 = vpack.c.b16 %v4035, %v4027
    %v4796 = vpack.c.b16 %v4036, %v4028
    %v4797 = vpack.c.b16 %v4037, %v4029
    %v4798 = vpack.c.b16 %v4038, %v4030
    %v4799 = vpack.c.b16 %v4039, %v4031
    %v4800 = vpack.c.b16 %v4040, %v4032
    %v4801 = vpack.c.b16 %v4041, %v4033
    %v4802 = vpack.c.b16 %v4042, %v4034
    %v4803 = vpack.c.b16 %v4051, %v4043
    %v4804 = vpack.c.b16 %v4052, %v4044
    %v4805 = vpack.c.b16 %v4053, %v4045
    %v4806 = vpack.c.b16 %v4054, %v4046
    %v4807 = vpack.c.b16 %v4055, %v4047
    %v4808 = vpack.c.b16 %v4056, %v4048
    %v4809 = vpack.c.b16 %v4057, %v4049
    %v4810 = vpack.c.b16 %v4058, %v4050
    %v4811 = vpack.c.b16 %v4067, %v4059
    %v4812 = vpack.c.b16 %v4068, %v4060
    %v4813 = vpack.c.b16 %v4069, %v4061
    %v4814 = vpack.c.b16 %v4070, %v4062
    %v4815 = vpack.c.b16 %v4071, %v4063
    %v4816 = vpack.c.b16 %v4072, %v4064
    %v4817 = vpack.c.b16 %v4073, %v4065
    %v4818 = vpack.c.b16 %v4074, %v4066
    %v4819 = vpack.c.b16 %v4083, %v4075
    %v4820 = vpack.c.b16 %v4084, %v4076
    %v4821 = vpack.c.b16 %v4085, %v4077
    %v4822 = vpack.c.b16 %v4086, %v4078
    %v4823 = vpack.c.b16 %v4087, %v4079
    %v4824 = vpack.c.b16 %v4088, %v4080
    %v4825 = vpack.c.b16 %v4089, %v4081
    %v4826 = vpack.c.b16 %v4090, %v4082
    %v4827 = vpack.c.b16 %v4099, %v4091
    %v4828 = vpack.c.b16 %v4100, %v4092
    %v4829 = vpack.c.b16 %v4101, %v4093
    %v4830 = vpack.c.b16 %v4102, %v4094
    %v4831 = vpack.c.b16 %v4103, %v4095
    %v4832 = vpack.c.b16 %v4104, %v4096
    %v4833 = vpack.c.b16 %v4105, %v4097
    %v4834 = vpack.c.b16 %v4106, %v4098
    %v4835 = vpack.c.b16 %v4115, %v4107
    %v4836 = vpack.c.b16 %v4116, %v4108
    %v4837 = vpack.c.b16 %v4117, %v4109
    %v4838 = vpack.c.b16 %v4118, %v4110
    %v4839 = vpack.c.b16 %v4119, %v4111
    %v4840 = vpack.c.b16 %v4120, %v4112
    %v4841 = vpack.c.b16 %v4121, %v4113
    %v4842 = vpack.c.b16 %v4122, %v4114
    %v4843 = vpack.c.b16 %v4131, %v4123
    %v4844 = vpack.c.b16 %v4132, %v4124
    %v4845 = vpack.c.b16 %v4133, %v4125
    %v4846 = vpack.c.b16 %v4134, %v4126
    %v4847 = vpack.c.b16 %v4135, %v4127
    %v4848 = vpack.c.b16 %v4136, %v4128
    %v4849 = vpack.c.b16 %v4137, %v4129
    %v4850 = vpack.c.b16 %v4138, %v4130
    %v4851 = vpack.c.b16 %v4147, %v4139
    %v4852 = vpack.c.b16 %v4148, %v4140
    %v4853 = vpack.c.b16 %v4149, %v4141
    %v4854 = vpack.c.b16 %v4150, %v4142
    %v4855 = vpack.c.b16 %v4151, %v4143
    %v4856 = vpack.c.b16 %v4152, %v4144
    %v4857 = vpack.c.b16 %v4153, %v4145
    %v4858 = vpack.c.b16 %v4154, %v4146
    %v4859 = vpack.c.b16 %v4163, %v4155
    %v4860 = vpack.c.b16 %v4164, %v4156
    %v4861 = vpack.c.b16 %v4165, %v4157
    %v4862 = vpack.c.b16 %v4166, %v4158
    %v4863 = vpack.c.b16 %v4167, %v4159
    %v4864 = vpack.c.b16 %v4168, %v4160
    %v4865 = vpack.c.b16 %v4169, %v4161
    %v4866 = vpack.c.b16 %v4170, %v4162
    %v4867 = vpack.c.b16 %v4179, %v4171
    %v4868 = vpack.c.b16 %v4180, %v4172
    %v4869 = vpack.c.b16 %v4181, %v4173
    %v4870 = vpack.c.b16 %v4182, %v4174
    %v4871 = vpack.c.b16 %v4183, %v4175
    %v4872 = vpack.c.b16 %v4184, %v4176
    %v4873 = vpack.c.b16 %v4185, %v4177
    %v4874 = vpack.c.b16 %v4186, %v4178
    %v4875 = vpack.c.b16 %v4195, %v4187
    %v4876 = vpack.c.b16 %v4196, %v4188
    %v4877 = vpack.c.b16 %v4197, %v4189
    %v4878 = vpack.c.b16 %v4198, %v4190
    %v4879 = vpack.c.b16 %v4199, %v4191
    %v4880 = vpack.c.b16 %v4200, %v4192
    %v4881 = vpack.c.b16 %v4201, %v4193
    %v4882 = vpack.c.b16 %v4202, %v4194
    %v4883 = vpack.c.b16 %v4211, %v4203
    %v4884 = vpack.c.b16 %v4212, %v4204
    %v4885 = vpack.c.b16 %v4213, %v4205
    %v4886 = vpack.c.b16 %v4214, %v4206
    %v4887 = vpack.c.b16 %v4215, %v4207
    %v4888 = vpack.c.b16 %v4216, %v4208
    %v4889 = vpack.c.b16 %v4217, %v4209
    %v4890 = vpack.c.b16 %v4218, %v4210
    %v4891 = vpack.c.b16 %v4227, %v4219
    %v4892 = vpack.c.b16 %v4228, %v4220
    %v4893 = vpack.c.b16 %v4229, %v4221
    %v4894 = vpack.c.b16 %v4230, %v4222
    %v4895 = vpack.c.b16 %v4231, %v4223
    %v4896 = vpack.c.b16 %v4232, %v4224
    %v4897 = vpack.c.b16 %v4233, %v4225
    %v4898 = vpack.c.b16 %v4234, %v4226
    %v4899 = vpack.c.b16 %v4243, %v4235
    %v4900 = vpack.c.b16 %v4244, %v4236
    %v4901 = vpack.c.b16 %v4245, %v4237
    %v4902 = vpack.c.b16 %v4246, %v4238
    %v4903 = vpack.c.b16 %v4247, %v4239
    %v4904 = vpack.c.b16 %v4248, %v4240
    %v4905 = vpack.c.b16 %v4249, %v4241
    %v4906 = vpack.c.b16 %v4250, %v4242
    %v4907 = vpack.c.b16 %v4259, %v4251
    %v4908 = vpack.c.b16 %v4260, %v4252
    %v4909 = vpack.c.b16 %v4261, %v4253
    %v4910 = vpack.c.b16 %v4262, %v4254
    %v4911 = vpack.c.b16 %v4263, %v4255
    %v4912 = vpack.c.b16 %v4264, %v4256
    %v4913 = vpack.c.b16 %v4265, %v4257
    %v4914 = vpack.c.b16 %v4266, %v4258
    %v4915 = vpack.c.b16 %v4275, %v4267
    %v4916 = vpack.c.b16 %v4276, %v4268
    %v4917 = vpack.c.b16 %v4277, %v4269
    %v4918 = vpack.c.b16 %v4278, %v4270
    %v4919 = vpack.c.b16 %v4279, %v4271
    %v4920 = vpack.c.b16 %v4280, %v4272
    %v4921 = vpack.c.b16 %v4281, %v4273
    %v4922 = vpack.c.b16 %v4282, %v4274
    %v4923 = vpack.c.b16 %v4291, %v4283
    %v4924 = vpack.c.b16 %v4292, %v4284
    %v4925 = vpack.c.b16 %v4293, %v4285
    %v4926 = vpack.c.b16 %v4294, %v4286
    %v4927 = vpack.c.b16 %v4295, %v4287
    %v4928 = vpack.c.b16 %v4296, %v4288
    %v4929 = vpack.c.b16 %v4297, %v4289
    %v4930 = vpack.c.b16 %v4298, %v4290
    %v4931 = vpack.c.b16 %v4307, %v4299
    %v4932 = vpack.c.b16 %v4308, %v4300
    %v4933 = vpack.c.b16 %v4309, %v4301
    %v4934 = vpack.c.b16 %v4310, %v4302
    %v4935 = vpack.c.b16 %v4311, %v4303
    %v4936 = vpack.c.b16 %v4312, %v4304
    %v4937 = vpack.c.b16 %v4313, %v4305
    %v4938 = vpack.c.b16 %v4314, %v4306
    %v4939 = vpack.c.b16 %v4323, %v4315
    %v4940 = vpack.c.b16 %v4324, %v4316
    %v4941 = vpack.c.b16 %v4325, %v4317
    %v4942 = vpack.c.b16 %v4326, %v4318
    %v4943 = vpack.c.b16 %v4327, %v4319
    %v4944 = vpack.c.b16 %v4328, %v4320
    %v4945 = vpack.c.b16 %v4329, %v4321
    %v4946 = vpack.c.b16 %v4330, %v4322
    %v4947 = vpack.c.b16 %v4339, %v4331
    %v4948 = vpack.c.b16 %v4340, %v4332
    %v4949 = vpack.c.b16 %v4341, %v4333
    %v4950 = vpack.c.b16 %v4342, %v4334
    %v4951 = vpack.c.b16 %v4343, %v4335
    %v4952 = vpack.c.b16 %v4344, %v4336
    %v4953 = vpack.c.b16 %v4345, %v4337
    %v4954 = vpack.c.b16 %v4346, %v4338
    %v4955 = vpack.c.b16 %v4355, %v4347
    %v4956 = vpack.c.b16 %v4356, %v4348
    %v4957 = vpack.c.b16 %v4357, %v4349
    %v4958 = vpack.c.b16 %v4358, %v4350
    %v4959 = vpack.c.b16 %v4359, %v4351
    %v4960 = vpack.c.b16 %v4360, %v4352
    %v4961 = vpack.c.b16 %v4361, %v4353
    %v4962 = vpack.c.b16 %v4362, %v4354
    %v4963 = vpack.c.b16 %v4371, %v4363
    %v4964 = vpack.c.b16 %v4372, %v4364
    %v4965 = vpack.c.b16 %v4373, %v4365
    %v4966 = vpack.c.b16 %v4374, %v4366
    %v4967 = vpack.c.b16 %v4375, %v4367
    %v4968 = vpack.c.b16 %v4376, %v4368
    %v4969 = vpack.c.b16 %v4377, %v4369
    %v4970 = vpack.c.b16 %v4378, %v4370
    %v4971 = vpack.c.b16 %v4387, %v4379
    %v4972 = vpack.c.b16 %v4388, %v4380
    %v4973 = vpack.c.b16 %v4389, %v4381
    %v4974 = vpack.c.b16 %v4390, %v4382
    %v4975 = vpack.c.b16 %v4391, %v4383
    %v4976 = vpack.c.b16 %v4392, %v4384
    %v4977 = vpack.c.b16 %v4393, %v4385
    %v4978 = vpack.c.b16 %v4394, %v4386
    %v4979 = vpack.c.b16 %v4403, %v4395
    %v4980 = vpack.c.b16 %v4404, %v4396
    %v4981 = vpack.c.b16 %v4405, %v4397
    %v4982 = vpack.c.b16 %v4406, %v4398
    %v4983 = vpack.c.b16 %v4407, %v4399
    %v4984 = vpack.c.b16 %v4408, %v4400
    %v4985 = vpack.c.b16 %v4409, %v4401
    %v4986 = vpack.c.b16 %v4410, %v4402
    %v4987 = vpack.c.b16 %v4419, %v4411
    %v4988 = vpack.c.b16 %v4420, %v4412
    %v4989 = vpack.c.b16 %v4421, %v4413
    %v4990 = vpack.c.b16 %v4422, %v4414
    %v4991 = vpack.c.b16 %v4423, %v4415
    %v4992 = vpack.c.b16 %v4424, %v4416
    %v4993 = vpack.c.b16 %v4425, %v4417
    %v4994 = vpack.c.b16 %v4426, %v4418
    %v4995 = vpack.c.b16 %v4435, %v4427
    %v4996 = vpack.c.b16 %v4436, %v4428
    %v4997 = vpack.c.b16 %v4437, %v4429
    %v4998 = vpack.c.b16 %v4438, %v4430
    %v4999 = vpack.c.b16 %v4439, %v4431
    %v5000 = vpack.c.b16 %v4440, %v4432
    %v5001 = vpack.c.b16 %v4441, %v4433
    %v5002 = vpack.c.b16 %v4442, %v4434
    %v5003 = vpack.c.b16 %v4451, %v4443
    %v5004 = vpack.c.b16 %v4452, %v4444
    %v5005 = vpack.c.b16 %v4453, %v4445
    %v5006 = vpack.c.b16 %v4454, %v4446
    %v5007 = vpack.c.b16 %v4455, %v4447
    %v5008 = vpack.c.b16 %v4456, %v4448
    %v5009 = vpack.c.b16 %v4457, %v4449
    %v5010 = vpack.c.b16 %v4458, %v4450
    %v5011 = vpack.c.b16 %v4467, %v4459
    %v5012 = vpack.c.b16 %v4468, %v4460
    %v5013 = vpack.c.b16 %v4469, %v4461
    %v5014 = vpack.c.b16 %v4470, %v4462
    %v5015 = vpack.c.b16 %v4471, %v4463
    %v5016 = vpack.c.b16 %v4472, %v4464
    %v5017 = vpack.c.b16 %v4473, %v4465
    %v5018 = vpack.c.b16 %v4474, %v4466
    %v5019 = vpack.c.b16 %v4483, %v4475
    %v5020 = vpack.c.b16 %v4484, %v4476
    %v5021 = vpack.c.b16 %v4485, %v4477
    %v5022 = vpack.c.b16 %v4486, %v4478
    %v5023 = vpack.c.b16 %v4487, %v4479
    %v5024 = vpack.c.b16 %v4488, %v4480
    %v5025 = vpack.c.b16 %v4489, %v4481
    %v5026 = vpack.c.b16 %v4490, %v4482
    %v5027 = vpack.c.b16 %v4499, %v4491
    %v5028 = vpack.c.b16 %v4500, %v4492
    %v5029 = vpack.c.b16 %v4501, %v4493
    %v5030 = vpack.c.b16 %v4502, %v4494
    %v5031 = vpack.c.b16 %v4503, %v4495
    %v5032 = vpack.c.b16 %v4504, %v4496
    %v5033 = vpack.c.b16 %v4505, %v4497
    %v5034 = vpack.c.b16 %v4506, %v4498
    %v5035 = vpack.c.b16 %v4515, %v4507
    %v5036 = vpack.c.b16 %v4516, %v4508
    %v5037 = vpack.c.b16 %v4517, %v4509
    %v5038 = vpack.c.b16 %v4518, %v4510
    %v5039 = vpack.c.b16 %v4519, %v4511
    %v5040 = vpack.c.b16 %v4520, %v4512
    %v5041 = vpack.c.b16 %v4521, %v4513
    %v5042 = vpack.c.b16 %v4522, %v4514
    %v5043 = vpack.c.b16 %v4531, %v4523
    %v5044 = vpack.c.b16 %v4532, %v4524
    %v5045 = vpack.c.b16 %v4533, %v4525
    %v5046 = vpack.c.b16 %v4534, %v4526
    %v5047 = vpack.c.b16 %v4535, %v4527
    %v5048 = vpack.c.b16 %v4536, %v4528
    %v5049 = vpack.c.b16 %v4537, %v4529
    %v5050 = vpack.c.b16 %v4538, %v4530
    %v5051 = vpack.c.b16 %v4547, %v4539
    %v5052 = vpack.c.b16 %v4548, %v4540
    %v5053 = vpack.c.b16 %v4549, %v4541
    %v5054 = vpack.c.b16 %v4550, %v4542
    %v5055 = vpack.c.b16 %v4551, %v4543
    %v5056 = vpack.c.b16 %v4552, %v4544
    %v5057 = vpack.c.b16 %v4553, %v4545
    %v5058 = vpack.c.b16 %v4554, %v4546
    %v5059 = vpack.c.b16 %v4563, %v4555
    %v5060 = vpack.c.b16 %v4564, %v4556
    %v5061 = vpack.c.b16 %v4565, %v4557
    %v5062 = vpack.c.b16 %v4566, %v4558
    %v5063 = vpack.c.b16 %v4567, %v4559
    %v5064 = vpack.c.b16 %v4568, %v4560
    %v5065 = vpack.c.b16 %v4569, %v4561
    %v5066 = vpack.c.b16 %v4570, %v4562
    %v5067 = vpack.c.b16 %v4579, %v4571
    %v5068 = vpack.c.b16 %v4580, %v4572
    %v5069 = vpack.c.b16 %v4581, %v4573
    %v5070 = vpack.c.b16 %v4582, %v4574
    %v5071 = vpack.c.b16 %v4583, %v4575
    %v5072 = vpack.c.b16 %v4584, %v4576
    %v5073 = vpack.c.b16 %v4585, %v4577
    %v5074 = vpack.c.b16 %v4586, %v4578
    %v5075 = vpack.c.b16 %v4595, %v4587
    %v5076 = vpack.c.b16 %v4596, %v4588
    %v5077 = vpack.c.b16 %v4597, %v4589
    %v5078 = vpack.c.b16 %v4598, %v4590
    %v5079 = vpack.c.b16 %v4599, %v4591
    %v5080 = vpack.c.b16 %v4600, %v4592
    %v5081 = vpack.c.b16 %v4601, %v4593
    %v5082 = vpack.c.b16 %v4602, %v4594
    %v5083 = vpack.c.b16 %v4611, %v4603
    %v5084 = vpack.c.b16 %v4612, %v4604
    %v5085 = vpack.c.b16 %v4613, %v4605
    %v5086 = vpack.c.b16 %v4614, %v4606
    %v5087 = vpack.c.b16 %v4615, %v4607
    %v5088 = vpack.c.b16 %v4616, %v4608
    %v5089 = vpack.c.b16 %v4617, %v4609
    %v5090 = vpack.c.b16 %v4618, %v4610
    %v5091 = vpack.c.b16 %v4627, %v4619
    %v5092 = vpack.c.b16 %v4628, %v4620
    %v5093 = vpack.c.b16 %v4629, %v4621
    %v5094 = vpack.c.b16 %v4630, %v4622
    %v5095 = vpack.c.b16 %v4631, %v4623
    %v5096 = vpack.c.b16 %v4632, %v4624
    %v5097 = vpack.c.b16 %v4633, %v4625
    %v5098 = vpack.c.b16 %v4634, %v4626
    %v5099 = vpack.c.b16 %v4643, %v4635
    %v5100 = vpack.c.b16 %v4644, %v4636
    %v5101 = vpack.c.b16 %v4645, %v4637
    %v5102 = vpack.c.b16 %v4646, %v4638
    %v5103 = vpack.c.b16 %v4647, %v4639
    %v5104 = vpack.c.b16 %v4648, %v4640
    %v5105 = vpack.c.b16 %v4649, %v4641
    %v5106 = vpack.c.b16 %v4650, %v4642
    %v5107 = vpack.c.b16 %v4659, %v4651
    %v5108 = vpack.c.b16 %v4660, %v4652
    %v5109 = vpack.c.b16 %v4661, %v4653
    %v5110 = vpack.c.b16 %v4662, %v4654
    %v5111 = vpack.c.b16 %v4663, %v4655
    %v5112 = vpack.c.b16 %v4664, %v4656
    %v5113 = vpack.c.b16 %v4665, %v4657
    %v5114 = vpack.c.b16 %v4666, %v4658
    %v5115 = vpack.c.b16 %v4675, %v4667
    %v5116 = vpack.c.b16 %v4676, %v4668
    %v5117 = vpack.c.b16 %v4677, %v4669
    %v5118 = vpack.c.b16 %v4678, %v4670
    %v5119 = vpack.c.b16 %v4679, %v4671
    %v5120 = vpack.c.b16 %v4680, %v4672
    %v5121 = vpack.c.b16 %v4681, %v4673
    %v5122 = vpack.c.b16 %v4682, %v4674
    %v5123 = vpack.c.b16 %v4691, %v4683
    %v5124 = vpack.c.b16 %v4692, %v4684
    %v5125 = vpack.c.b16 %v4693, %v4685
    %v5126 = vpack.c.b16 %v4694, %v4686
    %v5127 = vpack.c.b16 %v4695, %v4687
    %v5128 = vpack.c.b16 %v4696, %v4688
    %v5129 = vpack.c.b16 %v4697, %v4689
    %v5130 = vpack.c.b16 %v4698, %v4690
    %v5131 = vpack.c.b16 %v4707, %v4699
    %v5132 = vpack.c.b16 %v4708, %v4700
    %v5133 = vpack.c.b16 %v4709, %v4701
    %v5134 = vpack.c.b16 %v4710, %v4702
    %v5135 = vpack.c.b16 %v4711, %v4703
    %v5136 = vpack.c.b16 %v4712, %v4704
    %v5137 = vpack.c.b16 %v4713, %v4705
    %v5138 = vpack.c.b16 %v4714, %v4706
    %v5139 = vpack.c.b16 %v4723, %v4715
    %v5140 = vpack.c.b16 %v4724, %v4716
    %v5141 = vpack.c.b16 %v4725, %v4717
    %v5142 = vpack.c.b16 %v4726, %v4718
    %v5143 = vpack.c.b16 %v4727, %v4719
    %v5144 = vpack.c.b16 %v4728, %v4720
    %v5145 = vpack.c.b16 %v4729, %v4721
    %v5146 = vpack.c.b16 %v4730, %v4722
    %v5147 = vpack.c.b16 %v4739, %v4731
    %v5148 = vpack.c.b16 %v4740, %v4732
    %v5149 = vpack.c.b16 %v4741, %v4733
    %v5150 = vpack.c.b16 %v4742, %v4734
    %v5151 = vpack.c.b16 %v4743, %v4735
    %v5152 = vpack.c.b16 %v4744, %v4736
    %v5153 = vpack.c.b16 %v4745, %v4737
    %v5154 = vpack.c.b16 %v4746, %v4738
    %v5155 = vpack.c.b16 %v4755, %v4747
    %v5156 = vpack.c.b16 %v4756, %v4748
    %v5157 = vpack.c.b16 %v4757, %v4749
    %v5158 = vpack.c.b16 %v4758, %v4750
    %v5159 = vpack.c.b16 %v4759, %v4751
    %v5160 = vpack.c.b16 %v4760, %v4752
    %v5161 = vpack.c.b16 %v4761, %v4753
    %v5162 = vpack.c.b16 %v4762, %v4754
    %v5163 = vpack.c.b16 %v4771, %v4763
    %v5164 = vpack.c.b16 %v4772, %v4764
    %v5165 = vpack.c.b16 %v4773, %v4765
    %v5166 = vpack.c.b16 %v4774, %v4766
    %v5167 = vpack.c.b16 %v4775, %v4767
    %v5168 = vpack.c.b16 %v4776, %v4768
    %v5169 = vpack.c.b16 %v4777, %v4769
    %v5170 = vpack.c.b16 %v4778, %v4770
    %v5171 = vpack.c.b16 %v4787, %v4779
    %v5172 = vpack.c.b16 %v4788, %v4780
    %v5173 = vpack.c.b16 %v4789, %v4781
    %v5174 = vpack.c.b16 %v4790, %v4782
    %v5175 = vpack.c.b16 %v4791, %v4783
    %v5176 = vpack.c.b16 %v4792, %v4784
    %v5177 = vpack.c.b16 %v4793, %v4785
    %v5178 = vpack.c.b16 %v4794, %v4786
    %5563 = vmatprep.subr.bf16.mxu0 %v4796
    %5564 = vmatpush1.bf16.msra.mxu0 %v4795
    %5565 = vmatprep.subr.bf16.mxu0 %v4804
    %5566 = vmatpush1.bf16.msra.mxu0 %v4803
    %5567 = vmatprep.subr.bf16.mxu0 %v4812
    %5568 = vmatpush1.bf16.msra.mxu0 %v4811
    %5569 = vmatprep.subr.bf16.mxu0 %v4820
    %5570 = vmatpush1.bf16.msra.mxu0 %v4819
    %5571 = vmatprep.subr.bf16.mxu0 %v4828
    %5572 = vmatpush1.bf16.msra.mxu0 %v4827
    %5573 = vmatprep.subr.bf16.mxu0 %v4836
    %5574 = vmatpush1.bf16.msra.mxu0 %v4835
    %5575 = vmatprep.subr.bf16.mxu0 %v4844
    %5576 = vmatpush1.bf16.msra.mxu0 %v4843
    %5577 = vmatprep.subr.bf16.mxu0 %v4852
    %5578 = vmatpush1.bf16.msra.mxu0 %v4851
    %5579 = vmatprep.subr.bf16.mxu0 %v4860
    %5580 = vmatpush1.bf16.msra.mxu0 %v4859
    %5581 = vmatprep.subr.bf16.mxu0 %v4868
    %5582 = vmatpush1.bf16.msra.mxu0 %v4867
    %5583 = vmatprep.subr.bf16.mxu0 %v4876
    %5584 = vmatpush1.bf16.msra.mxu0 %v4875
    %5585 = vmatprep.subr.bf16.mxu0 %v4884
    %5586 = vmatpush1.bf16.msra.mxu0 %v4883
    %5587 = vmatprep.subr.bf16.mxu0 %v4892
    %5588 = vmatpush1.bf16.msra.mxu0 %v4891
    %5589 = vmatprep.subr.bf16.mxu0 %v4900
    %5590 = vmatpush1.bf16.msra.mxu0 %v4899
    %5591 = vmatprep.subr.bf16.mxu0 %v4908
    %5592 = vmatpush1.bf16.msra.mxu0 %v4907
    %5593 = vmatprep.subr.bf16.mxu0 %v4916
    %5594 = vmatpush1.bf16.msra.mxu0 %v4915
    %5595 = vmatprep.mubr.bf16.mxu0 %v311
    %5596 = vmatmul.mubr.bf16.gmra.mrb[0].mxu0 %v310
    %v5597 = vpop.f32.mrb[0].mxu0
    %v5598 = vadd.f32 %v3606, %v5597
    %v5599 = vpop.f32.mrb[0].mxu0
    %v5600 = vadd.f32 %v3610, %v5599
    %v5601 = vpop.f32.mrb[0].mxu0
    %v5602 = vadd.f32 %v3606, %v5601
    %v5603 = vpop.f32.mrb[0].mxu0
    %v5604 = vadd.f32 %v3610, %v5603
    %5605 = vdwg.mxu0
    %5606 = vmatprep.subr.bf16.mxu0 %v4924
    %5607 = vmatpush1.bf16.msra.mxu0 %v4923
    %5608 = vmatprep.subr.bf16.mxu0 %v4932
    %5609 = vmatpush1.bf16.msra.mxu0 %v4931
    %5610 = vmatprep.subr.bf16.mxu0 %v4940
    %5611 = vmatpush1.bf16.msra.mxu0 %v4939
    %5612 = vmatprep.subr.bf16.mxu0 %v4948
    %5613 = vmatpush1.bf16.msra.mxu0 %v4947
    %5614 = vmatprep.subr.bf16.mxu0 %v4956
    %5615 = vmatpush1.bf16.msra.mxu0 %v4955
    %5616 = vmatprep.subr.bf16.mxu0 %v4964
    %5617 = vmatpush1.bf16.msra.mxu0 %v4963
    %5618 = vmatprep.subr.bf16.mxu0 %v4972
    %5619 = vmatpush1.bf16.msra.mxu0 %v4971
    %5620 = vmatprep.subr.bf16.mxu0 %v4980
    %5621 = vmatpush1.bf16.msra.mxu0 %v4979
    %5622 = vmatprep.subr.bf16.mxu0 %v4988
    %5623 = vmatpush1.bf16.msra.mxu0 %v4987
    %5624 = vmatprep.subr.bf16.mxu0 %v4996
    %5625 = vmatpush1.bf16.msra.mxu0 %v4995
    %5626 = vmatprep.subr.bf16.mxu0 %v5004
    %5627 = vmatpush1.bf16.msra.mxu0 %v5003
    %5628 = vmatprep.subr.bf16.mxu0 %v5012
    %5629 = vmatpush1.bf16.msra.mxu0 %v5011
    %5630 = vmatprep.subr.bf16.mxu0 %v5020
    %5631 = vmatpush1.bf16.msra.mxu0 %v5019
    %5632 = vmatprep.subr.bf16.mxu0 %v5028
    %5633 = vmatpush1.bf16.msra.mxu0 %v5027
    %5634 = vmatprep.subr.bf16.mxu0 %v5036
    %5635 = vmatpush1.bf16.msra.mxu0 %v5035
    %5636 = vmatprep.subr.bf16.mxu0 %v5044
    %5637 = vmatpush1.bf16.msra.mxu0 %v5043
    %5638 = vmatprep.mubr.bf16.mxu0 %v313
    %5639 = vmatmul.mubr.bf16.gmra.mrb[0].mxu0 %v312
    %v5640 = vpop.f32.mrb[0].mxu0
    %v5641 = vadd.f32 %v5598, %v5640
    %v5642 = vpop.f32.mrb[0].mxu0
    %v5643 = vadd.f32 %v5600, %v5642
    %v5644 = vpop.f32.mrb[0].mxu0
    %v5645 = vadd.f32 %v5602, %v5644
    %v5646 = vpop.f32.mrb[0].mxu0
    %v5647 = vadd.f32 %v5604, %v5646
    %5648 = vdwg.mxu0
    %5649 = vmatprep.subr.bf16.mxu0 %v5052
    %5650 = vmatpush1.bf16.msra.mxu0 %v5051
    %5651 = vmatprep.subr.bf16.mxu0 %v5060
    %5652 = vmatpush1.bf16.msra.mxu0 %v5059
    %5653 = vmatprep.subr.bf16.mxu0 %v5068
    %5654 = vmatpush1.bf16.msra.mxu0 %v5067
    %5655 = vmatprep.subr.bf16.mxu0 %v5076
    %5656 = vmatpush1.bf16.msra.mxu0 %v5075
    %5657 = vmatprep.subr.bf16.mxu0 %v5084
    %5658 = vmatpush1.bf16.msra.mxu0 %v5083
    %5659 = vmatprep.subr.bf16.mxu0 %v5092
    %5660 = vmatpush1.bf16.msra.mxu0 %v5091
    %5661 = vmatprep.subr.bf16.mxu0 %v5100
    %5662 = vmatpush1.bf16.msra.mxu0 %v5099
    %5663 = vmatprep.subr.bf16.mxu0 %v5108
    %5664 = vmatpush1.bf16.msra.mxu0 %v5107
    %5665 = vmatprep.subr.bf16.mxu0 %v5116
    %5666 = vmatpush1.bf16.msra.mxu0 %v5115
    %5667 = vmatprep.subr.bf16.mxu0 %v5124
    %5668 = vmatpush1.bf16.msra.mxu0 %v5123
    %5669 = vmatprep.subr.bf16.mxu0 %v5132
    %5670 = vmatpush1.bf16.msra.mxu0 %v5131
    %5671 = vmatprep.subr.bf16.mxu0 %v5140
    %5672 = vmatpush1.bf16.msra.mxu0 %v5139
    %5673 = vmatprep.subr.bf16.mxu0 %v5148
    %5674 = vmatpush1.bf16.msra.mxu0 %v5147
    %5675 = vmatprep.subr.bf16.mxu0 %v5156
    %5676 = vmatpush1.bf16.msra.mxu0 %v5155
    %5677 = vmatprep.subr.bf16.mxu0 %v5164
    %5678 = vmatpush1.bf16.msra.mxu0 %v5163
    %5679 = vmatprep.subr.bf16.mxu0 %v5172
    %5680 = vmatpush1.bf16.msra.mxu0 %v5171
    %5681 = vmatprep.mubr.bf16.mxu0 %v315
    %5682 = vmatmul.mubr.bf16.gmra.mrb[0].mxu0 %v314
    %v5683 = vpop.f32.mrb[0].mxu0
    %v5684 = vadd.f32 %v5641, %v5683
    %v5685 = vpop.f32.mrb[0].mxu0
    %v5686 = vadd.f32 %v5643, %v5685
    %v5687 = vpop.f32.mrb[0].mxu0
    %v5688 = vadd.f32 %v5645, %v5687
    %v5689 = vpop.f32.mrb[0].mxu0
    %v5690 = vadd.f32 %v5647, %v5689
    %5691 = vdwg.mxu0
    %5692 = vmatprep.subr.bf16.mxu0 %v4798
    %5693 = vmatpush1.bf16.msra.mxu0 %v4797
    %5694 = vmatprep.subr.bf16.mxu0 %v4806
    %5695 = vmatpush1.bf16.msra.mxu0 %v4805
    %5696 = vmatprep.subr.bf16.mxu0 %v4814
    %5697 = vmatpush1.bf16.msra.mxu0 %v4813
    %5698 = vmatprep.subr.bf16.mxu0 %v4822
    %5699 = vmatpush1.bf16.msra.mxu0 %v4821
    %5700 = vmatprep.subr.bf16.mxu0 %v4830
    %5701 = vmatpush1.bf16.msra.mxu0 %v4829
    %5702 = vmatprep.subr.bf16.mxu0 %v4838
    %5703 = vmatpush1.bf16.msra.mxu0 %v4837
    %5704 = vmatprep.subr.bf16.mxu0 %v4846
    %5705 = vmatpush1.bf16.msra.mxu0 %v4845
    %5706 = vmatprep.subr.bf16.mxu0 %v4854
    %5707 = vmatpush1.bf16.msra.mxu0 %v4853
    %5708 = vmatprep.subr.bf16.mxu0 %v4862
    %5709 = vmatpush1.bf16.msra.mxu0 %v4861
    %5710 = vmatprep.subr.bf16.mxu0 %v4870
    %5711 = vmatpush1.bf16.msra.mxu0 %v4869
    %5712 = vmatprep.subr.bf16.mxu0 %v4878
    %5713 = vmatpush1.bf16.msra.mxu0 %v4877
    %5714 = vmatprep.subr.bf16.mxu0 %v4886
    %5715 = vmatpush1.bf16.msra.mxu0 %v4885
    %5716 = vmatprep.subr.bf16.mxu0 %v4894
    %5717 = vmatpush1.bf16.msra.mxu0 %v4893
    %5718 = vmatprep.subr.bf16.mxu0 %v4902
    %5719 = vmatpush1.bf16.msra.mxu0 %v4901
    %5720 = vmatprep.subr.bf16.mxu0 %v4910
    %5721 = vmatpush1.bf16.msra.mxu0 %v4909
    %5722 = vmatprep.subr.bf16.mxu0 %v4918
    %5723 = vmatpush1.bf16.msra.mxu0 %v4917
    %5724 = vmatprep.mubr.bf16.mxu0 %v311
    %5725 = vmatmul.mubr.bf16.gmra.mrb[0].mxu0 %v310
    %v5726 = vpop.f32.mrb[0].mxu0
    %v5727 = vadd.f32 %v3614, %v5726
    %v5728 = vpop.f32.mrb[0].mxu0
    %v5729 = vadd.f32 %v3618, %v5728
    %v5730 = vpop.f32.mrb[0].mxu0
    %v5731 = vadd.f32 %v3614, %v5730
    %v5732 = vpop.f32.mrb[0].mxu0
    %v5733 = vadd.f32 %v3618, %v5732
    %5734 = vdwg.mxu0
    %5735 = vmatprep.subr.bf16.mxu0 %v4926
    %5736 = vmatpush1.bf16.msra.mxu0 %v4925
    %5737 = vmatprep.subr.bf16.mxu0 %v4934
    %5738 = vmatpush1.bf16.msra.mxu0 %v4933
    %5739 = vmatprep.subr.bf16.mxu0 %v4942
    %5740 = vmatpush1.bf16.msra.mxu0 %v4941
    %5741 = vmatprep.subr.bf16.mxu0 %v4950
    %5742 = vmatpush1.bf16.msra.mxu0 %v4949
    %5743 = vmatprep.subr.bf16.mxu0 %v4958
    %5744 = vmatpush1.bf16.msra.mxu0 %v4957
    %5745 = vmatprep.subr.bf16.mxu0 %v4966
    %5746 = vmatpush1.bf16.msra.mxu0 %v4965
    %5747 = vmatprep.subr.bf16.mxu0 %v4974
    %5748 = vmatpush1.bf16.msra.mxu0 %v4973
    %5749 = vmatprep.subr.bf16.mxu0 %v4982
    %5750 = vmatpush1.bf16.msra.mxu0 %v4981
    %5751 = vmatprep.subr.bf16.mxu0 %v4990
    %5752 = vmatpush1.bf16.msra.mxu0 %v4989
    %5753 = vmatprep.subr.bf16.mxu0 %v4998
    %5754 = vmatpush1.bf16.msra.mxu0 %v4997
    %5755 = vmatprep.subr.bf16.mxu0 %v5006
    %5756 = vmatpush1.bf16.msra.mxu0 %v5005
    %5757 = vmatprep.subr.bf16.mxu0 %v5014
    %5758 = vmatpush1.bf16.msra.mxu0 %v5013
    %5759 = vmatprep.subr.bf16.mxu0 %v5022
    %5760 = vmatpush1.bf16.msra.mxu0 %v5021
    %5761 = vmatprep.subr.bf16.mxu0 %v5030
    %5762 = vmatpush1.bf16.msra.mxu0 %v5029
    %5763 = vmatprep.subr.bf16.mxu0 %v5038
    %5764 = vmatpush1.bf16.msra.mxu0 %v5037
    %5765 = vmatprep.subr.bf16.mxu0 %v5046
    %5766 = vmatpush1.bf16.msra.mxu0 %v5045
    %5767 = vmatprep.mubr.bf16.mxu0 %v313
    %5768 = vmatmul.mubr.bf16.gmra.mrb[0].mxu0 %v312
    %v5769 = vpop.f32.mrb[0].mxu0
    %v5770 = vadd.f32 %v5727, %v5769
    %v5771 = vpop.f32.mrb[0].mxu0
    %v5772 = vadd.f32 %v5729, %v5771
    %v5773 = vpop.f32.mrb[0].mxu0
    %v5774 = vadd.f32 %v5731, %v5773
    %v5775 = vpop.f32.mrb[0].mxu0
    %v5776 = vadd.f32 %v5733, %v5775
    %5777 = vdwg.mxu0
    %5778 = vmatprep.subr.bf16.mxu0 %v5054
    %5779 = vmatpush1.bf16.msra.mxu0 %v5053
    %5780 = vmatprep.subr.bf16.mxu0 %v5062
    %5781 = vmatpush1.bf16.msra.mxu0 %v5061
    %5782 = vmatprep.subr.bf16.mxu0 %v5070
    %5783 = vmatpush1.bf16.msra.mxu0 %v5069
    %5784 = vmatprep.subr.bf16.mxu0 %v5078
    %5785 = vmatpush1.bf16.msra.mxu0 %v5077
    %5786 = vmatprep.subr.bf16.mxu0 %v5086
    %5787 = vmatpush1.bf16.msra.mxu0 %v5085
    %5788 = vmatprep.subr.bf16.mxu0 %v5094
    %5789 = vmatpush1.bf16.msra.mxu0 %v5093
    %5790 = vmatprep.subr.bf16.mxu0 %v5102
    %5791 = vmatpush1.bf16.msra.mxu0 %v5101
    %5792 = vmatprep.subr.bf16.mxu0 %v5110
    %5793 = vmatpush1.bf16.msra.mxu0 %v5109
    %5794 = vmatprep.subr.bf16.mxu0 %v5118
    %5795 = vmatpush1.bf16.msra.mxu0 %v5117
    %5796 = vmatprep.subr.bf16.mxu0 %v5126
    %5797 = vmatpush1.bf16.msra.mxu0 %v5125
    %5798 = vmatprep.subr.bf16.mxu0 %v5134
    %5799 = vmatpush1.bf16.msra.mxu0 %v5133
    %5800 = vmatprep.subr.bf16.mxu0 %v5142
    %5801 = vmatpush1.bf16.msra.mxu0 %v5141
    %5802 = vmatprep.subr.bf16.mxu0 %v5150
    %5803 = vmatpush1.bf16.msra.mxu0 %v5149
    %5804 = vmatprep.subr.bf16.mxu0 %v5158
    %5805 = vmatpush1.bf16.msra.mxu0 %v5157
    %5806 = vmatprep.subr.bf16.mxu0 %v5166
    %5807 = vmatpush1.bf16.msra.mxu0 %v5165
    %5808 = vmatprep.subr.bf16.mxu0 %v5174
    %5809 = vmatpush1.bf16.msra.mxu0 %v5173
    %5810 = vmatprep.mubr.bf16.mxu0 %v315
    %5811 = vmatmul.mubr.bf16.gmra.mrb[0].mxu0 %v314
    %v5812 = vpop.f32.mrb[0].mxu0
    %v5813 = vadd.f32 %v5770, %v5812
    %v5814 = vpop.f32.mrb[0].mxu0
    %v5815 = vadd.f32 %v5772, %v5814
    %v5816 = vpop.f32.mrb[0].mxu0
    %v5817 = vadd.f32 %v5774, %v5816
    %v5818 = vpop.f32.mrb[0].mxu0
    %v5819 = vadd.f32 %v5776, %v5818
    %5820 = vdwg.mxu0
    %5821 = vmatprep.subr.bf16.mxu0 %v4800
    %5822 = vmatpush1.bf16.msra.mxu0 %v4799
    %5823 = vmatprep.subr.bf16.mxu0 %v4808
    %5824 = vmatpush1.bf16.msra.mxu0 %v4807
    %5825 = vmatprep.subr.bf16.mxu0 %v4816
    %5826 = vmatpush1.bf16.msra.mxu0 %v4815
    %5827 = vmatprep.subr.bf16.mxu0 %v4824
    %5828 = vmatpush1.bf16.msra.mxu0 %v4823
    %5829 = vmatprep.subr.bf16.mxu0 %v4832
    %5830 = vmatpush1.bf16.msra.mxu0 %v4831
    %5831 = vmatprep.subr.bf16.mxu0 %v4840
    %5832 = vmatpush1.bf16.msra.mxu0 %v4839
    %5833 = vmatprep.subr.bf16.mxu0 %v4848
    %5834 = vmatpush1.bf16.msra.mxu0 %v4847
    %5835 = vmatprep.subr.bf16.mxu0 %v4856
    %5836 = vmatpush1.bf16.msra.mxu0 %v4855
    %5837 = vmatprep.subr.bf16.mxu0 %v4864
    %5838 = vmatpush1.bf16.msra.mxu0 %v4863
    %5839 = vmatprep.subr.bf16.mxu0 %v4872
    %5840 = vmatpush1.bf16.msra.mxu0 %v4871
    %5841 = vmatprep.subr.bf16.mxu0 %v4880
    %5842 = vmatpush1.bf16.msra.mxu0 %v4879
    %5843 = vmatprep.subr.bf16.mxu0 %v4888
    %5844 = vmatpush1.bf16.msra.mxu0 %v4887
    %5845 = vmatprep.subr.bf16.mxu0 %v4896
    %5846 = vmatpush1.bf16.msra.mxu0 %v4895
    %5847 = vmatprep.subr.bf16.mxu0 %v4904
    %5848 = vmatpush1.bf16.msra.mxu0 %v4903
    %5849 = vmatprep.subr.bf16.mxu0 %v4912
    %5850 = vmatpush1.bf16.msra.mxu0 %v4911
    %5851 = vmatprep.subr.bf16.mxu0 %v4920
    %5852 = vmatpush1.bf16.msra.mxu0 %v4919
    %5853 = vmatprep.mubr.bf16.mxu0 %v311
    %5854 = vmatmul.mubr.bf16.gmra.mrb[0].mxu0 %v310
    %v5855 = vpop.f32.mrb[0].mxu0
    %v5856 = vadd.f32 %v3622, %v5855
    %v5857 = vpop.f32.mrb[0].mxu0
    %v5858 = vadd.f32 %v3626, %v5857
    %v5859 = vpop.f32.mrb[0].mxu0
    %v5860 = vadd.f32 %v3622, %v5859
    %v5861 = vpop.f32.mrb[0].mxu0
    %v5862 = vadd.f32 %v3626, %v5861
    %5863 = vdwg.mxu0
    %5864 = vmatprep.subr.bf16.mxu0 %v4928
    %5865 = vmatpush1.bf16.msra.mxu0 %v4927
    %5866 = vmatprep.subr.bf16.mxu0 %v4936
    %5867 = vmatpush1.bf16.msra.mxu0 %v4935
    %5868 = vmatprep.subr.bf16.mxu0 %v4944
    %5869 = vmatpush1.bf16.msra.mxu0 %v4943
    %5870 = vmatprep.subr.bf16.mxu0 %v4952
    %5871 = vmatpush1.bf16.msra.mxu0 %v4951
    %5872 = vmatprep.subr.bf16.mxu0 %v4960
    %5873 = vmatpush1.bf16.msra.mxu0 %v4959
    %5874 = vmatprep.subr.bf16.mxu0 %v4968
    %5875 = vmatpush1.bf16.msra.mxu0 %v4967
    %5876 = vmatprep.subr.bf16.mxu0 %v4976
    %5877 = vmatpush1.bf16.msra.mxu0 %v4975
    %5878 = vmatprep.subr.bf16.mxu0 %v4984
    %5879 = vmatpush1.bf16.msra.mxu0 %v4983
    %5880 = vmatprep.subr.bf16.mxu0 %v4992
    %5881 = vmatpush1.bf16.msra.mxu0 %v4991
    %5882 = vmatprep.subr.bf16.mxu0 %v5000
    %5883 = vmatpush1.bf16.msra.mxu0 %v4999
    %5884 = vmatprep.subr.bf16.mxu0 %v5008
    %5885 = vmatpush1.bf16.msra.mxu0 %v5007
    %5886 = vmatprep.subr.bf16.mxu0 %v5016
    %5887 = vmatpush1.bf16.msra.mxu0 %v5015
    %5888 = vmatprep.subr.bf16.mxu0 %v5024
    %5889 = vmatpush1.bf16.msra.mxu0 %v5023
    %5890 = vmatprep.subr.bf16.mxu0 %v5032
    %5891 = vmatpush1.bf16.msra.mxu0 %v5031
    %5892 = vmatprep.subr.bf16.mxu0 %v5040
    %5893 = vmatpush1.bf16.msra.mxu0 %v5039
    %5894 = vmatprep.subr.bf16.mxu0 %v5048
    %5895 = vmatpush1.bf16.msra.mxu0 %v5047
    %5896 = vmatprep.mubr.bf16.mxu0 %v313
    %5897 = vmatmul.mubr.bf16.gmra.mrb[0].mxu0 %v312
    %v5898 = vpop.f32.mrb[0].mxu0
    %v5899 = vadd.f32 %v5856, %v5898
    %v5900 = vpop.f32.mrb[0].mxu0
    %v5901 = vadd.f32 %v5858, %v5900
    %v5902 = vpop.f32.mrb[0].mxu0
    %v5903 = vadd.f32 %v5860, %v5902
    %v5904 = vpop.f32.mrb[0].mxu0
    %v5905 = vadd.f32 %v5862, %v5904
    %5906 = vdwg.mxu0
    %5907 = vmatprep.subr.bf16.mxu0 %v5056
    %5908 = vmatpush1.bf16.msra.mxu0 %v5055
    %5909 = vmatprep.subr.bf16.mxu0 %v5064
    %5910 = vmatpush1.bf16.msra.mxu0 %v5063
    %5911 = vmatprep.subr.bf16.mxu0 %v5072
    %5912 = vmatpush1.bf16.msra.mxu0 %v5071
    %5913 = vmatprep.subr.bf16.mxu0 %v5080
    %5914 = vmatpush1.bf16.msra.mxu0 %v5079
    %5915 = vmatprep.subr.bf16.mxu0 %v5088
    %5916 = vmatpush1.bf16.msra.mxu0 %v5087
    %5917 = vmatprep.subr.bf16.mxu0 %v5096
    %5918 = vmatpush1.bf16.msra.mxu0 %v5095
    %5919 = vmatprep.subr.bf16.mxu0 %v5104
    %5920 = vmatpush1.bf16.msra.mxu0 %v5103
    %5921 = vmatprep.subr.bf16.mxu0 %v5112
    %5922 = vmatpush1.bf16.msra.mxu0 %v5111
    %5923 = vmatprep.subr.bf16.mxu0 %v5120
    %5924 = vmatpush1.bf16.msra.mxu0 %v5119
    %5925 = vmatprep.subr.bf16.mxu0 %v5128
    %5926 = vmatpush1.bf16.msra.mxu0 %v5127
    %5927 = vmatprep.subr.bf16.mxu0 %v5136
    %5928 = vmatpush1.bf16.msra.mxu0 %v5135
    %5929 = vmatprep.subr.bf16.mxu0 %v5144
    %5930 = vmatpush1.bf16.msra.mxu0 %v5143
    %5931 = vmatprep.subr.bf16.mxu0 %v5152
    %5932 = vmatpush1.bf16.msra.mxu0 %v5151
    %5933 = vmatprep.subr.bf16.mxu0 %v5160
    %5934 = vmatpush1.bf16.msra.mxu0 %v5159
    %5935 = vmatprep.subr.bf16.mxu0 %v5168
    %5936 = vmatpush1.bf16.msra.mxu0 %v5167
    %5937 = vmatprep.subr.bf16.mxu0 %v5176
    %5938 = vmatpush1.bf16.msra.mxu0 %v5175
    %5939 = vmatprep.mubr.bf16.mxu0 %v315
    %5940 = vmatmul.mubr.bf16.gmra.mrb[0].mxu0 %v314
    %v5941 = vpop.f32.mrb[0].mxu0
    %v5942 = vadd.f32 %v5899, %v5941
    %v5943 = vpop.f32.mrb[0].mxu0
    %v5944 = vadd.f32 %v5901, %v5943
    %v5945 = vpop.f32.mrb[0].mxu0
    %v5946 = vadd.f32 %v5903, %v5945
    %v5947 = vpop.f32.mrb[0].mxu0
    %v5948 = vadd.f32 %v5905, %v5947
    %5949 = vdwg.mxu0
    %5950 = vmatprep.subr.bf16.mxu0 %v4802
    %5951 = vmatpush1.bf16.msra.mxu0 %v4801
    %5952 = vmatprep.subr.bf16.mxu0 %v4810
    %5953 = vmatpush1.bf16.msra.mxu0 %v4809
    %5954 = vmatprep.subr.bf16.mxu0 %v4818
    %5955 = vmatpush1.bf16.msra.mxu0 %v4817
    %5956 = vmatprep.subr.bf16.mxu0 %v4826
    %5957 = vmatpush1.bf16.msra.mxu0 %v4825
    %5958 = vmatprep.subr.bf16.mxu0 %v4834
    %5959 = vmatpush1.bf16.msra.mxu0 %v4833
    %5960 = vmatprep.subr.bf16.mxu0 %v4842
    %5961 = vmatpush1.bf16.msra.mxu0 %v4841
    %5962 = vmatprep.subr.bf16.mxu0 %v4850
    %5963 = vmatpush1.bf16.msra.mxu0 %v4849
    %5964 = vmatprep.subr.bf16.mxu0 %v4858
    %5965 = vmatpush1.bf16.msra.mxu0 %v4857
    %5966 = vmatprep.subr.bf16.mxu0 %v4866
    %5967 = vmatpush1.bf16.msra.mxu0 %v4865
    %5968 = vmatprep.subr.bf16.mxu0 %v4874
    %5969 = vmatpush1.bf16.msra.mxu0 %v4873
    %5970 = vmatprep.subr.bf16.mxu0 %v4882
    %5971 = vmatpush1.bf16.msra.mxu0 %v4881
    %5972 = vmatprep.subr.bf16.mxu0 %v4890
    %5973 = vmatpush1.bf16.msra.mxu0 %v4889
    %5974 = vmatprep.subr.bf16.mxu0 %v4898
    %5975 = vmatpush1.bf16.msra.mxu0 %v4897
    %5976 = vmatprep.subr.bf16.mxu0 %v4906
    %5977 = vmatpush1.bf16.msra.mxu0 %v4905
    %5978 = vmatprep.subr.bf16.mxu0 %v4914
    %5979 = vmatpush1.bf16.msra.mxu0 %v4913
    %5980 = vmatprep.subr.bf16.mxu0 %v4922
    %5981 = vmatpush1.bf16.msra.mxu0 %v4921
    %5982 = vmatprep.mubr.bf16.mxu0 %v311
    %5983 = vmatmul.mubr.bf16.gmra.mrb[0].mxu0 %v310
    %v5984 = vpop.f32.mrb[0].mxu0
    %v5985 = vadd.f32 %v3630, %v5984
    %v5986 = vpop.f32.mrb[0].mxu0
    %v5987 = vadd.f32 %v3634, %v5986
    %v5988 = vpop.f32.mrb[0].mxu0
    %v5989 = vadd.f32 %v3630, %v5988
    %v5990 = vpop.f32.mrb[0].mxu0
    %v5991 = vadd.f32 %v3634, %v5990
    %5992 = vdwg.mxu0
    %5993 = vmatprep.subr.bf16.mxu0 %v4930
    %5994 = vmatpush1.bf16.msra.mxu0 %v4929
    %5995 = vmatprep.subr.bf16.mxu0 %v4938
    %5996 = vmatpush1.bf16.msra.mxu0 %v4937
    %5997 = vmatprep.subr.bf16.mxu0 %v4946
    %5998 = vmatpush1.bf16.msra.mxu0 %v4945
    %5999 = vmatprep.subr.bf16.mxu0 %v4954
    %6000 = vmatpush1.bf16.msra.mxu0 %v4953
    %6001 = vmatprep.subr.bf16.mxu0 %v4962
    %6002 = vmatpush1.bf16.msra.mxu0 %v4961
    %6003 = vmatprep.subr.bf16.mxu0 %v4970
    %6004 = vmatpush1.bf16.msra.mxu0 %v4969
    %6005 = vmatprep.subr.bf16.mxu0 %v4978
    %6006 = vmatpush1.bf16.msra.mxu0 %v4977
    %6007 = vmatprep.subr.bf16.mxu0 %v4986
    %6008 = vmatpush1.bf16.msra.mxu0 %v4985
    %6009 = vmatprep.subr.bf16.mxu0 %v4994
    %6010 = vmatpush1.bf16.msra.mxu0 %v4993
    %6011 = vmatprep.subr.bf16.mxu0 %v5002
    %6012 = vmatpush1.bf16.msra.mxu0 %v5001
    %6013 = vmatprep.subr.bf16.mxu0 %v5010
    %6014 = vmatpush1.bf16.msra.mxu0 %v5009
    %6015 = vmatprep.subr.bf16.mxu0 %v5018
    %6016 = vmatpush1.bf16.msra.mxu0 %v5017
    %6017 = vmatprep.subr.bf16.mxu0 %v5026
    %6018 = vmatpush1.bf16.msra.mxu0 %v5025
    %6019 = vmatprep.subr.bf16.mxu0 %v5034
    %6020 = vmatpush1.bf16.msra.mxu0 %v5033
    %6021 = vmatprep.subr.bf16.mxu0 %v5042
    %6022 = vmatpush1.bf16.msra.mxu0 %v5041
    %6023 = vmatprep.subr.bf16.mxu0 %v5050
    %6024 = vmatpush1.bf16.msra.mxu0 %v5049
    %6025 = vmatprep.mubr.bf16.mxu0 %v313
    %6026 = vmatmul.mubr.bf16.gmra.mrb[0].mxu0 %v312
    %v6027 = vpop.f32.mrb[0].mxu0
    %v6028 = vadd.f32 %v5985, %v6027
    %v6029 = vpop.f32.mrb[0].mxu0
    %v6030 = vadd.f32 %v5987, %v6029
    %v6031 = vpop.f32.mrb[0].mxu0
    %v6032 = vadd.f32 %v5989, %v6031
    %v6033 = vpop.f32.mrb[0].mxu0
    %v6034 = vadd.f32 %v5991, %v6033
    %6035 = vdwg.mxu0
    %6036 = vmatprep.subr.bf16.mxu0 %v5058
    %6037 = vmatpush1.bf16.msra.mxu0 %v5057
    %6038 = vmatprep.subr.bf16.mxu0 %v5066
    %6039 = vmatpush1.bf16.msra.mxu0 %v5065
    %6040 = vmatprep.subr.bf16.mxu0 %v5074
    %6041 = vmatpush1.bf16.msra.mxu0 %v5073
    %6042 = vmatprep.subr.bf16.mxu0 %v5082
    %6043 = vmatpush1.bf16.msra.mxu0 %v5081
    %6044 = vmatprep.subr.bf16.mxu0 %v5090
    %6045 = vmatpush1.bf16.msra.mxu0 %v5089
    %6046 = vmatprep.subr.bf16.mxu0 %v5098
    %6047 = vmatpush1.bf16.msra.mxu0 %v5097
    %6048 = vmatprep.subr.bf16.mxu0 %v5106
    %6049 = vmatpush1.bf16.msra.mxu0 %v5105
    %6050 = vmatprep.subr.bf16.mxu0 %v5114
    %6051 = vmatpush1.bf16.msra.mxu0 %v5113
    %6052 = vmatprep.subr.bf16.mxu0 %v5122
    %6053 = vmatpush1.bf16.msra.mxu0 %v5121
    %6054 = vmatprep.subr.bf16.mxu0 %v5130
    %6055 = vmatpush1.bf16.msra.mxu0 %v5129
    %6056 = vmatprep.subr.bf16.mxu0 %v5138
    %6057 = vmatpush1.bf16.msra.mxu0 %v5137
    %6058 = vmatprep.subr.bf16.mxu0 %v5146
    %6059 = vmatpush1.bf16.msra.mxu0 %v5145
    %6060 = vmatprep.subr.bf16.mxu0 %v5154
    %6061 = vmatpush1.bf16.msra.mxu0 %v5153
    %6062 = vmatprep.subr.bf16.mxu0 %v5162
    %6063 = vmatpush1.bf16.msra.mxu0 %v5161
    %6064 = vmatprep.subr.bf16.mxu0 %v5170
    %6065 = vmatpush1.bf16.msra.mxu0 %v5169
    %6066 = vmatprep.subr.bf16.mxu0 %v5178
    %6067 = vmatpush1.bf16.msra.mxu0 %v5177
    %6068 = vmatprep.mubr.bf16.mxu0 %v315
    %6069 = vmatmul.mubr.bf16.gmra.mrb[0].mxu0 %v314
    %v6070 = vpop.f32.mrb[0].mxu0
    %v6071 = vadd.f32 %v6028, %v6070
    %v6072 = vpop.f32.mrb[0].mxu0
    %v6073 = vadd.f32 %v6030, %v6072
    %v6074 = vpop.f32.mrb[0].mxu0
    %v6075 = vadd.f32 %v6032, %v6074
    %v6076 = vpop.f32.mrb[0].mxu0
    %v6077 = vadd.f32 %v6034, %v6076
    %6078 = vdwg.mxu0
    %v6079 = vld [vmem:[#allocation7] sm:$0xff]
    %v6080 = vld [vmem:[#allocation7 + $0x8] sm:$0xff]
    %v6081 = vld [vmem:[#allocation7 + $0x10] sm:$0xff]
    %v6082 = vld [vmem:[#allocation7 + $0x18] sm:$0xff]
    %v6083 = vld [vmem:[#allocation7 + $0x20] sm:$0xff]
    %v6084 = vld [vmem:[#allocation7 + $0x28] sm:$0xff]
    %v6085 = vld [vmem:[#allocation7 + $0x30] sm:$0xff]
    %v6086 = vld [vmem:[#allocation7 + $0x38] sm:$0xff]
    %v6087 = vld [vmem:[#allocation7 + $0x40] sm:$0xff]
    %v6088 = vld [vmem:[#allocation7 + $0x48] sm:$0xff]
    %v6089 = vld [vmem:[#allocation7 + $0x50] sm:$0xff]
    %v6090 = vld [vmem:[#allocation7 + $0x58] sm:$0xff]
    %v6091 = vld [vmem:[#allocation7 + $0x60] sm:$0xff]
    %v6092 = vld [vmem:[#allocation7 + $0x68] sm:$0xff]
    %v6093 = vld [vmem:[#allocation7 + $0x70] sm:$0xff]
    %v6094 = vld [vmem:[#allocation7 + $0x78] sm:$0xff]
    %v6095 = vld [vmem:[#allocation7 + $0x80] sm:$0xff]
    %v6096 = vld [vmem:[#allocation7 + $0x88] sm:$0xff]
    %v6097 = vld [vmem:[#allocation7 + $0x90] sm:$0xff]
    %v6098 = vld [vmem:[#allocation7 + $0x98] sm:$0xff]
    %v6099 = vld [vmem:[#allocation7 + $0xa0] sm:$0xff]
    %v6100 = vld [vmem:[#allocation7 + $0xa8] sm:$0xff]
    %v6101 = vld [vmem:[#allocation7 + $0xb0] sm:$0xff]
    %v6102 = vld [vmem:[#allocation7 + $0xb8] sm:$0xff]
    %v6103 = vld [vmem:[#allocation7 + $0xc0] sm:$0xff]
    %v6104 = vld [vmem:[#allocation7 + $0xc8] sm:$0xff]
    %v6105 = vld [vmem:[#allocation7 + $0xd0] sm:$0xff]
    %v6106 = vld [vmem:[#allocation7 + $0xd8] sm:$0xff]
    %v6107 = vld [vmem:[#allocation7 + $0xe0] sm:$0xff]
    %v6108 = vld [vmem:[#allocation7 + $0xe8] sm:$0xff]
    %v6109 = vld [vmem:[#allocation7 + $0xf0] sm:$0xff]
    %v6110 = vld [vmem:[#allocation7 + $0xf8] sm:$0xff]
    %v6111 = vld [vmem:[#allocation7 + $0x100] sm:$0xff]
    %v6112 = vld [vmem:[#allocation7 + $0x108] sm:$0xff]
    %v6113 = vld [vmem:[#allocation7 + $0x110] sm:$0xff]
    %v6114 = vld [vmem:[#allocation7 + $0x118] sm:$0xff]
    %v6115 = vld [vmem:[#allocation7 + $0x120] sm:$0xff]
    %v6116 = vld [vmem:[#allocation7 + $0x128] sm:$0xff]
    %v6117 = vld [vmem:[#allocation7 + $0x130] sm:$0xff]
    %v6118 = vld [vmem:[#allocation7 + $0x138] sm:$0xff]
    %v6119 = vld [vmem:[#allocation7 + $0x140] sm:$0xff]
    %v6120 = vld [vmem:[#allocation7 + $0x148] sm:$0xff]
    %v6121 = vld [vmem:[#allocation7 + $0x150] sm:$0xff]
    %v6122 = vld [vmem:[#allocation7 + $0x158] sm:$0xff]
    %v6123 = vld [vmem:[#allocation7 + $0x160] sm:$0xff]
    %v6124 = vld [vmem:[#allocation7 + $0x168] sm:$0xff]
    %v6125 = vld [vmem:[#allocation7 + $0x170] sm:$0xff]
    %v6126 = vld [vmem:[#allocation7 + $0x178] sm:$0xff]
    %v6127 = vld [vmem:[#allocation7 + $0x180] sm:$0xff]
    %v6128 = vld [vmem:[#allocation7 + $0x188] sm:$0xff]
    %v6129 = vld [vmem:[#allocation7 + $0x190] sm:$0xff]
    %v6130 = vld [vmem:[#allocation7 + $0x198] sm:$0xff]
    %v6131 = vld [vmem:[#allocation7 + $0x1a0] sm:$0xff]
    %v6132 = vld [vmem:[#allocation7 + $0x1a8] sm:$0xff]
    %v6133 = vld [vmem:[#allocation7 + $0x1b0] sm:$0xff]
    %v6134 = vld [vmem:[#allocation7 + $0x1b8] sm:$0xff]
    %v6135 = vld [vmem:[#allocation7 + $0x1c0] sm:$0xff]
    %v6136 = vld [vmem:[#allocation7 + $0x1c8] sm:$0xff]
    %v6137 = vld [vmem:[#allocation7 + $0x1d0] sm:$0xff]
    %v6138 = vld [vmem:[#allocation7 + $0x1d8] sm:$0xff]
    %v6139 = vld [vmem:[#allocation7 + $0x1e0] sm:$0xff]
    %v6140 = vld [vmem:[#allocation7 + $0x1e8] sm:$0xff]
    %v6141 = vld [vmem:[#allocation7 + $0x1f0] sm:$0xff]
    %v6142 = vld [vmem:[#allocation7 + $0x1f8] sm:$0xff]
    %v6143 = vld [vmem:[#allocation7 + $0x200] sm:$0xff]
    %v6144 = vld [vmem:[#allocation7 + $0x208] sm:$0xff]
    %v6145 = vld [vmem:[#allocation7 + $0x210] sm:$0xff]
    %v6146 = vld [vmem:[#allocation7 + $0x218] sm:$0xff]
    %v6147 = vld [vmem:[#allocation7 + $0x220] sm:$0xff]
    %v6148 = vld [vmem:[#allocation7 + $0x228] sm:$0xff]
    %v6149 = vld [vmem:[#allocation7 + $0x230] sm:$0xff]
    %v6150 = vld [vmem:[#allocation7 + $0x238] sm:$0xff]
    %v6151 = vld [vmem:[#allocation7 + $0x240] sm:$0xff]
    %v6152 = vld [vmem:[#allocation7 + $0x248] sm:$0xff]
    %v6153 = vld [vmem:[#allocation7 + $0x250] sm:$0xff]
    %v6154 = vld [vmem:[#allocation7 + $0x258] sm:$0xff]
    %v6155 = vld [vmem:[#allocation7 + $0x260] sm:$0xff]
    %v6156 = vld [vmem:[#allocation7 + $0x268] sm:$0xff]
    %v6157 = vld [vmem:[#allocation7 + $0x270] sm:$0xff]
    %v6158 = vld [vmem:[#allocation7 + $0x278] sm:$0xff]
    %v6159 = vld [vmem:[#allocation7 + $0x280] sm:$0xff]
    %v6160 = vld [vmem:[#allocation7 + $0x288] sm:$0xff]
    %v6161 = vld [vmem:[#allocation7 + $0x290] sm:$0xff]
    %v6162 = vld [vmem:[#allocation7 + $0x298] sm:$0xff]
    %v6163 = vld [vmem:[#allocation7 + $0x2a0] sm:$0xff]
    %v6164 = vld [vmem:[#allocation7 + $0x2a8] sm:$0xff]
    %v6165 = vld [vmem:[#allocation7 + $0x2b0] sm:$0xff]
    %v6166 = vld [vmem:[#allocation7 + $0x2b8] sm:$0xff]
    %v6167 = vld [vmem:[#allocation7 + $0x2c0] sm:$0xff]
    %v6168 = vld [vmem:[#allocation7 + $0x2c8] sm:$0xff]
    %v6169 = vld [vmem:[#allocation7 + $0x2d0] sm:$0xff]
    %v6170 = vld [vmem:[#allocation7 + $0x2d8] sm:$0xff]
    %v6171 = vld [vmem:[#allocation7 + $0x2e0] sm:$0xff]
    %v6172 = vld [vmem:[#allocation7 + $0x2e8] sm:$0xff]
    %v6173 = vld [vmem:[#allocation7 + $0x2f0] sm:$0xff]
    %v6174 = vld [vmem:[#allocation7 + $0x2f8] sm:$0xff]
    %v6175 = vld [vmem:[#allocation7 + $0x300] sm:$0xff]
    %v6176 = vld [vmem:[#allocation7 + $0x308] sm:$0xff]
    %v6177 = vld [vmem:[#allocation7 + $0x310] sm:$0xff]
    %v6178 = vld [vmem:[#allocation7 + $0x318] sm:$0xff]
    %v6179 = vld [vmem:[#allocation7 + $0x320] sm:$0xff]
    %v6180 = vld [vmem:[#allocation7 + $0x328] sm:$0xff]
    %v6181 = vld [vmem:[#allocation7 + $0x330] sm:$0xff]
    %v6182 = vld [vmem:[#allocation7 + $0x338] sm:$0xff]
    %v6183 = vld [vmem:[#allocation7 + $0x340] sm:$0xff]
    %v6184 = vld [vmem:[#allocation7 + $0x348] sm:$0xff]
    %v6185 = vld [vmem:[#allocation7 + $0x350] sm:$0xff]
    %v6186 = vld [vmem:[#allocation7 + $0x358] sm:$0xff]
    %v6187 = vld [vmem:[#allocation7 + $0x360] sm:$0xff]
    %v6188 = vld [vmem:[#allocation7 + $0x368] sm:$0xff]
    %v6189 = vld [vmem:[#allocation7 + $0x370] sm:$0xff]
    %v6190 = vld [vmem:[#allocation7 + $0x378] sm:$0xff]
    %v6191 = vld [vmem:[#allocation7 + $0x380] sm:$0xff]
    %v6192 = vld [vmem:[#allocation7 + $0x388] sm:$0xff]
    %v6193 = vld [vmem:[#allocation7 + $0x390] sm:$0xff]
    %v6194 = vld [vmem:[#allocation7 + $0x398] sm:$0xff]
    %v6195 = vld [vmem:[#allocation7 + $0x3a0] sm:$0xff]
    %v6196 = vld [vmem:[#allocation7 + $0x3a8] sm:$0xff]
    %v6197 = vld [vmem:[#allocation7 + $0x3b0] sm:$0xff]
    %v6198 = vld [vmem:[#allocation7 + $0x3b8] sm:$0xff]
    %v6199 = vld [vmem:[#allocation7 + $0x3c0] sm:$0xff]
    %v6200 = vld [vmem:[#allocation7 + $0x3c8] sm:$0xff]
    %v6201 = vld [vmem:[#allocation7 + $0x3d0] sm:$0xff]
    %v6202 = vld [vmem:[#allocation7 + $0x3d8] sm:$0xff]
    %v6203 = vld [vmem:[#allocation7 + $0x3e0] sm:$0xff]
    %v6204 = vld [vmem:[#allocation7 + $0x3e8] sm:$0xff]
    %v6205 = vld [vmem:[#allocation7 + $0x3f0] sm:$0xff]
    %v6206 = vld [vmem:[#allocation7 + $0x3f8] sm:$0xff]
    %v6207 = vld [vmem:[#allocation7 + $0x400] sm:$0xff]
    %v6208 = vld [vmem:[#allocation7 + $0x408] sm:$0xff]
    %v6209 = vld [vmem:[#allocation7 + $0x410] sm:$0xff]
    %v6210 = vld [vmem:[#allocation7 + $0x418] sm:$0xff]
    %v6211 = vld [vmem:[#allocation7 + $0x420] sm:$0xff]
    %v6212 = vld [vmem:[#allocation7 + $0x428] sm:$0xff]
    %v6213 = vld [vmem:[#allocation7 + $0x430] sm:$0xff]
    %v6214 = vld [vmem:[#allocation7 + $0x438] sm:$0xff]
    %v6215 = vld [vmem:[#allocation7 + $0x440] sm:$0xff]
    %v6216 = vld [vmem:[#allocation7 + $0x448] sm:$0xff]
    %v6217 = vld [vmem:[#allocation7 + $0x450] sm:$0xff]
    %v6218 = vld [vmem:[#allocation7 + $0x458] sm:$0xff]
    %v6219 = vld [vmem:[#allocation7 + $0x460] sm:$0xff]
    %v6220 = vld [vmem:[#allocation7 + $0x468] sm:$0xff]
    %v6221 = vld [vmem:[#allocation7 + $0x470] sm:$0xff]
    %v6222 = vld [vmem:[#allocation7 + $0x478] sm:$0xff]
    %v6223 = vld [vmem:[#allocation7 + $0x480] sm:$0xff]
    %v6224 = vld [vmem:[#allocation7 + $0x488] sm:$0xff]
    %v6225 = vld [vmem:[#allocation7 + $0x490] sm:$0xff]
    %v6226 = vld [vmem:[#allocation7 + $0x498] sm:$0xff]
    %v6227 = vld [vmem:[#allocation7 + $0x4a0] sm:$0xff]
    %v6228 = vld [vmem:[#allocation7 + $0x4a8] sm:$0xff]
    %v6229 = vld [vmem:[#allocation7 + $0x4b0] sm:$0xff]
    %v6230 = vld [vmem:[#allocation7 + $0x4b8] sm:$0xff]
    %v6231 = vld [vmem:[#allocation7 + $0x4c0] sm:$0xff]
    %v6232 = vld [vmem:[#allocation7 + $0x4c8] sm:$0xff]
    %v6233 = vld [vmem:[#allocation7 + $0x4d0] sm:$0xff]
    %v6234 = vld [vmem:[#allocation7 + $0x4d8] sm:$0xff]
    %v6235 = vld [vmem:[#allocation7 + $0x4e0] sm:$0xff]
    %v6236 = vld [vmem:[#allocation7 + $0x4e8] sm:$0xff]
    %v6237 = vld [vmem:[#allocation7 + $0x4f0] sm:$0xff]
    %v6238 = vld [vmem:[#allocation7 + $0x4f8] sm:$0xff]
    %v6239 = vld [vmem:[#allocation7 + $0x500] sm:$0xff]
    %v6240 = vld [vmem:[#allocation7 + $0x508] sm:$0xff]
    %v6241 = vld [vmem:[#allocation7 + $0x510] sm:$0xff]
    %v6242 = vld [vmem:[#allocation7 + $0x518] sm:$0xff]
    %v6243 = vld [vmem:[#allocation7 + $0x520] sm:$0xff]
    %v6244 = vld [vmem:[#allocation7 + $0x528] sm:$0xff]
    %v6245 = vld [vmem:[#allocation7 + $0x530] sm:$0xff]
    %v6246 = vld [vmem:[#allocation7 + $0x538] sm:$0xff]
    %v6247 = vld [vmem:[#allocation7 + $0x540] sm:$0xff]
    %v6248 = vld [vmem:[#allocation7 + $0x548] sm:$0xff]
    %v6249 = vld [vmem:[#allocation7 + $0x550] sm:$0xff]
    %v6250 = vld [vmem:[#allocation7 + $0x558] sm:$0xff]
    %v6251 = vld [vmem:[#allocation7 + $0x560] sm:$0xff]
    %v6252 = vld [vmem:[#allocation7 + $0x568] sm:$0xff]
    %v6253 = vld [vmem:[#allocation7 + $0x570] sm:$0xff]
    %v6254 = vld [vmem:[#allocation7 + $0x578] sm:$0xff]
    %v6255 = vld [vmem:[#allocation7 + $0x580] sm:$0xff]
    %v6256 = vld [vmem:[#allocation7 + $0x588] sm:$0xff]
    %v6257 = vld [vmem:[#allocation7 + $0x590] sm:$0xff]
    %v6258 = vld [vmem:[#allocation7 + $0x598] sm:$0xff]
    %v6259 = vld [vmem:[#allocation7 + $0x5a0] sm:$0xff]
    %v6260 = vld [vmem:[#allocation7 + $0x5a8] sm:$0xff]
    %v6261 = vld [vmem:[#allocation7 + $0x5b0] sm:$0xff]
    %v6262 = vld [vmem:[#allocation7 + $0x5b8] sm:$0xff]
    %v6263 = vld [vmem:[#allocation7 + $0x5c0] sm:$0xff]
    %v6264 = vld [vmem:[#allocation7 + $0x5c8] sm:$0xff]
    %v6265 = vld [vmem:[#allocation7 + $0x5d0] sm:$0xff]
    %v6266 = vld [vmem:[#allocation7 + $0x5d8] sm:$0xff]
    %v6267 = vld [vmem:[#allocation7 + $0x5e0] sm:$0xff]
    %v6268 = vld [vmem:[#allocation7 + $0x5e8] sm:$0xff]
    %v6269 = vld [vmem:[#allocation7 + $0x5f0] sm:$0xff]
    %v6270 = vld [vmem:[#allocation7 + $0x5f8] sm:$0xff]
    %v6271 = vld [vmem:[#allocation7 + $0x600] sm:$0xff]
    %v6272 = vld [vmem:[#allocation7 + $0x608] sm:$0xff]
    %v6273 = vld [vmem:[#allocation7 + $0x610] sm:$0xff]
    %v6274 = vld [vmem:[#allocation7 + $0x618] sm:$0xff]
    %v6275 = vld [vmem:[#allocation7 + $0x620] sm:$0xff]
    %v6276 = vld [vmem:[#allocation7 + $0x628] sm:$0xff]
    %v6277 = vld [vmem:[#allocation7 + $0x630] sm:$0xff]
    %v6278 = vld [vmem:[#allocation7 + $0x638] sm:$0xff]
    %v6279 = vld [vmem:[#allocation7 + $0x640] sm:$0xff]
    %v6280 = vld [vmem:[#allocation7 + $0x648] sm:$0xff]
    %v6281 = vld [vmem:[#allocation7 + $0x650] sm:$0xff]
    %v6282 = vld [vmem:[#allocation7 + $0x658] sm:$0xff]
    %v6283 = vld [vmem:[#allocation7 + $0x660] sm:$0xff]
    %v6284 = vld [vmem:[#allocation7 + $0x668] sm:$0xff]
    %v6285 = vld [vmem:[#allocation7 + $0x670] sm:$0xff]
    %v6286 = vld [vmem:[#allocation7 + $0x678] sm:$0xff]
    %v6287 = vld [vmem:[#allocation7 + $0x680] sm:$0xff]
    %v6288 = vld [vmem:[#allocation7 + $0x688] sm:$0xff]
    %v6289 = vld [vmem:[#allocation7 + $0x690] sm:$0xff]
    %v6290 = vld [vmem:[#allocation7 + $0x698] sm:$0xff]
    %v6291 = vld [vmem:[#allocation7 + $0x6a0] sm:$0xff]
    %v6292 = vld [vmem:[#allocation7 + $0x6a8] sm:$0xff]
    %v6293 = vld [vmem:[#allocation7 + $0x6b0] sm:$0xff]
    %v6294 = vld [vmem:[#allocation7 + $0x6b8] sm:$0xff]
    %v6295 = vld [vmem:[#allocation7 + $0x6c0] sm:$0xff]
    %v6296 = vld [vmem:[#allocation7 + $0x6c8] sm:$0xff]
    %v6297 = vld [vmem:[#allocation7 + $0x6d0] sm:$0xff]
    %v6298 = vld [vmem:[#allocation7 + $0x6d8] sm:$0xff]
    %v6299 = vld [vmem:[#allocation7 + $0x6e0] sm:$0xff]
    %v6300 = vld [vmem:[#allocation7 + $0x6e8] sm:$0xff]
    %v6301 = vld [vmem:[#allocation7 + $0x6f0] sm:$0xff]
    %v6302 = vld [vmem:[#allocation7 + $0x6f8] sm:$0xff]
    %v6303 = vld [vmem:[#allocation7 + $0x700] sm:$0xff]
    %v6304 = vld [vmem:[#allocation7 + $0x708] sm:$0xff]
    %v6305 = vld [vmem:[#allocation7 + $0x710] sm:$0xff]
    %v6306 = vld [vmem:[#allocation7 + $0x718] sm:$0xff]
    %v6307 = vld [vmem:[#allocation7 + $0x720] sm:$0xff]
    %v6308 = vld [vmem:[#allocation7 + $0x728] sm:$0xff]
    %v6309 = vld [vmem:[#allocation7 + $0x730] sm:$0xff]
    %v6310 = vld [vmem:[#allocation7 + $0x738] sm:$0xff]
    %v6311 = vld [vmem:[#allocation7 + $0x740] sm:$0xff]
    %v6312 = vld [vmem:[#allocation7 + $0x748] sm:$0xff]
    %v6313 = vld [vmem:[#allocation7 + $0x750] sm:$0xff]
    %v6314 = vld [vmem:[#allocation7 + $0x758] sm:$0xff]
    %v6315 = vld [vmem:[#allocation7 + $0x760] sm:$0xff]
    %v6316 = vld [vmem:[#allocation7 + $0x768] sm:$0xff]
    %v6317 = vld [vmem:[#allocation7 + $0x770] sm:$0xff]
    %v6318 = vld [vmem:[#allocation7 + $0x778] sm:$0xff]
    %v6319 = vld [vmem:[#allocation7 + $0x780] sm:$0xff]
    %v6320 = vld [vmem:[#allocation7 + $0x788] sm:$0xff]
    %v6321 = vld [vmem:[#allocation7 + $0x790] sm:$0xff]
    %v6322 = vld [vmem:[#allocation7 + $0x798] sm:$0xff]
    %v6323 = vld [vmem:[#allocation7 + $0x7a0] sm:$0xff]
    %v6324 = vld [vmem:[#allocation7 + $0x7a8] sm:$0xff]
    %v6325 = vld [vmem:[#allocation7 + $0x7b0] sm:$0xff]
    %v6326 = vld [vmem:[#allocation7 + $0x7b8] sm:$0xff]
    %v6327 = vld [vmem:[#allocation7 + $0x7c0] sm:$0xff]
    %v6328 = vld [vmem:[#allocation7 + $0x7c8] sm:$0xff]
    %v6329 = vld [vmem:[#allocation7 + $0x7d0] sm:$0xff]
    %v6330 = vld [vmem:[#allocation7 + $0x7d8] sm:$0xff]
    %v6331 = vld [vmem:[#allocation7 + $0x7e0] sm:$0xff]
    %v6332 = vld [vmem:[#allocation7 + $0x7e8] sm:$0xff]
    %v6333 = vld [vmem:[#allocation7 + $0x7f0] sm:$0xff]
    %v6334 = vld [vmem:[#allocation7 + $0x7f8] sm:$0xff]
    %v6335 = vld [vmem:[#allocation7 + $0x800] sm:$0xff]
    %v6336 = vld [vmem:[#allocation7 + $0x808] sm:$0xff]
    %v6337 = vld [vmem:[#allocation7 + $0x810] sm:$0xff]
    %v6338 = vld [vmem:[#allocation7 + $0x818] sm:$0xff]
    %v6339 = vld [vmem:[#allocation7 + $0x820] sm:$0xff]
    %v6340 = vld [vmem:[#allocation7 + $0x828] sm:$0xff]
    %v6341 = vld [vmem:[#allocation7 + $0x830] sm:$0xff]
    %v6342 = vld [vmem:[#allocation7 + $0x838] sm:$0xff]
    %v6343 = vld [vmem:[#allocation7 + $0x840] sm:$0xff]
    %v6344 = vld [vmem:[#allocation7 + $0x848] sm:$0xff]
    %v6345 = vld [vmem:[#allocation7 + $0x850] sm:$0xff]
    %v6346 = vld [vmem:[#allocation7 + $0x858] sm:$0xff]
    %v6347 = vld [vmem:[#allocation7 + $0x860] sm:$0xff]
    %v6348 = vld [vmem:[#allocation7 + $0x868] sm:$0xff]
    %v6349 = vld [vmem:[#allocation7 + $0x870] sm:$0xff]
    %v6350 = vld [vmem:[#allocation7 + $0x878] sm:$0xff]
    %v6351 = vld [vmem:[#allocation7 + $0x880] sm:$0xff]
    %v6352 = vld [vmem:[#allocation7 + $0x888] sm:$0xff]
    %v6353 = vld [vmem:[#allocation7 + $0x890] sm:$0xff]
    %v6354 = vld [vmem:[#allocation7 + $0x898] sm:$0xff]
    %v6355 = vld [vmem:[#allocation7 + $0x8a0] sm:$0xff]
    %v6356 = vld [vmem:[#allocation7 + $0x8a8] sm:$0xff]
    %v6357 = vld [vmem:[#allocation7 + $0x8b0] sm:$0xff]
    %v6358 = vld [vmem:[#allocation7 + $0x8b8] sm:$0xff]
    %v6359 = vld [vmem:[#allocation7 + $0x8c0] sm:$0xff]
    %v6360 = vld [vmem:[#allocation7 + $0x8c8] sm:$0xff]
    %v6361 = vld [vmem:[#allocation7 + $0x8d0] sm:$0xff]
    %v6362 = vld [vmem:[#allocation7 + $0x8d8] sm:$0xff]
    %v6363 = vld [vmem:[#allocation7 + $0x8e0] sm:$0xff]
    %v6364 = vld [vmem:[#allocation7 + $0x8e8] sm:$0xff]
    %v6365 = vld [vmem:[#allocation7 + $0x8f0] sm:$0xff]
    %v6366 = vld [vmem:[#allocation7 + $0x8f8] sm:$0xff]
    %v6367 = vld [vmem:[#allocation7 + $0x900] sm:$0xff]
    %v6368 = vld [vmem:[#allocation7 + $0x908] sm:$0xff]
    %v6369 = vld [vmem:[#allocation7 + $0x910] sm:$0xff]
    %v6370 = vld [vmem:[#allocation7 + $0x918] sm:$0xff]
    %v6371 = vld [vmem:[#allocation7 + $0x920] sm:$0xff]
    %v6372 = vld [vmem:[#allocation7 + $0x928] sm:$0xff]
    %v6373 = vld [vmem:[#allocation7 + $0x930] sm:$0xff]
    %v6374 = vld [vmem:[#allocation7 + $0x938] sm:$0xff]
    %v6375 = vld [vmem:[#allocation7 + $0x940] sm:$0xff]
    %v6376 = vld [vmem:[#allocation7 + $0x948] sm:$0xff]
    %v6377 = vld [vmem:[#allocation7 + $0x950] sm:$0xff]
    %v6378 = vld [vmem:[#allocation7 + $0x958] sm:$0xff]
    %v6379 = vld [vmem:[#allocation7 + $0x960] sm:$0xff]
    %v6380 = vld [vmem:[#allocation7 + $0x968] sm:$0xff]
    %v6381 = vld [vmem:[#allocation7 + $0x970] sm:$0xff]
    %v6382 = vld [vmem:[#allocation7 + $0x978] sm:$0xff]
    %v6383 = vld [vmem:[#allocation7 + $0x980] sm:$0xff]
    %v6384 = vld [vmem:[#allocation7 + $0x988] sm:$0xff]
    %v6385 = vld [vmem:[#allocation7 + $0x990] sm:$0xff]
    %v6386 = vld [vmem:[#allocation7 + $0x998] sm:$0xff]
    %v6387 = vld [vmem:[#allocation7 + $0x9a0] sm:$0xff]
    %v6388 = vld [vmem:[#allocation7 + $0x9a8] sm:$0xff]
    %v6389 = vld [vmem:[#allocation7 + $0x9b0] sm:$0xff]
    %v6390 = vld [vmem:[#allocation7 + $0x9b8] sm:$0xff]
    %v6391 = vld [vmem:[#allocation7 + $0x9c0] sm:$0xff]
    %v6392 = vld [vmem:[#allocation7 + $0x9c8] sm:$0xff]
    %v6393 = vld [vmem:[#allocation7 + $0x9d0] sm:$0xff]
    %v6394 = vld [vmem:[#allocation7 + $0x9d8] sm:$0xff]
    %v6395 = vld [vmem:[#allocation7 + $0x9e0] sm:$0xff]
    %v6396 = vld [vmem:[#allocation7 + $0x9e8] sm:$0xff]
    %v6397 = vld [vmem:[#allocation7 + $0x9f0] sm:$0xff]
    %v6398 = vld [vmem:[#allocation7 + $0x9f8] sm:$0xff]
    %v6399 = vld [vmem:[#allocation7 + $0xa00] sm:$0xff]
    %v6400 = vld [vmem:[#allocation7 + $0xa08] sm:$0xff]
    %v6401 = vld [vmem:[#allocation7 + $0xa10] sm:$0xff]
    %v6402 = vld [vmem:[#allocation7 + $0xa18] sm:$0xff]
    %v6403 = vld [vmem:[#allocation7 + $0xa20] sm:$0xff]
    %v6404 = vld [vmem:[#allocation7 + $0xa28] sm:$0xff]
    %v6405 = vld [vmem:[#allocation7 + $0xa30] sm:$0xff]
    %v6406 = vld [vmem:[#allocation7 + $0xa38] sm:$0xff]
    %v6407 = vld [vmem:[#allocation7 + $0xa40] sm:$0xff]
    %v6408 = vld [vmem:[#allocation7 + $0xa48] sm:$0xff]
    %v6409 = vld [vmem:[#allocation7 + $0xa50] sm:$0xff]
    %v6410 = vld [vmem:[#allocation7 + $0xa58] sm:$0xff]
    %v6411 = vld [vmem:[#allocation7 + $0xa60] sm:$0xff]
    %v6412 = vld [vmem:[#allocation7 + $0xa68] sm:$0xff]
    %v6413 = vld [vmem:[#allocation7 + $0xa70] sm:$0xff]
    %v6414 = vld [vmem:[#allocation7 + $0xa78] sm:$0xff]
    %v6415 = vld [vmem:[#allocation7 + $0xa80] sm:$0xff]
    %v6416 = vld [vmem:[#allocation7 + $0xa88] sm:$0xff]
    %v6417 = vld [vmem:[#allocation7 + $0xa90] sm:$0xff]
    %v6418 = vld [vmem:[#allocation7 + $0xa98] sm:$0xff]
    %v6419 = vld [vmem:[#allocation7 + $0xaa0] sm:$0xff]
    %v6420 = vld [vmem:[#allocation7 + $0xaa8] sm:$0xff]
    %v6421 = vld [vmem:[#allocation7 + $0xab0] sm:$0xff]
    %v6422 = vld [vmem:[#allocation7 + $0xab8] sm:$0xff]
    %v6423 = vld [vmem:[#allocation7 + $0xac0] sm:$0xff]
    %v6424 = vld [vmem:[#allocation7 + $0xac8] sm:$0xff]
    %v6425 = vld [vmem:[#allocation7 + $0xad0] sm:$0xff]
    %v6426 = vld [vmem:[#allocation7 + $0xad8] sm:$0xff]
    %v6427 = vld [vmem:[#allocation7 + $0xae0] sm:$0xff]
    %v6428 = vld [vmem:[#allocation7 + $0xae8] sm:$0xff]
    %v6429 = vld [vmem:[#allocation7 + $0xaf0] sm:$0xff]
    %v6430 = vld [vmem:[#allocation7 + $0xaf8] sm:$0xff]
    %v6431 = vld [vmem:[#allocation7 + $0xb00] sm:$0xff]
    %v6432 = vld [vmem:[#allocation7 + $0xb08] sm:$0xff]
    %v6433 = vld [vmem:[#allocation7 + $0xb10] sm:$0xff]
    %v6434 = vld [vmem:[#allocation7 + $0xb18] sm:$0xff]
    %v6435 = vld [vmem:[#allocation7 + $0xb20] sm:$0xff]
    %v6436 = vld [vmem:[#allocation7 + $0xb28] sm:$0xff]
    %v6437 = vld [vmem:[#allocation7 + $0xb30] sm:$0xff]
    %v6438 = vld [vmem:[#allocation7 + $0xb38] sm:$0xff]
    %v6439 = vld [vmem:[#allocation7 + $0xb40] sm:$0xff]
    %v6440 = vld [vmem:[#allocation7 + $0xb48] sm:$0xff]
    %v6441 = vld [vmem:[#allocation7 + $0xb50] sm:$0xff]
    %v6442 = vld [vmem:[#allocation7 + $0xb58] sm:$0xff]
    %v6443 = vld [vmem:[#allocation7 + $0xb60] sm:$0xff]
    %v6444 = vld [vmem:[#allocation7 + $0xb68] sm:$0xff]
    %v6445 = vld [vmem:[#allocation7 + $0xb70] sm:$0xff]
    %v6446 = vld [vmem:[#allocation7 + $0xb78] sm:$0xff]
    %v6447 = vld [vmem:[#allocation7 + $0xb80] sm:$0xff]
    %v6448 = vld [vmem:[#allocation7 + $0xb88] sm:$0xff]
    %v6449 = vld [vmem:[#allocation7 + $0xb90] sm:$0xff]
    %v6450 = vld [vmem:[#allocation7 + $0xb98] sm:$0xff]
    %v6451 = vld [vmem:[#allocation7 + $0xba0] sm:$0xff]
    %v6452 = vld [vmem:[#allocation7 + $0xba8] sm:$0xff]
    %v6453 = vld [vmem:[#allocation7 + $0xbb0] sm:$0xff]
    %v6454 = vld [vmem:[#allocation7 + $0xbb8] sm:$0xff]
    %v6455 = vld [vmem:[#allocation7 + $0xbc0] sm:$0xff]
    %v6456 = vld [vmem:[#allocation7 + $0xbc8] sm:$0xff]
    %v6457 = vld [vmem:[#allocation7 + $0xbd0] sm:$0xff]
    %v6458 = vld [vmem:[#allocation7 + $0xbd8] sm:$0xff]
    %v6459 = vld [vmem:[#allocation7 + $0xbe0] sm:$0xff]
    %v6460 = vld [vmem:[#allocation7 + $0xbe8] sm:$0xff]
    %v6461 = vld [vmem:[#allocation7 + $0xbf0] sm:$0xff]
    %v6462 = vld [vmem:[#allocation7 + $0xbf8] sm:$0xff]
    %v6463 = vld [vmem:[#allocation8] sm:$0xff]
    %v6465 = vlaneseq
    %v6466 = vshrl.u32 %v6465, 7
    %v6467 = vsub.s32 0, %v6466
    %v6468 = vrot.slane %v6463, %v6467
    %v6469 = vlaneseq
    %v6470 = vshrl.u32 %v6469, 7
    %v6471 = vsub.s32 1, %v6470
    %v6472 = vrot.slane %v6463, %v6471
    %v6473 = vlaneseq
    %v6474 = vshrl.u32 %v6473, 7
    %v6475 = vsub.s32 2, %v6474
    %v6476 = vrot.slane %v6463, %v6475
    %v6477 = vlaneseq
    %v6478 = vshrl.u32 %v6477, 7
    %v6479 = vsub.s32 3, %v6478
    %v6480 = vrot.slane %v6463, %v6479
    %v6481 = vlaneseq
    %v6482 = vshrl.u32 %v6481, 7
    %v6483 = vsub.s32 4, %v6482
    %v6484 = vrot.slane %v6463, %v6483
    %v6485 = vlaneseq
    %v6486 = vshrl.u32 %v6485, 7
    %v6487 = vsub.s32 5, %v6486
    %v6488 = vrot.slane %v6463, %v6487
    %v6489 = vlaneseq
    %v6490 = vshrl.u32 %v6489, 7
    %v6491 = vsub.s32 6, %v6490
    %v6492 = vrot.slane %v6463, %v6491
    %v6493 = vlaneseq
    %v6494 = vshrl.u32 %v6493, 7
    %v6495 = vsub.s32 7, %v6494
    %v6496 = vrot.slane %v6463, %v6495
    %v6889 = vunpack.c.l.b16 %v6079
    %v6890 = vunpack.c.h.b16 %v6079
    %v6891 = vunpack.c.l.b16 %v6080
    %v6892 = vunpack.c.h.b16 %v6080
    %v6893 = vunpack.c.l.b16 %v6081
    %v6894 = vunpack.c.h.b16 %v6081
    %v6895 = vunpack.c.l.b16 %v6082
    %v6896 = vunpack.c.h.b16 %v6082
    %v6897 = vunpack.c.l.b16 %v6083
    %v6898 = vunpack.c.h.b16 %v6083
    %v6899 = vunpack.c.l.b16 %v6084
    %v6900 = vunpack.c.h.b16 %v6084
    %v6901 = vunpack.c.l.b16 %v6085
    %v6902 = vunpack.c.h.b16 %v6085
    %v6903 = vunpack.c.l.b16 %v6086
    %v6904 = vunpack.c.h.b16 %v6086
    %v6905 = vunpack.c.l.b16 %v6087
    %v6906 = vunpack.c.h.b16 %v6087
    %v6907 = vunpack.c.l.b16 %v6088
    %v6908 = vunpack.c.h.b16 %v6088
    %v6909 = vunpack.c.l.b16 %v6089
    %v6910 = vunpack.c.h.b16 %v6089
    %v6911 = vunpack.c.l.b16 %v6090
    %v6912 = vunpack.c.h.b16 %v6090
    %v6913 = vunpack.c.l.b16 %v6091
    %v6914 = vunpack.c.h.b16 %v6091
    %v6915 = vunpack.c.l.b16 %v6092
    %v6916 = vunpack.c.h.b16 %v6092
    %v6917 = vunpack.c.l.b16 %v6093
    %v6918 = vunpack.c.h.b16 %v6093
    %v6919 = vunpack.c.l.b16 %v6094
    %v6920 = vunpack.c.h.b16 %v6094
    %v6921 = vunpack.c.l.b16 %v6095
    %v6922 = vunpack.c.h.b16 %v6095
    %v6923 = vunpack.c.l.b16 %v6096
    %v6924 = vunpack.c.h.b16 %v6096
    %v6925 = vunpack.c.l.b16 %v6097
    %v6926 = vunpack.c.h.b16 %v6097
    %v6927 = vunpack.c.l.b16 %v6098
    %v6928 = vunpack.c.h.b16 %v6098
    %v6929 = vunpack.c.l.b16 %v6099
    %v6930 = vunpack.c.h.b16 %v6099
    %v6931 = vunpack.c.l.b16 %v6100
    %v6932 = vunpack.c.h.b16 %v6100
    %v6933 = vunpack.c.l.b16 %v6101
    %v6934 = vunpack.c.h.b16 %v6101
    %v6935 = vunpack.c.l.b16 %v6102
    %v6936 = vunpack.c.h.b16 %v6102
    %v6937 = vunpack.c.l.b16 %v6103
    %v6938 = vunpack.c.h.b16 %v6103
    %v6939 = vunpack.c.l.b16 %v6104
    %v6940 = vunpack.c.h.b16 %v6104
    %v6941 = vunpack.c.l.b16 %v6105
    %v6942 = vunpack.c.h.b16 %v6105
    %v6943 = vunpack.c.l.b16 %v6106
    %v6944 = vunpack.c.h.b16 %v6106
    %v6945 = vunpack.c.l.b16 %v6107
    %v6946 = vunpack.c.h.b16 %v6107
    %v6947 = vunpack.c.l.b16 %v6108
    %v6948 = vunpack.c.h.b16 %v6108
    %v6949 = vunpack.c.l.b16 %v6109
    %v6950 = vunpack.c.h.b16 %v6109
    %v6951 = vunpack.c.l.b16 %v6110
    %v6952 = vunpack.c.h.b16 %v6110
    %v6953 = vunpack.c.l.b16 %v6111
    %v6954 = vunpack.c.h.b16 %v6111
    %v6955 = vunpack.c.l.b16 %v6112
    %v6956 = vunpack.c.h.b16 %v6112
    %v6957 = vunpack.c.l.b16 %v6113
    %v6958 = vunpack.c.h.b16 %v6113
    %v6959 = vunpack.c.l.b16 %v6114
    %v6960 = vunpack.c.h.b16 %v6114
    %v6961 = vunpack.c.l.b16 %v6115
    %v6962 = vunpack.c.h.b16 %v6115
    %v6963 = vunpack.c.l.b16 %v6116
    %v6964 = vunpack.c.h.b16 %v6116
    %v6965 = vunpack.c.l.b16 %v6117
    %v6966 = vunpack.c.h.b16 %v6117
    %v6967 = vunpack.c.l.b16 %v6118
    %v6968 = vunpack.c.h.b16 %v6118
    %v6969 = vunpack.c.l.b16 %v6119
    %v6970 = vunpack.c.h.b16 %v6119
    %v6971 = vunpack.c.l.b16 %v6120
    %v6972 = vunpack.c.h.b16 %v6120
    %v6973 = vunpack.c.l.b16 %v6121
    %v6974 = vunpack.c.h.b16 %v6121
    %v6975 = vunpack.c.l.b16 %v6122
    %v6976 = vunpack.c.h.b16 %v6122
    %v6977 = vunpack.c.l.b16 %v6123
    %v6978 = vunpack.c.h.b16 %v6123
    %v6979 = vunpack.c.l.b16 %v6124
    %v6980 = vunpack.c.h.b16 %v6124
    %v6981 = vunpack.c.l.b16 %v6125
    %v6982 = vunpack.c.h.b16 %v6125
    %v6983 = vunpack.c.l.b16 %v6126
    %v6984 = vunpack.c.h.b16 %v6126
    %v6985 = vunpack.c.l.b16 %v6127
    %v6986 = vunpack.c.h.b16 %v6127
    %v6987 = vunpack.c.l.b16 %v6128
    %v6988 = vunpack.c.h.b16 %v6128
    %v6989 = vunpack.c.l.b16 %v6129
    %v6990 = vunpack.c.h.b16 %v6129
    %v6991 = vunpack.c.l.b16 %v6130
    %v6992 = vunpack.c.h.b16 %v6130
    %v6993 = vunpack.c.l.b16 %v6131
    %v6994 = vunpack.c.h.b16 %v6131
    %v6995 = vunpack.c.l.b16 %v6132
    %v6996 = vunpack.c.h.b16 %v6132
    %v6997 = vunpack.c.l.b16 %v6133
    %v6998 = vunpack.c.h.b16 %v6133
    %v6999 = vunpack.c.l.b16 %v6134
    %v7000 = vunpack.c.h.b16 %v6134
    %v7001 = vunpack.c.l.b16 %v6135
    %v7002 = vunpack.c.h.b16 %v6135
    %v7003 = vunpack.c.l.b16 %v6136
    %v7004 = vunpack.c.h.b16 %v6136
    %v7005 = vunpack.c.l.b16 %v6137
    %v7006 = vunpack.c.h.b16 %v6137
    %v7007 = vunpack.c.l.b16 %v6138
    %v7008 = vunpack.c.h.b16 %v6138
    %v7009 = vunpack.c.l.b16 %v6139
    %v7010 = vunpack.c.h.b16 %v6139
    %v7011 = vunpack.c.l.b16 %v6140
    %v7012 = vunpack.c.h.b16 %v6140
    %v7013 = vunpack.c.l.b16 %v6141
    %v7014 = vunpack.c.h.b16 %v6141
    %v7015 = vunpack.c.l.b16 %v6142
    %v7016 = vunpack.c.h.b16 %v6142
    %v7017 = vunpack.c.l.b16 %v6143
    %v7018 = vunpack.c.h.b16 %v6143
    %v7019 = vunpack.c.l.b16 %v6144
    %v7020 = vunpack.c.h.b16 %v6144
    %v7021 = vunpack.c.l.b16 %v6145
    %v7022 = vunpack.c.h.b16 %v6145
    %v7023 = vunpack.c.l.b16 %v6146
    %v7024 = vunpack.c.h.b16 %v6146
    %v7025 = vunpack.c.l.b16 %v6147
    %v7026 = vunpack.c.h.b16 %v6147
    %v7027 = vunpack.c.l.b16 %v6148
    %v7028 = vunpack.c.h.b16 %v6148
    %v7029 = vunpack.c.l.b16 %v6149
    %v7030 = vunpack.c.h.b16 %v6149
    %v7031 = vunpack.c.l.b16 %v6150
    %v7032 = vunpack.c.h.b16 %v6150
    %v7033 = vunpack.c.l.b16 %v6151
    %v7034 = vunpack.c.h.b16 %v6151
    %v7035 = vunpack.c.l.b16 %v6152
    %v7036 = vunpack.c.h.b16 %v6152
    %v7037 = vunpack.c.l.b16 %v6153
    %v7038 = vunpack.c.h.b16 %v6153
    %v7039 = vunpack.c.l.b16 %v6154
    %v7040 = vunpack.c.h.b16 %v6154
    %v7041 = vunpack.c.l.b16 %v6155
    %v7042 = vunpack.c.h.b16 %v6155
    %v7043 = vunpack.c.l.b16 %v6156
    %v7044 = vunpack.c.h.b16 %v6156
    %v7045 = vunpack.c.l.b16 %v6157
    %v7046 = vunpack.c.h.b16 %v6157
    %v7047 = vunpack.c.l.b16 %v6158
    %v7048 = vunpack.c.h.b16 %v6158
    %v7049 = vunpack.c.l.b16 %v6159
    %v7050 = vunpack.c.h.b16 %v6159
    %v7051 = vunpack.c.l.b16 %v6160
    %v7052 = vunpack.c.h.b16 %v6160
    %v7053 = vunpack.c.l.b16 %v6161
    %v7054 = vunpack.c.h.b16 %v6161
    %v7055 = vunpack.c.l.b16 %v6162
    %v7056 = vunpack.c.h.b16 %v6162
    %v7057 = vunpack.c.l.b16 %v6163
    %v7058 = vunpack.c.h.b16 %v6163
    %v7059 = vunpack.c.l.b16 %v6164
    %v7060 = vunpack.c.h.b16 %v6164
    %v7061 = vunpack.c.l.b16 %v6165
    %v7062 = vunpack.c.h.b16 %v6165
    %v7063 = vunpack.c.l.b16 %v6166
    %v7064 = vunpack.c.h.b16 %v6166
    %v7065 = vunpack.c.l.b16 %v6167
    %v7066 = vunpack.c.h.b16 %v6167
    %v7067 = vunpack.c.l.b16 %v6168
    %v7068 = vunpack.c.h.b16 %v6168
    %v7069 = vunpack.c.l.b16 %v6169
    %v7070 = vunpack.c.h.b16 %v6169
    %v7071 = vunpack.c.l.b16 %v6170
    %v7072 = vunpack.c.h.b16 %v6170
    %v7073 = vunpack.c.l.b16 %v6171
    %v7074 = vunpack.c.h.b16 %v6171
    %v7075 = vunpack.c.l.b16 %v6172
    %v7076 = vunpack.c.h.b16 %v6172
    %v7077 = vunpack.c.l.b16 %v6173
    %v7078 = vunpack.c.h.b16 %v6173
    %v7079 = vunpack.c.l.b16 %v6174
    %v7080 = vunpack.c.h.b16 %v6174
    %v7081 = vunpack.c.l.b16 %v6175
    %v7082 = vunpack.c.h.b16 %v6175
    %v7083 = vunpack.c.l.b16 %v6176
    %v7084 = vunpack.c.h.b16 %v6176
    %v7085 = vunpack.c.l.b16 %v6177
    %v7086 = vunpack.c.h.b16 %v6177
    %v7087 = vunpack.c.l.b16 %v6178
    %v7088 = vunpack.c.h.b16 %v6178
    %v7089 = vunpack.c.l.b16 %v6179
    %v7090 = vunpack.c.h.b16 %v6179
    %v7091 = vunpack.c.l.b16 %v6180
    %v7092 = vunpack.c.h.b16 %v6180
    %v7093 = vunpack.c.l.b16 %v6181
    %v7094 = vunpack.c.h.b16 %v6181
    %v7095 = vunpack.c.l.b16 %v6182
    %v7096 = vunpack.c.h.b16 %v6182
    %v7097 = vunpack.c.l.b16 %v6183
    %v7098 = vunpack.c.h.b16 %v6183
    %v7099 = vunpack.c.l.b16 %v6184
    %v7100 = vunpack.c.h.b16 %v6184
    %v7101 = vunpack.c.l.b16 %v6185
    %v7102 = vunpack.c.h.b16 %v6185
    %v7103 = vunpack.c.l.b16 %v6186
    %v7104 = vunpack.c.h.b16 %v6186
    %v7105 = vunpack.c.l.b16 %v6187
    %v7106 = vunpack.c.h.b16 %v6187
    %v7107 = vunpack.c.l.b16 %v6188
    %v7108 = vunpack.c.h.b16 %v6188
    %v7109 = vunpack.c.l.b16 %v6189
    %v7110 = vunpack.c.h.b16 %v6189
    %v7111 = vunpack.c.l.b16 %v6190
    %v7112 = vunpack.c.h.b16 %v6190
    %v7113 = vunpack.c.l.b16 %v6191
    %v7114 = vunpack.c.h.b16 %v6191
    %v7115 = vunpack.c.l.b16 %v6192
    %v7116 = vunpack.c.h.b16 %v6192
    %v7117 = vunpack.c.l.b16 %v6193
    %v7118 = vunpack.c.h.b16 %v6193
    %v7119 = vunpack.c.l.b16 %v6194
    %v7120 = vunpack.c.h.b16 %v6194
    %v7121 = vunpack.c.l.b16 %v6195
    %v7122 = vunpack.c.h.b16 %v6195
    %v7123 = vunpack.c.l.b16 %v6196
    %v7124 = vunpack.c.h.b16 %v6196
    %v7125 = vunpack.c.l.b16 %v6197
    %v7126 = vunpack.c.h.b16 %v6197
    %v7127 = vunpack.c.l.b16 %v6198
    %v7128 = vunpack.c.h.b16 %v6198
    %v7129 = vunpack.c.l.b16 %v6199
    %v7130 = vunpack.c.h.b16 %v6199
    %v7131 = vunpack.c.l.b16 %v6200
    %v7132 = vunpack.c.h.b16 %v6200
    %v7133 = vunpack.c.l.b16 %v6201
    %v7134 = vunpack.c.h.b16 %v6201
    %v7135 = vunpack.c.l.b16 %v6202
    %v7136 = vunpack.c.h.b16 %v6202
    %v7137 = vunpack.c.l.b16 %v6203
    %v7138 = vunpack.c.h.b16 %v6203
    %v7139 = vunpack.c.l.b16 %v6204
    %v7140 = vunpack.c.h.b16 %v6204
    %v7141 = vunpack.c.l.b16 %v6205
    %v7142 = vunpack.c.h.b16 %v6205
    %v7143 = vunpack.c.l.b16 %v6206
    %v7144 = vunpack.c.h.b16 %v6206
    %v7145 = vunpack.c.l.b16 %v6207
    %v7146 = vunpack.c.h.b16 %v6207
    %v7147 = vunpack.c.l.b16 %v6208
    %v7148 = vunpack.c.h.b16 %v6208
    %v7149 = vunpack.c.l.b16 %v6209
    %v7150 = vunpack.c.h.b16 %v6209
    %v7151 = vunpack.c.l.b16 %v6210
    %v7152 = vunpack.c.h.b16 %v6210
    %v7153 = vunpack.c.l.b16 %v6211
    %v7154 = vunpack.c.h.b16 %v6211
    %v7155 = vunpack.c.l.b16 %v6212
    %v7156 = vunpack.c.h.b16 %v6212
    %v7157 = vunpack.c.l.b16 %v6213
    %v7158 = vunpack.c.h.b16 %v6213
    %v7159 = vunpack.c.l.b16 %v6214
    %v7160 = vunpack.c.h.b16 %v6214
    %v7161 = vunpack.c.l.b16 %v6215
    %v7162 = vunpack.c.h.b16 %v6215
    %v7163 = vunpack.c.l.b16 %v6216
    %v7164 = vunpack.c.h.b16 %v6216
    %v7165 = vunpack.c.l.b16 %v6217
    %v7166 = vunpack.c.h.b16 %v6217
    %v7167 = vunpack.c.l.b16 %v6218
    %v7168 = vunpack.c.h.b16 %v6218
    %v7169 = vunpack.c.l.b16 %v6219
    %v7170 = vunpack.c.h.b16 %v6219
    %v7171 = vunpack.c.l.b16 %v6220
    %v7172 = vunpack.c.h.b16 %v6220
    %v7173 = vunpack.c.l.b16 %v6221
    %v7174 = vunpack.c.h.b16 %v6221
    %v7175 = vunpack.c.l.b16 %v6222
    %v7176 = vunpack.c.h.b16 %v6222
    %v7177 = vunpack.c.l.b16 %v6223
    %v7178 = vunpack.c.h.b16 %v6223
    %v7179 = vunpack.c.l.b16 %v6224
    %v7180 = vunpack.c.h.b16 %v6224
    %v7181 = vunpack.c.l.b16 %v6225
    %v7182 = vunpack.c.h.b16 %v6225
    %v7183 = vunpack.c.l.b16 %v6226
    %v7184 = vunpack.c.h.b16 %v6226
    %v7185 = vunpack.c.l.b16 %v6227
    %v7186 = vunpack.c.h.b16 %v6227
    %v7187 = vunpack.c.l.b16 %v6228
    %v7188 = vunpack.c.h.b16 %v6228
    %v7189 = vunpack.c.l.b16 %v6229
    %v7190 = vunpack.c.h.b16 %v6229
    %v7191 = vunpack.c.l.b16 %v6230
    %v7192 = vunpack.c.h.b16 %v6230
    %v7193 = vunpack.c.l.b16 %v6231
    %v7194 = vunpack.c.h.b16 %v6231
    %v7195 = vunpack.c.l.b16 %v6232
    %v7196 = vunpack.c.h.b16 %v6232
    %v7197 = vunpack.c.l.b16 %v6233
    %v7198 = vunpack.c.h.b16 %v6233
    %v7199 = vunpack.c.l.b16 %v6234
    %v7200 = vunpack.c.h.b16 %v6234
    %v7201 = vunpack.c.l.b16 %v6235
    %v7202 = vunpack.c.h.b16 %v6235
    %v7203 = vunpack.c.l.b16 %v6236
    %v7204 = vunpack.c.h.b16 %v6236
    %v7205 = vunpack.c.l.b16 %v6237
    %v7206 = vunpack.c.h.b16 %v6237
    %v7207 = vunpack.c.l.b16 %v6238
    %v7208 = vunpack.c.h.b16 %v6238
    %v7209 = vunpack.c.l.b16 %v6239
    %v7210 = vunpack.c.h.b16 %v6239
    %v7211 = vunpack.c.l.b16 %v6240
    %v7212 = vunpack.c.h.b16 %v6240
    %v7213 = vunpack.c.l.b16 %v6241
    %v7214 = vunpack.c.h.b16 %v6241
    %v7215 = vunpack.c.l.b16 %v6242
    %v7216 = vunpack.c.h.b16 %v6242
    %v7217 = vunpack.c.l.b16 %v6243
    %v7218 = vunpack.c.h.b16 %v6243
    %v7219 = vunpack.c.l.b16 %v6244
    %v7220 = vunpack.c.h.b16 %v6244
    %v7221 = vunpack.c.l.b16 %v6245
    %v7222 = vunpack.c.h.b16 %v6245
    %v7223 = vunpack.c.l.b16 %v6246
    %v7224 = vunpack.c.h.b16 %v6246
    %v7225 = vunpack.c.l.b16 %v6247
    %v7226 = vunpack.c.h.b16 %v6247
    %v7227 = vunpack.c.l.b16 %v6248
    %v7228 = vunpack.c.h.b16 %v6248
    %v7229 = vunpack.c.l.b16 %v6249
    %v7230 = vunpack.c.h.b16 %v6249
    %v7231 = vunpack.c.l.b16 %v6250
    %v7232 = vunpack.c.h.b16 %v6250
    %v7233 = vunpack.c.l.b16 %v6251
    %v7234 = vunpack.c.h.b16 %v6251
    %v7235 = vunpack.c.l.b16 %v6252
    %v7236 = vunpack.c.h.b16 %v6252
    %v7237 = vunpack.c.l.b16 %v6253
    %v7238 = vunpack.c.h.b16 %v6253
    %v7239 = vunpack.c.l.b16 %v6254
    %v7240 = vunpack.c.h.b16 %v6254
    %v7241 = vunpack.c.l.b16 %v6255
    %v7242 = vunpack.c.h.b16 %v6255
    %v7243 = vunpack.c.l.b16 %v6256
    %v7244 = vunpack.c.h.b16 %v6256
    %v7245 = vunpack.c.l.b16 %v6257
    %v7246 = vunpack.c.h.b16 %v6257
    %v7247 = vunpack.c.l.b16 %v6258
    %v7248 = vunpack.c.h.b16 %v6258
    %v7249 = vunpack.c.l.b16 %v6259
    %v7250 = vunpack.c.h.b16 %v6259
    %v7251 = vunpack.c.l.b16 %v6260
    %v7252 = vunpack.c.h.b16 %v6260
    %v7253 = vunpack.c.l.b16 %v6261
    %v7254 = vunpack.c.h.b16 %v6261
    %v7255 = vunpack.c.l.b16 %v6262
    %v7256 = vunpack.c.h.b16 %v6262
    %v7257 = vunpack.c.l.b16 %v6263
    %v7258 = vunpack.c.h.b16 %v6263
    %v7259 = vunpack.c.l.b16 %v6264
    %v7260 = vunpack.c.h.b16 %v6264
    %v7261 = vunpack.c.l.b16 %v6265
    %v7262 = vunpack.c.h.b16 %v6265
    %v7263 = vunpack.c.l.b16 %v6266
    %v7264 = vunpack.c.h.b16 %v6266
    %v7265 = vunpack.c.l.b16 %v6267
    %v7266 = vunpack.c.h.b16 %v6267
    %v7267 = vunpack.c.l.b16 %v6268
    %v7268 = vunpack.c.h.b16 %v6268
    %v7269 = vunpack.c.l.b16 %v6269
    %v7270 = vunpack.c.h.b16 %v6269
    %v7271 = vunpack.c.l.b16 %v6270
    %v7272 = vunpack.c.h.b16 %v6270
    %v7273 = vunpack.c.l.b16 %v6271
    %v7274 = vunpack.c.h.b16 %v6271
    %v7275 = vunpack.c.l.b16 %v6272
    %v7276 = vunpack.c.h.b16 %v6272
    %v7277 = vunpack.c.l.b16 %v6273
    %v7278 = vunpack.c.h.b16 %v6273
    %v7279 = vunpack.c.l.b16 %v6274
    %v7280 = vunpack.c.h.b16 %v6274
    %v7281 = vunpack.c.l.b16 %v6275
    %v7282 = vunpack.c.h.b16 %v6275
    %v7283 = vunpack.c.l.b16 %v6276
    %v7284 = vunpack.c.h.b16 %v6276
    %v7285 = vunpack.c.l.b16 %v6277
    %v7286 = vunpack.c.h.b16 %v6277
    %v7287 = vunpack.c.l.b16 %v6278
    %v7288 = vunpack.c.h.b16 %v6278
    %v7289 = vunpack.c.l.b16 %v6279
    %v7290 = vunpack.c.h.b16 %v6279
    %v7291 = vunpack.c.l.b16 %v6280
    %v7292 = vunpack.c.h.b16 %v6280
    %v7293 = vunpack.c.l.b16 %v6281
    %v7294 = vunpack.c.h.b16 %v6281
    %v7295 = vunpack.c.l.b16 %v6282
    %v7296 = vunpack.c.h.b16 %v6282
    %v7297 = vunpack.c.l.b16 %v6283
    %v7298 = vunpack.c.h.b16 %v6283
    %v7299 = vunpack.c.l.b16 %v6284
    %v7300 = vunpack.c.h.b16 %v6284
    %v7301 = vunpack.c.l.b16 %v6285
    %v7302 = vunpack.c.h.b16 %v6285
    %v7303 = vunpack.c.l.b16 %v6286
    %v7304 = vunpack.c.h.b16 %v6286
    %v7305 = vunpack.c.l.b16 %v6287
    %v7306 = vunpack.c.h.b16 %v6287
    %v7307 = vunpack.c.l.b16 %v6288
    %v7308 = vunpack.c.h.b16 %v6288
    %v7309 = vunpack.c.l.b16 %v6289
    %v7310 = vunpack.c.h.b16 %v6289
    %v7311 = vunpack.c.l.b16 %v6290
    %v7312 = vunpack.c.h.b16 %v6290
    %v7313 = vunpack.c.l.b16 %v6291
    %v7314 = vunpack.c.h.b16 %v6291
    %v7315 = vunpack.c.l.b16 %v6292
    %v7316 = vunpack.c.h.b16 %v6292
    %v7317 = vunpack.c.l.b16 %v6293
    %v7318 = vunpack.c.h.b16 %v6293
    %v7319 = vunpack.c.l.b16 %v6294
    %v7320 = vunpack.c.h.b16 %v6294
    %v7321 = vunpack.c.l.b16 %v6295
    %v7322 = vunpack.c.h.b16 %v6295
    %v7323 = vunpack.c.l.b16 %v6296
    %v7324 = vunpack.c.h.b16 %v6296
    %v7325 = vunpack.c.l.b16 %v6297
    %v7326 = vunpack.c.h.b16 %v6297
    %v7327 = vunpack.c.l.b16 %v6298
    %v7328 = vunpack.c.h.b16 %v6298
    %v7329 = vunpack.c.l.b16 %v6299
    %v7330 = vunpack.c.h.b16 %v6299
    %v7331 = vunpack.c.l.b16 %v6300
    %v7332 = vunpack.c.h.b16 %v6300
    %v7333 = vunpack.c.l.b16 %v6301
    %v7334 = vunpack.c.h.b16 %v6301
    %v7335 = vunpack.c.l.b16 %v6302
    %v7336 = vunpack.c.h.b16 %v6302
    %v7337 = vunpack.c.l.b16 %v6303
    %v7338 = vunpack.c.h.b16 %v6303
    %v7339 = vunpack.c.l.b16 %v6304
    %v7340 = vunpack.c.h.b16 %v6304
    %v7341 = vunpack.c.l.b16 %v6305
    %v7342 = vunpack.c.h.b16 %v6305
    %v7343 = vunpack.c.l.b16 %v6306
    %v7344 = vunpack.c.h.b16 %v6306
    %v7345 = vunpack.c.l.b16 %v6307
    %v7346 = vunpack.c.h.b16 %v6307
    %v7347 = vunpack.c.l.b16 %v6308
    %v7348 = vunpack.c.h.b16 %v6308
    %v7349 = vunpack.c.l.b16 %v6309
    %v7350 = vunpack.c.h.b16 %v6309
    %v7351 = vunpack.c.l.b16 %v6310
    %v7352 = vunpack.c.h.b16 %v6310
    %v7353 = vunpack.c.l.b16 %v6311
    %v7354 = vunpack.c.h.b16 %v6311
    %v7355 = vunpack.c.l.b16 %v6312
    %v7356 = vunpack.c.h.b16 %v6312
    %v7357 = vunpack.c.l.b16 %v6313
    %v7358 = vunpack.c.h.b16 %v6313
    %v7359 = vunpack.c.l.b16 %v6314
    %v7360 = vunpack.c.h.b16 %v6314
    %v7361 = vunpack.c.l.b16 %v6315
    %v7362 = vunpack.c.h.b16 %v6315
    %v7363 = vunpack.c.l.b16 %v6316
    %v7364 = vunpack.c.h.b16 %v6316
    %v7365 = vunpack.c.l.b16 %v6317
    %v7366 = vunpack.c.h.b16 %v6317
    %v7367 = vunpack.c.l.b16 %v6318
    %v7368 = vunpack.c.h.b16 %v6318
    %v7369 = vunpack.c.l.b16 %v6319
    %v7370 = vunpack.c.h.b16 %v6319
    %v7371 = vunpack.c.l.b16 %v6320
    %v7372 = vunpack.c.h.b16 %v6320
    %v7373 = vunpack.c.l.b16 %v6321
    %v7374 = vunpack.c.h.b16 %v6321
    %v7375 = vunpack.c.l.b16 %v6322
    %v7376 = vunpack.c.h.b16 %v6322
    %v7377 = vunpack.c.l.b16 %v6323
    %v7378 = vunpack.c.h.b16 %v6323
    %v7379 = vunpack.c.l.b16 %v6324
    %v7380 = vunpack.c.h.b16 %v6324
    %v7381 = vunpack.c.l.b16 %v6325
    %v7382 = vunpack.c.h.b16 %v6325
    %v7383 = vunpack.c.l.b16 %v6326
    %v7384 = vunpack.c.h.b16 %v6326
    %v7385 = vunpack.c.l.b16 %v6327
    %v7386 = vunpack.c.h.b16 %v6327
    %v7387 = vunpack.c.l.b16 %v6328
    %v7388 = vunpack.c.h.b16 %v6328
    %v7389 = vunpack.c.l.b16 %v6329
    %v7390 = vunpack.c.h.b16 %v6329
    %v7391 = vunpack.c.l.b16 %v6330
    %v7392 = vunpack.c.h.b16 %v6330
    %v7393 = vunpack.c.l.b16 %v6331
    %v7394 = vunpack.c.h.b16 %v6331
    %v7395 = vunpack.c.l.b16 %v6332
    %v7396 = vunpack.c.h.b16 %v6332
    %v7397 = vunpack.c.l.b16 %v6333
    %v7398 = vunpack.c.h.b16 %v6333
    %v7399 = vunpack.c.l.b16 %v6334
    %v7400 = vunpack.c.h.b16 %v6334
    %v7401 = vunpack.c.l.b16 %v6335
    %v7402 = vunpack.c.h.b16 %v6335
    %v7403 = vunpack.c.l.b16 %v6336
    %v7404 = vunpack.c.h.b16 %v6336
    %v7405 = vunpack.c.l.b16 %v6337
    %v7406 = vunpack.c.h.b16 %v6337
    %v7407 = vunpack.c.l.b16 %v6338
    %v7408 = vunpack.c.h.b16 %v6338
    %v7409 = vunpack.c.l.b16 %v6339
    %v7410 = vunpack.c.h.b16 %v6339
    %v7411 = vunpack.c.l.b16 %v6340
    %v7412 = vunpack.c.h.b16 %v6340
    %v7413 = vunpack.c.l.b16 %v6341
    %v7414 = vunpack.c.h.b16 %v6341
    %v7415 = vunpack.c.l.b16 %v6342
    %v7416 = vunpack.c.h.b16 %v6342
    %v7417 = vunpack.c.l.b16 %v6343
    %v7418 = vunpack.c.h.b16 %v6343
    %v7419 = vunpack.c.l.b16 %v6344
    %v7420 = vunpack.c.h.b16 %v6344
    %v7421 = vunpack.c.l.b16 %v6345
    %v7422 = vunpack.c.h.b16 %v6345
    %v7423 = vunpack.c.l.b16 %v6346
    %v7424 = vunpack.c.h.b16 %v6346
    %v7425 = vunpack.c.l.b16 %v6347
    %v7426 = vunpack.c.h.b16 %v6347
    %v7427 = vunpack.c.l.b16 %v6348
    %v7428 = vunpack.c.h.b16 %v6348
    %v7429 = vunpack.c.l.b16 %v6349
    %v7430 = vunpack.c.h.b16 %v6349
    %v7431 = vunpack.c.l.b16 %v6350
    %v7432 = vunpack.c.h.b16 %v6350
    %v7433 = vunpack.c.l.b16 %v6351
    %v7434 = vunpack.c.h.b16 %v6351
    %v7435 = vunpack.c.l.b16 %v6352
    %v7436 = vunpack.c.h.b16 %v6352
    %v7437 = vunpack.c.l.b16 %v6353
    %v7438 = vunpack.c.h.b16 %v6353
    %v7439 = vunpack.c.l.b16 %v6354
    %v7440 = vunpack.c.h.b16 %v6354
    %v7441 = vunpack.c.l.b16 %v6355
    %v7442 = vunpack.c.h.b16 %v6355
    %v7443 = vunpack.c.l.b16 %v6356
    %v7444 = vunpack.c.h.b16 %v6356
    %v7445 = vunpack.c.l.b16 %v6357
    %v7446 = vunpack.c.h.b16 %v6357
    %v7447 = vunpack.c.l.b16 %v6358
    %v7448 = vunpack.c.h.b16 %v6358
    %v7449 = vunpack.c.l.b16 %v6359
    %v7450 = vunpack.c.h.b16 %v6359
    %v7451 = vunpack.c.l.b16 %v6360
    %v7452 = vunpack.c.h.b16 %v6360
    %v7453 = vunpack.c.l.b16 %v6361
    %v7454 = vunpack.c.h.b16 %v6361
    %v7455 = vunpack.c.l.b16 %v6362
    %v7456 = vunpack.c.h.b16 %v6362
    %v7457 = vunpack.c.l.b16 %v6363
    %v7458 = vunpack.c.h.b16 %v6363
    %v7459 = vunpack.c.l.b16 %v6364
    %v7460 = vunpack.c.h.b16 %v6364
    %v7461 = vunpack.c.l.b16 %v6365
    %v7462 = vunpack.c.h.b16 %v6365
    %v7463 = vunpack.c.l.b16 %v6366
    %v7464 = vunpack.c.h.b16 %v6366
    %v7465 = vunpack.c.l.b16 %v6367
    %v7466 = vunpack.c.h.b16 %v6367
    %v7467 = vunpack.c.l.b16 %v6368
    %v7468 = vunpack.c.h.b16 %v6368
    %v7469 = vunpack.c.l.b16 %v6369
    %v7470 = vunpack.c.h.b16 %v6369
    %v7471 = vunpack.c.l.b16 %v6370
    %v7472 = vunpack.c.h.b16 %v6370
    %v7473 = vunpack.c.l.b16 %v6371
    %v7474 = vunpack.c.h.b16 %v6371
    %v7475 = vunpack.c.l.b16 %v6372
    %v7476 = vunpack.c.h.b16 %v6372
    %v7477 = vunpack.c.l.b16 %v6373
    %v7478 = vunpack.c.h.b16 %v6373
    %v7479 = vunpack.c.l.b16 %v6374
    %v7480 = vunpack.c.h.b16 %v6374
    %v7481 = vunpack.c.l.b16 %v6375
    %v7482 = vunpack.c.h.b16 %v6375
    %v7483 = vunpack.c.l.b16 %v6376
    %v7484 = vunpack.c.h.b16 %v6376
    %v7485 = vunpack.c.l.b16 %v6377
    %v7486 = vunpack.c.h.b16 %v6377
    %v7487 = vunpack.c.l.b16 %v6378
    %v7488 = vunpack.c.h.b16 %v6378
    %v7489 = vunpack.c.l.b16 %v6379
    %v7490 = vunpack.c.h.b16 %v6379
    %v7491 = vunpack.c.l.b16 %v6380
    %v7492 = vunpack.c.h.b16 %v6380
    %v7493 = vunpack.c.l.b16 %v6381
    %v7494 = vunpack.c.h.b16 %v6381
    %v7495 = vunpack.c.l.b16 %v6382
    %v7496 = vunpack.c.h.b16 %v6382
    %v7497 = vunpack.c.l.b16 %v6383
    %v7498 = vunpack.c.h.b16 %v6383
    %v7499 = vunpack.c.l.b16 %v6384
    %v7500 = vunpack.c.h.b16 %v6384
    %v7501 = vunpack.c.l.b16 %v6385
    %v7502 = vunpack.c.h.b16 %v6385
    %v7503 = vunpack.c.l.b16 %v6386
    %v7504 = vunpack.c.h.b16 %v6386
    %v7505 = vunpack.c.l.b16 %v6387
    %v7506 = vunpack.c.h.b16 %v6387
    %v7507 = vunpack.c.l.b16 %v6388
    %v7508 = vunpack.c.h.b16 %v6388
    %v7509 = vunpack.c.l.b16 %v6389
    %v7510 = vunpack.c.h.b16 %v6389
    %v7511 = vunpack.c.l.b16 %v6390
    %v7512 = vunpack.c.h.b16 %v6390
    %v7513 = vunpack.c.l.b16 %v6391
    %v7514 = vunpack.c.h.b16 %v6391
    %v7515 = vunpack.c.l.b16 %v6392
    %v7516 = vunpack.c.h.b16 %v6392
    %v7517 = vunpack.c.l.b16 %v6393
    %v7518 = vunpack.c.h.b16 %v6393
    %v7519 = vunpack.c.l.b16 %v6394
    %v7520 = vunpack.c.h.b16 %v6394
    %v7521 = vunpack.c.l.b16 %v6395
    %v7522 = vunpack.c.h.b16 %v6395
    %v7523 = vunpack.c.l.b16 %v6396
    %v7524 = vunpack.c.h.b16 %v6396
    %v7525 = vunpack.c.l.b16 %v6397
    %v7526 = vunpack.c.h.b16 %v6397
    %v7527 = vunpack.c.l.b16 %v6398
    %v7528 = vunpack.c.h.b16 %v6398
    %v7529 = vunpack.c.l.b16 %v6399
    %v7530 = vunpack.c.h.b16 %v6399
    %v7531 = vunpack.c.l.b16 %v6400
    %v7532 = vunpack.c.h.b16 %v6400
    %v7533 = vunpack.c.l.b16 %v6401
    %v7534 = vunpack.c.h.b16 %v6401
    %v7535 = vunpack.c.l.b16 %v6402
    %v7536 = vunpack.c.h.b16 %v6402
    %v7537 = vunpack.c.l.b16 %v6403
    %v7538 = vunpack.c.h.b16 %v6403
    %v7539 = vunpack.c.l.b16 %v6404
    %v7540 = vunpack.c.h.b16 %v6404
    %v7541 = vunpack.c.l.b16 %v6405
    %v7542 = vunpack.c.h.b16 %v6405
    %v7543 = vunpack.c.l.b16 %v6406
    %v7544 = vunpack.c.h.b16 %v6406
    %v7545 = vunpack.c.l.b16 %v6407
    %v7546 = vunpack.c.h.b16 %v6407
    %v7547 = vunpack.c.l.b16 %v6408
    %v7548 = vunpack.c.h.b16 %v6408
    %v7549 = vunpack.c.l.b16 %v6409
    %v7550 = vunpack.c.h.b16 %v6409
    %v7551 = vunpack.c.l.b16 %v6410
    %v7552 = vunpack.c.h.b16 %v6410
    %v7553 = vunpack.c.l.b16 %v6411
    %v7554 = vunpack.c.h.b16 %v6411
    %v7555 = vunpack.c.l.b16 %v6412
    %v7556 = vunpack.c.h.b16 %v6412
    %v7557 = vunpack.c.l.b16 %v6413
    %v7558 = vunpack.c.h.b16 %v6413
    %v7559 = vunpack.c.l.b16 %v6414
    %v7560 = vunpack.c.h.b16 %v6414
    %v7561 = vunpack.c.l.b16 %v6415
    %v7562 = vunpack.c.h.b16 %v6415
    %v7563 = vunpack.c.l.b16 %v6416
    %v7564 = vunpack.c.h.b16 %v6416
    %v7565 = vunpack.c.l.b16 %v6417
    %v7566 = vunpack.c.h.b16 %v6417
    %v7567 = vunpack.c.l.b16 %v6418
    %v7568 = vunpack.c.h.b16 %v6418
    %v7569 = vunpack.c.l.b16 %v6419
    %v7570 = vunpack.c.h.b16 %v6419
    %v7571 = vunpack.c.l.b16 %v6420
    %v7572 = vunpack.c.h.b16 %v6420
    %v7573 = vunpack.c.l.b16 %v6421
    %v7574 = vunpack.c.h.b16 %v6421
    %v7575 = vunpack.c.l.b16 %v6422
    %v7576 = vunpack.c.h.b16 %v6422
    %v7577 = vunpack.c.l.b16 %v6423
    %v7578 = vunpack.c.h.b16 %v6423
    %v7579 = vunpack.c.l.b16 %v6424
    %v7580 = vunpack.c.h.b16 %v6424
    %v7581 = vunpack.c.l.b16 %v6425
    %v7582 = vunpack.c.h.b16 %v6425
    %v7583 = vunpack.c.l.b16 %v6426
    %v7584 = vunpack.c.h.b16 %v6426
    %v7585 = vunpack.c.l.b16 %v6427
    %v7586 = vunpack.c.h.b16 %v6427
    %v7587 = vunpack.c.l.b16 %v6428
    %v7588 = vunpack.c.h.b16 %v6428
    %v7589 = vunpack.c.l.b16 %v6429
    %v7590 = vunpack.c.h.b16 %v6429
    %v7591 = vunpack.c.l.b16 %v6430
    %v7592 = vunpack.c.h.b16 %v6430
    %v7593 = vunpack.c.l.b16 %v6431
    %v7594 = vunpack.c.h.b16 %v6431
    %v7595 = vunpack.c.l.b16 %v6432
    %v7596 = vunpack.c.h.b16 %v6432
    %v7597 = vunpack.c.l.b16 %v6433
    %v7598 = vunpack.c.h.b16 %v6433
    %v7599 = vunpack.c.l.b16 %v6434
    %v7600 = vunpack.c.h.b16 %v6434
    %v7601 = vunpack.c.l.b16 %v6435
    %v7602 = vunpack.c.h.b16 %v6435
    %v7603 = vunpack.c.l.b16 %v6436
    %v7604 = vunpack.c.h.b16 %v6436
    %v7605 = vunpack.c.l.b16 %v6437
    %v7606 = vunpack.c.h.b16 %v6437
    %v7607 = vunpack.c.l.b16 %v6438
    %v7608 = vunpack.c.h.b16 %v6438
    %v7609 = vunpack.c.l.b16 %v6439
    %v7610 = vunpack.c.h.b16 %v6439
    %v7611 = vunpack.c.l.b16 %v6440
    %v7612 = vunpack.c.h.b16 %v6440
    %v7613 = vunpack.c.l.b16 %v6441
    %v7614 = vunpack.c.h.b16 %v6441
    %v7615 = vunpack.c.l.b16 %v6442
    %v7616 = vunpack.c.h.b16 %v6442
    %v7617 = vunpack.c.l.b16 %v6443
    %v7618 = vunpack.c.h.b16 %v6443
    %v7619 = vunpack.c.l.b16 %v6444
    %v7620 = vunpack.c.h.b16 %v6444
    %v7621 = vunpack.c.l.b16 %v6445
    %v7622 = vunpack.c.h.b16 %v6445
    %v7623 = vunpack.c.l.b16 %v6446
    %v7624 = vunpack.c.h.b16 %v6446
    %v7625 = vunpack.c.l.b16 %v6447
    %v7626 = vunpack.c.h.b16 %v6447
    %v7627 = vunpack.c.l.b16 %v6448
    %v7628 = vunpack.c.h.b16 %v6448
    %v7629 = vunpack.c.l.b16 %v6449
    %v7630 = vunpack.c.h.b16 %v6449
    %v7631 = vunpack.c.l.b16 %v6450
    %v7632 = vunpack.c.h.b16 %v6450
    %v7633 = vunpack.c.l.b16 %v6451
    %v7634 = vunpack.c.h.b16 %v6451
    %v7635 = vunpack.c.l.b16 %v6452
    %v7636 = vunpack.c.h.b16 %v6452
    %v7637 = vunpack.c.l.b16 %v6453
    %v7638 = vunpack.c.h.b16 %v6453
    %v7639 = vunpack.c.l.b16 %v6454
    %v7640 = vunpack.c.h.b16 %v6454
    %v7641 = vunpack.c.l.b16 %v6455
    %v7642 = vunpack.c.h.b16 %v6455
    %v7643 = vunpack.c.l.b16 %v6456
    %v7644 = vunpack.c.h.b16 %v6456
    %v7645 = vunpack.c.l.b16 %v6457
    %v7646 = vunpack.c.h.b16 %v6457
    %v7647 = vunpack.c.l.b16 %v6458
    %v7648 = vunpack.c.h.b16 %v6458
    %v7649 = vunpack.c.l.b16 %v6459
    %v7650 = vunpack.c.h.b16 %v6459
    %v7651 = vunpack.c.l.b16 %v6460
    %v7652 = vunpack.c.h.b16 %v6460
    %v7653 = vunpack.c.l.b16 %v6461
    %v7654 = vunpack.c.h.b16 %v6461
    %v7655 = vunpack.c.l.b16 %v6462
    %v7656 = vunpack.c.h.b16 %v6462
    %v7657 = vpack.c.b16 %v6897, %v6889
    %v7658 = vpack.c.b16 %v6898, %v6890
    %v7659 = vpack.c.b16 %v6899, %v6891
    %v7660 = vpack.c.b16 %v6900, %v6892
    %v7661 = vpack.c.b16 %v6901, %v6893
    %v7662 = vpack.c.b16 %v6902, %v6894
    %v7663 = vpack.c.b16 %v6903, %v6895
    %v7664 = vpack.c.b16 %v6904, %v6896
    %v7665 = vpack.c.b16 %v6913, %v6905
    %v7666 = vpack.c.b16 %v6914, %v6906
    %v7667 = vpack.c.b16 %v6915, %v6907
    %v7668 = vpack.c.b16 %v6916, %v6908
    %v7669 = vpack.c.b16 %v6917, %v6909
    %v7670 = vpack.c.b16 %v6918, %v6910
    %v7671 = vpack.c.b16 %v6919, %v6911
    %v7672 = vpack.c.b16 %v6920, %v6912
    %v7673 = vpack.c.b16 %v6929, %v6921
    %v7674 = vpack.c.b16 %v6930, %v6922
    %v7675 = vpack.c.b16 %v6931, %v6923
    %v7676 = vpack.c.b16 %v6932, %v6924
    %v7677 = vpack.c.b16 %v6933, %v6925
    %v7678 = vpack.c.b16 %v6934, %v6926
    %v7679 = vpack.c.b16 %v6935, %v6927
    %v7680 = vpack.c.b16 %v6936, %v6928
    %v7681 = vpack.c.b16 %v6945, %v6937
    %v7682 = vpack.c.b16 %v6946, %v6938
    %v7683 = vpack.c.b16 %v6947, %v6939
    %v7684 = vpack.c.b16 %v6948, %v6940
    %v7685 = vpack.c.b16 %v6949, %v6941
    %v7686 = vpack.c.b16 %v6950, %v6942
    %v7687 = vpack.c.b16 %v6951, %v6943
    %v7688 = vpack.c.b16 %v6952, %v6944
    %v7689 = vpack.c.b16 %v6961, %v6953
    %v7690 = vpack.c.b16 %v6962, %v6954
    %v7691 = vpack.c.b16 %v6963, %v6955
    %v7692 = vpack.c.b16 %v6964, %v6956
    %v7693 = vpack.c.b16 %v6965, %v6957
    %v7694 = vpack.c.b16 %v6966, %v6958
    %v7695 = vpack.c.b16 %v6967, %v6959
    %v7696 = vpack.c.b16 %v6968, %v6960
    %v7697 = vpack.c.b16 %v6977, %v6969
    %v7698 = vpack.c.b16 %v6978, %v6970
    %v7699 = vpack.c.b16 %v6979, %v6971
    %v7700 = vpack.c.b16 %v6980, %v6972
    %v7701 = vpack.c.b16 %v6981, %v6973
    %v7702 = vpack.c.b16 %v6982, %v6974
    %v7703 = vpack.c.b16 %v6983, %v6975
    %v7704 = vpack.c.b16 %v6984, %v6976
    %v7705 = vpack.c.b16 %v6993, %v6985
    %v7706 = vpack.c.b16 %v6994, %v6986
    %v7707 = vpack.c.b16 %v6995, %v6987
    %v7708 = vpack.c.b16 %v6996, %v6988
    %v7709 = vpack.c.b16 %v6997, %v6989
    %v7710 = vpack.c.b16 %v6998, %v6990
    %v7711 = vpack.c.b16 %v6999, %v6991
    %v7712 = vpack.c.b16 %v7000, %v6992
    %v7713 = vpack.c.b16 %v7009, %v7001
    %v7714 = vpack.c.b16 %v7010, %v7002
    %v7715 = vpack.c.b16 %v7011, %v7003
    %v7716 = vpack.c.b16 %v7012, %v7004
    %v7717 = vpack.c.b16 %v7013, %v7005
    %v7718 = vpack.c.b16 %v7014, %v7006
    %v7719 = vpack.c.b16 %v7015, %v7007
    %v7720 = vpack.c.b16 %v7016, %v7008
    %v7721 = vpack.c.b16 %v7025, %v7017
    %v7722 = vpack.c.b16 %v7026, %v7018
    %v7723 = vpack.c.b16 %v7027, %v7019
    %v7724 = vpack.c.b16 %v7028, %v7020
    %v7725 = vpack.c.b16 %v7029, %v7021
    %v7726 = vpack.c.b16 %v7030, %v7022
    %v7727 = vpack.c.b16 %v7031, %v7023
    %v7728 = vpack.c.b16 %v7032, %v7024
    %v7729 = vpack.c.b16 %v7041, %v7033
    %v7730 = vpack.c.b16 %v7042, %v7034
    %v7731 = vpack.c.b16 %v7043, %v7035
    %v7732 = vpack.c.b16 %v7044, %v7036
    %v7733 = vpack.c.b16 %v7045, %v7037
    %v7734 = vpack.c.b16 %v7046, %v7038
    %v7735 = vpack.c.b16 %v7047, %v7039
    %v7736 = vpack.c.b16 %v7048, %v7040
    %v7737 = vpack.c.b16 %v7057, %v7049
    %v7738 = vpack.c.b16 %v7058, %v7050
    %v7739 = vpack.c.b16 %v7059, %v7051
    %v7740 = vpack.c.b16 %v7060, %v7052
    %v7741 = vpack.c.b16 %v7061, %v7053
    %v7742 = vpack.c.b16 %v7062, %v7054
    %v7743 = vpack.c.b16 %v7063, %v7055
    %v7744 = vpack.c.b16 %v7064, %v7056
    %v7745 = vpack.c.b16 %v7073, %v7065
    %v7746 = vpack.c.b16 %v7074, %v7066
    %v7747 = vpack.c.b16 %v7075, %v7067
    %v7748 = vpack.c.b16 %v7076, %v7068
    %v7749 = vpack.c.b16 %v7077, %v7069
    %v7750 = vpack.c.b16 %v7078, %v7070
    %v7751 = vpack.c.b16 %v7079, %v7071
    %v7752 = vpack.c.b16 %v7080, %v7072
    %v7753 = vpack.c.b16 %v7089, %v7081
    %v7754 = vpack.c.b16 %v7090, %v7082
    %v7755 = vpack.c.b16 %v7091, %v7083
    %v7756 = vpack.c.b16 %v7092, %v7084
    %v7757 = vpack.c.b16 %v7093, %v7085
    %v7758 = vpack.c.b16 %v7094, %v7086
    %v7759 = vpack.c.b16 %v7095, %v7087
    %v7760 = vpack.c.b16 %v7096, %v7088
    %v7761 = vpack.c.b16 %v7105, %v7097
    %v7762 = vpack.c.b16 %v7106, %v7098
    %v7763 = vpack.c.b16 %v7107, %v7099
    %v7764 = vpack.c.b16 %v7108, %v7100
    %v7765 = vpack.c.b16 %v7109, %v7101
    %v7766 = vpack.c.b16 %v7110, %v7102
    %v7767 = vpack.c.b16 %v7111, %v7103
    %v7768 = vpack.c.b16 %v7112, %v7104
    %v7769 = vpack.c.b16 %v7121, %v7113
    %v7770 = vpack.c.b16 %v7122, %v7114
    %v7771 = vpack.c.b16 %v7123, %v7115
    %v7772 = vpack.c.b16 %v7124, %v7116
    %v7773 = vpack.c.b16 %v7125, %v7117
    %v7774 = vpack.c.b16 %v7126, %v7118
    %v7775 = vpack.c.b16 %v7127, %v7119
    %v7776 = vpack.c.b16 %v7128, %v7120
    %v7777 = vpack.c.b16 %v7137, %v7129
    %v7778 = vpack.c.b16 %v7138, %v7130
    %v7779 = vpack.c.b16 %v7139, %v7131
    %v7780 = vpack.c.b16 %v7140, %v7132
    %v7781 = vpack.c.b16 %v7141, %v7133
    %v7782 = vpack.c.b16 %v7142, %v7134
    %v7783 = vpack.c.b16 %v7143, %v7135
    %v7784 = vpack.c.b16 %v7144, %v7136
    %v7785 = vpack.c.b16 %v7153, %v7145
    %v7786 = vpack.c.b16 %v7154, %v7146
    %v7787 = vpack.c.b16 %v7155, %v7147
    %v7788 = vpack.c.b16 %v7156, %v7148
    %v7789 = vpack.c.b16 %v7157, %v7149
    %v7790 = vpack.c.b16 %v7158, %v7150
    %v7791 = vpack.c.b16 %v7159, %v7151
    %v7792 = vpack.c.b16 %v7160, %v7152
    %v7793 = vpack.c.b16 %v7169, %v7161
    %v7794 = vpack.c.b16 %v7170, %v7162
    %v7795 = vpack.c.b16 %v7171, %v7163
    %v7796 = vpack.c.b16 %v7172, %v7164
    %v7797 = vpack.c.b16 %v7173, %v7165
    %v7798 = vpack.c.b16 %v7174, %v7166
    %v7799 = vpack.c.b16 %v7175, %v7167
    %v7800 = vpack.c.b16 %v7176, %v7168
    %v7801 = vpack.c.b16 %v7185, %v7177
    %v7802 = vpack.c.b16 %v7186, %v7178
    %v7803 = vpack.c.b16 %v7187, %v7179
    %v7804 = vpack.c.b16 %v7188, %v7180
    %v7805 = vpack.c.b16 %v7189, %v7181
    %v7806 = vpack.c.b16 %v7190, %v7182
    %v7807 = vpack.c.b16 %v7191, %v7183
    %v7808 = vpack.c.b16 %v7192, %v7184
    %v7809 = vpack.c.b16 %v7201, %v7193
    %v7810 = vpack.c.b16 %v7202, %v7194
    %v7811 = vpack.c.b16 %v7203, %v7195
    %v7812 = vpack.c.b16 %v7204, %v7196
    %v7813 = vpack.c.b16 %v7205, %v7197
    %v7814 = vpack.c.b16 %v7206, %v7198
    %v7815 = vpack.c.b16 %v7207, %v7199
    %v7816 = vpack.c.b16 %v7208, %v7200
    %v7817 = vpack.c.b16 %v7217, %v7209
    %v7818 = vpack.c.b16 %v7218, %v7210
    %v7819 = vpack.c.b16 %v7219, %v7211
    %v7820 = vpack.c.b16 %v7220, %v7212
    %v7821 = vpack.c.b16 %v7221, %v7213
    %v7822 = vpack.c.b16 %v7222, %v7214
    %v7823 = vpack.c.b16 %v7223, %v7215
    %v7824 = vpack.c.b16 %v7224, %v7216
    %v7825 = vpack.c.b16 %v7233, %v7225
    %v7826 = vpack.c.b16 %v7234, %v7226
    %v7827 = vpack.c.b16 %v7235, %v7227
    %v7828 = vpack.c.b16 %v7236, %v7228
    %v7829 = vpack.c.b16 %v7237, %v7229
    %v7830 = vpack.c.b16 %v7238, %v7230
    %v7831 = vpack.c.b16 %v7239, %v7231
    %v7832 = vpack.c.b16 %v7240, %v7232
    %v7833 = vpack.c.b16 %v7249, %v7241
    %v7834 = vpack.c.b16 %v7250, %v7242
    %v7835 = vpack.c.b16 %v7251, %v7243
    %v7836 = vpack.c.b16 %v7252, %v7244
    %v7837 = vpack.c.b16 %v7253, %v7245
    %v7838 = vpack.c.b16 %v7254, %v7246
    %v7839 = vpack.c.b16 %v7255, %v7247
    %v7840 = vpack.c.b16 %v7256, %v7248
    %v7841 = vpack.c.b16 %v7265, %v7257
    %v7842 = vpack.c.b16 %v7266, %v7258
    %v7843 = vpack.c.b16 %v7267, %v7259
    %v7844 = vpack.c.b16 %v7268, %v7260
    %v7845 = vpack.c.b16 %v7269, %v7261
    %v7846 = vpack.c.b16 %v7270, %v7262
    %v7847 = vpack.c.b16 %v7271, %v7263
    %v7848 = vpack.c.b16 %v7272, %v7264
    %v7849 = vpack.c.b16 %v7281, %v7273
    %v7850 = vpack.c.b16 %v7282, %v7274
    %v7851 = vpack.c.b16 %v7283, %v7275
    %v7852 = vpack.c.b16 %v7284, %v7276
    %v7853 = vpack.c.b16 %v7285, %v7277
    %v7854 = vpack.c.b16 %v7286, %v7278
    %v7855 = vpack.c.b16 %v7287, %v7279
    %v7856 = vpack.c.b16 %v7288, %v7280
    %v7857 = vpack.c.b16 %v7297, %v7289
    %v7858 = vpack.c.b16 %v7298, %v7290
    %v7859 = vpack.c.b16 %v7299, %v7291
    %v7860 = vpack.c.b16 %v7300, %v7292
    %v7861 = vpack.c.b16 %v7301, %v7293
    %v7862 = vpack.c.b16 %v7302, %v7294
    %v7863 = vpack.c.b16 %v7303, %v7295
    %v7864 = vpack.c.b16 %v7304, %v7296
    %v7865 = vpack.c.b16 %v7313, %v7305
    %v7866 = vpack.c.b16 %v7314, %v7306
    %v7867 = vpack.c.b16 %v7315, %v7307
    %v7868 = vpack.c.b16 %v7316, %v7308
    %v7869 = vpack.c.b16 %v7317, %v7309
    %v7870 = vpack.c.b16 %v7318, %v7310
    %v7871 = vpack.c.b16 %v7319, %v7311
    %v7872 = vpack.c.b16 %v7320, %v7312
    %v7873 = vpack.c.b16 %v7329, %v7321
    %v7874 = vpack.c.b16 %v7330, %v7322
    %v7875 = vpack.c.b16 %v7331, %v7323
    %v7876 = vpack.c.b16 %v7332, %v7324
    %v7877 = vpack.c.b16 %v7333, %v7325
    %v7878 = vpack.c.b16 %v7334, %v7326
    %v7879 = vpack.c.b16 %v7335, %v7327
    %v7880 = vpack.c.b16 %v7336, %v7328
    %v7881 = vpack.c.b16 %v7345, %v7337
    %v7882 = vpack.c.b16 %v7346, %v7338
    %v7883 = vpack.c.b16 %v7347, %v7339
    %v7884 = vpack.c.b16 %v7348, %v7340
    %v7885 = vpack.c.b16 %v7349, %v7341
    %v7886 = vpack.c.b16 %v7350, %v7342
    %v7887 = vpack.c.b16 %v7351, %v7343
    %v7888 = vpack.c.b16 %v7352, %v7344
    %v7889 = vpack.c.b16 %v7361, %v7353
    %v7890 = vpack.c.b16 %v7362, %v7354
    %v7891 = vpack.c.b16 %v7363, %v7355
    %v7892 = vpack.c.b16 %v7364, %v7356
    %v7893 = vpack.c.b16 %v7365, %v7357
    %v7894 = vpack.c.b16 %v7366, %v7358
    %v7895 = vpack.c.b16 %v7367, %v7359
    %v7896 = vpack.c.b16 %v7368, %v7360
    %v7897 = vpack.c.b16 %v7377, %v7369
    %v7898 = vpack.c.b16 %v7378, %v7370
    %v7899 = vpack.c.b16 %v7379, %v7371
    %v7900 = vpack.c.b16 %v7380, %v7372
    %v7901 = vpack.c.b16 %v7381, %v7373
    %v7902 = vpack.c.b16 %v7382, %v7374
    %v7903 = vpack.c.b16 %v7383, %v7375
    %v7904 = vpack.c.b16 %v7384, %v7376
    %v7905 = vpack.c.b16 %v7393, %v7385
    %v7906 = vpack.c.b16 %v7394, %v7386
    %v7907 = vpack.c.b16 %v7395, %v7387
    %v7908 = vpack.c.b16 %v7396, %v7388
    %v7909 = vpack.c.b16 %v7397, %v7389
    %v7910 = vpack.c.b16 %v7398, %v7390
    %v7911 = vpack.c.b16 %v7399, %v7391
    %v7912 = vpack.c.b16 %v7400, %v7392
    %v7913 = vpack.c.b16 %v7409, %v7401
    %v7914 = vpack.c.b16 %v7410, %v7402
    %v7915 = vpack.c.b16 %v7411, %v7403
    %v7916 = vpack.c.b16 %v7412, %v7404
    %v7917 = vpack.c.b16 %v7413, %v7405
    %v7918 = vpack.c.b16 %v7414, %v7406
    %v7919 = vpack.c.b16 %v7415, %v7407
    %v7920 = vpack.c.b16 %v7416, %v7408
    %v7921 = vpack.c.b16 %v7425, %v7417
    %v7922 = vpack.c.b16 %v7426, %v7418
    %v7923 = vpack.c.b16 %v7427, %v7419
    %v7924 = vpack.c.b16 %v7428, %v7420
    %v7925 = vpack.c.b16 %v7429, %v7421
    %v7926 = vpack.c.b16 %v7430, %v7422
    %v7927 = vpack.c.b16 %v7431, %v7423
    %v7928 = vpack.c.b16 %v7432, %v7424
    %v7929 = vpack.c.b16 %v7441, %v7433
    %v7930 = vpack.c.b16 %v7442, %v7434
    %v7931 = vpack.c.b16 %v7443, %v7435
    %v7932 = vpack.c.b16 %v7444, %v7436
    %v7933 = vpack.c.b16 %v7445, %v7437
    %v7934 = vpack.c.b16 %v7446, %v7438
    %v7935 = vpack.c.b16 %v7447, %v7439
    %v7936 = vpack.c.b16 %v7448, %v7440
    %v7937 = vpack.c.b16 %v7457, %v7449
    %v7938 = vpack.c.b16 %v7458, %v7450
    %v7939 = vpack.c.b16 %v7459, %v7451
    %v7940 = vpack.c.b16 %v7460, %v7452
    %v7941 = vpack.c.b16 %v7461, %v7453
    %v7942 = vpack.c.b16 %v7462, %v7454
    %v7943 = vpack.c.b16 %v7463, %v7455
    %v7944 = vpack.c.b16 %v7464, %v7456
    %v7945 = vpack.c.b16 %v7473, %v7465
    %v7946 = vpack.c.b16 %v7474, %v7466
    %v7947 = vpack.c.b16 %v7475, %v7467
    %v7948 = vpack.c.b16 %v7476, %v7468
    %v7949 = vpack.c.b16 %v7477, %v7469
    %v7950 = vpack.c.b16 %v7478, %v7470
    %v7951 = vpack.c.b16 %v7479, %v7471
    %v7952 = vpack.c.b16 %v7480, %v7472
    %v7953 = vpack.c.b16 %v7489, %v7481
    %v7954 = vpack.c.b16 %v7490, %v7482
    %v7955 = vpack.c.b16 %v7491, %v7483
    %v7956 = vpack.c.b16 %v7492, %v7484
    %v7957 = vpack.c.b16 %v7493, %v7485
    %v7958 = vpack.c.b16 %v7494, %v7486
    %v7959 = vpack.c.b16 %v7495, %v7487
    %v7960 = vpack.c.b16 %v7496, %v7488
    %v7961 = vpack.c.b16 %v7505, %v7497
    %v7962 = vpack.c.b16 %v7506, %v7498
    %v7963 = vpack.c.b16 %v7507, %v7499
    %v7964 = vpack.c.b16 %v7508, %v7500
    %v7965 = vpack.c.b16 %v7509, %v7501
    %v7966 = vpack.c.b16 %v7510, %v7502
    %v7967 = vpack.c.b16 %v7511, %v7503
    %v7968 = vpack.c.b16 %v7512, %v7504
    %v7969 = vpack.c.b16 %v7521, %v7513
    %v7970 = vpack.c.b16 %v7522, %v7514
    %v7971 = vpack.c.b16 %v7523, %v7515
    %v7972 = vpack.c.b16 %v7524, %v7516
    %v7973 = vpack.c.b16 %v7525, %v7517
    %v7974 = vpack.c.b16 %v7526, %v7518
    %v7975 = vpack.c.b16 %v7527, %v7519
    %v7976 = vpack.c.b16 %v7528, %v7520
    %v7977 = vpack.c.b16 %v7537, %v7529
    %v7978 = vpack.c.b16 %v7538, %v7530
    %v7979 = vpack.c.b16 %v7539, %v7531
    %v7980 = vpack.c.b16 %v7540, %v7532
    %v7981 = vpack.c.b16 %v7541, %v7533
    %v7982 = vpack.c.b16 %v7542, %v7534
    %v7983 = vpack.c.b16 %v7543, %v7535
    %v7984 = vpack.c.b16 %v7544, %v7536
    %v7985 = vpack.c.b16 %v7553, %v7545
    %v7986 = vpack.c.b16 %v7554, %v7546
    %v7987 = vpack.c.b16 %v7555, %v7547
    %v7988 = vpack.c.b16 %v7556, %v7548
    %v7989 = vpack.c.b16 %v7557, %v7549
    %v7990 = vpack.c.b16 %v7558, %v7550
    %v7991 = vpack.c.b16 %v7559, %v7551
    %v7992 = vpack.c.b16 %v7560, %v7552
    %v7993 = vpack.c.b16 %v7569, %v7561
    %v7994 = vpack.c.b16 %v7570, %v7562
    %v7995 = vpack.c.b16 %v7571, %v7563
    %v7996 = vpack.c.b16 %v7572, %v7564
    %v7997 = vpack.c.b16 %v7573, %v7565
    %v7998 = vpack.c.b16 %v7574, %v7566
    %v7999 = vpack.c.b16 %v7575, %v7567
    %v8000 = vpack.c.b16 %v7576, %v7568
    %v8001 = vpack.c.b16 %v7585, %v7577
    %v8002 = vpack.c.b16 %v7586, %v7578
    %v8003 = vpack.c.b16 %v7587, %v7579
    %v8004 = vpack.c.b16 %v7588, %v7580
    %v8005 = vpack.c.b16 %v7589, %v7581
    %v8006 = vpack.c.b16 %v7590, %v7582
    %v8007 = vpack.c.b16 %v7591, %v7583
    %v8008 = vpack.c.b16 %v7592, %v7584
    %v8009 = vpack.c.b16 %v7601, %v7593
    %v8010 = vpack.c.b16 %v7602, %v7594
    %v8011 = vpack.c.b16 %v7603, %v7595
    %v8012 = vpack.c.b16 %v7604, %v7596
    %v8013 = vpack.c.b16 %v7605, %v7597
    %v8014 = vpack.c.b16 %v7606, %v7598
    %v8015 = vpack.c.b16 %v7607, %v7599
    %v8016 = vpack.c.b16 %v7608, %v7600
    %v8017 = vpack.c.b16 %v7617, %v7609
    %v8018 = vpack.c.b16 %v7618, %v7610
    %v8019 = vpack.c.b16 %v7619, %v7611
    %v8020 = vpack.c.b16 %v7620, %v7612
    %v8021 = vpack.c.b16 %v7621, %v7613
    %v8022 = vpack.c.b16 %v7622, %v7614
    %v8023 = vpack.c.b16 %v7623, %v7615
    %v8024 = vpack.c.b16 %v7624, %v7616
    %v8025 = vpack.c.b16 %v7633, %v7625
    %v8026 = vpack.c.b16 %v7634, %v7626
    %v8027 = vpack.c.b16 %v7635, %v7627
    %v8028 = vpack.c.b16 %v7636, %v7628
    %v8029 = vpack.c.b16 %v7637, %v7629
    %v8030 = vpack.c.b16 %v7638, %v7630
    %v8031 = vpack.c.b16 %v7639, %v7631
    %v8032 = vpack.c.b16 %v7640, %v7632
    %v8033 = vpack.c.b16 %v7649, %v7641
    %v8034 = vpack.c.b16 %v7650, %v7642
    %v8035 = vpack.c.b16 %v7651, %v7643
    %v8036 = vpack.c.b16 %v7652, %v7644
    %v8037 = vpack.c.b16 %v7653, %v7645
    %v8038 = vpack.c.b16 %v7654, %v7646
    %v8039 = vpack.c.b16 %v7655, %v7647
    %v8040 = vpack.c.b16 %v7656, %v7648
    %8425 = vmatprep.subr.bf16.mxu0 %v7658
    %8426 = vmatpush1.bf16.msra.mxu0 %v7657
    %8427 = vmatprep.subr.bf16.mxu0 %v7666
    %8428 = vmatpush1.bf16.msra.mxu0 %v7665
    %8429 = vmatprep.subr.bf16.mxu0 %v7674
    %8430 = vmatpush1.bf16.msra.mxu0 %v7673
    %8431 = vmatprep.subr.bf16.mxu0 %v7682
    %8432 = vmatpush1.bf16.msra.mxu0 %v7681
    %8433 = vmatprep.subr.bf16.mxu0 %v7690
    %8434 = vmatpush1.bf16.msra.mxu0 %v7689
    %8435 = vmatprep.subr.bf16.mxu0 %v7698
    %8436 = vmatpush1.bf16.msra.mxu0 %v7697
    %8437 = vmatprep.subr.bf16.mxu0 %v7706
    %8438 = vmatpush1.bf16.msra.mxu0 %v7705
    %8439 = vmatprep.subr.bf16.mxu0 %v7714
    %8440 = vmatpush1.bf16.msra.mxu0 %v7713
    %8441 = vmatprep.subr.bf16.mxu0 %v7722
    %8442 = vmatpush1.bf16.msra.mxu0 %v7721
    %8443 = vmatprep.subr.bf16.mxu0 %v7730
    %8444 = vmatpush1.bf16.msra.mxu0 %v7729
    %8445 = vmatprep.subr.bf16.mxu0 %v7738
    %8446 = vmatpush1.bf16.msra.mxu0 %v7737
    %8447 = vmatprep.subr.bf16.mxu0 %v7746
    %8448 = vmatpush1.bf16.msra.mxu0 %v7745
    %8449 = vmatprep.subr.bf16.mxu0 %v7754
    %8450 = vmatpush1.bf16.msra.mxu0 %v7753
    %8451 = vmatprep.subr.bf16.mxu0 %v7762
    %8452 = vmatpush1.bf16.msra.mxu0 %v7761
    %8453 = vmatprep.subr.bf16.mxu0 %v7770
    %8454 = vmatpush1.bf16.msra.mxu0 %v7769
    %8455 = vmatprep.subr.bf16.mxu0 %v7778
    %8456 = vmatpush1.bf16.msra.mxu0 %v7777
    %8457 = vmatprep.mubr.bf16.mxu0 %v350
    %8458 = vmatmul.mubr.bf16.gmra.mrb[0].mxu0 %v349
    %v8459 = vpop.f32.mrb[0].mxu0
    %v8460 = vadd.f32 %v6468, %v8459
    %v8461 = vpop.f32.mrb[0].mxu0
    %v8462 = vadd.f32 %v6472, %v8461
    %v8463 = vpop.f32.mrb[0].mxu0
    %v8464 = vpop.f32.mrb[0].mxu0
    %8465 = vdwg.mxu0
    %8466 = vmatprep.subr.bf16.mxu0 %v7786
    %8467 = vmatpush1.bf16.msra.mxu0 %v7785
    %8468 = vmatprep.subr.bf16.mxu0 %v7794
    %8469 = vmatpush1.bf16.msra.mxu0 %v7793
    %8470 = vmatprep.subr.bf16.mxu0 %v7802
    %8471 = vmatpush1.bf16.msra.mxu0 %v7801
    %8472 = vmatprep.subr.bf16.mxu0 %v7810
    %8473 = vmatpush1.bf16.msra.mxu0 %v7809
    %8474 = vmatprep.subr.bf16.mxu0 %v7818
    %8475 = vmatpush1.bf16.msra.mxu0 %v7817
    %8476 = vmatprep.subr.bf16.mxu0 %v7826
    %8477 = vmatpush1.bf16.msra.mxu0 %v7825
    %8478 = vmatprep.subr.bf16.mxu0 %v7834
    %8479 = vmatpush1.bf16.msra.mxu0 %v7833
    %8480 = vmatprep.subr.bf16.mxu0 %v7842
    %8481 = vmatpush1.bf16.msra.mxu0 %v7841
    %8482 = vmatprep.subr.bf16.mxu0 %v7850
    %8483 = vmatpush1.bf16.msra.mxu0 %v7849
    %8484 = vmatprep.subr.bf16.mxu0 %v7858
    %8485 = vmatpush1.bf16.msra.mxu0 %v7857
    %8486 = vmatprep.subr.bf16.mxu0 %v7866
    %8487 = vmatpush1.bf16.msra.mxu0 %v7865
    %8488 = vmatprep.subr.bf16.mxu0 %v7874
    %8489 = vmatpush1.bf16.msra.mxu0 %v7873
    %8490 = vmatprep.subr.bf16.mxu0 %v7882
    %8491 = vmatpush1.bf16.msra.mxu0 %v7881
    %8492 = vmatprep.subr.bf16.mxu0 %v7890
    %8493 = vmatpush1.bf16.msra.mxu0 %v7889
    %8494 = vmatprep.subr.bf16.mxu0 %v7898
    %8495 = vmatpush1.bf16.msra.mxu0 %v7897
    %8496 = vmatprep.subr.bf16.mxu0 %v7906
    %8497 = vmatpush1.bf16.msra.mxu0 %v7905
    %8498 = vmatprep.mubr.bf16.mxu0 %v352
    %8499 = vmatmul.mubr.bf16.gmra.mrb[0].mxu0 %v351
    %v8500 = vpop.f32.mrb[0].mxu0
    %v8501 = vadd.f32 %v8460, %v8500
    %v8502 = vpop.f32.mrb[0].mxu0
    %v8503 = vadd.f32 %v8462, %v8502
    %v8504 = vpop.f32.mrb[0].mxu0
    %v8505 = vpop.f32.mrb[0].mxu0
    %8506 = vdwg.mxu0
    %8507 = vmatprep.subr.bf16.mxu0 %v7914
    %8508 = vmatpush1.bf16.msra.mxu0 %v7913
    %8509 = vmatprep.subr.bf16.mxu0 %v7922
    %8510 = vmatpush1.bf16.msra.mxu0 %v7921
    %8511 = vmatprep.subr.bf16.mxu0 %v7930
    %8512 = vmatpush1.bf16.msra.mxu0 %v7929
    %8513 = vmatprep.subr.bf16.mxu0 %v7938
    %8514 = vmatpush1.bf16.msra.mxu0 %v7937
    %8515 = vmatprep.subr.bf16.mxu0 %v7946
    %8516 = vmatpush1.bf16.msra.mxu0 %v7945
    %8517 = vmatprep.subr.bf16.mxu0 %v7954
    %8518 = vmatpush1.bf16.msra.mxu0 %v7953
    %8519 = vmatprep.subr.bf16.mxu0 %v7962
    %8520 = vmatpush1.bf16.msra.mxu0 %v7961
    %8521 = vmatprep.subr.bf16.mxu0 %v7970
    %8522 = vmatpush1.bf16.msra.mxu0 %v7969
    %8523 = vmatprep.subr.bf16.mxu0 %v7978
    %8524 = vmatpush1.bf16.msra.mxu0 %v7977
    %8525 = vmatprep.subr.bf16.mxu0 %v7986
    %8526 = vmatpush1.bf16.msra.mxu0 %v7985
    %8527 = vmatprep.subr.bf16.mxu0 %v7994
    %8528 = vmatpush1.bf16.msra.mxu0 %v7993
    %8529 = vmatprep.subr.bf16.mxu0 %v8002
    %8530 = vmatpush1.bf16.msra.mxu0 %v8001
    %8531 = vmatprep.subr.bf16.mxu0 %v8010
    %8532 = vmatpush1.bf16.msra.mxu0 %v8009
    %8533 = vmatprep.subr.bf16.mxu0 %v8018
    %8534 = vmatpush1.bf16.msra.mxu0 %v8017
    %8535 = vmatprep.subr.bf16.mxu0 %v8026
    %8536 = vmatpush1.bf16.msra.mxu0 %v8025
    %8537 = vmatprep.subr.bf16.mxu0 %v8034
    %8538 = vmatpush1.bf16.msra.mxu0 %v8033
    %8539 = vmatprep.mubr.bf16.mxu0 %v354
    %8540 = vmatmul.mubr.bf16.gmra.mrb[0].mxu0 %v353
    %v8541 = vpop.f32.mrb[0].mxu0
    %v8542 = vadd.f32 %v8501, %v8541
    %v8543 = vpop.f32.mrb[0].mxu0
    %v8544 = vadd.f32 %v8503, %v8543
    %v8545 = vpop.f32.mrb[0].mxu0
    %v8546 = vpop.f32.mrb[0].mxu0
    %8547 = vdwg.mxu0
    %8548 = vmatprep.subr.bf16.mxu0 %v7660
    %8549 = vmatpush1.bf16.msra.mxu0 %v7659
    %8550 = vmatprep.subr.bf16.mxu0 %v7668
    %8551 = vmatpush1.bf16.msra.mxu0 %v7667
    %8552 = vmatprep.subr.bf16.mxu0 %v7676
    %8553 = vmatpush1.bf16.msra.mxu0 %v7675
    %8554 = vmatprep.subr.bf16.mxu0 %v7684
    %8555 = vmatpush1.bf16.msra.mxu0 %v7683
    %8556 = vmatprep.subr.bf16.mxu0 %v7692
    %8557 = vmatpush1.bf16.msra.mxu0 %v7691
    %8558 = vmatprep.subr.bf16.mxu0 %v7700
    %8559 = vmatpush1.bf16.msra.mxu0 %v7699
    %8560 = vmatprep.subr.bf16.mxu0 %v7708
    %8561 = vmatpush1.bf16.msra.mxu0 %v7707
    %8562 = vmatprep.subr.bf16.mxu0 %v7716
    %8563 = vmatpush1.bf16.msra.mxu0 %v7715
    %8564 = vmatprep.subr.bf16.mxu0 %v7724
    %8565 = vmatpush1.bf16.msra.mxu0 %v7723
    %8566 = vmatprep.subr.bf16.mxu0 %v7732
    %8567 = vmatpush1.bf16.msra.mxu0 %v7731
    %8568 = vmatprep.subr.bf16.mxu0 %v7740
    %8569 = vmatpush1.bf16.msra.mxu0 %v7739
    %8570 = vmatprep.subr.bf16.mxu0 %v7748
    %8571 = vmatpush1.bf16.msra.mxu0 %v7747
    %8572 = vmatprep.subr.bf16.mxu0 %v7756
    %8573 = vmatpush1.bf16.msra.mxu0 %v7755
    %8574 = vmatprep.subr.bf16.mxu0 %v7764
    %8575 = vmatpush1.bf16.msra.mxu0 %v7763
    %8576 = vmatprep.subr.bf16.mxu0 %v7772
    %8577 = vmatpush1.bf16.msra.mxu0 %v7771
    %8578 = vmatprep.subr.bf16.mxu0 %v7780
    %8579 = vmatpush1.bf16.msra.mxu0 %v7779
    %8580 = vmatprep.mubr.bf16.mxu0 %v350
    %8581 = vmatmul.mubr.bf16.gmra.mrb[0].mxu0 %v349
    %v8582 = vpop.f32.mrb[0].mxu0
    %v8583 = vadd.f32 %v6476, %v8582
    %v8584 = vpop.f32.mrb[0].mxu0
    %v8585 = vadd.f32 %v6480, %v8584
    %v8586 = vpop.f32.mrb[0].mxu0
    %v8587 = vpop.f32.mrb[0].mxu0
    %8588 = vdwg.mxu0
    %8589 = vmatprep.subr.bf16.mxu0 %v7788
    %8590 = vmatpush1.bf16.msra.mxu0 %v7787
    %8591 = vmatprep.subr.bf16.mxu0 %v7796
    %8592 = vmatpush1.bf16.msra.mxu0 %v7795
    %8593 = vmatprep.subr.bf16.mxu0 %v7804
    %8594 = vmatpush1.bf16.msra.mxu0 %v7803
    %8595 = vmatprep.subr.bf16.mxu0 %v7812
    %8596 = vmatpush1.bf16.msra.mxu0 %v7811
    %8597 = vmatprep.subr.bf16.mxu0 %v7820
    %8598 = vmatpush1.bf16.msra.mxu0 %v7819
    %8599 = vmatprep.subr.bf16.mxu0 %v7828
    %8600 = vmatpush1.bf16.msra.mxu0 %v7827
    %8601 = vmatprep.subr.bf16.mxu0 %v7836
    %8602 = vmatpush1.bf16.msra.mxu0 %v7835
    %8603 = vmatprep.subr.bf16.mxu0 %v7844
    %8604 = vmatpush1.bf16.msra.mxu0 %v7843
    %8605 = vmatprep.subr.bf16.mxu0 %v7852
    %8606 = vmatpush1.bf16.msra.mxu0 %v7851
    %8607 = vmatprep.subr.bf16.mxu0 %v7860
    %8608 = vmatpush1.bf16.msra.mxu0 %v7859
    %8609 = vmatprep.subr.bf16.mxu0 %v7868
    %8610 = vmatpush1.bf16.msra.mxu0 %v7867
    %8611 = vmatprep.subr.bf16.mxu0 %v7876
    %8612 = vmatpush1.bf16.msra.mxu0 %v7875
    %8613 = vmatprep.subr.bf16.mxu0 %v7884
    %8614 = vmatpush1.bf16.msra.mxu0 %v7883
    %8615 = vmatprep.subr.bf16.mxu0 %v7892
    %8616 = vmatpush1.bf16.msra.mxu0 %v7891
    %8617 = vmatprep.subr.bf16.mxu0 %v7900
    %8618 = vmatpush1.bf16.msra.mxu0 %v7899
    %8619 = vmatprep.subr.bf16.mxu0 %v7908
    %8620 = vmatpush1.bf16.msra.mxu0 %v7907
    %8621 = vmatprep.mubr.bf16.mxu0 %v352
    %8622 = vmatmul.mubr.bf16.gmra.mrb[0].mxu0 %v351
    %v8623 = vpop.f32.mrb[0].mxu0
    %v8624 = vadd.f32 %v8583, %v8623
    %v8625 = vpop.f32.mrb[0].mxu0
    %v8626 = vadd.f32 %v8585, %v8625
    %v8627 = vpop.f32.mrb[0].mxu0
    %v8628 = vpop.f32.mrb[0].mxu0
    %8629 = vdwg.mxu0
    %8630 = vmatprep.subr.bf16.mxu0 %v7916
    %8631 = vmatpush1.bf16.msra.mxu0 %v7915
    %8632 = vmatprep.subr.bf16.mxu0 %v7924
    %8633 = vmatpush1.bf16.msra.mxu0 %v7923
    %8634 = vmatprep.subr.bf16.mxu0 %v7932
    %8635 = vmatpush1.bf16.msra.mxu0 %v7931
    %8636 = vmatprep.subr.bf16.mxu0 %v7940
    %8637 = vmatpush1.bf16.msra.mxu0 %v7939
    %8638 = vmatprep.subr.bf16.mxu0 %v7948
    %8639 = vmatpush1.bf16.msra.mxu0 %v7947
    %8640 = vmatprep.subr.bf16.mxu0 %v7956
    %8641 = vmatpush1.bf16.msra.mxu0 %v7955
    %8642 = vmatprep.subr.bf16.mxu0 %v7964
    %8643 = vmatpush1.bf16.msra.mxu0 %v7963
    %8644 = vmatprep.subr.bf16.mxu0 %v7972
    %8645 = vmatpush1.bf16.msra.mxu0 %v7971
    %8646 = vmatprep.subr.bf16.mxu0 %v7980
    %8647 = vmatpush1.bf16.msra.mxu0 %v7979
    %8648 = vmatprep.subr.bf16.mxu0 %v7988
    %8649 = vmatpush1.bf16.msra.mxu0 %v7987
    %8650 = vmatprep.subr.bf16.mxu0 %v7996
    %8651 = vmatpush1.bf16.msra.mxu0 %v7995
    %8652 = vmatprep.subr.bf16.mxu0 %v8004
    %8653 = vmatpush1.bf16.msra.mxu0 %v8003
    %8654 = vmatprep.subr.bf16.mxu0 %v8012
    %8655 = vmatpush1.bf16.msra.mxu0 %v8011
    %8656 = vmatprep.subr.bf16.mxu0 %v8020
    %8657 = vmatpush1.bf16.msra.mxu0 %v8019
    %8658 = vmatprep.subr.bf16.mxu0 %v8028
    %8659 = vmatpush1.bf16.msra.mxu0 %v8027
    %8660 = vmatprep.subr.bf16.mxu0 %v8036
    %8661 = vmatpush1.bf16.msra.mxu0 %v8035
    %8662 = vmatprep.mubr.bf16.mxu0 %v354
    %8663 = vmatmul.mubr.bf16.gmra.mrb[0].mxu0 %v353
    %v8664 = vpop.f32.mrb[0].mxu0
    %v8665 = vadd.f32 %v8624, %v8664
    %v8666 = vpop.f32.mrb[0].mxu0
    %v8667 = vadd.f32 %v8626, %v8666
    %v8668 = vpop.f32.mrb[0].mxu0
    %v8669 = vpop.f32.mrb[0].mxu0
    %8670 = vdwg.mxu0
    %8671 = vmatprep.subr.bf16.mxu0 %v7662
    %8672 = vmatpush1.bf16.msra.mxu0 %v7661
    %8673 = vmatprep.subr.bf16.mxu0 %v7670
    %8674 = vmatpush1.bf16.msra.mxu0 %v7669
    %8675 = vmatprep.subr.bf16.mxu0 %v7678
    %8676 = vmatpush1.bf16.msra.mxu0 %v7677
    %8677 = vmatprep.subr.bf16.mxu0 %v7686
    %8678 = vmatpush1.bf16.msra.mxu0 %v7685
    %8679 = vmatprep.subr.bf16.mxu0 %v7694
    %8680 = vmatpush1.bf16.msra.mxu0 %v7693
    %8681 = vmatprep.subr.bf16.mxu0 %v7702
    %8682 = vmatpush1.bf16.msra.mxu0 %v7701
    %8683 = vmatprep.subr.bf16.mxu0 %v7710
    %8684 = vmatpush1.bf16.msra.mxu0 %v7709
    %8685 = vmatprep.subr.bf16.mxu0 %v7718
    %8686 = vmatpush1.bf16.msra.mxu0 %v7717
    %8687 = vmatprep.subr.bf16.mxu0 %v7726
    %8688 = vmatpush1.bf16.msra.mxu0 %v7725
    %8689 = vmatprep.subr.bf16.mxu0 %v7734
    %8690 = vmatpush1.bf16.msra.mxu0 %v7733
    %8691 = vmatprep.subr.bf16.mxu0 %v7742
    %8692 = vmatpush1.bf16.msra.mxu0 %v7741
    %8693 = vmatprep.subr.bf16.mxu0 %v7750
    %8694 = vmatpush1.bf16.msra.mxu0 %v7749
    %8695 = vmatprep.subr.bf16.mxu0 %v7758
    %8696 = vmatpush1.bf16.msra.mxu0 %v7757
    %8697 = vmatprep.subr.bf16.mxu0 %v7766
    %8698 = vmatpush1.bf16.msra.mxu0 %v7765
    %8699 = vmatprep.subr.bf16.mxu0 %v7774
    %8700 = vmatpush1.bf16.msra.mxu0 %v7773
    %8701 = vmatprep.subr.bf16.mxu0 %v7782
    %8702 = vmatpush1.bf16.msra.mxu0 %v7781
    %8703 = vmatprep.mubr.bf16.mxu0 %v350
    %8704 = vmatmul.mubr.bf16.gmra.mrb[0].mxu0 %v349
    %v8705 = vpop.f32.mrb[0].mxu0
    %v8706 = vadd.f32 %v6484, %v8705
    %v8707 = vpop.f32.mrb[0].mxu0
    %v8708 = vadd.f32 %v6488, %v8707
    %v8709 = vpop.f32.mrb[0].mxu0
    %v8710 = vpop.f32.mrb[0].mxu0
    %8711 = vdwg.mxu0
    %8712 = vmatprep.subr.bf16.mxu0 %v7790
    %8713 = vmatpush1.bf16.msra.mxu0 %v7789
    %8714 = vmatprep.subr.bf16.mxu0 %v7798
    %8715 = vmatpush1.bf16.msra.mxu0 %v7797
    %8716 = vmatprep.subr.bf16.mxu0 %v7806
    %8717 = vmatpush1.bf16.msra.mxu0 %v7805
    %8718 = vmatprep.subr.bf16.mxu0 %v7814
    %8719 = vmatpush1.bf16.msra.mxu0 %v7813
    %8720 = vmatprep.subr.bf16.mxu0 %v7822
    %8721 = vmatpush1.bf16.msra.mxu0 %v7821
    %8722 = vmatprep.subr.bf16.mxu0 %v7830
    %8723 = vmatpush1.bf16.msra.mxu0 %v7829
    %8724 = vmatprep.subr.bf16.mxu0 %v7838
    %8725 = vmatpush1.bf16.msra.mxu0 %v7837
    %8726 = vmatprep.subr.bf16.mxu0 %v7846
    %8727 = vmatpush1.bf16.msra.mxu0 %v7845
    %8728 = vmatprep.subr.bf16.mxu0 %v7854
    %8729 = vmatpush1.bf16.msra.mxu0 %v7853
    %8730 = vmatprep.subr.bf16.mxu0 %v7862
    %8731 = vmatpush1.bf16.msra.mxu0 %v7861
    %8732 = vmatprep.subr.bf16.mxu0 %v7870
    %8733 = vmatpush1.bf16.msra.mxu0 %v7869
    %8734 = vmatprep.subr.bf16.mxu0 %v7878
    %8735 = vmatpush1.bf16.msra.mxu0 %v7877
    %8736 = vmatprep.subr.bf16.mxu0 %v7886
    %8737 = vmatpush1.bf16.msra.mxu0 %v7885
    %8738 = vmatprep.subr.bf16.mxu0 %v7894
    %8739 = vmatpush1.bf16.msra.mxu0 %v7893
    %8740 = vmatprep.subr.bf16.mxu0 %v7902
    %8741 = vmatpush1.bf16.msra.mxu0 %v7901
    %8742 = vmatprep.subr.bf16.mxu0 %v7910
    %8743 = vmatpush1.bf16.msra.mxu0 %v7909
    %8744 = vmatprep.mubr.bf16.mxu0 %v352
    %8745 = vmatmul.mubr.bf16.gmra.mrb[0].mxu0 %v351
    %v8746 = vpop.f32.mrb[0].mxu0
    %v8747 = vadd.f32 %v8706, %v8746
    %v8748 = vpop.f32.mrb[0].mxu0
    %v8749 = vadd.f32 %v8708, %v8748
    %v8750 = vpop.f32.mrb[0].mxu0
    %v8751 = vpop.f32.mrb[0].mxu0
    %8752 = vdwg.mxu0
    %8753 = vmatprep.subr.bf16.mxu0 %v7918
    %8754 = vmatpush1.bf16.msra.mxu0 %v7917
    %8755 = vmatprep.subr.bf16.mxu0 %v7926
    %8756 = vmatpush1.bf16.msra.mxu0 %v7925
    %8757 = vmatprep.subr.bf16.mxu0 %v7934
    %8758 = vmatpush1.bf16.msra.mxu0 %v7933
    %8759 = vmatprep.subr.bf16.mxu0 %v7942
    %8760 = vmatpush1.bf16.msra.mxu0 %v7941
    %8761 = vmatprep.subr.bf16.mxu0 %v7950
    %8762 = vmatpush1.bf16.msra.mxu0 %v7949
    %8763 = vmatprep.subr.bf16.mxu0 %v7958
    %8764 = vmatpush1.bf16.msra.mxu0 %v7957
    %8765 = vmatprep.subr.bf16.mxu0 %v7966
    %8766 = vmatpush1.bf16.msra.mxu0 %v7965
    %8767 = vmatprep.subr.bf16.mxu0 %v7974
    %8768 = vmatpush1.bf16.msra.mxu0 %v7973
    %8769 = vmatprep.subr.bf16.mxu0 %v7982
    %8770 = vmatpush1.bf16.msra.mxu0 %v7981
    %8771 = vmatprep.subr.bf16.mxu0 %v7990
    %8772 = vmatpush1.bf16.msra.mxu0 %v7989
    %8773 = vmatprep.subr.bf16.mxu0 %v7998
    %8774 = vmatpush1.bf16.msra.mxu0 %v7997
    %8775 = vmatprep.subr.bf16.mxu0 %v8006
    %8776 = vmatpush1.bf16.msra.mxu0 %v8005
    %8777 = vmatprep.subr.bf16.mxu0 %v8014
    %8778 = vmatpush1.bf16.msra.mxu0 %v8013
    %8779 = vmatprep.subr.bf16.mxu0 %v8022
    %8780 = vmatpush1.bf16.msra.mxu0 %v8021
    %8781 = vmatprep.subr.bf16.mxu0 %v8030
    %8782 = vmatpush1.bf16.msra.mxu0 %v8029
    %8783 = vmatprep.subr.bf16.mxu0 %v8038
    %8784 = vmatpush1.bf16.msra.mxu0 %v8037
    %8785 = vmatprep.mubr.bf16.mxu0 %v354
    %8786 = vmatmul.mubr.bf16.gmra.mrb[0].mxu0 %v353
    %v8787 = vpop.f32.mrb[0].mxu0
    %v8788 = vadd.f32 %v8747, %v8787
    %v8789 = vpop.f32.mrb[0].mxu0
    %v8790 = vadd.f32 %v8749, %v8789
    %v8791 = vpop.f32.mrb[0].mxu0
    %v8792 = vpop.f32.mrb[0].mxu0
    %8793 = vdwg.mxu0
    %8794 = vmatprep.subr.bf16.mxu0 %v7664
    %8795 = vmatpush1.bf16.msra.mxu0 %v7663
    %8796 = vmatprep.subr.bf16.mxu0 %v7672
    %8797 = vmatpush1.bf16.msra.mxu0 %v7671
    %8798 = vmatprep.subr.bf16.mxu0 %v7680
    %8799 = vmatpush1.bf16.msra.mxu0 %v7679
    %8800 = vmatprep.subr.bf16.mxu0 %v7688
    %8801 = vmatpush1.bf16.msra.mxu0 %v7687
    %8802 = vmatprep.subr.bf16.mxu0 %v7696
    %8803 = vmatpush1.bf16.msra.mxu0 %v7695
    %8804 = vmatprep.subr.bf16.mxu0 %v7704
    %8805 = vmatpush1.bf16.msra.mxu0 %v7703
    %8806 = vmatprep.subr.bf16.mxu0 %v7712
    %8807 = vmatpush1.bf16.msra.mxu0 %v7711
    %8808 = vmatprep.subr.bf16.mxu0 %v7720
    %8809 = vmatpush1.bf16.msra.mxu0 %v7719
    %8810 = vmatprep.subr.bf16.mxu0 %v7728
    %8811 = vmatpush1.bf16.msra.mxu0 %v7727
    %8812 = vmatprep.subr.bf16.mxu0 %v7736
    %8813 = vmatpush1.bf16.msra.mxu0 %v7735
    %8814 = vmatprep.subr.bf16.mxu0 %v7744
    %8815 = vmatpush1.bf16.msra.mxu0 %v7743
    %8816 = vmatprep.subr.bf16.mxu0 %v7752
    %8817 = vmatpush1.bf16.msra.mxu0 %v7751
    %8818 = vmatprep.subr.bf16.mxu0 %v7760
    %8819 = vmatpush1.bf16.msra.mxu0 %v7759
    %8820 = vmatprep.subr.bf16.mxu0 %v7768
    %8821 = vmatpush1.bf16.msra.mxu0 %v7767
    %8822 = vmatprep.subr.bf16.mxu0 %v7776
    %8823 = vmatpush1.bf16.msra.mxu0 %v7775
    %8824 = vmatprep.subr.bf16.mxu0 %v7784
    %8825 = vmatpush1.bf16.msra.mxu0 %v7783
    %8826 = vmatprep.mubr.bf16.mxu0 %v350
    %8827 = vmatmul.mubr.bf16.gmra.mrb[0].mxu0 %v349
    %v8828 = vpop.f32.mrb[0].mxu0
    %v8829 = vadd.f32 %v6492, %v8828
    %v8830 = vpop.f32.mrb[0].mxu0
    %v8831 = vadd.f32 %v6496, %v8830
    %v8832 = vpop.f32.mrb[0].mxu0
    %v8833 = vpop.f32.mrb[0].mxu0
    %8834 = vdwg.mxu0
    %8835 = vmatprep.subr.bf16.mxu0 %v7792
    %8836 = vmatpush1.bf16.msra.mxu0 %v7791
    %8837 = vmatprep.subr.bf16.mxu0 %v7800
    %8838 = vmatpush1.bf16.msra.mxu0 %v7799
    %8839 = vmatprep.subr.bf16.mxu0 %v7808
    %8840 = vmatpush1.bf16.msra.mxu0 %v7807
    %8841 = vmatprep.subr.bf16.mxu0 %v7816
    %8842 = vmatpush1.bf16.msra.mxu0 %v7815
    %8843 = vmatprep.subr.bf16.mxu0 %v7824
    %8844 = vmatpush1.bf16.msra.mxu0 %v7823
    %8845 = vmatprep.subr.bf16.mxu0 %v7832
    %8846 = vmatpush1.bf16.msra.mxu0 %v7831
    %8847 = vmatprep.subr.bf16.mxu0 %v7840
    %8848 = vmatpush1.bf16.msra.mxu0 %v7839
    %8849 = vmatprep.subr.bf16.mxu0 %v7848
    %8850 = vmatpush1.bf16.msra.mxu0 %v7847
    %8851 = vmatprep.subr.bf16.mxu0 %v7856
    %8852 = vmatpush1.bf16.msra.mxu0 %v7855
    %8853 = vmatprep.subr.bf16.mxu0 %v7864
    %8854 = vmatpush1.bf16.msra.mxu0 %v7863
    %8855 = vmatprep.subr.bf16.mxu0 %v7872
    %8856 = vmatpush1.bf16.msra.mxu0 %v7871
    %8857 = vmatprep.subr.bf16.mxu0 %v7880
    %8858 = vmatpush1.bf16.msra.mxu0 %v7879
    %8859 = vmatprep.subr.bf16.mxu0 %v7888
    %8860 = vmatpush1.bf16.msra.mxu0 %v7887
    %8861 = vmatprep.subr.bf16.mxu0 %v7896
    %8862 = vmatpush1.bf16.msra.mxu0 %v7895
    %8863 = vmatprep.subr.bf16.mxu0 %v7904
    %8864 = vmatpush1.bf16.msra.mxu0 %v7903
    %8865 = vmatprep.subr.bf16.mxu0 %v7912
    %8866 = vmatpush1.bf16.msra.mxu0 %v7911
    %8867 = vmatprep.mubr.bf16.mxu0 %v352
    %8868 = vmatmul.mubr.bf16.gmra.mrb[0].mxu0 %v351
    %v8869 = vpop.f32.mrb[0].mxu0
    %v8870 = vadd.f32 %v8829, %v8869
    %v8871 = vpop.f32.mrb[0].mxu0
    %v8872 = vadd.f32 %v8831, %v8871
    %v8873 = vpop.f32.mrb[0].mxu0
    %v8874 = vpop.f32.mrb[0].mxu0
    %8875 = vdwg.mxu0
    %8876 = vmatprep.subr.bf16.mxu0 %v7920
    %8877 = vmatpush1.bf16.msra.mxu0 %v7919
    %8878 = vmatprep.subr.bf16.mxu0 %v7928
    %8879 = vmatpush1.bf16.msra.mxu0 %v7927
    %8880 = vmatprep.subr.bf16.mxu0 %v7936
    %8881 = vmatpush1.bf16.msra.mxu0 %v7935
    %8882 = vmatprep.subr.bf16.mxu0 %v7944
    %8883 = vmatpush1.bf16.msra.mxu0 %v7943
    %8884 = vmatprep.subr.bf16.mxu0 %v7952
    %8885 = vmatpush1.bf16.msra.mxu0 %v7951
    %8886 = vmatprep.subr.bf16.mxu0 %v7960
    %8887 = vmatpush1.bf16.msra.mxu0 %v7959
    %8888 = vmatprep.subr.bf16.mxu0 %v7968
    %8889 = vmatpush1.bf16.msra.mxu0 %v7967
    %8890 = vmatprep.subr.bf16.mxu0 %v7976
    %8891 = vmatpush1.bf16.msra.mxu0 %v7975
    %8892 = vmatprep.subr.bf16.mxu0 %v7984
    %8893 = vmatpush1.bf16.msra.mxu0 %v7983
    %8894 = vmatprep.subr.bf16.mxu0 %v7992
    %8895 = vmatpush1.bf16.msra.mxu0 %v7991
    %8896 = vmatprep.subr.bf16.mxu0 %v8000
    %8897 = vmatpush1.bf16.msra.mxu0 %v7999
    %8898 = vmatprep.subr.bf16.mxu0 %v8008
    %8899 = vmatpush1.bf16.msra.mxu0 %v8007
    %8900 = vmatprep.subr.bf16.mxu0 %v8016
    %8901 = vmatpush1.bf16.msra.mxu0 %v8015
    %8902 = vmatprep.subr.bf16.mxu0 %v8024
    %8903 = vmatpush1.bf16.msra.mxu0 %v8023
    %8904 = vmatprep.subr.bf16.mxu0 %v8032
    %8905 = vmatpush1.bf16.msra.mxu0 %v8031
    %8906 = vmatprep.subr.bf16.mxu0 %v8040
    %8907 = vmatpush1.bf16.msra.mxu0 %v8039
    %8908 = vmatprep.mubr.bf16.mxu0 %v354
    %8909 = vmatmul.mubr.bf16.gmra.mrb[0].mxu0 %v353
    %v8910 = vpop.f32.mrb[0].mxu0
    %v8911 = vadd.f32 %v8870, %v8910
    %v8912 = vpop.f32.mrb[0].mxu0
    %v8913 = vadd.f32 %v8872, %v8912
    %v8914 = vpop.f32.mrb[0].mxu0
    %v8915 = vpop.f32.mrb[0].mxu0
    %8916 = vdwg.mxu0
    %v8917 = vmul.f32 %v8542, 0.07216878
    %v8918 = vmul.f32 %v8544, 0.07216878
    %v8919 = vmul.f32 %v8665, 0.07216878
    %v8920 = vmul.f32 %v8667, 0.07216878
    %v8921 = vmul.f32 %v8788, 0.07216878
    %v8922 = vmul.f32 %v8790, 0.07216878
    %v8923 = vmul.f32 %v8911, 0.07216878
    %v8924 = vmul.f32 %v8913, 0.07216878
    %v8933 = vcombine.low %v8917, %v8918
    %v8934 = vcombine.low %v8919, %v8920
    %v8935 = vcombine.low %v8921, %v8922
    %v8936 = vcombine.low %v8923, %v8924
    %v8938 = vunpack.c.l.s4 1966171168
    %v8939 = vunpack.c.0.s8 %v8938
    %v8940 = vlaneseq
    %v8941 = vshrl.u32 %v8940, 7
    %v8942 = vsub.s32 %v8939, %v8941
    %v8943 = vrot.slane %v8933, %v8942
    %v8945 = vunpack.c.l.s4 1966171168
    %v8946 = vunpack.c.0.s8 %v8945
    %v8947 = vlaneseq
    %v8948 = vshrl.u32 %v8947, 7
    %v8949 = vsub.s32 %v8946, %v8948
    %v8950 = vrot.slane %v8934, %v8949
    %v8952 = vunpack.c.l.s4 1966171168
    %v8953 = vunpack.c.0.s8 %v8952
    %v8954 = vlaneseq
    %v8955 = vshrl.u32 %v8954, 7
    %v8956 = vsub.s32 %v8953, %v8955
    %v8957 = vrot.slane %v8935, %v8956
    %v8959 = vunpack.c.l.s4 1966171168
    %v8960 = vunpack.c.0.s8 %v8959
    %v8961 = vlaneseq
    %v8962 = vshrl.u32 %v8961, 7
    %v8963 = vsub.s32 %v8960, %v8962
    %v8964 = vrot.slane %v8936, %v8963
    %v8965 = vcombine.low %v8943, %v8950
    %v8966 = vcombine.high %v8943, %v8950
    %v8967 = vcombine.low %v8957, %v8964
    %v8968 = vcombine.high %v8957, %v8964
    %v8970 = vunpack.c.l.s4 1966171168
    %v8971 = vunpack.c.0.s8 %v8970
    %v8972 = vlaneseq
    %v8973 = vshrl.u32 %v8972, 7
    %v8974 = vsub.s32 %v8971, %v8973
    %v8975 = vrot.slane %v8965, %v8974
    %v8977 = vunpack.c.l.s4 1966171168
    %v8978 = vunpack.c.0.s8 %v8977
    %v8979 = vlaneseq
    %v8980 = vshrl.u32 %v8979, 7
    %v8981 = vsub.s32 %v8978, %v8980
    %v8982 = vrot.slane %v8966, %v8981
    %v8984 = vunpack.c.l.s4 1966171168
    %v8985 = vunpack.c.0.s8 %v8984
    %v8986 = vlaneseq
    %v8987 = vshrl.u32 %v8986, 7
    %v8988 = vsub.s32 %v8985, %v8987
    %v8989 = vrot.slane %v8967, %v8988
    %v8991 = vunpack.c.l.s4 1966171168
    %v8992 = vunpack.c.0.s8 %v8991
    %v8993 = vlaneseq
    %v8994 = vshrl.u32 %v8993, 7
    %v8995 = vsub.s32 %v8992, %v8994
    %v8996 = vrot.slane %v8968, %v8995
    %v8997 = vcombine.low %v8975, %v8989
    %v8998 = vcombine.low %v8982, %v8996
    %v8999 = vlaneseq
    %v9000 = vshrl.u32 %v8999, 7
    %v9001 = vsub.s32 0, %v9000
    %v9002 = vrot.slane %v8997, %v9001
    %v9003 = vlaneseq
    %v9004 = vshrl.u32 %v9003, 7
    %v9005 = vsub.s32 1, %v9004
    %v9006 = vrot.slane %v8997, %v9005
    %v9007 = vlaneseq
    %v9008 = vshrl.u32 %v9007, 7
    %v9009 = vsub.s32 2, %v9008
    %v9010 = vrot.slane %v8997, %v9009
    %v9011 = vlaneseq
    %v9012 = vshrl.u32 %v9011, 7
    %v9013 = vsub.s32 3, %v9012
    %v9014 = vrot.slane %v8997, %v9013
    %v9015 = vlaneseq
    %v9016 = vshrl.u32 %v9015, 7
    %v9017 = vsub.s32 4, %v9016
    %v9018 = vrot.slane %v8997, %v9017
    %v9019 = vlaneseq
    %v9020 = vshrl.u32 %v9019, 7
    %v9021 = vsub.s32 5, %v9020
    %v9022 = vrot.slane %v8997, %v9021
    %v9023 = vlaneseq
    %v9024 = vshrl.u32 %v9023, 7
    %v9025 = vsub.s32 6, %v9024
    %v9026 = vrot.slane %v8997, %v9025
    %v9027 = vlaneseq
    %v9028 = vshrl.u32 %v9027, 7
    %v9029 = vsub.s32 7, %v9028
    %v9030 = vrot.slane %v8997, %v9029
    %v9031 = vlaneseq
    %v9032 = vshrl.u32 %v9031, 7
    %v9033 = vsub.s32 0, %v9032
    %v9034 = vrot.slane %v8998, %v9033
    %v9035 = vlaneseq
    %v9036 = vshrl.u32 %v9035, 7
    %v9037 = vsub.s32 1, %v9036
    %v9038 = vrot.slane %v8998, %v9037
    %v9039 = vlaneseq
    %v9040 = vshrl.u32 %v9039, 7
    %v9041 = vsub.s32 2, %v9040
    %v9042 = vrot.slane %v8998, %v9041
    %v9043 = vlaneseq
    %v9044 = vshrl.u32 %v9043, 7
    %v9045 = vsub.s32 3, %v9044
    %v9046 = vrot.slane %v8998, %v9045
    %v9047 = vlaneseq
    %v9048 = vshrl.u32 %v9047, 7
    %v9049 = vsub.s32 4, %v9048
    %v9050 = vrot.slane %v8998, %v9049
    %v9051 = vlaneseq
    %v9052 = vshrl.u32 %v9051, 7
    %v9053 = vsub.s32 5, %v9052
    %v9054 = vrot.slane %v8998, %v9053
    %v9055 = vlaneseq
    %v9056 = vshrl.u32 %v9055, 7
    %v9057 = vsub.s32 6, %v9056
    %v9058 = vrot.slane %v8998, %v9057
    %v9059 = vlaneseq
    %v9060 = vshrl.u32 %v9059, 7
    %v9061 = vsub.s32 7, %v9060
    %v9062 = vrot.slane %v8998, %v9061
    %v9079 = vmul.f32 %v2822, %v9002
    %v9080 = vmul.f32 %v2824, %v9006
    %v9081 = vmul.f32 %v2951, %v9010
    %v9082 = vmul.f32 %v2953, %v9014
    %v9083 = vmul.f32 %v3080, %v9018
    %v9084 = vmul.f32 %v3082, %v9022
    %v9085 = vmul.f32 %v3209, %v9026
    %v9086 = vmul.f32 %v3211, %v9030
    %v9087 = vmul.f32 %v2826, %v9034
    %v9088 = vmul.f32 %v2828, %v9038
    %v9089 = vmul.f32 %v2955, %v9042
    %v9090 = vmul.f32 %v2957, %v9046
    %v9091 = vmul.f32 %v3084, %v9050
    %v9092 = vmul.f32 %v3086, %v9054
    %v9093 = vmul.f32 %v3213, %v9058
    %v9094 = vmul.f32 %v3215, %v9062
    %v9095 = vadd.f32 %v9079, %v9080
    %9096 = vadd.xlane.f32.xlu0 %v9095
    %v9097 = vpop.xlane.xlu0 %9096
    %v9098 = vadd.f32 %v9087, %v9088
    %9099 = vadd.xlane.f32.xlu0 %v9098
    %v9100 = vpop.xlane.xlu0 %9099
    %v9101 = vrot.slane %v9097, 4
    %v9102 = vmax.f32 %v9097, %v9101
    %v9103 = vrot.slane %v9102, 2
    %v9104 = vmax.f32 %v9102, %v9103
    %v9105 = vrot.slane %v9104, 1
    %v9106 = vmax.f32 %v9104, %v9105
    %v9107 = vrot.slane %v9100, 4
    %v9108 = vmax.f32 %v9100, %v9107
    %v9109 = vrot.slane %v9108, 2
    %v9110 = vmax.f32 %v9108, %v9109
    %v9111 = vrot.slane %v9110, 1
    %v9112 = vmax.f32 %v9110, %v9111
    %v9113 = vsub.f32 %v9097, %v9106
    %v9114 = vsub.f32 %v9100, %v9112
    %v9115 = vmul.f32 %v9113, 1.442695
    %v9116 = vpow.pop %v9115
    %v9117 = vmul.f32 %v9114, 1.442695
    %v9118 = vpow.pop %v9117
    %v9119 = vrot.slane %v9116, 4
    %v9120 = vadd.f32 %v9116, %v9119
    %v9121 = vrot.slane %v9120, 2
    %v9122 = vadd.f32 %v9120, %v9121
    %v9123 = vrot.slane %v9122, 1
    %v9124 = vadd.f32 %v9122, %v9123
    %v9125 = vrot.slane %v9118, 4
    %v9126 = vadd.f32 %v9118, %v9125
    %v9127 = vrot.slane %v9126, 2
    %v9128 = vadd.f32 %v9126, %v9127
    %v9129 = vrot.slane %v9128, 1
    %v9130 = vadd.f32 %v9128, %v9129
    %v9131 = vrcp.pop %v9124
    %v9132 = vrcp.pop %v9130
    %v9133 = vmul.f32 %v9116, %v9131
    %v9134 = vmul.f32 %v9118, %v9132
    %v9135 = vmul.f32 %v9133, %v5684
    %v9136 = vmul.f32 %v9133, %v5686
    %v9137 = vmul.f32 %v9134, %v5688
    %v9138 = vmul.f32 %v9134, %v5690
    %v9139 = vrot.slane %v9135, 4
    %v9140 = vadd.f32 %v9135, %v9139
    %v9141 = vrot.slane %v9140, 2
    %v9142 = vadd.f32 %v9140, %v9141
    %v9143 = vrot.slane %v9142, 1
    %v9144 = vadd.f32 %v9142, %v9143
    %v9145 = vrot.slane %v9136, 4
    %v9146 = vadd.f32 %v9136, %v9145
    %v9147 = vrot.slane %v9146, 2
    %v9148 = vadd.f32 %v9146, %v9147
    %v9149 = vrot.slane %v9148, 1
    %v9150 = vadd.f32 %v9148, %v9149
    %v9151 = vrot.slane %v9137, 4
    %v9152 = vadd.f32 %v9137, %v9151
    %v9153 = vrot.slane %v9152, 2
    %v9154 = vadd.f32 %v9152, %v9153
    %v9155 = vrot.slane %v9154, 1
    %v9156 = vadd.f32 %v9154, %v9155
    %v9157 = vrot.slane %v9138, 4
    %v9158 = vadd.f32 %v9138, %v9157
    %v9159 = vrot.slane %v9158, 2
    %v9160 = vadd.f32 %v9158, %v9159
    %v9161 = vrot.slane %v9160, 1
    %v9162 = vadd.f32 %v9160, %v9161
    %v9163 = vadd.f32 %v9081, %v9082
    %9164 = vadd.xlane.f32.xlu0 %v9163
    %v9165 = vpop.xlane.xlu0 %9164
    %v9166 = vadd.f32 %v9089, %v9090
    %9167 = vadd.xlane.f32.xlu0 %v9166
    %v9168 = vpop.xlane.xlu0 %9167
    %v9169 = vrot.slane %v9165, 4
    %v9170 = vmax.f32 %v9165, %v9169
    %v9171 = vrot.slane %v9170, 2
    %v9172 = vmax.f32 %v9170, %v9171
    %v9173 = vrot.slane %v9172, 1
    %v9174 = vmax.f32 %v9172, %v9173
    %v9175 = vrot.slane %v9168, 4
    %v9176 = vmax.f32 %v9168, %v9175
    %v9177 = vrot.slane %v9176, 2
    %v9178 = vmax.f32 %v9176, %v9177
    %v9179 = vrot.slane %v9178, 1
    %v9180 = vmax.f32 %v9178, %v9179
    %v9181 = vsub.f32 %v9165, %v9174
    %v9182 = vsub.f32 %v9168, %v9180
    %v9183 = vmul.f32 %v9181, 1.442695
    %v9184 = vpow.pop %v9183
    %v9185 = vmul.f32 %v9182, 1.442695
    %v9186 = vpow.pop %v9185
    %v9187 = vrot.slane %v9184, 4
    %v9188 = vadd.f32 %v9184, %v9187
    %v9189 = vrot.slane %v9188, 2
    %v9190 = vadd.f32 %v9188, %v9189
    %v9191 = vrot.slane %v9190, 1
    %v9192 = vadd.f32 %v9190, %v9191
    %v9193 = vrot.slane %v9186, 4
    %v9194 = vadd.f32 %v9186, %v9193
    %v9195 = vrot.slane %v9194, 2
    %v9196 = vadd.f32 %v9194, %v9195
    %v9197 = vrot.slane %v9196, 1
    %v9198 = vadd.f32 %v9196, %v9197
    %v9199 = vrcp.pop %v9192
    %v9200 = vrcp.pop %v9198
    %v9201 = vmul.f32 %v9184, %v9199
    %v9202 = vmul.f32 %v9186, %v9200
    %v9203 = vmul.f32 %v9201, %v5813
    %v9204 = vmul.f32 %v9201, %v5815
    %v9205 = vmul.f32 %v9202, %v5817
    %v9206 = vmul.f32 %v9202, %v5819
    %v9207 = vrot.slane %v9203, 4
    %v9208 = vadd.f32 %v9203, %v9207
    %v9209 = vrot.slane %v9208, 2
    %v9210 = vadd.f32 %v9208, %v9209
    %v9211 = vrot.slane %v9210, 1
    %v9212 = vadd.f32 %v9210, %v9211
    %v9213 = vrot.slane %v9204, 4
    %v9214 = vadd.f32 %v9204, %v9213
    %v9215 = vrot.slane %v9214, 2
    %v9216 = vadd.f32 %v9214, %v9215
    %v9217 = vrot.slane %v9216, 1
    %v9218 = vadd.f32 %v9216, %v9217
    %v9219 = vrot.slane %v9205, 4
    %v9220 = vadd.f32 %v9205, %v9219
    %v9221 = vrot.slane %v9220, 2
    %v9222 = vadd.f32 %v9220, %v9221
    %v9223 = vrot.slane %v9222, 1
    %v9224 = vadd.f32 %v9222, %v9223
    %v9225 = vrot.slane %v9206, 4
    %v9226 = vadd.f32 %v9206, %v9225
    %v9227 = vrot.slane %v9226, 2
    %v9228 = vadd.f32 %v9226, %v9227
    %v9229 = vrot.slane %v9228, 1
    %v9230 = vadd.f32 %v9228, %v9229
    %v9231 = vadd.f32 %v9083, %v9084
    %9232 = vadd.xlane.f32.xlu0 %v9231
    %v9233 = vpop.xlane.xlu0 %9232
    %v9234 = vadd.f32 %v9091, %v9092
    %9235 = vadd.xlane.f32.xlu0 %v9234
    %v9236 = vpop.xlane.xlu0 %9235
    %v9237 = vrot.slane %v9233, 4
    %v9238 = vmax.f32 %v9233, %v9237
    %v9239 = vrot.slane %v9238, 2
    %v9240 = vmax.f32 %v9238, %v9239
    %v9241 = vrot.slane %v9240, 1
    %v9242 = vmax.f32 %v9240, %v9241
    %v9243 = vrot.slane %v9236, 4
    %v9244 = vmax.f32 %v9236, %v9243
    %v9245 = vrot.slane %v9244, 2
    %v9246 = vmax.f32 %v9244, %v9245
    %v9247 = vrot.slane %v9246, 1
    %v9248 = vmax.f32 %v9246, %v9247
    %v9249 = vsub.f32 %v9233, %v9242
    %v9250 = vsub.f32 %v9236, %v9248
    %v9251 = vmul.f32 %v9249, 1.442695
    %v9252 = vpow.pop %v9251
    %v9253 = vmul.f32 %v9250, 1.442695
    %v9254 = vpow.pop %v9253
    %v9255 = vrot.slane %v9252, 4
    %v9256 = vadd.f32 %v9252, %v9255
    %v9257 = vrot.slane %v9256, 2
    %v9258 = vadd.f32 %v9256, %v9257
    %v9259 = vrot.slane %v9258, 1
    %v9260 = vadd.f32 %v9258, %v9259
    %v9261 = vrot.slane %v9254, 4
    %v9262 = vadd.f32 %v9254, %v9261
    %v9263 = vrot.slane %v9262, 2
    %v9264 = vadd.f32 %v9262, %v9263
    %v9265 = vrot.slane %v9264, 1
    %v9266 = vadd.f32 %v9264, %v9265
    %v9267 = vrcp.pop %v9260
    %v9268 = vrcp.pop %v9266
    %v9269 = vmul.f32 %v9252, %v9267
    %v9270 = vmul.f32 %v9254, %v9268
    %v9271 = vmul.f32 %v9269, %v5942
    %v9272 = vmul.f32 %v9269, %v5944
    %v9273 = vmul.f32 %v9270, %v5946
    %v9274 = vmul.f32 %v9270, %v5948
    %v9275 = vrot.slane %v9271, 4
    %v9276 = vadd.f32 %v9271, %v9275
    %v9277 = vrot.slane %v9276, 2
    %v9278 = vadd.f32 %v9276, %v9277
    %v9279 = vrot.slane %v9278, 1
    %v9280 = vadd.f32 %v9278, %v9279
    %v9281 = vrot.slane %v9272, 4
    %v9282 = vadd.f32 %v9272, %v9281
    %v9283 = vrot.slane %v9282, 2
    %v9284 = vadd.f32 %v9282, %v9283
    %v9285 = vrot.slane %v9284, 1
    %v9286 = vadd.f32 %v9284, %v9285
    %v9287 = vrot.slane %v9273, 4
    %v9288 = vadd.f32 %v9273, %v9287
    %v9289 = vrot.slane %v9288, 2
    %v9290 = vadd.f32 %v9288, %v9289
    %v9291 = vrot.slane %v9290, 1
    %v9292 = vadd.f32 %v9290, %v9291
    %v9293 = vrot.slane %v9274, 4
    %v9294 = vadd.f32 %v9274, %v9293
    %v9295 = vrot.slane %v9294, 2
    %v9296 = vadd.f32 %v9294, %v9295
    %v9297 = vrot.slane %v9296, 1
    %v9298 = vadd.f32 %v9296, %v9297
    %v9299 = vadd.f32 %v9085, %v9086
    %9300 = vadd.xlane.f32.xlu0 %v9299
    %v9301 = vpop.xlane.xlu0 %9300
    %v9302 = vadd.f32 %v9093, %v9094
    %9303 = vadd.xlane.f32.xlu0 %v9302
    %v9304 = vpop.xlane.xlu0 %9303
    %v9305 = vrot.slane %v9301, 4
    %v9306 = vmax.f32 %v9301, %v9305
    %v9307 = vrot.slane %v9306, 2
    %v9308 = vmax.f32 %v9306, %v9307
    %v9309 = vrot.slane %v9308, 1
    %v9310 = vmax.f32 %v9308, %v9309
    %v9311 = vrot.slane %v9304, 4
    %v9312 = vmax.f32 %v9304, %v9311
    %v9313 = vrot.slane %v9312, 2
    %v9314 = vmax.f32 %v9312, %v9313
    %v9315 = vrot.slane %v9314, 1
    %v9316 = vmax.f32 %v9314, %v9315
    %v9317 = vsub.f32 %v9301, %v9310
    %v9318 = vsub.f32 %v9304, %v9316
    %v9319 = vmul.f32 %v9317, 1.442695
    %v9320 = vpow.pop %v9319
    %v9321 = vmul.f32 %v9318, 1.442695
    %v9322 = vpow.pop %v9321
    %v9323 = vrot.slane %v9320, 4
    %v9324 = vadd.f32 %v9320, %v9323
    %v9325 = vrot.slane %v9324, 2
    %v9326 = vadd.f32 %v9324, %v9325
    %v9327 = vrot.slane %v9326, 1
    %v9328 = vadd.f32 %v9326, %v9327
    %v9329 = vrot.slane %v9322, 4
    %v9330 = vadd.f32 %v9322, %v9329
    %v9331 = vrot.slane %v9330, 2
    %v9332 = vadd.f32 %v9330, %v9331
    %v9333 = vrot.slane %v9332, 1
    %v9334 = vadd.f32 %v9332, %v9333
    %v9335 = vrcp.pop %v9328
    %v9336 = vrcp.pop %v9334
    %v9337 = vmul.f32 %v9320, %v9335
    %v9338 = vmul.f32 %v9322, %v9336
    %v9339 = vmul.f32 %v9337, %v6071
    %v9340 = vmul.f32 %v9337, %v6073
    %v9341 = vmul.f32 %v9338, %v6075
    %v9342 = vmul.f32 %v9338, %v6077
    %v9343 = vrot.slane %v9339, 4
    %v9344 = vadd.f32 %v9339, %v9343
    %v9345 = vrot.slane %v9344, 2
    %v9346 = vadd.f32 %v9344, %v9345
    %v9347 = vrot.slane %v9346, 1
    %v9348 = vadd.f32 %v9346, %v9347
    %v9349 = vrot.slane %v9340, 4
    %v9350 = vadd.f32 %v9340, %v9349
    %v9351 = vrot.slane %v9350, 2
    %v9352 = vadd.f32 %v9350, %v9351
    %v9353 = vrot.slane %v9352, 1
    %v9354 = vadd.f32 %v9352, %v9353
    %v9355 = vrot.slane %v9341, 4
    %v9356 = vadd.f32 %v9341, %v9355
    %v9357 = vrot.slane %v9356, 2
    %v9358 = vadd.f32 %v9356, %v9357
    %v9359 = vrot.slane %v9358, 1
    %v9360 = vadd.f32 %v9358, %v9359
    %v9361 = vrot.slane %v9342, 4
    %v9362 = vadd.f32 %v9342, %v9361
    %v9363 = vrot.slane %v9362, 2
    %v9364 = vadd.f32 %v9362, %v9363
    %v9365 = vrot.slane %v9364, 1
    %v9366 = vadd.f32 %v9364, %v9365
    %vm9371 = vcmask 1041409
    %v9372 = vsel %vm9371, %v9156, %v9144
    %v9373 = vsel %vm9371, %v9162, %v9150
    %v9380 = vsel %vm9371, %v9224, %v9212
    %v9381 = vsel %vm9371, %v9230, %v9218
    %v9388 = vsel %vm9371, %v9292, %v9280
    %v9389 = vsel %vm9371, %v9298, %v9286
    %v9396 = vsel %vm9371, %v9360, %v9348
    %v9397 = vsel %vm9371, %v9366, %v9354
    %v9400 = vpack.c.bf16 %v9372, %v9372
    %v9401 = vpack.c.bf16 %v9373, %v9373
    %v9402 = vpack.c.bf16 %v9380, %v9380
    %v9403 = vpack.c.bf16 %v9381, %v9381
    %v9404 = vpack.c.bf16 %v9388, %v9388
    %v9405 = vpack.c.bf16 %v9389, %v9389
    %v9406 = vpack.c.bf16 %v9396, %v9396
    %v9407 = vpack.c.bf16 %v9397, %v9397
    %v9408 = vld [vmem:[#allocation16] sm:$0xff]
    %v9409 = vld [vmem:[#allocation16 + $0x8] sm:$0xff]
    %v9410 = vld [vmem:[#allocation16 + $0x10] sm:$0xff]
    %v9411 = vld [vmem:[#allocation16 + $0x18] sm:$0xff]
    %v9412 = vld [vmem:[#allocation16 + $0x20] sm:$0xff]
    %v9413 = vld [vmem:[#allocation16 + $0x28] sm:$0xff]
    %v9414 = vld [vmem:[#allocation16 + $0x30] sm:$0xff]
    %v9415 = vld [vmem:[#allocation16 + $0x38] sm:$0xff]
    %v9416 = vld [vmem:[#allocation16 + $0x40] sm:$0xff]
    %v9417 = vld [vmem:[#allocation16 + $0x48] sm:$0xff]
    %v9418 = vld [vmem:[#allocation16 + $0x50] sm:$0xff]
    %v9419 = vld [vmem:[#allocation16 + $0x58] sm:$0xff]
    %v9420 = vld [vmem:[#allocation16 + $0x60] sm:$0xff]
    %v9421 = vld [vmem:[#allocation16 + $0x68] sm:$0xff]
    %v9422 = vld [vmem:[#allocation16 + $0x70] sm:$0xff]
    %v9423 = vld [vmem:[#allocation16 + $0x78] sm:$0xff]
    %v9424 = vld [vmem:[#allocation16 + $0x80] sm:$0xff]
    %v9425 = vld [vmem:[#allocation16 + $0x88] sm:$0xff]
    %v9426 = vld [vmem:[#allocation16 + $0x90] sm:$0xff]
    %v9427 = vld [vmem:[#allocation16 + $0x98] sm:$0xff]
    %v9428 = vld [vmem:[#allocation16 + $0xa0] sm:$0xff]
    %v9429 = vld [vmem:[#allocation16 + $0xa8] sm:$0xff]
    %v9430 = vld [vmem:[#allocation16 + $0xb0] sm:$0xff]
    %v9431 = vld [vmem:[#allocation16 + $0xb8] sm:$0xff]
    %v9432 = vld [vmem:[#allocation16 + $0xc0] sm:$0xff]
    %v9433 = vld [vmem:[#allocation16 + $0xc8] sm:$0xff]
    %v9434 = vld [vmem:[#allocation16 + $0xd0] sm:$0xff]
    %v9435 = vld [vmem:[#allocation16 + $0xd8] sm:$0xff]
    %v9436 = vld [vmem:[#allocation16 + $0xe0] sm:$0xff]
    %v9437 = vld [vmem:[#allocation16 + $0xe8] sm:$0xff]
    %v9438 = vld [vmem:[#allocation16 + $0xf0] sm:$0xff]
    %v9439 = vld [vmem:[#allocation16 + $0xf8] sm:$0xff]
    %v9440 = vld [vmem:[#allocation16 + $0x100] sm:$0xff]
    %v9441 = vld [vmem:[#allocation16 + $0x108] sm:$0xff]
    %v9442 = vld [vmem:[#allocation16 + $0x110] sm:$0xff]
    %v9443 = vld [vmem:[#allocation16 + $0x118] sm:$0xff]
    %v9444 = vld [vmem:[#allocation16 + $0x120] sm:$0xff]
    %v9445 = vld [vmem:[#allocation16 + $0x128] sm:$0xff]
    %v9446 = vld [vmem:[#allocation16 + $0x130] sm:$0xff]
    %v9447 = vld [vmem:[#allocation16 + $0x138] sm:$0xff]
    %v9448 = vld [vmem:[#allocation16 + $0x140] sm:$0xff]
    %v9449 = vld [vmem:[#allocation16 + $0x148] sm:$0xff]
    %v9450 = vld [vmem:[#allocation16 + $0x150] sm:$0xff]
    %v9451 = vld [vmem:[#allocation16 + $0x158] sm:$0xff]
    %v9452 = vld [vmem:[#allocation16 + $0x160] sm:$0xff]
    %v9453 = vld [vmem:[#allocation16 + $0x168] sm:$0xff]
    %v9454 = vld [vmem:[#allocation16 + $0x170] sm:$0xff]
    %v9455 = vld [vmem:[#allocation16 + $0x178] sm:$0xff]
    %v9456 = vld [vmem:[#allocation16 + $0x180] sm:$0xff]
    %v9457 = vld [vmem:[#allocation16 + $0x188] sm:$0xff]
    %v9458 = vld [vmem:[#allocation16 + $0x190] sm:$0xff]
    %v9459 = vld [vmem:[#allocation16 + $0x198] sm:$0xff]
    %v9460 = vld [vmem:[#allocation16 + $0x1a0] sm:$0xff]
    %v9461 = vld [vmem:[#allocation16 + $0x1a8] sm:$0xff]
    %v9462 = vld [vmem:[#allocation16 + $0x1b0] sm:$0xff]
    %v9463 = vld [vmem:[#allocation16 + $0x1b8] sm:$0xff]
    %v9464 = vld [vmem:[#allocation16 + $0x1c0] sm:$0xff]
    %v9465 = vld [vmem:[#allocation16 + $0x1c8] sm:$0xff]
    %v9466 = vld [vmem:[#allocation16 + $0x1d0] sm:$0xff]
    %v9467 = vld [vmem:[#allocation16 + $0x1d8] sm:$0xff]
    %v9468 = vld [vmem:[#allocation16 + $0x1e0] sm:$0xff]
    %v9469 = vld [vmem:[#allocation16 + $0x1e8] sm:$0xff]
    %v9470 = vld [vmem:[#allocation16 + $0x1f0] sm:$0xff]
    %v9471 = vld [vmem:[#allocation16 + $0x1f8] sm:$0xff]
    %v9472 = vld [vmem:[#allocation16 + $0x200] sm:$0xff]
    %v9473 = vld [vmem:[#allocation16 + $0x208] sm:$0xff]
    %v9474 = vld [vmem:[#allocation16 + $0x210] sm:$0xff]
    %v9475 = vld [vmem:[#allocation16 + $0x218] sm:$0xff]
    %v9476 = vld [vmem:[#allocation16 + $0x220] sm:$0xff]
    %v9477 = vld [vmem:[#allocation16 + $0x228] sm:$0xff]
    %v9478 = vld [vmem:[#allocation16 + $0x230] sm:$0xff]
    %v9479 = vld [vmem:[#allocation16 + $0x238] sm:$0xff]
    %v9480 = vld [vmem:[#allocation16 + $0x240] sm:$0xff]
    %v9481 = vld [vmem:[#allocation16 + $0x248] sm:$0xff]
    %v9482 = vld [vmem:[#allocation16 + $0x250] sm:$0xff]
    %v9483 = vld [vmem:[#allocation16 + $0x258] sm:$0xff]
    %v9484 = vld [vmem:[#allocation16 + $0x260] sm:$0xff]
    %v9485 = vld [vmem:[#allocation16 + $0x268] sm:$0xff]
    %v9486 = vld [vmem:[#allocation16 + $0x270] sm:$0xff]
    %v9487 = vld [vmem:[#allocation16 + $0x278] sm:$0xff]
    %v9488 = vld [vmem:[#allocation16 + $0x280] sm:$0xff]
    %v9489 = vld [vmem:[#allocation16 + $0x288] sm:$0xff]
    %v9490 = vld [vmem:[#allocation16 + $0x290] sm:$0xff]
    %v9491 = vld [vmem:[#allocation16 + $0x298] sm:$0xff]
    %v9492 = vld [vmem:[#allocation16 + $0x2a0] sm:$0xff]
    %v9493 = vld [vmem:[#allocation16 + $0x2a8] sm:$0xff]
    %v9494 = vld [vmem:[#allocation16 + $0x2b0] sm:$0xff]
    %v9495 = vld [vmem:[#allocation16 + $0x2b8] sm:$0xff]
    %v9496 = vld [vmem:[#allocation16 + $0x2c0] sm:$0xff]
    %v9497 = vld [vmem:[#allocation16 + $0x2c8] sm:$0xff]
    %v9498 = vld [vmem:[#allocation16 + $0x2d0] sm:$0xff]
    %v9499 = vld [vmem:[#allocation16 + $0x2d8] sm:$0xff]
    %v9500 = vld [vmem:[#allocation16 + $0x2e0] sm:$0xff]
    %v9501 = vld [vmem:[#allocation16 + $0x2e8] sm:$0xff]
    %v9502 = vld [vmem:[#allocation16 + $0x2f0] sm:$0xff]
    %v9503 = vld [vmem:[#allocation16 + $0x2f8] sm:$0xff]
    %v9504 = vld [vmem:[#allocation16 + $0x300] sm:$0xff]
    %v9505 = vld [vmem:[#allocation16 + $0x308] sm:$0xff]
    %v9506 = vld [vmem:[#allocation16 + $0x310] sm:$0xff]
    %v9507 = vld [vmem:[#allocation16 + $0x318] sm:$0xff]
    %v9508 = vld [vmem:[#allocation16 + $0x320] sm:$0xff]
    %v9509 = vld [vmem:[#allocation16 + $0x328] sm:$0xff]
    %v9510 = vld [vmem:[#allocation16 + $0x330] sm:$0xff]
    %v9511 = vld [vmem:[#allocation16 + $0x338] sm:$0xff]
    %v9512 = vld [vmem:[#allocation16 + $0x340] sm:$0xff]
    %v9513 = vld [vmem:[#allocation16 + $0x348] sm:$0xff]
    %v9514 = vld [vmem:[#allocation16 + $0x350] sm:$0xff]
    %v9515 = vld [vmem:[#allocation16 + $0x358] sm:$0xff]
    %v9516 = vld [vmem:[#allocation16 + $0x360] sm:$0xff]
    %v9517 = vld [vmem:[#allocation16 + $0x368] sm:$0xff]
    %v9518 = vld [vmem:[#allocation16 + $0x370] sm:$0xff]
    %v9519 = vld [vmem:[#allocation16 + $0x378] sm:$0xff]
    %v9520 = vld [vmem:[#allocation16 + $0x380] sm:$0xff]
    %v9521 = vld [vmem:[#allocation16 + $0x388] sm:$0xff]
    %v9522 = vld [vmem:[#allocation16 + $0x390] sm:$0xff]
    %v9523 = vld [vmem:[#allocation16 + $0x398] sm:$0xff]
    %v9524 = vld [vmem:[#allocation16 + $0x3a0] sm:$0xff]
    %v9525 = vld [vmem:[#allocation16 + $0x3a8] sm:$0xff]
    %v9526 = vld [vmem:[#allocation16 + $0x3b0] sm:$0xff]
    %v9527 = vld [vmem:[#allocation16 + $0x3b8] sm:$0xff]
    %v9528 = vld [vmem:[#allocation16 + $0x3c0] sm:$0xff]
    %v9529 = vld [vmem:[#allocation16 + $0x3c8] sm:$0xff]
    %v9530 = vld [vmem:[#allocation16 + $0x3d0] sm:$0xff]
    %v9531 = vld [vmem:[#allocation16 + $0x3d8] sm:$0xff]
    %v9532 = vld [vmem:[#allocation16 + $0x3e0] sm:$0xff]
    %v9533 = vld [vmem:[#allocation16 + $0x3e8] sm:$0xff]
    %v9534 = vld [vmem:[#allocation16 + $0x3f0] sm:$0xff]
    %v9535 = vld [vmem:[#allocation16 + $0x3f8] sm:$0xff]
    %v9536 = vld [vmem:[#allocation16 + $0x400] sm:$0xff]
    %v9537 = vld [vmem:[#allocation16 + $0x408] sm:$0xff]
    %v9538 = vld [vmem:[#allocation16 + $0x410] sm:$0xff]
    %v9539 = vld [vmem:[#allocation16 + $0x418] sm:$0xff]
    %v9540 = vld [vmem:[#allocation16 + $0x420] sm:$0xff]
    %v9541 = vld [vmem:[#allocation16 + $0x428] sm:$0xff]
    %v9542 = vld [vmem:[#allocation16 + $0x430] sm:$0xff]
    %v9543 = vld [vmem:[#allocation16 + $0x438] sm:$0xff]
    %v9544 = vld [vmem:[#allocation16 + $0x440] sm:$0xff]
    %v9545 = vld [vmem:[#allocation16 + $0x448] sm:$0xff]
    %v9546 = vld [vmem:[#allocation16 + $0x450] sm:$0xff]
    %v9547 = vld [vmem:[#allocation16 + $0x458] sm:$0xff]
    %v9548 = vld [vmem:[#allocation16 + $0x460] sm:$0xff]
    %v9549 = vld [vmem:[#allocation16 + $0x468] sm:$0xff]
    %v9550 = vld [vmem:[#allocation16 + $0x470] sm:$0xff]
    %v9551 = vld [vmem:[#allocation16 + $0x478] sm:$0xff]
    %v9552 = vld [vmem:[#allocation16 + $0x480] sm:$0xff]
    %v9553 = vld [vmem:[#allocation16 + $0x488] sm:$0xff]
    %v9554 = vld [vmem:[#allocation16 + $0x490] sm:$0xff]
    %v9555 = vld [vmem:[#allocation16 + $0x498] sm:$0xff]
    %v9556 = vld [vmem:[#allocation16 + $0x4a0] sm:$0xff]
    %v9557 = vld [vmem:[#allocation16 + $0x4a8] sm:$0xff]
    %v9558 = vld [vmem:[#allocation16 + $0x4b0] sm:$0xff]
    %v9559 = vld [vmem:[#allocation16 + $0x4b8] sm:$0xff]
    %v9560 = vld [vmem:[#allocation16 + $0x4c0] sm:$0xff]
    %v9561 = vld [vmem:[#allocation16 + $0x4c8] sm:$0xff]
    %v9562 = vld [vmem:[#allocation16 + $0x4d0] sm:$0xff]
    %v9563 = vld [vmem:[#allocation16 + $0x4d8] sm:$0xff]
    %v9564 = vld [vmem:[#allocation16 + $0x4e0] sm:$0xff]
    %v9565 = vld [vmem:[#allocation16 + $0x4e8] sm:$0xff]
    %v9566 = vld [vmem:[#allocation16 + $0x4f0] sm:$0xff]
    %v9567 = vld [vmem:[#allocation16 + $0x4f8] sm:$0xff]
    %v9568 = vld [vmem:[#allocation16 + $0x500] sm:$0xff]
    %v9569 = vld [vmem:[#allocation16 + $0x508] sm:$0xff]
    %v9570 = vld [vmem:[#allocation16 + $0x510] sm:$0xff]
    %v9571 = vld [vmem:[#allocation16 + $0x518] sm:$0xff]
    %v9572 = vld [vmem:[#allocation16 + $0x520] sm:$0xff]
    %v9573 = vld [vmem:[#allocation16 + $0x528] sm:$0xff]
    %v9574 = vld [vmem:[#allocation16 + $0x530] sm:$0xff]
    %v9575 = vld [vmem:[#allocation16 + $0x538] sm:$0xff]
    %v9576 = vld [vmem:[#allocation16 + $0x540] sm:$0xff]
    %v9577 = vld [vmem:[#allocation16 + $0x548] sm:$0xff]
    %v9578 = vld [vmem:[#allocation16 + $0x550] sm:$0xff]
    %v9579 = vld [vmem:[#allocation16 + $0x558] sm:$0xff]
    %v9580 = vld [vmem:[#allocation16 + $0x560] sm:$0xff]
    %v9581 = vld [vmem:[#allocation16 + $0x568] sm:$0xff]
    %v9582 = vld [vmem:[#allocation16 + $0x570] sm:$0xff]
    %v9583 = vld [vmem:[#allocation16 + $0x578] sm:$0xff]
    %v9584 = vld [vmem:[#allocation16 + $0x580] sm:$0xff]
    %v9585 = vld [vmem:[#allocation16 + $0x588] sm:$0xff]
    %v9586 = vld [vmem:[#allocation16 + $0x590] sm:$0xff]
    %v9587 = vld [vmem:[#allocation16 + $0x598] sm:$0xff]
    %v9588 = vld [vmem:[#allocation16 + $0x5a0] sm:$0xff]
    %v9589 = vld [vmem:[#allocation16 + $0x5a8] sm:$0xff]
    %v9590 = vld [vmem:[#allocation16 + $0x5b0] sm:$0xff]
    %v9591 = vld [vmem:[#allocation16 + $0x5b8] sm:$0xff]
    %v9592 = vld [vmem:[#allocation16 + $0x5c0] sm:$0xff]
    %v9593 = vld [vmem:[#allocation16 + $0x5c8] sm:$0xff]
    %v9594 = vld [vmem:[#allocation16 + $0x5d0] sm:$0xff]
    %v9595 = vld [vmem:[#allocation16 + $0x5d8] sm:$0xff]
    %v9596 = vld [vmem:[#allocation16 + $0x5e0] sm:$0xff]
    %v9597 = vld [vmem:[#allocation16 + $0x5e8] sm:$0xff]
    %v9598 = vld [vmem:[#allocation16 + $0x5f0] sm:$0xff]
    %v9599 = vld [vmem:[#allocation16 + $0x5f8] sm:$0xff]
    %v9600 = vld [vmem:[#allocation16 + $0x600] sm:$0xff]
    %v9601 = vld [vmem:[#allocation16 + $0x608] sm:$0xff]
    %v9602 = vld [vmem:[#allocation16 + $0x610] sm:$0xff]
    %v9603 = vld [vmem:[#allocation16 + $0x618] sm:$0xff]
    %v9604 = vld [vmem:[#allocation16 + $0x620] sm:$0xff]
    %v9605 = vld [vmem:[#allocation16 + $0x628] sm:$0xff]
    %v9606 = vld [vmem:[#allocation16 + $0x630] sm:$0xff]
    %v9607 = vld [vmem:[#allocation16 + $0x638] sm:$0xff]
    %v9608 = vld [vmem:[#allocation16 + $0x640] sm:$0xff]
    %v9609 = vld [vmem:[#allocation16 + $0x648] sm:$0xff]
    %v9610 = vld [vmem:[#allocation16 + $0x650] sm:$0xff]
    %v9611 = vld [vmem:[#allocation16 + $0x658] sm:$0xff]
    %v9612 = vld [vmem:[#allocation16 + $0x660] sm:$0xff]
    %v9613 = vld [vmem:[#allocation16 + $0x668] sm:$0xff]
    %v9614 = vld [vmem:[#allocation16 + $0x670] sm:$0xff]
    %v9615 = vld [vmem:[#allocation16 + $0x678] sm:$0xff]
    %v9616 = vld [vmem:[#allocation16 + $0x680] sm:$0xff]
    %v9617 = vld [vmem:[#allocation16 + $0x688] sm:$0xff]
    %v9618 = vld [vmem:[#allocation16 + $0x690] sm:$0xff]
    %v9619 = vld [vmem:[#allocation16 + $0x698] sm:$0xff]
    %v9620 = vld [vmem:[#allocation16 + $0x6a0] sm:$0xff]
    %v9621 = vld [vmem:[#allocation16 + $0x6a8] sm:$0xff]
    %v9622 = vld [vmem:[#allocation16 + $0x6b0] sm:$0xff]
    %v9623 = vld [vmem:[#allocation16 + $0x6b8] sm:$0xff]
    %v9624 = vld [vmem:[#allocation16 + $0x6c0] sm:$0xff]
    %v9625 = vld [vmem:[#allocation16 + $0x6c8] sm:$0xff]
    %v9626 = vld [vmem:[#allocation16 + $0x6d0] sm:$0xff]
    %v9627 = vld [vmem:[#allocation16 + $0x6d8] sm:$0xff]
    %v9628 = vld [vmem:[#allocation16 + $0x6e0] sm:$0xff]
    %v9629 = vld [vmem:[#allocation16 + $0x6e8] sm:$0xff]
    %v9630 = vld [vmem:[#allocation16 + $0x6f0] sm:$0xff]
    %v9631 = vld [vmem:[#allocation16 + $0x6f8] sm:$0xff]
    %v9632 = vld [vmem:[#allocation16 + $0x700] sm:$0xff]
    %v9633 = vld [vmem:[#allocation16 + $0x708] sm:$0xff]
    %v9634 = vld [vmem:[#allocation16 + $0x710] sm:$0xff]
    %v9635 = vld [vmem:[#allocation16 + $0x718] sm:$0xff]
    %v9636 = vld [vmem:[#allocation16 + $0x720] sm:$0xff]
    %v9637 = vld [vmem:[#allocation16 + $0x728] sm:$0xff]
    %v9638 = vld [vmem:[#allocation16 + $0x730] sm:$0xff]
    %v9639 = vld [vmem:[#allocation16 + $0x738] sm:$0xff]
    %v9640 = vld [vmem:[#allocation16 + $0x740] sm:$0xff]
    %v9641 = vld [vmem:[#allocation16 + $0x748] sm:$0xff]
    %v9642 = vld [vmem:[#allocation16 + $0x750] sm:$0xff]
    %v9643 = vld [vmem:[#allocation16 + $0x758] sm:$0xff]
    %v9644 = vld [vmem:[#allocation16 + $0x760] sm:$0xff]
    %v9645 = vld [vmem:[#allocation16 + $0x768] sm:$0xff]
    %v9646 = vld [vmem:[#allocation16 + $0x770] sm:$0xff]
    %v9647 = vld [vmem:[#allocation16 + $0x778] sm:$0xff]
    %v9648 = vld [vmem:[#allocation16 + $0x780] sm:$0xff]
    %v9649 = vld [vmem:[#allocation16 + $0x788] sm:$0xff]
    %v9650 = vld [vmem:[#allocation16 + $0x790] sm:$0xff]
    %v9651 = vld [vmem:[#allocation16 + $0x798] sm:$0xff]
    %v9652 = vld [vmem:[#allocation16 + $0x7a0] sm:$0xff]
    %v9653 = vld [vmem:[#allocation16 + $0x7a8] sm:$0xff]
    %v9654 = vld [vmem:[#allocation16 + $0x7b0] sm:$0xff]
    %v9655 = vld [vmem:[#allocation16 + $0x7b8] sm:$0xff]
    %v9656 = vld [vmem:[#allocation16 + $0x7c0] sm:$0xff]
    %v9657 = vld [vmem:[#allocation16 + $0x7c8] sm:$0xff]
    %v9658 = vld [vmem:[#allocation16 + $0x7d0] sm:$0xff]
    %v9659 = vld [vmem:[#allocation16 + $0x7d8] sm:$0xff]
    %v9660 = vld [vmem:[#allocation16 + $0x7e0] sm:$0xff]
    %v9661 = vld [vmem:[#allocation16 + $0x7e8] sm:$0xff]
    %v9662 = vld [vmem:[#allocation16 + $0x7f0] sm:$0xff]
    %v9663 = vld [vmem:[#allocation16 + $0x7f8] sm:$0xff]
    %v9664 = vld [vmem:[#allocation16 + $0x800] sm:$0xff]
    %v9665 = vld [vmem:[#allocation16 + $0x808] sm:$0xff]
    %v9666 = vld [vmem:[#allocation16 + $0x810] sm:$0xff]
    %v9667 = vld [vmem:[#allocation16 + $0x818] sm:$0xff]
    %v9668 = vld [vmem:[#allocation16 + $0x820] sm:$0xff]
    %v9669 = vld [vmem:[#allocation16 + $0x828] sm:$0xff]
    %v9670 = vld [vmem:[#allocation16 + $0x830] sm:$0xff]
    %v9671 = vld [vmem:[#allocation16 + $0x838] sm:$0xff]
    %v9672 = vld [vmem:[#allocation16 + $0x840] sm:$0xff]
    %v9673 = vld [vmem:[#allocation16 + $0x848] sm:$0xff]
    %v9674 = vld [vmem:[#allocation16 + $0x850] sm:$0xff]
    %v9675 = vld [vmem:[#allocation16 + $0x858] sm:$0xff]
    %v9676 = vld [vmem:[#allocation16 + $0x860] sm:$0xff]
    %v9677 = vld [vmem:[#allocation16 + $0x868] sm:$0xff]
    %v9678 = vld [vmem:[#allocation16 + $0x870] sm:$0xff]
    %v9679 = vld [vmem:[#allocation16 + $0x878] sm:$0xff]
    %v9680 = vld [vmem:[#allocation16 + $0x880] sm:$0xff]
    %v9681 = vld [vmem:[#allocation16 + $0x888] sm:$0xff]
    %v9682 = vld [vmem:[#allocation16 + $0x890] sm:$0xff]
    %v9683 = vld [vmem:[#allocation16 + $0x898] sm:$0xff]
    %v9684 = vld [vmem:[#allocation16 + $0x8a0] sm:$0xff]
    %v9685 = vld [vmem:[#allocation16 + $0x8a8] sm:$0xff]
    %v9686 = vld [vmem:[#allocation16 + $0x8b0] sm:$0xff]
    %v9687 = vld [vmem:[#allocation16 + $0x8b8] sm:$0xff]
    %v9688 = vld [vmem:[#allocation16 + $0x8c0] sm:$0xff]
    %v9689 = vld [vmem:[#allocation16 + $0x8c8] sm:$0xff]
    %v9690 = vld [vmem:[#allocation16 + $0x8d0] sm:$0xff]
    %v9691 = vld [vmem:[#allocation16 + $0x8d8] sm:$0xff]
    %v9692 = vld [vmem:[#allocation16 + $0x8e0] sm:$0xff]
    %v9693 = vld [vmem:[#allocation16 + $0x8e8] sm:$0xff]
    %v9694 = vld [vmem:[#allocation16 + $0x8f0] sm:$0xff]
    %v9695 = vld [vmem:[#allocation16 + $0x8f8] sm:$0xff]
    %v9696 = vld [vmem:[#allocation16 + $0x900] sm:$0xff]
    %v9697 = vld [vmem:[#allocation16 + $0x908] sm:$0xff]
    %v9698 = vld [vmem:[#allocation16 + $0x910] sm:$0xff]
    %v9699 = vld [vmem:[#allocation16 + $0x918] sm:$0xff]
    %v9700 = vld [vmem:[#allocation16 + $0x920] sm:$0xff]
    %v9701 = vld [vmem:[#allocation16 + $0x928] sm:$0xff]
    %v9702 = vld [vmem:[#allocation16 + $0x930] sm:$0xff]
    %v9703 = vld [vmem:[#allocation16 + $0x938] sm:$0xff]
    %v9704 = vld [vmem:[#allocation16 + $0x940] sm:$0xff]
    %v9705 = vld [vmem:[#allocation16 + $0x948] sm:$0xff]
    %v9706 = vld [vmem:[#allocation16 + $0x950] sm:$0xff]
    %v9707 = vld [vmem:[#allocation16 + $0x958] sm:$0xff]
    %v9708 = vld [vmem:[#allocation16 + $0x960] sm:$0xff]
    %v9709 = vld [vmem:[#allocation16 + $0x968] sm:$0xff]
    %v9710 = vld [vmem:[#allocation16 + $0x970] sm:$0xff]
    %v9711 = vld [vmem:[#allocation16 + $0x978] sm:$0xff]
    %v9712 = vld [vmem:[#allocation16 + $0x980] sm:$0xff]
    %v9713 = vld [vmem:[#allocation16 + $0x988] sm:$0xff]
    %v9714 = vld [vmem:[#allocation16 + $0x990] sm:$0xff]
    %v9715 = vld [vmem:[#allocation16 + $0x998] sm:$0xff]
    %v9716 = vld [vmem:[#allocation16 + $0x9a0] sm:$0xff]
    %v9717 = vld [vmem:[#allocation16 + $0x9a8] sm:$0xff]
    %v9718 = vld [vmem:[#allocation16 + $0x9b0] sm:$0xff]
    %v9719 = vld [vmem:[#allocation16 + $0x9b8] sm:$0xff]
    %v9720 = vld [vmem:[#allocation16 + $0x9c0] sm:$0xff]
    %v9721 = vld [vmem:[#allocation16 + $0x9c8] sm:$0xff]
    %v9722 = vld [vmem:[#allocation16 + $0x9d0] sm:$0xff]
    %v9723 = vld [vmem:[#allocation16 + $0x9d8] sm:$0xff]
    %v9724 = vld [vmem:[#allocation16 + $0x9e0] sm:$0xff]
    %v9725 = vld [vmem:[#allocation16 + $0x9e8] sm:$0xff]
    %v9726 = vld [vmem:[#allocation16 + $0x9f0] sm:$0xff]
    %v9727 = vld [vmem:[#allocation16 + $0x9f8] sm:$0xff]
    %v9728 = vld [vmem:[#allocation16 + $0xa00] sm:$0xff]
    %v9729 = vld [vmem:[#allocation16 + $0xa08] sm:$0xff]
    %v9730 = vld [vmem:[#allocation16 + $0xa10] sm:$0xff]
    %v9731 = vld [vmem:[#allocation16 + $0xa18] sm:$0xff]
    %v9732 = vld [vmem:[#allocation16 + $0xa20] sm:$0xff]
    %v9733 = vld [vmem:[#allocation16 + $0xa28] sm:$0xff]
    %v9734 = vld [vmem:[#allocation16 + $0xa30] sm:$0xff]
    %v9735 = vld [vmem:[#allocation16 + $0xa38] sm:$0xff]
    %v9736 = vld [vmem:[#allocation16 + $0xa40] sm:$0xff]
    %v9737 = vld [vmem:[#allocation16 + $0xa48] sm:$0xff]
    %v9738 = vld [vmem:[#allocation16 + $0xa50] sm:$0xff]
    %v9739 = vld [vmem:[#allocation16 + $0xa58] sm:$0xff]
    %v9740 = vld [vmem:[#allocation16 + $0xa60] sm:$0xff]
    %v9741 = vld [vmem:[#allocation16 + $0xa68] sm:$0xff]
    %v9742 = vld [vmem:[#allocation16 + $0xa70] sm:$0xff]
    %v9743 = vld [vmem:[#allocation16 + $0xa78] sm:$0xff]
    %v9744 = vld [vmem:[#allocation16 + $0xa80] sm:$0xff]
    %v9745 = vld [vmem:[#allocation16 + $0xa88] sm:$0xff]
    %v9746 = vld [vmem:[#allocation16 + $0xa90] sm:$0xff]
    %v9747 = vld [vmem:[#allocation16 + $0xa98] sm:$0xff]
    %v9748 = vld [vmem:[#allocation16 + $0xaa0] sm:$0xff]
    %v9749 = vld [vmem:[#allocation16 + $0xaa8] sm:$0xff]
    %v9750 = vld [vmem:[#allocation16 + $0xab0] sm:$0xff]
    %v9751 = vld [vmem:[#allocation16 + $0xab8] sm:$0xff]
    %v9752 = vld [vmem:[#allocation16 + $0xac0] sm:$0xff]
    %v9753 = vld [vmem:[#allocation16 + $0xac8] sm:$0xff]
    %v9754 = vld [vmem:[#allocation16 + $0xad0] sm:$0xff]
    %v9755 = vld [vmem:[#allocation16 + $0xad8] sm:$0xff]
    %v9756 = vld [vmem:[#allocation16 + $0xae0] sm:$0xff]
    %v9757 = vld [vmem:[#allocation16 + $0xae8] sm:$0xff]
    %v9758 = vld [vmem:[#allocation16 + $0xaf0] sm:$0xff]
    %v9759 = vld [vmem:[#allocation16 + $0xaf8] sm:$0xff]
    %v9760 = vld [vmem:[#allocation16 + $0xb00] sm:$0xff]
    %v9761 = vld [vmem:[#allocation16 + $0xb08] sm:$0xff]
    %v9762 = vld [vmem:[#allocation16 + $0xb10] sm:$0xff]
    %v9763 = vld [vmem:[#allocation16 + $0xb18] sm:$0xff]
    %v9764 = vld [vmem:[#allocation16 + $0xb20] sm:$0xff]
    %v9765 = vld [vmem:[#allocation16 + $0xb28] sm:$0xff]
    %v9766 = vld [vmem:[#allocation16 + $0xb30] sm:$0xff]
    %v9767 = vld [vmem:[#allocation16 + $0xb38] sm:$0xff]
    %v9768 = vld [vmem:[#allocation16 + $0xb40] sm:$0xff]
    %v9769 = vld [vmem:[#allocation16 + $0xb48] sm:$0xff]
    %v9770 = vld [vmem:[#allocation16 + $0xb50] sm:$0xff]
    %v9771 = vld [vmem:[#allocation16 + $0xb58] sm:$0xff]
    %v9772 = vld [vmem:[#allocation16 + $0xb60] sm:$0xff]
    %v9773 = vld [vmem:[#allocation16 + $0xb68] sm:$0xff]
    %v9774 = vld [vmem:[#allocation16 + $0xb70] sm:$0xff]
    %v9775 = vld [vmem:[#allocation16 + $0xb78] sm:$0xff]
    %v9776 = vld [vmem:[#allocation16 + $0xb80] sm:$0xff]
    %v9777 = vld [vmem:[#allocation16 + $0xb88] sm:$0xff]
    %v9778 = vld [vmem:[#allocation16 + $0xb90] sm:$0xff]
    %v9779 = vld [vmem:[#allocation16 + $0xb98] sm:$0xff]
    %v9780 = vld [vmem:[#allocation16 + $0xba0] sm:$0xff]
    %v9781 = vld [vmem:[#allocation16 + $0xba8] sm:$0xff]
    %v9782 = vld [vmem:[#allocation16 + $0xbb0] sm:$0xff]
    %v9783 = vld [vmem:[#allocation16 + $0xbb8] sm:$0xff]
    %v9784 = vld [vmem:[#allocation16 + $0xbc0] sm:$0xff]
    %v9785 = vld [vmem:[#allocation16 + $0xbc8] sm:$0xff]
    %v9786 = vld [vmem:[#allocation16 + $0xbd0] sm:$0xff]
    %v9787 = vld [vmem:[#allocation16 + $0xbd8] sm:$0xff]
    %v9788 = vld [vmem:[#allocation16 + $0xbe0] sm:$0xff]
    %v9789 = vld [vmem:[#allocation16 + $0xbe8] sm:$0xff]
    %v9790 = vld [vmem:[#allocation16 + $0xbf0] sm:$0xff]
    %v9791 = vld [vmem:[#allocation16 + $0xbf8] sm:$0xff]
    %v9792 = vld [vmem:[#allocation17] sm:$0x3f]
    %v9794 = vlaneseq
    %v9795 = vshrl.u32 %v9794, 7
    %v9796 = vsub.s32 0, %v9795
    %v9797 = vrot.slane %v9792, %v9796
    %v9798 = vlaneseq
    %v9799 = vshrl.u32 %v9798, 7
    %v9800 = vsub.s32 1, %v9799
    %v9801 = vrot.slane %v9792, %v9800
    %v9802 = vlaneseq
    %v9803 = vshrl.u32 %v9802, 7
    %v9804 = vsub.s32 2, %v9803
    %v9805 = vrot.slane %v9792, %v9804
    %v9806 = vlaneseq
    %v9807 = vshrl.u32 %v9806, 7
    %v9808 = vsub.s32 3, %v9807
    %v9809 = vrot.slane %v9792, %v9808
    %v9810 = vlaneseq
    %v9811 = vshrl.u32 %v9810, 7
    %v9812 = vsub.s32 4, %v9811
    %v9813 = vrot.slane %v9792, %v9812
    %v9814 = vlaneseq
    %v9815 = vshrl.u32 %v9814, 7
    %v9816 = vsub.s32 5, %v9815
    %v9817 = vrot.slane %v9792, %v9816
    %v10208 = vunpack.c.l.b16 %v9408
    %v10209 = vunpack.c.h.b16 %v9408
    %v10210 = vunpack.c.l.b16 %v9409
    %v10211 = vunpack.c.h.b16 %v9409
    %v10212 = vunpack.c.l.b16 %v9410
    %v10213 = vunpack.c.h.b16 %v9410
    %v10214 = vunpack.c.l.b16 %v9411
    %v10215 = vunpack.c.h.b16 %v9411
    %v10216 = vunpack.c.l.b16 %v9412
    %v10217 = vunpack.c.h.b16 %v9412
    %v10218 = vunpack.c.l.b16 %v9413
    %v10219 = vunpack.c.h.b16 %v9413
    %v10220 = vunpack.c.l.b16 %v9414
    %v10221 = vunpack.c.h.b16 %v9414
    %v10222 = vunpack.c.l.b16 %v9415
    %v10223 = vunpack.c.h.b16 %v9415
    %v10224 = vunpack.c.l.b16 %v9416
    %v10225 = vunpack.c.h.b16 %v9416
    %v10226 = vunpack.c.l.b16 %v9417
    %v10227 = vunpack.c.h.b16 %v9417
    %v10228 = vunpack.c.l.b16 %v9418
    %v10229 = vunpack.c.h.b16 %v9418
    %v10230 = vunpack.c.l.b16 %v9419
    %v10231 = vunpack.c.h.b16 %v9419
    %v10232 = vunpack.c.l.b16 %v9420
    %v10233 = vunpack.c.h.b16 %v9420
    %v10234 = vunpack.c.l.b16 %v9421
    %v10235 = vunpack.c.h.b16 %v9421
    %v10236 = vunpack.c.l.b16 %v9422
    %v10237 = vunpack.c.h.b16 %v9422
    %v10238 = vunpack.c.l.b16 %v9423
    %v10239 = vunpack.c.h.b16 %v9423
    %v10240 = vunpack.c.l.b16 %v9424
    %v10241 = vunpack.c.h.b16 %v9424
    %v10242 = vunpack.c.l.b16 %v9425
    %v10243 = vunpack.c.h.b16 %v9425
    %v10244 = vunpack.c.l.b16 %v9426
    %v10245 = vunpack.c.h.b16 %v9426
    %v10246 = vunpack.c.l.b16 %v9427
    %v10247 = vunpack.c.h.b16 %v9427
    %v10248 = vunpack.c.l.b16 %v9428
    %v10249 = vunpack.c.h.b16 %v9428
    %v10250 = vunpack.c.l.b16 %v9429
    %v10251 = vunpack.c.h.b16 %v9429
    %v10252 = vunpack.c.l.b16 %v9430
    %v10253 = vunpack.c.h.b16 %v9430
    %v10254 = vunpack.c.l.b16 %v9431
    %v10255 = vunpack.c.h.b16 %v9431
    %v10256 = vunpack.c.l.b16 %v9432
    %v10257 = vunpack.c.h.b16 %v9432
    %v10258 = vunpack.c.l.b16 %v9433
    %v10259 = vunpack.c.h.b16 %v9433
    %v10260 = vunpack.c.l.b16 %v9434
    %v10261 = vunpack.c.h.b16 %v9434
    %v10262 = vunpack.c.l.b16 %v9435
    %v10263 = vunpack.c.h.b16 %v9435
    %v10264 = vunpack.c.l.b16 %v9436
    %v10265 = vunpack.c.h.b16 %v9436
    %v10266 = vunpack.c.l.b16 %v9437
    %v10267 = vunpack.c.h.b16 %v9437
    %v10268 = vunpack.c.l.b16 %v9438
    %v10269 = vunpack.c.h.b16 %v9438
    %v10270 = vunpack.c.l.b16 %v9439
    %v10271 = vunpack.c.h.b16 %v9439
    %v10272 = vunpack.c.l.b16 %v9440
    %v10273 = vunpack.c.h.b16 %v9440
    %v10274 = vunpack.c.l.b16 %v9441
    %v10275 = vunpack.c.h.b16 %v9441
    %v10276 = vunpack.c.l.b16 %v9442
    %v10277 = vunpack.c.h.b16 %v9442
    %v10278 = vunpack.c.l.b16 %v9443
    %v10279 = vunpack.c.h.b16 %v9443
    %v10280 = vunpack.c.l.b16 %v9444
    %v10281 = vunpack.c.h.b16 %v9444
    %v10282 = vunpack.c.l.b16 %v9445
    %v10283 = vunpack.c.h.b16 %v9445
    %v10284 = vunpack.c.l.b16 %v9446
    %v10285 = vunpack.c.h.b16 %v9446
    %v10286 = vunpack.c.l.b16 %v9447
    %v10287 = vunpack.c.h.b16 %v9447
    %v10288 = vunpack.c.l.b16 %v9448
    %v10289 = vunpack.c.h.b16 %v9448
    %v10290 = vunpack.c.l.b16 %v9449
    %v10291 = vunpack.c.h.b16 %v9449
    %v10292 = vunpack.c.l.b16 %v9450
    %v10293 = vunpack.c.h.b16 %v9450
    %v10294 = vunpack.c.l.b16 %v9451
    %v10295 = vunpack.c.h.b16 %v9451
    %v10296 = vunpack.c.l.b16 %v9452
    %v10297 = vunpack.c.h.b16 %v9452
    %v10298 = vunpack.c.l.b16 %v9453
    %v10299 = vunpack.c.h.b16 %v9453
    %v10300 = vunpack.c.l.b16 %v9454
    %v10301 = vunpack.c.h.b16 %v9454
    %v10302 = vunpack.c.l.b16 %v9455
    %v10303 = vunpack.c.h.b16 %v9455
    %v10304 = vunpack.c.l.b16 %v9456
    %v10305 = vunpack.c.h.b16 %v9456
    %v10306 = vunpack.c.l.b16 %v9457
    %v10307 = vunpack.c.h.b16 %v9457
    %v10308 = vunpack.c.l.b16 %v9458
    %v10309 = vunpack.c.h.b16 %v9458
    %v10310 = vunpack.c.l.b16 %v9459
    %v10311 = vunpack.c.h.b16 %v9459
    %v10312 = vunpack.c.l.b16 %v9460
    %v10313 = vunpack.c.h.b16 %v9460
    %v10314 = vunpack.c.l.b16 %v9461
    %v10315 = vunpack.c.h.b16 %v9461
    %v10316 = vunpack.c.l.b16 %v9462
    %v10317 = vunpack.c.h.b16 %v9462
    %v10318 = vunpack.c.l.b16 %v9463
    %v10319 = vunpack.c.h.b16 %v9463
    %v10320 = vunpack.c.l.b16 %v9464
    %v10321 = vunpack.c.h.b16 %v9464
    %v10322 = vunpack.c.l.b16 %v9465
    %v10323 = vunpack.c.h.b16 %v9465
    %v10324 = vunpack.c.l.b16 %v9466
    %v10325 = vunpack.c.h.b16 %v9466
    %v10326 = vunpack.c.l.b16 %v9467
    %v10327 = vunpack.c.h.b16 %v9467
    %v10328 = vunpack.c.l.b16 %v9468
    %v10329 = vunpack.c.h.b16 %v9468
    %v10330 = vunpack.c.l.b16 %v9469
    %v10331 = vunpack.c.h.b16 %v9469
    %v10332 = vunpack.c.l.b16 %v9470
    %v10333 = vunpack.c.h.b16 %v9470
    %v10334 = vunpack.c.l.b16 %v9471
    %v10335 = vunpack.c.h.b16 %v9471
    %v10336 = vunpack.c.l.b16 %v9472
    %v10337 = vunpack.c.h.b16 %v9472
    %v10338 = vunpack.c.l.b16 %v9473
    %v10339 = vunpack.c.h.b16 %v9473
    %v10340 = vunpack.c.l.b16 %v9474
    %v10341 = vunpack.c.h.b16 %v9474
    %v10342 = vunpack.c.l.b16 %v9475
    %v10343 = vunpack.c.h.b16 %v9475
    %v10344 = vunpack.c.l.b16 %v9476
    %v10345 = vunpack.c.h.b16 %v9476
    %v10346 = vunpack.c.l.b16 %v9477
    %v10347 = vunpack.c.h.b16 %v9477
    %v10348 = vunpack.c.l.b16 %v9478
    %v10349 = vunpack.c.h.b16 %v9478
    %v10350 = vunpack.c.l.b16 %v9479
    %v10351 = vunpack.c.h.b16 %v9479
    %v10352 = vunpack.c.l.b16 %v9480
    %v10353 = vunpack.c.h.b16 %v9480
    %v10354 = vunpack.c.l.b16 %v9481
    %v10355 = vunpack.c.h.b16 %v9481
    %v10356 = vunpack.c.l.b16 %v9482
    %v10357 = vunpack.c.h.b16 %v9482
    %v10358 = vunpack.c.l.b16 %v9483
    %v10359 = vunpack.c.h.b16 %v9483
    %v10360 = vunpack.c.l.b16 %v9484
    %v10361 = vunpack.c.h.b16 %v9484
    %v10362 = vunpack.c.l.b16 %v9485
    %v10363 = vunpack.c.h.b16 %v9485
    %v10364 = vunpack.c.l.b16 %v9486
    %v10365 = vunpack.c.h.b16 %v9486
    %v10366 = vunpack.c.l.b16 %v9487
    %v10367 = vunpack.c.h.b16 %v9487
    %v10368 = vunpack.c.l.b16 %v9488
    %v10369 = vunpack.c.h.b16 %v9488
    %v10370 = vunpack.c.l.b16 %v9489
    %v10371 = vunpack.c.h.b16 %v9489
    %v10372 = vunpack.c.l.b16 %v9490
    %v10373 = vunpack.c.h.b16 %v9490
    %v10374 = vunpack.c.l.b16 %v9491
    %v10375 = vunpack.c.h.b16 %v9491
    %v10376 = vunpack.c.l.b16 %v9492
    %v10377 = vunpack.c.h.b16 %v9492
    %v10378 = vunpack.c.l.b16 %v9493
    %v10379 = vunpack.c.h.b16 %v9493
    %v10380 = vunpack.c.l.b16 %v9494
    %v10381 = vunpack.c.h.b16 %v9494
    %v10382 = vunpack.c.l.b16 %v9495
    %v10383 = vunpack.c.h.b16 %v9495
    %v10384 = vunpack.c.l.b16 %v9496
    %v10385 = vunpack.c.h.b16 %v9496
    %v10386 = vunpack.c.l.b16 %v9497
    %v10387 = vunpack.c.h.b16 %v9497
    %v10388 = vunpack.c.l.b16 %v9498
    %v10389 = vunpack.c.h.b16 %v9498
    %v10390 = vunpack.c.l.b16 %v9499
    %v10391 = vunpack.c.h.b16 %v9499
    %v10392 = vunpack.c.l.b16 %v9500
    %v10393 = vunpack.c.h.b16 %v9500
    %v10394 = vunpack.c.l.b16 %v9501
    %v10395 = vunpack.c.h.b16 %v9501
    %v10396 = vunpack.c.l.b16 %v9502
    %v10397 = vunpack.c.h.b16 %v9502
    %v10398 = vunpack.c.l.b16 %v9503
    %v10399 = vunpack.c.h.b16 %v9503
    %v10400 = vunpack.c.l.b16 %v9504
    %v10401 = vunpack.c.h.b16 %v9504
    %v10402 = vunpack.c.l.b16 %v9505
    %v10403 = vunpack.c.h.b16 %v9505
    %v10404 = vunpack.c.l.b16 %v9506
    %v10405 = vunpack.c.h.b16 %v9506
    %v10406 = vunpack.c.l.b16 %v9507
    %v10407 = vunpack.c.h.b16 %v9507
    %v10408 = vunpack.c.l.b16 %v9508
    %v10409 = vunpack.c.h.b16 %v9508
    %v10410 = vunpack.c.l.b16 %v9509
    %v10411 = vunpack.c.h.b16 %v9509
    %v10412 = vunpack.c.l.b16 %v9510
    %v10413 = vunpack.c.h.b16 %v9510
    %v10414 = vunpack.c.l.b16 %v9511
    %v10415 = vunpack.c.h.b16 %v9511
    %v10416 = vunpack.c.l.b16 %v9512
    %v10417 = vunpack.c.h.b16 %v9512
    %v10418 = vunpack.c.l.b16 %v9513
    %v10419 = vunpack.c.h.b16 %v9513
    %v10420 = vunpack.c.l.b16 %v9514
    %v10421 = vunpack.c.h.b16 %v9514
    %v10422 = vunpack.c.l.b16 %v9515
    %v10423 = vunpack.c.h.b16 %v9515
    %v10424 = vunpack.c.l.b16 %v9516
    %v10425 = vunpack.c.h.b16 %v9516
    %v10426 = vunpack.c.l.b16 %v9517
    %v10427 = vunpack.c.h.b16 %v9517
    %v10428 = vunpack.c.l.b16 %v9518
    %v10429 = vunpack.c.h.b16 %v9518
    %v10430 = vunpack.c.l.b16 %v9519
    %v10431 = vunpack.c.h.b16 %v9519
    %v10432 = vunpack.c.l.b16 %v9520
    %v10433 = vunpack.c.h.b16 %v9520
    %v10434 = vunpack.c.l.b16 %v9521
    %v10435 = vunpack.c.h.b16 %v9521
    %v10436 = vunpack.c.l.b16 %v9522
    %v10437 = vunpack.c.h.b16 %v9522
    %v10438 = vunpack.c.l.b16 %v9523
    %v10439 = vunpack.c.h.b16 %v9523
    %v10440 = vunpack.c.l.b16 %v9524
    %v10441 = vunpack.c.h.b16 %v9524
    %v10442 = vunpack.c.l.b16 %v9525
    %v10443 = vunpack.c.h.b16 %v9525
    %v10444 = vunpack.c.l.b16 %v9526
    %v10445 = vunpack.c.h.b16 %v9526
    %v10446 = vunpack.c.l.b16 %v9527
    %v10447 = vunpack.c.h.b16 %v9527
    %v10448 = vunpack.c.l.b16 %v9528
    %v10449 = vunpack.c.h.b16 %v9528
    %v10450 = vunpack.c.l.b16 %v9529
    %v10451 = vunpack.c.h.b16 %v9529
    %v10452 = vunpack.c.l.b16 %v9530
    %v10453 = vunpack.c.h.b16 %v9530
    %v10454 = vunpack.c.l.b16 %v9531
    %v10455 = vunpack.c.h.b16 %v9531
    %v10456 = vunpack.c.l.b16 %v9532
    %v10457 = vunpack.c.h.b16 %v9532
    %v10458 = vunpack.c.l.b16 %v9533
    %v10459 = vunpack.c.h.b16 %v9533
    %v10460 = vunpack.c.l.b16 %v9534
    %v10461 = vunpack.c.h.b16 %v9534
    %v10462 = vunpack.c.l.b16 %v9535
    %v10463 = vunpack.c.h.b16 %v9535
    %v10464 = vunpack.c.l.b16 %v9536
    %v10465 = vunpack.c.h.b16 %v9536
    %v10466 = vunpack.c.l.b16 %v9537
    %v10467 = vunpack.c.h.b16 %v9537
    %v10468 = vunpack.c.l.b16 %v9538
    %v10469 = vunpack.c.h.b16 %v9538
    %v10470 = vunpack.c.l.b16 %v9539
    %v10471 = vunpack.c.h.b16 %v9539
    %v10472 = vunpack.c.l.b16 %v9540
    %v10473 = vunpack.c.h.b16 %v9540
    %v10474 = vunpack.c.l.b16 %v9541
    %v10475 = vunpack.c.h.b16 %v9541
    %v10476 = vunpack.c.l.b16 %v9542
    %v10477 = vunpack.c.h.b16 %v9542
    %v10478 = vunpack.c.l.b16 %v9543
    %v10479 = vunpack.c.h.b16 %v9543
    %v10480 = vunpack.c.l.b16 %v9544
    %v10481 = vunpack.c.h.b16 %v9544
    %v10482 = vunpack.c.l.b16 %v9545
    %v10483 = vunpack.c.h.b16 %v9545
    %v10484 = vunpack.c.l.b16 %v9546
    %v10485 = vunpack.c.h.b16 %v9546
    %v10486 = vunpack.c.l.b16 %v9547
    %v10487 = vunpack.c.h.b16 %v9547
    %v10488 = vunpack.c.l.b16 %v9548
    %v10489 = vunpack.c.h.b16 %v9548
    %v10490 = vunpack.c.l.b16 %v9549
    %v10491 = vunpack.c.h.b16 %v9549
    %v10492 = vunpack.c.l.b16 %v9550
    %v10493 = vunpack.c.h.b16 %v9550
    %v10494 = vunpack.c.l.b16 %v9551
    %v10495 = vunpack.c.h.b16 %v9551
    %v10496 = vunpack.c.l.b16 %v9552
    %v10497 = vunpack.c.h.b16 %v9552
    %v10498 = vunpack.c.l.b16 %v9553
    %v10499 = vunpack.c.h.b16 %v9553
    %v10500 = vunpack.c.l.b16 %v9554
    %v10501 = vunpack.c.h.b16 %v9554
    %v10502 = vunpack.c.l.b16 %v9555
    %v10503 = vunpack.c.h.b16 %v9555
    %v10504 = vunpack.c.l.b16 %v9556
    %v10505 = vunpack.c.h.b16 %v9556
    %v10506 = vunpack.c.l.b16 %v9557
    %v10507 = vunpack.c.h.b16 %v9557
    %v10508 = vunpack.c.l.b16 %v9558
    %v10509 = vunpack.c.h.b16 %v9558
    %v10510 = vunpack.c.l.b16 %v9559
    %v10511 = vunpack.c.h.b16 %v9559
    %v10512 = vunpack.c.l.b16 %v9560
    %v10513 = vunpack.c.h.b16 %v9560
    %v10514 = vunpack.c.l.b16 %v9561
    %v10515 = vunpack.c.h.b16 %v9561
    %v10516 = vunpack.c.l.b16 %v9562
    %v10517 = vunpack.c.h.b16 %v9562
    %v10518 = vunpack.c.l.b16 %v9563
    %v10519 = vunpack.c.h.b16 %v9563
    %v10520 = vunpack.c.l.b16 %v9564
    %v10521 = vunpack.c.h.b16 %v9564
    %v10522 = vunpack.c.l.b16 %v9565
    %v10523 = vunpack.c.h.b16 %v9565
    %v10524 = vunpack.c.l.b16 %v9566
    %v10525 = vunpack.c.h.b16 %v9566
    %v10526 = vunpack.c.l.b16 %v9567
    %v10527 = vunpack.c.h.b16 %v9567
    %v10528 = vunpack.c.l.b16 %v9568
    %v10529 = vunpack.c.h.b16 %v9568
    %v10530 = vunpack.c.l.b16 %v9569
    %v10531 = vunpack.c.h.b16 %v9569
    %v10532 = vunpack.c.l.b16 %v9570
    %v10533 = vunpack.c.h.b16 %v9570
    %v10534 = vunpack.c.l.b16 %v9571
    %v10535 = vunpack.c.h.b16 %v9571
    %v10536 = vunpack.c.l.b16 %v9572
    %v10537 = vunpack.c.h.b16 %v9572
    %v10538 = vunpack.c.l.b16 %v9573
    %v10539 = vunpack.c.h.b16 %v9573
    %v10540 = vunpack.c.l.b16 %v9574
    %v10541 = vunpack.c.h.b16 %v9574
    %v10542 = vunpack.c.l.b16 %v9575
    %v10543 = vunpack.c.h.b16 %v9575
    %v10544 = vunpack.c.l.b16 %v9576
    %v10545 = vunpack.c.h.b16 %v9576
    %v10546 = vunpack.c.l.b16 %v9577
    %v10547 = vunpack.c.h.b16 %v9577
    %v10548 = vunpack.c.l.b16 %v9578
    %v10549 = vunpack.c.h.b16 %v9578
    %v10550 = vunpack.c.l.b16 %v9579
    %v10551 = vunpack.c.h.b16 %v9579
    %v10552 = vunpack.c.l.b16 %v9580
    %v10553 = vunpack.c.h.b16 %v9580
    %v10554 = vunpack.c.l.b16 %v9581
    %v10555 = vunpack.c.h.b16 %v9581
    %v10556 = vunpack.c.l.b16 %v9582
    %v10557 = vunpack.c.h.b16 %v9582
    %v10558 = vunpack.c.l.b16 %v9583
    %v10559 = vunpack.c.h.b16 %v9583
    %v10560 = vunpack.c.l.b16 %v9584
    %v10561 = vunpack.c.h.b16 %v9584
    %v10562 = vunpack.c.l.b16 %v9585
    %v10563 = vunpack.c.h.b16 %v9585
    %v10564 = vunpack.c.l.b16 %v9586
    %v10565 = vunpack.c.h.b16 %v9586
    %v10566 = vunpack.c.l.b16 %v9587
    %v10567 = vunpack.c.h.b16 %v9587
    %v10568 = vunpack.c.l.b16 %v9588
    %v10569 = vunpack.c.h.b16 %v9588
    %v10570 = vunpack.c.l.b16 %v9589
    %v10571 = vunpack.c.h.b16 %v9589
    %v10572 = vunpack.c.l.b16 %v9590
    %v10573 = vunpack.c.h.b16 %v9590
    %v10574 = vunpack.c.l.b16 %v9591
    %v10575 = vunpack.c.h.b16 %v9591
    %v10576 = vunpack.c.l.b16 %v9592
    %v10577 = vunpack.c.h.b16 %v9592
    %v10578 = vunpack.c.l.b16 %v9593
    %v10579 = vunpack.c.h.b16 %v9593
    %v10580 = vunpack.c.l.b16 %v9594
    %v10581 = vunpack.c.h.b16 %v9594
    %v10582 = vunpack.c.l.b16 %v9595
    %v10583 = vunpack.c.h.b16 %v9595
    %v10584 = vunpack.c.l.b16 %v9596
    %v10585 = vunpack.c.h.b16 %v9596
    %v10586 = vunpack.c.l.b16 %v9597
    %v10587 = vunpack.c.h.b16 %v9597
    %v10588 = vunpack.c.l.b16 %v9598
    %v10589 = vunpack.c.h.b16 %v9598
    %v10590 = vunpack.c.l.b16 %v9599
    %v10591 = vunpack.c.h.b16 %v9599
    %v10592 = vunpack.c.l.b16 %v9600
    %v10593 = vunpack.c.h.b16 %v9600
    %v10594 = vunpack.c.l.b16 %v9601
    %v10595 = vunpack.c.h.b16 %v9601
    %v10596 = vunpack.c.l.b16 %v9602
    %v10597 = vunpack.c.h.b16 %v9602
    %v10598 = vunpack.c.l.b16 %v9603
    %v10599 = vunpack.c.h.b16 %v9603
    %v10600 = vunpack.c.l.b16 %v9604
    %v10601 = vunpack.c.h.b16 %v9604
    %v10602 = vunpack.c.l.b16 %v9605
    %v10603 = vunpack.c.h.b16 %v9605
    %v10604 = vunpack.c.l.b16 %v9606
    %v10605 = vunpack.c.h.b16 %v9606
    %v10606 = vunpack.c.l.b16 %v9607
    %v10607 = vunpack.c.h.b16 %v9607
    %v10608 = vunpack.c.l.b16 %v9608
    %v10609 = vunpack.c.h.b16 %v9608
    %v10610 = vunpack.c.l.b16 %v9609
    %v10611 = vunpack.c.h.b16 %v9609
    %v10612 = vunpack.c.l.b16 %v9610
    %v10613 = vunpack.c.h.b16 %v9610
    %v10614 = vunpack.c.l.b16 %v9611
    %v10615 = vunpack.c.h.b16 %v9611
    %v10616 = vunpack.c.l.b16 %v9612
    %v10617 = vunpack.c.h.b16 %v9612
    %v10618 = vunpack.c.l.b16 %v9613
    %v10619 = vunpack.c.h.b16 %v9613
    %v10620 = vunpack.c.l.b16 %v9614
    %v10621 = vunpack.c.h.b16 %v9614
    %v10622 = vunpack.c.l.b16 %v9615
    %v10623 = vunpack.c.h.b16 %v9615
    %v10624 = vunpack.c.l.b16 %v9616
    %v10625 = vunpack.c.h.b16 %v9616
    %v10626 = vunpack.c.l.b16 %v9617
    %v10627 = vunpack.c.h.b16 %v9617
    %v10628 = vunpack.c.l.b16 %v9618
    %v10629 = vunpack.c.h.b16 %v9618
    %v10630 = vunpack.c.l.b16 %v9619
    %v10631 = vunpack.c.h.b16 %v9619
    %v10632 = vunpack.c.l.b16 %v9620
    %v10633 = vunpack.c.h.b16 %v9620
    %v10634 = vunpack.c.l.b16 %v9621
    %v10635 = vunpack.c.h.b16 %v9621
    %v10636 = vunpack.c.l.b16 %v9622
    %v10637 = vunpack.c.h.b16 %v9622
    %v10638 = vunpack.c.l.b16 %v9623
    %v10639 = vunpack.c.h.b16 %v9623
    %v10640 = vunpack.c.l.b16 %v9624
    %v10641 = vunpack.c.h.b16 %v9624
    %v10642 = vunpack.c.l.b16 %v9625
    %v10643 = vunpack.c.h.b16 %v9625
    %v10644 = vunpack.c.l.b16 %v9626
    %v10645 = vunpack.c.h.b16 %v9626
    %v10646 = vunpack.c.l.b16 %v9627
    %v10647 = vunpack.c.h.b16 %v9627
    %v10648 = vunpack.c.l.b16 %v9628
    %v10649 = vunpack.c.h.b16 %v9628
    %v10650 = vunpack.c.l.b16 %v9629
    %v10651 = vunpack.c.h.b16 %v9629
    %v10652 = vunpack.c.l.b16 %v9630
    %v10653 = vunpack.c.h.b16 %v9630
    %v10654 = vunpack.c.l.b16 %v9631
    %v10655 = vunpack.c.h.b16 %v9631
    %v10656 = vunpack.c.l.b16 %v9632
    %v10657 = vunpack.c.h.b16 %v9632
    %v10658 = vunpack.c.l.b16 %v9633
    %v10659 = vunpack.c.h.b16 %v9633
    %v10660 = vunpack.c.l.b16 %v9634
    %v10661 = vunpack.c.h.b16 %v9634
    %v10662 = vunpack.c.l.b16 %v9635
    %v10663 = vunpack.c.h.b16 %v9635
    %v10664 = vunpack.c.l.b16 %v9636
    %v10665 = vunpack.c.h.b16 %v9636
    %v10666 = vunpack.c.l.b16 %v9637
    %v10667 = vunpack.c.h.b16 %v9637
    %v10668 = vunpack.c.l.b16 %v9638
    %v10669 = vunpack.c.h.b16 %v9638
    %v10670 = vunpack.c.l.b16 %v9639
    %v10671 = vunpack.c.h.b16 %v9639
    %v10672 = vunpack.c.l.b16 %v9640
    %v10673 = vunpack.c.h.b16 %v9640
    %v10674 = vunpack.c.l.b16 %v9641
    %v10675 = vunpack.c.h.b16 %v9641
    %v10676 = vunpack.c.l.b16 %v9642
    %v10677 = vunpack.c.h.b16 %v9642
    %v10678 = vunpack.c.l.b16 %v9643
    %v10679 = vunpack.c.h.b16 %v9643
    %v10680 = vunpack.c.l.b16 %v9644
    %v10681 = vunpack.c.h.b16 %v9644
    %v10682 = vunpack.c.l.b16 %v9645
    %v10683 = vunpack.c.h.b16 %v9645
    %v10684 = vunpack.c.l.b16 %v9646
    %v10685 = vunpack.c.h.b16 %v9646
    %v10686 = vunpack.c.l.b16 %v9647
    %v10687 = vunpack.c.h.b16 %v9647
    %v10688 = vunpack.c.l.b16 %v9648
    %v10689 = vunpack.c.h.b16 %v9648
    %v10690 = vunpack.c.l.b16 %v9649
    %v10691 = vunpack.c.h.b16 %v9649
    %v10692 = vunpack.c.l.b16 %v9650
    %v10693 = vunpack.c.h.b16 %v9650
    %v10694 = vunpack.c.l.b16 %v9651
    %v10695 = vunpack.c.h.b16 %v9651
    %v10696 = vunpack.c.l.b16 %v9652
    %v10697 = vunpack.c.h.b16 %v9652
    %v10698 = vunpack.c.l.b16 %v9653
    %v10699 = vunpack.c.h.b16 %v9653
    %v10700 = vunpack.c.l.b16 %v9654
    %v10701 = vunpack.c.h.b16 %v9654
    %v10702 = vunpack.c.l.b16 %v9655
    %v10703 = vunpack.c.h.b16 %v9655
    %v10704 = vunpack.c.l.b16 %v9656
    %v10705 = vunpack.c.h.b16 %v9656
    %v10706 = vunpack.c.l.b16 %v9657
    %v10707 = vunpack.c.h.b16 %v9657
    %v10708 = vunpack.c.l.b16 %v9658
    %v10709 = vunpack.c.h.b16 %v9658
    %v10710 = vunpack.c.l.b16 %v9659
    %v10711 = vunpack.c.h.b16 %v9659
    %v10712 = vunpack.c.l.b16 %v9660
    %v10713 = vunpack.c.h.b16 %v9660
    %v10714 = vunpack.c.l.b16 %v9661
    %v10715 = vunpack.c.h.b16 %v9661
    %v10716 = vunpack.c.l.b16 %v9662
    %v10717 = vunpack.c.h.b16 %v9662
    %v10718 = vunpack.c.l.b16 %v9663
    %v10719 = vunpack.c.h.b16 %v9663
    %v10720 = vunpack.c.l.b16 %v9664
    %v10721 = vunpack.c.h.b16 %v9664
    %v10722 = vunpack.c.l.b16 %v9665
    %v10723 = vunpack.c.h.b16 %v9665
    %v10724 = vunpack.c.l.b16 %v9666
    %v10725 = vunpack.c.h.b16 %v9666
    %v10726 = vunpack.c.l.b16 %v9667
    %v10727 = vunpack.c.h.b16 %v9667
    %v10728 = vunpack.c.l.b16 %v9668
    %v10729 = vunpack.c.h.b16 %v9668
    %v10730 = vunpack.c.l.b16 %v9669
    %v10731 = vunpack.c.h.b16 %v9669
    %v10732 = vunpack.c.l.b16 %v9670
    %v10733 = vunpack.c.h.b16 %v9670
    %v10734 = vunpack.c.l.b16 %v9671
    %v10735 = vunpack.c.h.b16 %v9671
    %v10736 = vunpack.c.l.b16 %v9672
    %v10737 = vunpack.c.h.b16 %v9672
    %v10738 = vunpack.c.l.b16 %v9673
    %v10739 = vunpack.c.h.b16 %v9673
    %v10740 = vunpack.c.l.b16 %v9674
    %v10741 = vunpack.c.h.b16 %v9674
    %v10742 = vunpack.c.l.b16 %v9675
    %v10743 = vunpack.c.h.b16 %v9675
    %v10744 = vunpack.c.l.b16 %v9676
    %v10745 = vunpack.c.h.b16 %v9676
    %v10746 = vunpack.c.l.b16 %v9677
    %v10747 = vunpack.c.h.b16 %v9677
    %v10748 = vunpack.c.l.b16 %v9678
    %v10749 = vunpack.c.h.b16 %v9678
    %v10750 = vunpack.c.l.b16 %v9679
    %v10751 = vunpack.c.h.b16 %v9679
    %v10752 = vunpack.c.l.b16 %v9680
    %v10753 = vunpack.c.h.b16 %v9680
    %v10754 = vunpack.c.l.b16 %v9681
    %v10755 = vunpack.c.h.b16 %v9681
    %v10756 = vunpack.c.l.b16 %v9682
    %v10757 = vunpack.c.h.b16 %v9682
    %v10758 = vunpack.c.l.b16 %v9683
    %v10759 = vunpack.c.h.b16 %v9683
    %v10760 = vunpack.c.l.b16 %v9684
    %v10761 = vunpack.c.h.b16 %v9684
    %v10762 = vunpack.c.l.b16 %v9685
    %v10763 = vunpack.c.h.b16 %v9685
    %v10764 = vunpack.c.l.b16 %v9686
    %v10765 = vunpack.c.h.b16 %v9686
    %v10766 = vunpack.c.l.b16 %v9687
    %v10767 = vunpack.c.h.b16 %v9687
    %v10768 = vunpack.c.l.b16 %v9688
    %v10769 = vunpack.c.h.b16 %v9688
    %v10770 = vunpack.c.l.b16 %v9689
    %v10771 = vunpack.c.h.b16 %v9689
    %v10772 = vunpack.c.l.b16 %v9690
    %v10773 = vunpack.c.h.b16 %v9690
    %v10774 = vunpack.c.l.b16 %v9691
    %v10775 = vunpack.c.h.b16 %v9691
    %v10776 = vunpack.c.l.b16 %v9692
    %v10777 = vunpack.c.h.b16 %v9692
    %v10778 = vunpack.c.l.b16 %v9693
    %v10779 = vunpack.c.h.b16 %v9693
    %v10780 = vunpack.c.l.b16 %v9694
    %v10781 = vunpack.c.h.b16 %v9694
    %v10782 = vunpack.c.l.b16 %v9695
    %v10783 = vunpack.c.h.b16 %v9695
    %v10784 = vunpack.c.l.b16 %v9696
    %v10785 = vunpack.c.h.b16 %v9696
    %v10786 = vunpack.c.l.b16 %v9697
    %v10787 = vunpack.c.h.b16 %v9697
    %v10788 = vunpack.c.l.b16 %v9698
    %v10789 = vunpack.c.h.b16 %v9698
    %v10790 = vunpack.c.l.b16 %v9699
    %v10791 = vunpack.c.h.b16 %v9699
    %v10792 = vunpack.c.l.b16 %v9700
    %v10793 = vunpack.c.h.b16 %v9700
    %v10794 = vunpack.c.l.b16 %v9701
    %v10795 = vunpack.c.h.b16 %v9701
    %v10796 = vunpack.c.l.b16 %v9702
    %v10797 = vunpack.c.h.b16 %v9702
    %v10798 = vunpack.c.l.b16 %v9703
    %v10799 = vunpack.c.h.b16 %v9703
    %v10800 = vunpack.c.l.b16 %v9704
    %v10801 = vunpack.c.h.b16 %v9704
    %v10802 = vunpack.c.l.b16 %v9705
    %v10803 = vunpack.c.h.b16 %v9705
    %v10804 = vunpack.c.l.b16 %v9706
    %v10805 = vunpack.c.h.b16 %v9706
    %v10806 = vunpack.c.l.b16 %v9707
    %v10807 = vunpack.c.h.b16 %v9707
    %v10808 = vunpack.c.l.b16 %v9708
    %v10809 = vunpack.c.h.b16 %v9708
    %v10810 = vunpack.c.l.b16 %v9709
    %v10811 = vunpack.c.h.b16 %v9709
    %v10812 = vunpack.c.l.b16 %v9710
    %v10813 = vunpack.c.h.b16 %v9710
    %v10814 = vunpack.c.l.b16 %v9711
    %v10815 = vunpack.c.h.b16 %v9711
    %v10816 = vunpack.c.l.b16 %v9712
    %v10817 = vunpack.c.h.b16 %v9712
    %v10818 = vunpack.c.l.b16 %v9713
    %v10819 = vunpack.c.h.b16 %v9713
    %v10820 = vunpack.c.l.b16 %v9714
    %v10821 = vunpack.c.h.b16 %v9714
    %v10822 = vunpack.c.l.b16 %v9715
    %v10823 = vunpack.c.h.b16 %v9715
    %v10824 = vunpack.c.l.b16 %v9716
    %v10825 = vunpack.c.h.b16 %v9716
    %v10826 = vunpack.c.l.b16 %v9717
    %v10827 = vunpack.c.h.b16 %v9717
    %v10828 = vunpack.c.l.b16 %v9718
    %v10829 = vunpack.c.h.b16 %v9718
    %v10830 = vunpack.c.l.b16 %v9719
    %v10831 = vunpack.c.h.b16 %v9719
    %v10832 = vunpack.c.l.b16 %v9720
    %v10833 = vunpack.c.h.b16 %v9720
    %v10834 = vunpack.c.l.b16 %v9721
    %v10835 = vunpack.c.h.b16 %v9721
    %v10836 = vunpack.c.l.b16 %v9722
    %v10837 = vunpack.c.h.b16 %v9722
    %v10838 = vunpack.c.l.b16 %v9723
    %v10839 = vunpack.c.h.b16 %v9723
    %v10840 = vunpack.c.l.b16 %v9724
    %v10841 = vunpack.c.h.b16 %v9724
    %v10842 = vunpack.c.l.b16 %v9725
    %v10843 = vunpack.c.h.b16 %v9725
    %v10844 = vunpack.c.l.b16 %v9726
    %v10845 = vunpack.c.h.b16 %v9726
    %v10846 = vunpack.c.l.b16 %v9727
    %v10847 = vunpack.c.h.b16 %v9727
    %v10848 = vunpack.c.l.b16 %v9728
    %v10849 = vunpack.c.h.b16 %v9728
    %v10850 = vunpack.c.l.b16 %v9729
    %v10851 = vunpack.c.h.b16 %v9729
    %v10852 = vunpack.c.l.b16 %v9730
    %v10853 = vunpack.c.h.b16 %v9730
    %v10854 = vunpack.c.l.b16 %v9731
    %v10855 = vunpack.c.h.b16 %v9731
    %v10856 = vunpack.c.l.b16 %v9732
    %v10857 = vunpack.c.h.b16 %v9732
    %v10858 = vunpack.c.l.b16 %v9733
    %v10859 = vunpack.c.h.b16 %v9733
    %v10860 = vunpack.c.l.b16 %v9734
    %v10861 = vunpack.c.h.b16 %v9734
    %v10862 = vunpack.c.l.b16 %v9735
    %v10863 = vunpack.c.h.b16 %v9735
    %v10864 = vunpack.c.l.b16 %v9736
    %v10865 = vunpack.c.h.b16 %v9736
    %v10866 = vunpack.c.l.b16 %v9737
    %v10867 = vunpack.c.h.b16 %v9737
    %v10868 = vunpack.c.l.b16 %v9738
    %v10869 = vunpack.c.h.b16 %v9738
    %v10870 = vunpack.c.l.b16 %v9739
    %v10871 = vunpack.c.h.b16 %v9739
    %v10872 = vunpack.c.l.b16 %v9740
    %v10873 = vunpack.c.h.b16 %v9740
    %v10874 = vunpack.c.l.b16 %v9741
    %v10875 = vunpack.c.h.b16 %v9741
    %v10876 = vunpack.c.l.b16 %v9742
    %v10877 = vunpack.c.h.b16 %v9742
    %v10878 = vunpack.c.l.b16 %v9743
    %v10879 = vunpack.c.h.b16 %v9743
    %v10880 = vunpack.c.l.b16 %v9744
    %v10881 = vunpack.c.h.b16 %v9744
    %v10882 = vunpack.c.l.b16 %v9745
    %v10883 = vunpack.c.h.b16 %v9745
    %v10884 = vunpack.c.l.b16 %v9746
    %v10885 = vunpack.c.h.b16 %v9746
    %v10886 = vunpack.c.l.b16 %v9747
    %v10887 = vunpack.c.h.b16 %v9747
    %v10888 = vunpack.c.l.b16 %v9748
    %v10889 = vunpack.c.h.b16 %v9748
    %v10890 = vunpack.c.l.b16 %v9749
    %v10891 = vunpack.c.h.b16 %v9749
    %v10892 = vunpack.c.l.b16 %v9750
    %v10893 = vunpack.c.h.b16 %v9750
    %v10894 = vunpack.c.l.b16 %v9751
    %v10895 = vunpack.c.h.b16 %v9751
    %v10896 = vunpack.c.l.b16 %v9752
    %v10897 = vunpack.c.h.b16 %v9752
    %v10898 = vunpack.c.l.b16 %v9753
    %v10899 = vunpack.c.h.b16 %v9753
    %v10900 = vunpack.c.l.b16 %v9754
    %v10901 = vunpack.c.h.b16 %v9754
    %v10902 = vunpack.c.l.b16 %v9755
    %v10903 = vunpack.c.h.b16 %v9755
    %v10904 = vunpack.c.l.b16 %v9756
    %v10905 = vunpack.c.h.b16 %v9756
    %v10906 = vunpack.c.l.b16 %v9757
    %v10907 = vunpack.c.h.b16 %v9757
    %v10908 = vunpack.c.l.b16 %v9758
    %v10909 = vunpack.c.h.b16 %v9758
    %v10910 = vunpack.c.l.b16 %v9759
    %v10911 = vunpack.c.h.b16 %v9759
    %v10912 = vunpack.c.l.b16 %v9760
    %v10913 = vunpack.c.h.b16 %v9760
    %v10914 = vunpack.c.l.b16 %v9761
    %v10915 = vunpack.c.h.b16 %v9761
    %v10916 = vunpack.c.l.b16 %v9762
    %v10917 = vunpack.c.h.b16 %v9762
    %v10918 = vunpack.c.l.b16 %v9763
    %v10919 = vunpack.c.h.b16 %v9763
    %v10920 = vunpack.c.l.b16 %v9764
    %v10921 = vunpack.c.h.b16 %v9764
    %v10922 = vunpack.c.l.b16 %v9765
    %v10923 = vunpack.c.h.b16 %v9765
    %v10924 = vunpack.c.l.b16 %v9766
    %v10925 = vunpack.c.h.b16 %v9766
    %v10926 = vunpack.c.l.b16 %v9767
    %v10927 = vunpack.c.h.b16 %v9767
    %v10928 = vunpack.c.l.b16 %v9768
    %v10929 = vunpack.c.h.b16 %v9768
    %v10930 = vunpack.c.l.b16 %v9769
    %v10931 = vunpack.c.h.b16 %v9769
    %v10932 = vunpack.c.l.b16 %v9770
    %v10933 = vunpack.c.h.b16 %v9770
    %v10934 = vunpack.c.l.b16 %v9771
    %v10935 = vunpack.c.h.b16 %v9771
    %v10936 = vunpack.c.l.b16 %v9772
    %v10937 = vunpack.c.h.b16 %v9772
    %v10938 = vunpack.c.l.b16 %v9773
    %v10939 = vunpack.c.h.b16 %v9773
    %v10940 = vunpack.c.l.b16 %v9774
    %v10941 = vunpack.c.h.b16 %v9774
    %v10942 = vunpack.c.l.b16 %v9775
    %v10943 = vunpack.c.h.b16 %v9775
    %v10944 = vunpack.c.l.b16 %v9776
    %v10945 = vunpack.c.h.b16 %v9776
    %v10946 = vunpack.c.l.b16 %v9777
    %v10947 = vunpack.c.h.b16 %v9777
    %v10948 = vunpack.c.l.b16 %v9778
    %v10949 = vunpack.c.h.b16 %v9778
    %v10950 = vunpack.c.l.b16 %v9779
    %v10951 = vunpack.c.h.b16 %v9779
    %v10952 = vunpack.c.l.b16 %v9780
    %v10953 = vunpack.c.h.b16 %v9780
    %v10954 = vunpack.c.l.b16 %v9781
    %v10955 = vunpack.c.h.b16 %v9781
    %v10956 = vunpack.c.l.b16 %v9782
    %v10957 = vunpack.c.h.b16 %v9782
    %v10958 = vunpack.c.l.b16 %v9783
    %v10959 = vunpack.c.h.b16 %v9783
    %v10960 = vunpack.c.l.b16 %v9784
    %v10961 = vunpack.c.h.b16 %v9784
    %v10962 = vunpack.c.l.b16 %v9785
    %v10963 = vunpack.c.h.b16 %v9785
    %v10964 = vunpack.c.l.b16 %v9786
    %v10965 = vunpack.c.h.b16 %v9786
    %v10966 = vunpack.c.l.b16 %v9787
    %v10967 = vunpack.c.h.b16 %v9787
    %v10968 = vunpack.c.l.b16 %v9788
    %v10969 = vunpack.c.h.b16 %v9788
    %v10970 = vunpack.c.l.b16 %v9789
    %v10971 = vunpack.c.h.b16 %v9789
    %v10972 = vunpack.c.l.b16 %v9790
    %v10973 = vunpack.c.h.b16 %v9790
    %v10974 = vunpack.c.l.b16 %v9791
    %v10975 = vunpack.c.h.b16 %v9791
    %v10976 = vpack.c.b16 %v10214, %v10208
    %v10977 = vpack.c.b16 %v10215, %v10209
    %v10978 = vpack.c.b16 %v10216, %v10210
    %v10979 = vpack.c.b16 %v10217, %v10211
    %v10980 = vpack.c.b16 %v10218, %v10212
    %v10981 = vpack.c.b16 %v10219, %v10213
    %v10982 = vpack.c.b16 %v10226, %v10220
    %v10983 = vpack.c.b16 %v10227, %v10221
    %v10984 = vpack.c.b16 %v10228, %v10222
    %v10985 = vpack.c.b16 %v10229, %v10223
    %v10986 = vpack.c.b16 %v10230, %v10224
    %v10987 = vpack.c.b16 %v10231, %v10225
    %v10988 = vpack.c.b16 %v10238, %v10232
    %v10989 = vpack.c.b16 %v10239, %v10233
    %v10990 = vpack.c.b16 %v10240, %v10234
    %v10991 = vpack.c.b16 %v10241, %v10235
    %v10992 = vpack.c.b16 %v10242, %v10236
    %v10993 = vpack.c.b16 %v10243, %v10237
    %v10994 = vpack.c.b16 %v10250, %v10244
    %v10995 = vpack.c.b16 %v10251, %v10245
    %v10996 = vpack.c.b16 %v10252, %v10246
    %v10997 = vpack.c.b16 %v10253, %v10247
    %v10998 = vpack.c.b16 %v10254, %v10248
    %v10999 = vpack.c.b16 %v10255, %v10249
    %v11000 = vpack.c.b16 %v10262, %v10256
    %v11001 = vpack.c.b16 %v10263, %v10257
    %v11002 = vpack.c.b16 %v10264, %v10258
    %v11003 = vpack.c.b16 %v10265, %v10259
    %v11004 = vpack.c.b16 %v10266, %v10260
    %v11005 = vpack.c.b16 %v10267, %v10261
    %v11006 = vpack.c.b16 %v10274, %v10268
    %v11007 = vpack.c.b16 %v10275, %v10269
    %v11008 = vpack.c.b16 %v10276, %v10270
    %v11009 = vpack.c.b16 %v10277, %v10271
    %v11010 = vpack.c.b16 %v10278, %v10272
    %v11011 = vpack.c.b16 %v10279, %v10273
    %v11012 = vpack.c.b16 %v10286, %v10280
    %v11013 = vpack.c.b16 %v10287, %v10281
    %v11014 = vpack.c.b16 %v10288, %v10282
    %v11015 = vpack.c.b16 %v10289, %v10283
    %v11016 = vpack.c.b16 %v10290, %v10284
    %v11017 = vpack.c.b16 %v10291, %v10285
    %v11018 = vpack.c.b16 %v10298, %v10292
    %v11019 = vpack.c.b16 %v10299, %v10293
    %v11020 = vpack.c.b16 %v10300, %v10294
    %v11021 = vpack.c.b16 %v10301, %v10295
    %v11022 = vpack.c.b16 %v10302, %v10296
    %v11023 = vpack.c.b16 %v10303, %v10297
    %v11024 = vpack.c.b16 %v10310, %v10304
    %v11025 = vpack.c.b16 %v10311, %v10305
    %v11026 = vpack.c.b16 %v10312, %v10306
    %v11027 = vpack.c.b16 %v10313, %v10307
    %v11028 = vpack.c.b16 %v10314, %v10308
    %v11029 = vpack.c.b16 %v10315, %v10309
    %v11030 = vpack.c.b16 %v10322, %v10316
    %v11031 = vpack.c.b16 %v10323, %v10317
    %v11032 = vpack.c.b16 %v10324, %v10318
    %v11033 = vpack.c.b16 %v10325, %v10319
    %v11034 = vpack.c.b16 %v10326, %v10320
    %v11035 = vpack.c.b16 %v10327, %v10321
    %v11036 = vpack.c.b16 %v10334, %v10328
    %v11037 = vpack.c.b16 %v10335, %v10329
    %v11038 = vpack.c.b16 %v10336, %v10330
    %v11039 = vpack.c.b16 %v10337, %v10331
    %v11040 = vpack.c.b16 %v10338, %v10332
    %v11041 = vpack.c.b16 %v10339, %v10333
    %v11042 = vpack.c.b16 %v10346, %v10340
    %v11043 = vpack.c.b16 %v10347, %v10341
    %v11044 = vpack.c.b16 %v10348, %v10342
    %v11045 = vpack.c.b16 %v10349, %v10343
    %v11046 = vpack.c.b16 %v10350, %v10344
    %v11047 = vpack.c.b16 %v10351, %v10345
    %v11048 = vpack.c.b16 %v10358, %v10352
    %v11049 = vpack.c.b16 %v10359, %v10353
    %v11050 = vpack.c.b16 %v10360, %v10354
    %v11051 = vpack.c.b16 %v10361, %v10355
    %v11052 = vpack.c.b16 %v10362, %v10356
    %v11053 = vpack.c.b16 %v10363, %v10357
    %v11054 = vpack.c.b16 %v10370, %v10364
    %v11055 = vpack.c.b16 %v10371, %v10365
    %v11056 = vpack.c.b16 %v10372, %v10366
    %v11057 = vpack.c.b16 %v10373, %v10367
    %v11058 = vpack.c.b16 %v10374, %v10368
    %v11059 = vpack.c.b16 %v10375, %v10369
    %v11060 = vpack.c.b16 %v10382, %v10376
    %v11061 = vpack.c.b16 %v10383, %v10377
    %v11062 = vpack.c.b16 %v10384, %v10378
    %v11063 = vpack.c.b16 %v10385, %v10379
    %v11064 = vpack.c.b16 %v10386, %v10380
    %v11065 = vpack.c.b16 %v10387, %v10381
    %v11066 = vpack.c.b16 %v10394, %v10388
    %v11067 = vpack.c.b16 %v10395, %v10389
    %v11068 = vpack.c.b16 %v10396, %v10390
    %v11069 = vpack.c.b16 %v10397, %v10391
    %v11070 = vpack.c.b16 %v10398, %v10392
    %v11071 = vpack.c.b16 %v10399, %v10393
    %v11072 = vpack.c.b16 %v10406, %v10400
    %v11073 = vpack.c.b16 %v10407, %v10401
    %v11074 = vpack.c.b16 %v10408, %v10402
    %v11075 = vpack.c.b16 %v10409, %v10403
    %v11076 = vpack.c.b16 %v10410, %v10404
    %v11077 = vpack.c.b16 %v10411, %v10405
    %v11078 = vpack.c.b16 %v10418, %v10412
    %v11079 = vpack.c.b16 %v10419, %v10413
    %v11080 = vpack.c.b16 %v10420, %v10414
    %v11081 = vpack.c.b16 %v10421, %v10415
    %v11082 = vpack.c.b16 %v10422, %v10416
    %v11083 = vpack.c.b16 %v10423, %v10417
    %v11084 = vpack.c.b16 %v10430, %v10424
    %v11085 = vpack.c.b16 %v10431, %v10425
    %v11086 = vpack.c.b16 %v10432, %v10426
    %v11087 = vpack.c.b16 %v10433, %v10427
    %v11088 = vpack.c.b16 %v10434, %v10428
    %v11089 = vpack.c.b16 %v10435, %v10429
    %v11090 = vpack.c.b16 %v10442, %v10436
    %v11091 = vpack.c.b16 %v10443, %v10437
    %v11092 = vpack.c.b16 %v10444, %v10438
    %v11093 = vpack.c.b16 %v10445, %v10439
    %v11094 = vpack.c.b16 %v10446, %v10440
    %v11095 = vpack.c.b16 %v10447, %v10441
    %v11096 = vpack.c.b16 %v10454, %v10448
    %v11097 = vpack.c.b16 %v10455, %v10449
    %v11098 = vpack.c.b16 %v10456, %v10450
    %v11099 = vpack.c.b16 %v10457, %v10451
    %v11100 = vpack.c.b16 %v10458, %v10452
    %v11101 = vpack.c.b16 %v10459, %v10453
    %v11102 = vpack.c.b16 %v10466, %v10460
    %v11103 = vpack.c.b16 %v10467, %v10461
    %v11104 = vpack.c.b16 %v10468, %v10462
    %v11105 = vpack.c.b16 %v10469, %v10463
    %v11106 = vpack.c.b16 %v10470, %v10464
    %v11107 = vpack.c.b16 %v10471, %v10465
    %v11108 = vpack.c.b16 %v10478, %v10472
    %v11109 = vpack.c.b16 %v10479, %v10473
    %v11110 = vpack.c.b16 %v10480, %v10474
    %v11111 = vpack.c.b16 %v10481, %v10475
    %v11112 = vpack.c.b16 %v10482, %v10476
    %v11113 = vpack.c.b16 %v10483, %v10477
    %v11114 = vpack.c.b16 %v10490, %v10484
    %v11115 = vpack.c.b16 %v10491, %v10485
    %v11116 = vpack.c.b16 %v10492, %v10486
    %v11117 = vpack.c.b16 %v10493, %v10487
    %v11118 = vpack.c.b16 %v10494, %v10488
    %v11119 = vpack.c.b16 %v10495, %v10489
    %v11120 = vpack.c.b16 %v10502, %v10496
    %v11121 = vpack.c.b16 %v10503, %v10497
    %v11122 = vpack.c.b16 %v10504, %v10498
    %v11123 = vpack.c.b16 %v10505, %v10499
    %v11124 = vpack.c.b16 %v10506, %v10500
    %v11125 = vpack.c.b16 %v10507, %v10501
    %v11126 = vpack.c.b16 %v10514, %v10508
    %v11127 = vpack.c.b16 %v10515, %v10509
    %v11128 = vpack.c.b16 %v10516, %v10510
    %v11129 = vpack.c.b16 %v10517, %v10511
    %v11130 = vpack.c.b16 %v10518, %v10512
    %v11131 = vpack.c.b16 %v10519, %v10513
    %v11132 = vpack.c.b16 %v10526, %v10520
    %v11133 = vpack.c.b16 %v10527, %v10521
    %v11134 = vpack.c.b16 %v10528, %v10522
    %v11135 = vpack.c.b16 %v10529, %v10523
    %v11136 = vpack.c.b16 %v10530, %v10524
    %v11137 = vpack.c.b16 %v10531, %v10525
    %v11138 = vpack.c.b16 %v10538, %v10532
    %v11139 = vpack.c.b16 %v10539, %v10533
    %v11140 = vpack.c.b16 %v10540, %v10534
    %v11141 = vpack.c.b16 %v10541, %v10535
    %v11142 = vpack.c.b16 %v10542, %v10536
    %v11143 = vpack.c.b16 %v10543, %v10537
    %v11144 = vpack.c.b16 %v10550, %v10544
    %v11145 = vpack.c.b16 %v10551, %v10545
    %v11146 = vpack.c.b16 %v10552, %v10546
    %v11147 = vpack.c.b16 %v10553, %v10547
    %v11148 = vpack.c.b16 %v10554, %v10548
    %v11149 = vpack.c.b16 %v10555, %v10549
    %v11150 = vpack.c.b16 %v10562, %v10556
    %v11151 = vpack.c.b16 %v10563, %v10557
    %v11152 = vpack.c.b16 %v10564, %v10558
    %v11153 = vpack.c.b16 %v10565, %v10559
    %v11154 = vpack.c.b16 %v10566, %v10560
    %v11155 = vpack.c.b16 %v10567, %v10561
    %v11156 = vpack.c.b16 %v10574, %v10568
    %v11157 = vpack.c.b16 %v10575, %v10569
    %v11158 = vpack.c.b16 %v10576, %v10570
    %v11159 = vpack.c.b16 %v10577, %v10571
    %v11160 = vpack.c.b16 %v10578, %v10572
    %v11161 = vpack.c.b16 %v10579, %v10573
    %v11162 = vpack.c.b16 %v10586, %v10580
    %v11163 = vpack.c.b16 %v10587, %v10581
    %v11164 = vpack.c.b16 %v10588, %v10582
    %v11165 = vpack.c.b16 %v10589, %v10583
    %v11166 = vpack.c.b16 %v10590, %v10584
    %v11167 = vpack.c.b16 %v10591, %v10585
    %v11168 = vpack.c.b16 %v10598, %v10592
    %v11169 = vpack.c.b16 %v10599, %v10593
    %v11170 = vpack.c.b16 %v10600, %v10594
    %v11171 = vpack.c.b16 %v10601, %v10595
    %v11172 = vpack.c.b16 %v10602, %v10596
    %v11173 = vpack.c.b16 %v10603, %v10597
    %v11174 = vpack.c.b16 %v10610, %v10604
    %v11175 = vpack.c.b16 %v10611, %v10605
    %v11176 = vpack.c.b16 %v10612, %v10606
    %v11177 = vpack.c.b16 %v10613, %v10607
    %v11178 = vpack.c.b16 %v10614, %v10608
    %v11179 = vpack.c.b16 %v10615, %v10609
    %v11180 = vpack.c.b16 %v10622, %v10616
    %v11181 = vpack.c.b16 %v10623, %v10617
    %v11182 = vpack.c.b16 %v10624, %v10618
    %v11183 = vpack.c.b16 %v10625, %v10619
    %v11184 = vpack.c.b16 %v10626, %v10620
    %v11185 = vpack.c.b16 %v10627, %v10621
    %v11186 = vpack.c.b16 %v10634, %v10628
    %v11187 = vpack.c.b16 %v10635, %v10629
    %v11188 = vpack.c.b16 %v10636, %v10630
    %v11189 = vpack.c.b16 %v10637, %v10631
    %v11190 = vpack.c.b16 %v10638, %v10632
    %v11191 = vpack.c.b16 %v10639, %v10633
    %v11192 = vpack.c.b16 %v10646, %v10640
    %v11193 = vpack.c.b16 %v10647, %v10641
    %v11194 = vpack.c.b16 %v10648, %v10642
    %v11195 = vpack.c.b16 %v10649, %v10643
    %v11196 = vpack.c.b16 %v10650, %v10644
    %v11197 = vpack.c.b16 %v10651, %v10645
    %v11198 = vpack.c.b16 %v10658, %v10652
    %v11199 = vpack.c.b16 %v10659, %v10653
    %v11200 = vpack.c.b16 %v10660, %v10654
    %v11201 = vpack.c.b16 %v10661, %v10655
    %v11202 = vpack.c.b16 %v10662, %v10656
    %v11203 = vpack.c.b16 %v10663, %v10657
    %v11204 = vpack.c.b16 %v10670, %v10664
    %v11205 = vpack.c.b16 %v10671, %v10665
    %v11206 = vpack.c.b16 %v10672, %v10666
    %v11207 = vpack.c.b16 %v10673, %v10667
    %v11208 = vpack.c.b16 %v10674, %v10668
    %v11209 = vpack.c.b16 %v10675, %v10669
    %v11210 = vpack.c.b16 %v10682, %v10676
    %v11211 = vpack.c.b16 %v10683, %v10677
    %v11212 = vpack.c.b16 %v10684, %v10678
    %v11213 = vpack.c.b16 %v10685, %v10679
    %v11214 = vpack.c.b16 %v10686, %v10680
    %v11215 = vpack.c.b16 %v10687, %v10681
    %v11216 = vpack.c.b16 %v10694, %v10688
    %v11217 = vpack.c.b16 %v10695, %v10689
    %v11218 = vpack.c.b16 %v10696, %v10690
    %v11219 = vpack.c.b16 %v10697, %v10691
    %v11220 = vpack.c.b16 %v10698, %v10692
    %v11221 = vpack.c.b16 %v10699, %v10693
    %v11222 = vpack.c.b16 %v10706, %v10700
    %v11223 = vpack.c.b16 %v10707, %v10701
    %v11224 = vpack.c.b16 %v10708, %v10702
    %v11225 = vpack.c.b16 %v10709, %v10703
    %v11226 = vpack.c.b16 %v10710, %v10704
    %v11227 = vpack.c.b16 %v10711, %v10705
    %v11228 = vpack.c.b16 %v10718, %v10712
    %v11229 = vpack.c.b16 %v10719, %v10713
    %v11230 = vpack.c.b16 %v10720, %v10714
    %v11231 = vpack.c.b16 %v10721, %v10715
    %v11232 = vpack.c.b16 %v10722, %v10716
    %v11233 = vpack.c.b16 %v10723, %v10717
    %v11234 = vpack.c.b16 %v10730, %v10724
    %v11235 = vpack.c.b16 %v10731, %v10725
    %v11236 = vpack.c.b16 %v10732, %v10726
    %v11237 = vpack.c.b16 %v10733, %v10727
    %v11238 = vpack.c.b16 %v10734, %v10728
    %v11239 = vpack.c.b16 %v10735, %v10729
    %v11240 = vpack.c.b16 %v10742, %v10736
    %v11241 = vpack.c.b16 %v10743, %v10737
    %v11242 = vpack.c.b16 %v10744, %v10738
    %v11243 = vpack.c.b16 %v10745, %v10739
    %v11244 = vpack.c.b16 %v10746, %v10740
    %v11245 = vpack.c.b16 %v10747, %v10741
    %v11246 = vpack.c.b16 %v10754, %v10748
    %v11247 = vpack.c.b16 %v10755, %v10749
    %v11248 = vpack.c.b16 %v10756, %v10750
    %v11249 = vpack.c.b16 %v10757, %v10751
    %v11250 = vpack.c.b16 %v10758, %v10752
    %v11251 = vpack.c.b16 %v10759, %v10753
    %v11252 = vpack.c.b16 %v10766, %v10760
    %v11253 = vpack.c.b16 %v10767, %v10761
    %v11254 = vpack.c.b16 %v10768, %v10762
    %v11255 = vpack.c.b16 %v10769, %v10763
    %v11256 = vpack.c.b16 %v10770, %v10764
    %v11257 = vpack.c.b16 %v10771, %v10765
    %v11258 = vpack.c.b16 %v10778, %v10772
    %v11259 = vpack.c.b16 %v10779, %v10773
    %v11260 = vpack.c.b16 %v10780, %v10774
    %v11261 = vpack.c.b16 %v10781, %v10775
    %v11262 = vpack.c.b16 %v10782, %v10776
    %v11263 = vpack.c.b16 %v10783, %v10777
    %v11264 = vpack.c.b16 %v10790, %v10784
    %v11265 = vpack.c.b16 %v10791, %v10785
    %v11266 = vpack.c.b16 %v10792, %v10786
    %v11267 = vpack.c.b16 %v10793, %v10787
    %v11268 = vpack.c.b16 %v10794, %v10788
    %v11269 = vpack.c.b16 %v10795, %v10789
    %v11270 = vpack.c.b16 %v10802, %v10796
    %v11271 = vpack.c.b16 %v10803, %v10797
    %v11272 = vpack.c.b16 %v10804, %v10798
    %v11273 = vpack.c.b16 %v10805, %v10799
    %v11274 = vpack.c.b16 %v10806, %v10800
    %v11275 = vpack.c.b16 %v10807, %v10801
    %v11276 = vpack.c.b16 %v10814, %v10808
    %v11277 = vpack.c.b16 %v10815, %v10809
    %v11278 = vpack.c.b16 %v10816, %v10810
    %v11279 = vpack.c.b16 %v10817, %v10811
    %v11280 = vpack.c.b16 %v10818, %v10812
    %v11281 = vpack.c.b16 %v10819, %v10813
    %v11282 = vpack.c.b16 %v10826, %v10820
    %v11283 = vpack.c.b16 %v10827, %v10821
    %v11284 = vpack.c.b16 %v10828, %v10822
    %v11285 = vpack.c.b16 %v10829, %v10823
    %v11286 = vpack.c.b16 %v10830, %v10824
    %v11287 = vpack.c.b16 %v10831, %v10825
    %v11288 = vpack.c.b16 %v10838, %v10832
    %v11289 = vpack.c.b16 %v10839, %v10833
    %v11290 = vpack.c.b16 %v10840, %v10834
    %v11291 = vpack.c.b16 %v10841, %v10835
    %v11292 = vpack.c.b16 %v10842, %v10836
    %v11293 = vpack.c.b16 %v10843, %v10837
    %v11294 = vpack.c.b16 %v10850, %v10844
    %v11295 = vpack.c.b16 %v10851, %v10845
    %v11296 = vpack.c.b16 %v10852, %v10846
    %v11297 = vpack.c.b16 %v10853, %v10847
    %v11298 = vpack.c.b16 %v10854, %v10848
    %v11299 = vpack.c.b16 %v10855, %v10849
    %v11300 = vpack.c.b16 %v10862, %v10856
    %v11301 = vpack.c.b16 %v10863, %v10857
    %v11302 = vpack.c.b16 %v10864, %v10858
    %v11303 = vpack.c.b16 %v10865, %v10859
    %v11304 = vpack.c.b16 %v10866, %v10860
    %v11305 = vpack.c.b16 %v10867, %v10861
    %v11306 = vpack.c.b16 %v10874, %v10868
    %v11307 = vpack.c.b16 %v10875, %v10869
    %v11308 = vpack.c.b16 %v10876, %v10870
    %v11309 = vpack.c.b16 %v10877, %v10871
    %v11310 = vpack.c.b16 %v10878, %v10872
    %v11311 = vpack.c.b16 %v10879, %v10873
    %v11312 = vpack.c.b16 %v10886, %v10880
    %v11313 = vpack.c.b16 %v10887, %v10881
    %v11314 = vpack.c.b16 %v10888, %v10882
    %v11315 = vpack.c.b16 %v10889, %v10883
    %v11316 = vpack.c.b16 %v10890, %v10884
    %v11317 = vpack.c.b16 %v10891, %v10885
    %v11318 = vpack.c.b16 %v10898, %v10892
    %v11319 = vpack.c.b16 %v10899, %v10893
    %v11320 = vpack.c.b16 %v10900, %v10894
    %v11321 = vpack.c.b16 %v10901, %v10895
    %v11322 = vpack.c.b16 %v10902, %v10896
    %v11323 = vpack.c.b16 %v10903, %v10897
    %v11324 = vpack.c.b16 %v10910, %v10904
    %v11325 = vpack.c.b16 %v10911, %v10905
    %v11326 = vpack.c.b16 %v10912, %v10906
    %v11327 = vpack.c.b16 %v10913, %v10907
    %v11328 = vpack.c.b16 %v10914, %v10908
    %v11329 = vpack.c.b16 %v10915, %v10909
    %v11330 = vpack.c.b16 %v10922, %v10916
    %v11331 = vpack.c.b16 %v10923, %v10917
    %v11332 = vpack.c.b16 %v10924, %v10918
    %v11333 = vpack.c.b16 %v10925, %v10919
    %v11334 = vpack.c.b16 %v10926, %v10920
    %v11335 = vpack.c.b16 %v10927, %v10921
    %v11336 = vpack.c.b16 %v10934, %v10928
    %v11337 = vpack.c.b16 %v10935, %v10929
    %v11338 = vpack.c.b16 %v10936, %v10930
    %v11339 = vpack.c.b16 %v10937, %v10931
    %v11340 = vpack.c.b16 %v10938, %v10932
    %v11341 = vpack.c.b16 %v10939, %v10933
    %v11342 = vpack.c.b16 %v10946, %v10940
    %v11343 = vpack.c.b16 %v10947, %v10941
    %v11344 = vpack.c.b16 %v10948, %v10942
    %v11345 = vpack.c.b16 %v10949, %v10943
    %v11346 = vpack.c.b16 %v10950, %v10944
    %v11347 = vpack.c.b16 %v10951, %v10945
    %v11348 = vpack.c.b16 %v10958, %v10952
    %v11349 = vpack.c.b16 %v10959, %v10953
    %v11350 = vpack.c.b16 %v10960, %v10954
    %v11351 = vpack.c.b16 %v10961, %v10955
    %v11352 = vpack.c.b16 %v10962, %v10956
    %v11353 = vpack.c.b16 %v10963, %v10957
    %v11354 = vpack.c.b16 %v10970, %v10964
    %v11355 = vpack.c.b16 %v10971, %v10965
    %v11356 = vpack.c.b16 %v10972, %v10966
    %v11357 = vpack.c.b16 %v10973, %v10967
    %v11358 = vpack.c.b16 %v10974, %v10968
    %v11359 = vpack.c.b16 %v10975, %v10969
    %11744 = vmatprep.subr.bf16.mxu0 %v10977
    %11745 = vmatpush1.bf16.msra.mxu0 %v10976
    %11746 = vmatprep.subr.bf16.mxu0 %v10983
    %11747 = vmatpush1.bf16.msra.mxu0 %v10982
    %11748 = vmatprep.subr.bf16.mxu0 %v10989
    %11749 = vmatpush1.bf16.msra.mxu0 %v10988
    %11750 = vmatprep.subr.bf16.mxu0 %v10995
    %11751 = vmatpush1.bf16.msra.mxu0 %v10994
    %11752 = vmatprep.subr.bf16.mxu0 %v11001
    %11753 = vmatpush1.bf16.msra.mxu0 %v11000
    %11754 = vmatprep.subr.bf16.mxu0 %v11007
    %11755 = vmatpush1.bf16.msra.mxu0 %v11006
    %11756 = vmatprep.subr.bf16.mxu0 %v11013
    %11757 = vmatpush1.bf16.msra.mxu0 %v11012
    %11758 = vmatprep.subr.bf16.mxu0 %v11019
    %11759 = vmatpush1.bf16.msra.mxu0 %v11018
    %11760 = vmatprep.subr.bf16.mxu0 %v11025
    %11761 = vmatpush1.bf16.msra.mxu0 %v11024
    %11762 = vmatprep.subr.bf16.mxu0 %v11031
    %11763 = vmatpush1.bf16.msra.mxu0 %v11030
    %11764 = vmatprep.subr.bf16.mxu0 %v11037
    %11765 = vmatpush1.bf16.msra.mxu0 %v11036
    %11766 = vmatprep.subr.bf16.mxu0 %v11043
    %11767 = vmatpush1.bf16.msra.mxu0 %v11042
    %11768 = vmatprep.subr.bf16.mxu0 %v11049
    %11769 = vmatpush1.bf16.msra.mxu0 %v11048
    %11770 = vmatprep.subr.bf16.mxu0 %v11055
    %11771 = vmatpush1.bf16.msra.mxu0 %v11054
    %11772 = vmatprep.subr.bf16.mxu0 %v11061
    %11773 = vmatpush1.bf16.msra.mxu0 %v11060
    %11774 = vmatprep.subr.bf16.mxu0 %v11067
    %11775 = vmatpush1.bf16.msra.mxu0 %v11066
    %11776 = vmatprep.mubr.bf16.mxu0 %v9401
    %11777 = vmatmul.mubr.bf16.gmra.mrb[0].mxu0 %v9400
    %v11778 = vpop.f32.mrb[0].mxu0
    %v11779 = vadd.f32 %v9797, %v11778
    %v11780 = vpop.f32.mrb[0].mxu0
    %v11781 = vadd.f32 %v9801, %v11780
    %v11782 = vpop.f32.mrb[0].mxu0
    %v11783 = vpop.f32.mrb[0].mxu0
    %11784 = vdwg.mxu0
    %11785 = vmatprep.subr.bf16.mxu0 %v11073
    %11786 = vmatpush1.bf16.msra.mxu0 %v11072
    %11787 = vmatprep.subr.bf16.mxu0 %v11079
    %11788 = vmatpush1.bf16.msra.mxu0 %v11078
    %11789 = vmatprep.subr.bf16.mxu0 %v11085
    %11790 = vmatpush1.bf16.msra.mxu0 %v11084
    %11791 = vmatprep.subr.bf16.mxu0 %v11091
    %11792 = vmatpush1.bf16.msra.mxu0 %v11090
    %11793 = vmatprep.subr.bf16.mxu0 %v11097
    %11794 = vmatpush1.bf16.msra.mxu0 %v11096
    %11795 = vmatprep.subr.bf16.mxu0 %v11103
    %11796 = vmatpush1.bf16.msra.mxu0 %v11102
    %11797 = vmatprep.subr.bf16.mxu0 %v11109
    %11798 = vmatpush1.bf16.msra.mxu0 %v11108
    %11799 = vmatprep.subr.bf16.mxu0 %v11115
    %11800 = vmatpush1.bf16.msra.mxu0 %v11114
    %11801 = vmatprep.subr.bf16.mxu0 %v11121
    %11802 = vmatpush1.bf16.msra.mxu0 %v11120
    %11803 = vmatprep.subr.bf16.mxu0 %v11127
    %11804 = vmatpush1.bf16.msra.mxu0 %v11126
    %11805 = vmatprep.subr.bf16.mxu0 %v11133
    %11806 = vmatpush1.bf16.msra.mxu0 %v11132
    %11807 = vmatprep.subr.bf16.mxu0 %v11139
    %11808 = vmatpush1.bf16.msra.mxu0 %v11138
    %11809 = vmatprep.subr.bf16.mxu0 %v11145
    %11810 = vmatpush1.bf16.msra.mxu0 %v11144
    %11811 = vmatprep.subr.bf16.mxu0 %v11151
    %11812 = vmatpush1.bf16.msra.mxu0 %v11150
    %11813 = vmatprep.subr.bf16.mxu0 %v11157
    %11814 = vmatpush1.bf16.msra.mxu0 %v11156
    %11815 = vmatprep.subr.bf16.mxu0 %v11163
    %11816 = vmatpush1.bf16.msra.mxu0 %v11162
    %11817 = vmatprep.mubr.bf16.mxu0 %v9403
    %11818 = vmatmul.mubr.bf16.gmra.mrb[0].mxu0 %v9402
    %v11819 = vpop.f32.mrb[0].mxu0
    %v11820 = vadd.f32 %v11779, %v11819
    %v11821 = vpop.f32.mrb[0].mxu0
    %v11822 = vadd.f32 %v11781, %v11821
    %v11823 = vpop.f32.mrb[0].mxu0
    %v11824 = vpop.f32.mrb[0].mxu0
    %11825 = vdwg.mxu0
    %11826 = vmatprep.subr.bf16.mxu0 %v11169
    %11827 = vmatpush1.bf16.msra.mxu0 %v11168
    %11828 = vmatprep.subr.bf16.mxu0 %v11175
    %11829 = vmatpush1.bf16.msra.mxu0 %v11174
    %11830 = vmatprep.subr.bf16.mxu0 %v11181
    %11831 = vmatpush1.bf16.msra.mxu0 %v11180
    %11832 = vmatprep.subr.bf16.mxu0 %v11187
    %11833 = vmatpush1.bf16.msra.mxu0 %v11186
    %11834 = vmatprep.subr.bf16.mxu0 %v11193
    %11835 = vmatpush1.bf16.msra.mxu0 %v11192
    %11836 = vmatprep.subr.bf16.mxu0 %v11199
    %11837 = vmatpush1.bf16.msra.mxu0 %v11198
    %11838 = vmatprep.subr.bf16.mxu0 %v11205
    %11839 = vmatpush1.bf16.msra.mxu0 %v11204
    %11840 = vmatprep.subr.bf16.mxu0 %v11211
    %11841 = vmatpush1.bf16.msra.mxu0 %v11210
    %11842 = vmatprep.subr.bf16.mxu0 %v11217
    %11843 = vmatpush1.bf16.msra.mxu0 %v11216
    %11844 = vmatprep.subr.bf16.mxu0 %v11223
    %11845 = vmatpush1.bf16.msra.mxu0 %v11222
    %11846 = vmatprep.subr.bf16.mxu0 %v11229
    %11847 = vmatpush1.bf16.msra.mxu0 %v11228
    %11848 = vmatprep.subr.bf16.mxu0 %v11235
    %11849 = vmatpush1.bf16.msra.mxu0 %v11234
    %11850 = vmatprep.subr.bf16.mxu0 %v11241
    %11851 = vmatpush1.bf16.msra.mxu0 %v11240
    %11852 = vmatprep.subr.bf16.mxu0 %v11247
    %11853 = vmatpush1.bf16.msra.mxu0 %v11246
    %11854 = vmatprep.subr.bf16.mxu0 %v11253
    %11855 = vmatpush1.bf16.msra.mxu0 %v11252
    %11856 = vmatprep.subr.bf16.mxu0 %v11259
    %11857 = vmatpush1.bf16.msra.mxu0 %v11258
    %11858 = vmatprep.mubr.bf16.mxu0 %v9405
    %11859 = vmatmul.mubr.bf16.gmra.mrb[0].mxu0 %v9404
    %v11860 = vpop.f32.mrb[0].mxu0
    %v11861 = vadd.f32 %v11820, %v11860
    %v11862 = vpop.f32.mrb[0].mxu0
    %v11863 = vadd.f32 %v11822, %v11862
    %v11864 = vpop.f32.mrb[0].mxu0
    %v11865 = vpop.f32.mrb[0].mxu0
    %11866 = vdwg.mxu0
    %11867 = vmatprep.subr.bf16.mxu0 %v11265
    %11868 = vmatpush1.bf16.msra.mxu0 %v11264
    %11869 = vmatprep.subr.bf16.mxu0 %v11271
    %11870 = vmatpush1.bf16.msra.mxu0 %v11270
    %11871 = vmatprep.subr.bf16.mxu0 %v11277
    %11872 = vmatpush1.bf16.msra.mxu0 %v11276
    %11873 = vmatprep.subr.bf16.mxu0 %v11283
    %11874 = vmatpush1.bf16.msra.mxu0 %v11282
    %11875 = vmatprep.subr.bf16.mxu0 %v11289
    %11876 = vmatpush1.bf16.msra.mxu0 %v11288
    %11877 = vmatprep.subr.bf16.mxu0 %v11295
    %11878 = vmatpush1.bf16.msra.mxu0 %v11294
    %11879 = vmatprep.subr.bf16.mxu0 %v11301
    %11880 = vmatpush1.bf16.msra.mxu0 %v11300
    %11881 = vmatprep.subr.bf16.mxu0 %v11307
    %11882 = vmatpush1.bf16.msra.mxu0 %v11306
    %11883 = vmatprep.subr.bf16.mxu0 %v11313
    %11884 = vmatpush1.bf16.msra.mxu0 %v11312
    %11885 = vmatprep.subr.bf16.mxu0 %v11319
    %11886 = vmatpush1.bf16.msra.mxu0 %v11318
    %11887 = vmatprep.subr.bf16.mxu0 %v11325
    %11888 = vmatpush1.bf16.msra.mxu0 %v11324
    %11889 = vmatprep.subr.bf16.mxu0 %v11331
    %11890 = vmatpush1.bf16.msra.mxu0 %v11330
    %11891 = vmatprep.subr.bf16.mxu0 %v11337
    %11892 = vmatpush1.bf16.msra.mxu0 %v11336
    %11893 = vmatprep.subr.bf16.mxu0 %v11343
    %11894 = vmatpush1.bf16.msra.mxu0 %v11342
    %11895 = vmatprep.subr.bf16.mxu0 %v11349
    %11896 = vmatpush1.bf16.msra.mxu0 %v11348
    %11897 = vmatprep.subr.bf16.mxu0 %v11355
    %11898 = vmatpush1.bf16.msra.mxu0 %v11354
    %11899 = vmatprep.mubr.bf16.mxu0 %v9407
    %11900 = vmatmul.mubr.bf16.gmra.mrb[0].mxu0 %v9406
    %v11901 = vpop.f32.mrb[0].mxu0
    %v11902 = vadd.f32 %v11861, %v11901
    %v11903 = vpop.f32.mrb[0].mxu0
    %v11904 = vadd.f32 %v11863, %v11903
    %v11905 = vpop.f32.mrb[0].mxu0
    %v11906 = vpop.f32.mrb[0].mxu0
    %11907 = vdwg.mxu0
    %11908 = vmatprep.subr.bf16.mxu0 %v10979
    %11909 = vmatpush1.bf16.msra.mxu0 %v10978
    %11910 = vmatprep.subr.bf16.mxu0 %v10985
    %11911 = vmatpush1.bf16.msra.mxu0 %v10984
    %11912 = vmatprep.subr.bf16.mxu0 %v10991
    %11913 = vmatpush1.bf16.msra.mxu0 %v10990
    %11914 = vmatprep.subr.bf16.mxu0 %v10997
    %11915 = vmatpush1.bf16.msra.mxu0 %v10996
    %11916 = vmatprep.subr.bf16.mxu0 %v11003
    %11917 = vmatpush1.bf16.msra.mxu0 %v11002
    %11918 = vmatprep.subr.bf16.mxu0 %v11009
    %11919 = vmatpush1.bf16.msra.mxu0 %v11008
    %11920 = vmatprep.subr.bf16.mxu0 %v11015
    %11921 = vmatpush1.bf16.msra.mxu0 %v11014
    %11922 = vmatprep.subr.bf16.mxu0 %v11021
    %11923 = vmatpush1.bf16.msra.mxu0 %v11020
    %11924 = vmatprep.subr.bf16.mxu0 %v11027
    %11925 = vmatpush1.bf16.msra.mxu0 %v11026
    %11926 = vmatprep.subr.bf16.mxu0 %v11033
    %11927 = vmatpush1.bf16.msra.mxu0 %v11032
    %11928 = vmatprep.subr.bf16.mxu0 %v11039
    %11929 = vmatpush1.bf16.msra.mxu0 %v11038
    %11930 = vmatprep.subr.bf16.mxu0 %v11045
    %11931 = vmatpush1.bf16.msra.mxu0 %v11044
    %11932 = vmatprep.subr.bf16.mxu0 %v11051
    %11933 = vmatpush1.bf16.msra.mxu0 %v11050
    %11934 = vmatprep.subr.bf16.mxu0 %v11057
    %11935 = vmatpush1.bf16.msra.mxu0 %v11056
    %11936 = vmatprep.subr.bf16.mxu0 %v11063
    %11937 = vmatpush1.bf16.msra.mxu0 %v11062
    %11938 = vmatprep.subr.bf16.mxu0 %v11069
    %11939 = vmatpush1.bf16.msra.mxu0 %v11068
    %11940 = vmatprep.mubr.bf16.mxu0 %v9401
    %11941 = vmatmul.mubr.bf16.gmra.mrb[0].mxu0 %v9400
    %v11942 = vpop.f32.mrb[0].mxu0
    %v11943 = vadd.f32 %v9805, %v11942
    %v11944 = vpop.f32.mrb[0].mxu0
    %v11945 = vadd.f32 %v9809, %v11944
    %v11946 = vpop.f32.mrb[0].mxu0
    %v11947 = vpop.f32.mrb[0].mxu0
    %11948 = vdwg.mxu0
    %11949 = vmatprep.subr.bf16.mxu0 %v11075
    %11950 = vmatpush1.bf16.msra.mxu0 %v11074
    %11951 = vmatprep.subr.bf16.mxu0 %v11081
    %11952 = vmatpush1.bf16.msra.mxu0 %v11080
    %11953 = vmatprep.subr.bf16.mxu0 %v11087
    %11954 = vmatpush1.bf16.msra.mxu0 %v11086
    %11955 = vmatprep.subr.bf16.mxu0 %v11093
    %11956 = vmatpush1.bf16.msra.mxu0 %v11092
    %11957 = vmatprep.subr.bf16.mxu0 %v11099
    %11958 = vmatpush1.bf16.msra.mxu0 %v11098
    %11959 = vmatprep.subr.bf16.mxu0 %v11105
    %11960 = vmatpush1.bf16.msra.mxu0 %v11104
    %11961 = vmatprep.subr.bf16.mxu0 %v11111
    %11962 = vmatpush1.bf16.msra.mxu0 %v11110
    %11963 = vmatprep.subr.bf16.mxu0 %v11117
    %11964 = vmatpush1.bf16.msra.mxu0 %v11116
    %11965 = vmatprep.subr.bf16.mxu0 %v11123
    %11966 = vmatpush1.bf16.msra.mxu0 %v11122
    %11967 = vmatprep.subr.bf16.mxu0 %v11129
    %11968 = vmatpush1.bf16.msra.mxu0 %v11128
    %11969 = vmatprep.subr.bf16.mxu0 %v11135
    %11970 = vmatpush1.bf16.msra.mxu0 %v11134
    %11971 = vmatprep.subr.bf16.mxu0 %v11141
    %11972 = vmatpush1.bf16.msra.mxu0 %v11140
    %11973 = vmatprep.subr.bf16.mxu0 %v11147
    %11974 = vmatpush1.bf16.msra.mxu0 %v11146
    %11975 = vmatprep.subr.bf16.mxu0 %v11153
    %11976 = vmatpush1.bf16.msra.mxu0 %v11152
    %11977 = vmatprep.subr.bf16.mxu0 %v11159
    %11978 = vmatpush1.bf16.msra.mxu0 %v11158
    %11979 = vmatprep.subr.bf16.mxu0 %v11165
    %11980 = vmatpush1.bf16.msra.mxu0 %v11164
    %11981 = vmatprep.mubr.bf16.mxu0 %v9403
    %11982 = vmatmul.mubr.bf16.gmra.mrb[0].mxu0 %v9402
    %v11983 = vpop.f32.mrb[0].mxu0
    %v11984 = vadd.f32 %v11943, %v11983
    %v11985 = vpop.f32.mrb[0].mxu0
    %v11986 = vadd.f32 %v11945, %v11985
    %v11987 = vpop.f32.mrb[0].mxu0
    %v11988 = vpop.f32.mrb[0].mxu0
    %11989 = vdwg.mxu0
    %11990 = vmatprep.subr.bf16.mxu0 %v11171
    %11991 = vmatpush1.bf16.msra.mxu0 %v11170
    %11992 = vmatprep.subr.bf16.mxu0 %v11177
    %11993 = vmatpush1.bf16.msra.mxu0 %v11176
    %11994 = vmatprep.subr.bf16.mxu0 %v11183
    %11995 = vmatpush1.bf16.msra.mxu0 %v11182
    %11996 = vmatprep.subr.bf16.mxu0 %v11189
    %11997 = vmatpush1.bf16.msra.mxu0 %v11188
    %11998 = vmatprep.subr.bf16.mxu0 %v11195
    %11999 = vmatpush1.bf16.msra.mxu0 %v11194
    %12000 = vmatprep.subr.bf16.mxu0 %v11201
    %12001 = vmatpush1.bf16.msra.mxu0 %v11200
    %12002 = vmatprep.subr.bf16.mxu0 %v11207
    %12003 = vmatpush1.bf16.msra.mxu0 %v11206
    %12004 = vmatprep.subr.bf16.mxu0 %v11213
    %12005 = vmatpush1.bf16.msra.mxu0 %v11212
    %12006 = vmatprep.subr.bf16.mxu0 %v11219
    %12007 = vmatpush1.bf16.msra.mxu0 %v11218
    %12008 = vmatprep.subr.bf16.mxu0 %v11225
    %12009 = vmatpush1.bf16.msra.mxu0 %v11224
    %12010 = vmatprep.subr.bf16.mxu0 %v11231
    %12011 = vmatpush1.bf16.msra.mxu0 %v11230
    %12012 = vmatprep.subr.bf16.mxu0 %v11237
    %12013 = vmatpush1.bf16.msra.mxu0 %v11236
    %12014 = vmatprep.subr.bf16.mxu0 %v11243
    %12015 = vmatpush1.bf16.msra.mxu0 %v11242
    %12016 = vmatprep.subr.bf16.mxu0 %v11249
    %12017 = vmatpush1.bf16.msra.mxu0 %v11248
    %12018 = vmatprep.subr.bf16.mxu0 %v11255
    %12019 = vmatpush1.bf16.msra.mxu0 %v11254
    %12020 = vmatprep.subr.bf16.mxu0 %v11261
    %12021 = vmatpush1.bf16.msra.mxu0 %v11260
    %12022 = vmatprep.mubr.bf16.mxu0 %v9405
    %12023 = vmatmul.mubr.bf16.gmra.mrb[0].mxu0 %v9404
    %v12024 = vpop.f32.mrb[0].mxu0
    %v12025 = vadd.f32 %v11984, %v12024
    %v12026 = vpop.f32.mrb[0].mxu0
    %v12027 = vadd.f32 %v11986, %v12026
    %v12028 = vpop.f32.mrb[0].mxu0
    %v12029 = vpop.f32.mrb[0].mxu0
    %12030 = vdwg.mxu0
    %12031 = vmatprep.subr.bf16.mxu0 %v11267
    %12032 = vmatpush1.bf16.msra.mxu0 %v11266
    %12033 = vmatprep.subr.bf16.mxu0 %v11273
    %12034 = vmatpush1.bf16.msra.mxu0 %v11272
    %12035 = vmatprep.subr.bf16.mxu0 %v11279
    %12036 = vmatpush1.bf16.msra.mxu0 %v11278
    %12037 = vmatprep.subr.bf16.mxu0 %v11285
    %12038 = vmatpush1.bf16.msra.mxu0 %v11284
    %12039 = vmatprep.subr.bf16.mxu0 %v11291
    %12040 = vmatpush1.bf16.msra.mxu0 %v11290
    %12041 = vmatprep.subr.bf16.mxu0 %v11297
    %12042 = vmatpush1.bf16.msra.mxu0 %v11296
    %12043 = vmatprep.subr.bf16.mxu0 %v11303
    %12044 = vmatpush1.bf16.msra.mxu0 %v11302
    %12045 = vmatprep.subr.bf16.mxu0 %v11309
    %12046 = vmatpush1.bf16.msra.mxu0 %v11308
    %12047 = vmatprep.subr.bf16.mxu0 %v11315
    %12048 = vmatpush1.bf16.msra.mxu0 %v11314
    %12049 = vmatprep.subr.bf16.mxu0 %v11321
    %12050 = vmatpush1.bf16.msra.mxu0 %v11320
    %12051 = vmatprep.subr.bf16.mxu0 %v11327
    %12052 = vmatpush1.bf16.msra.mxu0 %v11326
    %12053 = vmatprep.subr.bf16.mxu0 %v11333
    %12054 = vmatpush1.bf16.msra.mxu0 %v11332
    %12055 = vmatprep.subr.bf16.mxu0 %v11339
    %12056 = vmatpush1.bf16.msra.mxu0 %v11338
    %12057 = vmatprep.subr.bf16.mxu0 %v11345
    %12058 = vmatpush1.bf16.msra.mxu0 %v11344
    %12059 = vmatprep.subr.bf16.mxu0 %v11351
    %12060 = vmatpush1.bf16.msra.mxu0 %v11350
    %12061 = vmatprep.subr.bf16.mxu0 %v11357
    %12062 = vmatpush1.bf16.msra.mxu0 %v11356
    %12063 = vmatprep.mubr.bf16.mxu0 %v9407
    %12064 = vmatmul.mubr.bf16.gmra.mrb[0].mxu0 %v9406
    %v12065 = vpop.f32.mrb[0].mxu0
    %v12066 = vadd.f32 %v12025, %v12065
    %v12067 = vpop.f32.mrb[0].mxu0
    %v12068 = vadd.f32 %v12027, %v12067
    %v12069 = vpop.f32.mrb[0].mxu0
    %v12070 = vpop.f32.mrb[0].mxu0
    %12071 = vdwg.mxu0
    %12072 = vmatprep.subr.bf16.mxu0 %v10981
    %12073 = vmatpush1.bf16.msra.mxu0 %v10980
    %12074 = vmatprep.subr.bf16.mxu0 %v10987
    %12075 = vmatpush1.bf16.msra.mxu0 %v10986
    %12076 = vmatprep.subr.bf16.mxu0 %v10993
    %12077 = vmatpush1.bf16.msra.mxu0 %v10992
    %12078 = vmatprep.subr.bf16.mxu0 %v10999
    %12079 = vmatpush1.bf16.msra.mxu0 %v10998
    %12080 = vmatprep.subr.bf16.mxu0 %v11005
    %12081 = vmatpush1.bf16.msra.mxu0 %v11004
    %12082 = vmatprep.subr.bf16.mxu0 %v11011
    %12083 = vmatpush1.bf16.msra.mxu0 %v11010
    %12084 = vmatprep.subr.bf16.mxu0 %v11017
    %12085 = vmatpush1.bf16.msra.mxu0 %v11016
    %12086 = vmatprep.subr.bf16.mxu0 %v11023
    %12087 = vmatpush1.bf16.msra.mxu0 %v11022
    %12088 = vmatprep.subr.bf16.mxu0 %v11029
    %12089 = vmatpush1.bf16.msra.mxu0 %v11028
    %12090 = vmatprep.subr.bf16.mxu0 %v11035
    %12091 = vmatpush1.bf16.msra.mxu0 %v11034
    %12092 = vmatprep.subr.bf16.mxu0 %v11041
    %12093 = vmatpush1.bf16.msra.mxu0 %v11040
    %12094 = vmatprep.subr.bf16.mxu0 %v11047
    %12095 = vmatpush1.bf16.msra.mxu0 %v11046
    %12096 = vmatprep.subr.bf16.mxu0 %v11053
    %12097 = vmatpush1.bf16.msra.mxu0 %v11052
    %12098 = vmatprep.subr.bf16.mxu0 %v11059
    %12099 = vmatpush1.bf16.msra.mxu0 %v11058
    %12100 = vmatprep.subr.bf16.mxu0 %v11065
    %12101 = vmatpush1.bf16.msra.mxu0 %v11064
    %12102 = vmatprep.subr.bf16.mxu0 %v11071
    %12103 = vmatpush1.bf16.msra.mxu0 %v11070
    %12104 = vmatprep.mubr.bf16.mxu0 %v9401
    %12105 = vmatmul.mubr.bf16.gmra.mrb[0].mxu0 %v9400
    %v12106 = vpop.f32.mrb[0].mxu0
    %v12107 = vadd.f32 %v9813, %v12106
    %v12108 = vpop.f32.mrb[0].mxu0
    %v12109 = vadd.f32 %v9817, %v12108
    %v12110 = vpop.f32.mrb[0].mxu0
    %v12111 = vpop.f32.mrb[0].mxu0
    %12112 = vdwg.mxu0
    %12113 = vmatprep.subr.bf16.mxu0 %v11077
    %12114 = vmatpush1.bf16.msra.mxu0 %v11076
    %12115 = vmatprep.subr.bf16.mxu0 %v11083
    %12116 = vmatpush1.bf16.msra.mxu0 %v11082
    %12117 = vmatprep.subr.bf16.mxu0 %v11089
    %12118 = vmatpush1.bf16.msra.mxu0 %v11088
    %12119 = vmatprep.subr.bf16.mxu0 %v11095
    %12120 = vmatpush1.bf16.msra.mxu0 %v11094
    %12121 = vmatprep.subr.bf16.mxu0 %v11101
    %12122 = vmatpush1.bf16.msra.mxu0 %v11100
    %12123 = vmatprep.subr.bf16.mxu0 %v11107
    %12124 = vmatpush1.bf16.msra.mxu0 %v11106
    %12125 = vmatprep.subr.bf16.mxu0 %v11113
    %12126 = vmatpush1.bf16.msra.mxu0 %v11112
    %12127 = vmatprep.subr.bf16.mxu0 %v11119
    %12128 = vmatpush1.bf16.msra.mxu0 %v11118
    %12129 = vmatprep.subr.bf16.mxu0 %v11125
    %12130 = vmatpush1.bf16.msra.mxu0 %v11124
    %12131 = vmatprep.subr.bf16.mxu0 %v11131
    %12132 = vmatpush1.bf16.msra.mxu0 %v11130
    %12133 = vmatprep.subr.bf16.mxu0 %v11137
    %12134 = vmatpush1.bf16.msra.mxu0 %v11136
    %12135 = vmatprep.subr.bf16.mxu0 %v11143
    %12136 = vmatpush1.bf16.msra.mxu0 %v11142
    %12137 = vmatprep.subr.bf16.mxu0 %v11149
    %12138 = vmatpush1.bf16.msra.mxu0 %v11148
    %12139 = vmatprep.subr.bf16.mxu0 %v11155
    %12140 = vmatpush1.bf16.msra.mxu0 %v11154
    %12141 = vmatprep.subr.bf16.mxu0 %v11161
    %12142 = vmatpush1.bf16.msra.mxu0 %v11160
    %12143 = vmatprep.subr.bf16.mxu0 %v11167
    %12144 = vmatpush1.bf16.msra.mxu0 %v11166
    %12145 = vmatprep.mubr.bf16.mxu0 %v9403
    %12146 = vmatmul.mubr.bf16.gmra.mrb[0].mxu0 %v9402
    %v12147 = vpop.f32.mrb[0].mxu0
    %v12148 = vadd.f32 %v12107, %v12147
    %v12149 = vpop.f32.mrb[0].mxu0
    %v12150 = vadd.f32 %v12109, %v12149
    %v12151 = vpop.f32.mrb[0].mxu0
    %v12152 = vpop.f32.mrb[0].mxu0
    %12153 = vdwg.mxu0
    %12154 = vmatprep.subr.bf16.mxu0 %v11173
    %12155 = vmatpush1.bf16.msra.mxu0 %v11172
    %12156 = vmatprep.subr.bf16.mxu0 %v11179
    %12157 = vmatpush1.bf16.msra.mxu0 %v11178
    %12158 = vmatprep.subr.bf16.mxu0 %v11185
    %12159 = vmatpush1.bf16.msra.mxu0 %v11184
    %12160 = vmatprep.subr.bf16.mxu0 %v11191
    %12161 = vmatpush1.bf16.msra.mxu0 %v11190
    %12162 = vmatprep.subr.bf16.mxu0 %v11197
    %12163 = vmatpush1.bf16.msra.mxu0 %v11196
    %12164 = vmatprep.subr.bf16.mxu0 %v11203
    %12165 = vmatpush1.bf16.msra.mxu0 %v11202
    %12166 = vmatprep.subr.bf16.mxu0 %v11209
    %12167 = vmatpush1.bf16.msra.mxu0 %v11208
    %12168 = vmatprep.subr.bf16.mxu0 %v11215
    %12169 = vmatpush1.bf16.msra.mxu0 %v11214
    %12170 = vmatprep.subr.bf16.mxu0 %v11221
    %12171 = vmatpush1.bf16.msra.mxu0 %v11220
    %12172 = vmatprep.subr.bf16.mxu0 %v11227
    %12173 = vmatpush1.bf16.msra.mxu0 %v11226
    %12174 = vmatprep.subr.bf16.mxu0 %v11233
    %12175 = vmatpush1.bf16.msra.mxu0 %v11232
    %12176 = vmatprep.subr.bf16.mxu0 %v11239
    %12177 = vmatpush1.bf16.msra.mxu0 %v11238
    %12178 = vmatprep.subr.bf16.mxu0 %v11245
    %12179 = vmatpush1.bf16.msra.mxu0 %v11244
    %12180 = vmatprep.subr.bf16.mxu0 %v11251
    %12181 = vmatpush1.bf16.msra.mxu0 %v11250
    %12182 = vmatprep.subr.bf16.mxu0 %v11257
    %12183 = vmatpush1.bf16.msra.mxu0 %v11256
    %12184 = vmatprep.subr.bf16.mxu0 %v11263
    %12185 = vmatpush1.bf16.msra.mxu0 %v11262
    %12186 = vmatprep.mubr.bf16.mxu0 %v9405
    %12187 = vmatmul.mubr.bf16.gmra.mrb[0].mxu0 %v9404
    %v12188 = vpop.f32.mrb[0].mxu0
    %v12189 = vadd.f32 %v12148, %v12188
    %v12190 = vpop.f32.mrb[0].mxu0
    %v12191 = vadd.f32 %v12150, %v12190
    %v12192 = vpop.f32.mrb[0].mxu0
    %v12193 = vpop.f32.mrb[0].mxu0
    %12194 = vdwg.mxu0
    %12195 = vmatprep.subr.bf16.mxu0 %v11269
    %12196 = vmatpush1.bf16.msra.mxu0 %v11268
    %12197 = vmatprep.subr.bf16.mxu0 %v11275
    %12198 = vmatpush1.bf16.msra.mxu0 %v11274
    %12199 = vmatprep.subr.bf16.mxu0 %v11281
    %12200 = vmatpush1.bf16.msra.mxu0 %v11280
    %12201 = vmatprep.subr.bf16.mxu0 %v11287
    %12202 = vmatpush1.bf16.msra.mxu0 %v11286
    %12203 = vmatprep.subr.bf16.mxu0 %v11293
    %12204 = vmatpush1.bf16.msra.mxu0 %v11292
    %12205 = vmatprep.subr.bf16.mxu0 %v11299
    %12206 = vmatpush1.bf16.msra.mxu0 %v11298
    %12207 = vmatprep.subr.bf16.mxu0 %v11305
    %12208 = vmatpush1.bf16.msra.mxu0 %v11304
    %12209 = vmatprep.subr.bf16.mxu0 %v11311
    %12210 = vmatpush1.bf16.msra.mxu0 %v11310
    %12211 = vmatprep.subr.bf16.mxu0 %v11317
    %12212 = vmatpush1.bf16.msra.mxu0 %v11316
    %12213 = vmatprep.subr.bf16.mxu0 %v11323
    %12214 = vmatpush1.bf16.msra.mxu0 %v11322
    %12215 = vmatprep.subr.bf16.mxu0 %v11329
    %12216 = vmatpush1.bf16.msra.mxu0 %v11328
    %12217 = vmatprep.subr.bf16.mxu0 %v11335
    %12218 = vmatpush1.bf16.msra.mxu0 %v11334
    %12219 = vmatprep.subr.bf16.mxu0 %v11341
    %12220 = vmatpush1.bf16.msra.mxu0 %v11340
    %12221 = vmatprep.subr.bf16.mxu0 %v11347
    %12222 = vmatpush1.bf16.msra.mxu0 %v11346
    %12223 = vmatprep.subr.bf16.mxu0 %v11353
    %12224 = vmatpush1.bf16.msra.mxu0 %v11352
    %12225 = vmatprep.subr.bf16.mxu0 %v11359
    %12226 = vmatpush1.bf16.msra.mxu0 %v11358
    %12227 = vmatprep.mubr.bf16.mxu0 %v9407
    %12228 = vmatmul.mubr.bf16.gmra.mrb[0].mxu0 %v9406
    %v12229 = vpop.f32.mrb[0].mxu0
    %v12230 = vadd.f32 %v12189, %v12229
    %v12231 = vpop.f32.mrb[0].mxu0
    %v12232 = vadd.f32 %v12191, %v12231
    %v12233 = vpop.f32.mrb[0].mxu0
    %v12234 = vpop.f32.mrb[0].mxu0
    %12235 = vdwg.mxu0
    %v12242 = vcombine.low %v11902, %v11904
    %v12243 = vcombine.low %v12066, %v12068
    %v12245 = vunpack.c.l.s4 1983009808
    %v12246 = vunpack.c.0.s8 %v12245
    %v12247 = vlaneseq
    %v12248 = vshrl.u32 %v12247, 7
    %v12249 = vsub.s32 %v12246, %v12248
    %v12250 = vrot.slane %v12242, %v12249
    %v12252 = vunpack.c.l.s4 1983009808
    %v12253 = vunpack.c.0.s8 %v12252
    %v12254 = vlaneseq
    %v12255 = vshrl.u32 %v12254, 7
    %v12256 = vsub.s32 %v12253, %v12255
    %v12257 = vrot.slane %v12243, %v12256
    %v12258 = vcombine.low %v12250, %v12257
    %v12259 = vcombine.low %v12230, %v12232
    %v12261 = vunpack.c.l.s4 1983009808
    %v12262 = vunpack.c.0.s8 %v12261
    %v12263 = vlaneseq
    %v12264 = vshrl.u32 %v12263, 7
    %v12265 = vsub.s32 %v12262, %v12264
    %v12266 = vrot.slane %v12259, %v12265
    %v12269 = vadd.f32 %v308, %v12258
    %v12270 = vadd.f32 %v309, %v12266
    %v12273 = vcombine.high %v12269, %v12269
    %v12275 = vunpack.c.l.s4 1983009808
    %v12276 = vunpack.c.0.s8 %v12275
    %v12277 = vlaneseq
    %v12278 = vshrl.u32 %v12277, 7
    %v12279 = vsub.s32 %v12276, %v12278
    %v12280 = vrot.slane %v12269, %v12279
    %v12282 = vunpack.c.l.s4 1983009808
    %v12283 = vunpack.c.0.s8 %v12282
    %v12284 = vlaneseq
    %v12285 = vshrl.u32 %v12284, 7
    %v12286 = vsub.s32 %v12283, %v12285
    %v12287 = vrot.slane %v12273, %v12286
    %v12288 = vcombine.high %v12280, %v12280
    %v12289 = vcombine.high %v12287, %v12287
    %v12291 = vunpack.c.l.s4 1983009808
    %v12292 = vunpack.c.0.s8 %v12291
    %v12293 = vlaneseq
    %v12294 = vshrl.u32 %v12293, 7
    %v12295 = vsub.s32 %v12292, %v12294
    %v12296 = vrot.slane %v12270, %v12295
    %v12297 = vcombine.high %v12296, %v12296
    %vm12304 = vcmask 1041408
    %v12305 = vsel %vm12304, %v12280, 0.0
    %v12306 = vsel %vm12304, %v12288, 0.0
    %v12307 = vadd.f32 %v12305, %v12306
    %v12308 = vsel %vm12304, %v12287, 0.0
    %v12309 = vadd.f32 %v12307, %v12308
    %v12310 = vsel %vm12304, %v12289, 0.0
    %v12311 = vadd.f32 %v12309, %v12310
    %v12312 = vsel %vm12304, %v12296, 0.0
    %v12313 = vadd.f32 %v12311, %v12312
    %v12314 = vsel %vm12304, %v12297, 0.0
    %v12315 = vadd.f32 %v12313, %v12314
    %12316 = vadd.xlane.f32.xlu0 %v12315
    %v12317 = vpop.xlane.xlu0 %12316
    %v12318 = vrcp.pop 768.0
    %v12319 = vmul.f32 %v12317, %v12318
    %v12322 = vunpack.c.l.s4 269488144
    %v12323 = vunpack.c.0.s8 %v12322
    %v12324 = vlaneseq
    %v12325 = vshrl.u32 %v12324, 7
    %v12326 = vsub.s32 %v12323, %v12325
    %v12327 = vrot.slane %v12319, %v12326
    %v12329 = vsub.f32 %v12269, %v12327
    %v12330 = vsub.f32 %v12270, %v12327
    %v12331 = vmul.f32 %v12329, %v12329
    %v12332 = vmul.f32 %v12330, %v12330
    %v12335 = vcombine.high %v12331, %v12331
    %v12337 = vunpack.c.l.s4 1983009808
    %v12338 = vunpack.c.0.s8 %v12337
    %v12339 = vlaneseq
    %v12340 = vshrl.u32 %v12339, 7
    %v12341 = vsub.s32 %v12338, %v12340
    %v12342 = vrot.slane %v12331, %v12341
    %v12344 = vunpack.c.l.s4 1983009808
    %v12345 = vunpack.c.0.s8 %v12344
    %v12346 = vlaneseq
    %v12347 = vshrl.u32 %v12346, 7
    %v12348 = vsub.s32 %v12345, %v12347
    %v12349 = vrot.slane %v12335, %v12348
    %v12350 = vcombine.high %v12342, %v12342
    %v12351 = vcombine.high %v12349, %v12349
    %v12353 = vunpack.c.l.s4 1983009808
    %v12354 = vunpack.c.0.s8 %v12353
    %v12355 = vlaneseq
    %v12356 = vshrl.u32 %v12355, 7
    %v12357 = vsub.s32 %v12354, %v12356
    %v12358 = vrot.slane %v12332, %v12357
    %v12359 = vcombine.high %v12358, %v12358
    %v12366 = vsel %vm12304, %v12342, 0.0
    %v12367 = vsel %vm12304, %v12350, 0.0
    %v12368 = vadd.f32 %v12366, %v12367
    %v12369 = vsel %vm12304, %v12349, 0.0
    %v12370 = vadd.f32 %v12368, %v12369
    %v12371 = vsel %vm12304, %v12351, 0.0
    %v12372 = vadd.f32 %v12370, %v12371
    %v12373 = vsel %vm12304, %v12358, 0.0
    %v12374 = vadd.f32 %v12372, %v12373
    %v12375 = vsel %vm12304, %v12359, 0.0
    %v12376 = vadd.f32 %v12374, %v12375
    %12377 = vadd.xlane.f32.xlu0 %v12376
    %v12378 = vpop.xlane.xlu0 %12377
    %v12379 = vmul.f32 %v12378, %v12318
    %v12380 = vadd.f32 %v12379, 1e-05
    %v12381 = vrsqrt.pop %v12380
    %v12384 = vunpack.c.l.s4 269488144
    %v12385 = vunpack.c.0.s8 %v12384
    %v12386 = vlaneseq
    %v12387 = vshrl.u32 %v12386, 7
    %v12388 = vsub.s32 %v12385, %v12387
    %v12389 = vrot.slane %v12381, %v12388
    %v12391 = vmul.f32 %v12329, %v12389
    %v12392 = vmul.f32 %v12330, %v12389
    %v12393 = vld [vmem:[#allocation19] sm:$0x3f]
    %v12395 = vlaneseq
    %v12396 = vshrl.u32 %v12395, 7
    %v12397 = vsub.s32 0, %v12396
    %v12398 = vrot.slane %v12393, %v12397
    %v12399 = vlaneseq
    %v12400 = vshrl.u32 %v12399, 7
    %v12401 = vsub.s32 1, %v12400
    %v12402 = vrot.slane %v12393, %v12401
    %v12403 = vlaneseq
    %v12404 = vshrl.u32 %v12403, 7
    %v12405 = vsub.s32 2, %v12404
    %v12406 = vrot.slane %v12393, %v12405
    %v12407 = vlaneseq
    %v12408 = vshrl.u32 %v12407, 7
    %v12409 = vsub.s32 3, %v12408
    %v12410 = vrot.slane %v12393, %v12409
    %v12411 = vlaneseq
    %v12412 = vshrl.u32 %v12411, 7
    %v12413 = vsub.s32 4, %v12412
    %v12414 = vrot.slane %v12393, %v12413
    %v12415 = vlaneseq
    %v12416 = vshrl.u32 %v12415, 7
    %v12417 = vsub.s32 5, %v12416
    %v12418 = vrot.slane %v12393, %v12417
    %v12419 = vcombine.low %v12398, %v12402
    %v12420 = vcombine.low %v12406, %v12410
    %v12422 = vunpack.c.l.s4 1983009808
    %v12423 = vunpack.c.0.s8 %v12422
    %v12424 = vlaneseq
    %v12425 = vshrl.u32 %v12424, 7
    %v12426 = vsub.s32 %v12423, %v12425
    %v12427 = vrot.slane %v12419, %v12426
    %v12429 = vunpack.c.l.s4 1983009808
    %v12430 = vunpack.c.0.s8 %v12429
    %v12431 = vlaneseq
    %v12432 = vshrl.u32 %v12431, 7
    %v12433 = vsub.s32 %v12430, %v12432
    %v12434 = vrot.slane %v12420, %v12433
    %v12435 = vcombine.low %v12427, %v12434
    %v12436 = vcombine.low %v12414, %v12418
    %v12438 = vunpack.c.l.s4 1983009808
    %v12439 = vunpack.c.0.s8 %v12438
    %v12440 = vlaneseq
    %v12441 = vshrl.u32 %v12440, 7
    %v12442 = vsub.s32 %v12439, %v12441
    %v12443 = vrot.slane %v12436, %v12442
    %v12446 = vmul.f32 %v12391, %v12435
    %v12447 = vmul.f32 %v12392, %v12443
    %v12448 = vld [vmem:[#allocation20] sm:$0x3f]
    %v12450 = vlaneseq
    %v12451 = vshrl.u32 %v12450, 7
    %v12452 = vsub.s32 0, %v12451
    %v12453 = vrot.slane %v12448, %v12452
    %v12454 = vlaneseq
    %v12455 = vshrl.u32 %v12454, 7
    %v12456 = vsub.s32 1, %v12455
    %v12457 = vrot.slane %v12448, %v12456
    %v12458 = vlaneseq
    %v12459 = vshrl.u32 %v12458, 7
    %v12460 = vsub.s32 2, %v12459
    %v12461 = vrot.slane %v12448, %v12460
    %v12462 = vlaneseq
    %v12463 = vshrl.u32 %v12462, 7
    %v12464 = vsub.s32 3, %v12463
    %v12465 = vrot.slane %v12448, %v12464
    %v12466 = vlaneseq
    %v12467 = vshrl.u32 %v12466, 7
    %v12468 = vsub.s32 4, %v12467
    %v12469 = vrot.slane %v12448, %v12468
    %v12470 = vlaneseq
    %v12471 = vshrl.u32 %v12470, 7
    %v12472 = vsub.s32 5, %v12471
    %v12473 = vrot.slane %v12448, %v12472
    %v12474 = vcombine.low %v12453, %v12457
    %v12475 = vcombine.low %v12461, %v12465
    %v12477 = vunpack.c.l.s4 1983009808
    %v12478 = vunpack.c.0.s8 %v12477
    %v12479 = vlaneseq
    %v12480 = vshrl.u32 %v12479, 7
    %v12481 = vsub.s32 %v12478, %v12480
    %v12482 = vrot.slane %v12474, %v12481
    %v12484 = vunpack.c.l.s4 1983009808
    %v12485 = vunpack.c.0.s8 %v12484
    %v12486 = vlaneseq
    %v12487 = vshrl.u32 %v12486, 7
    %v12488 = vsub.s32 %v12485, %v12487
    %v12489 = vrot.slane %v12475, %v12488
    %v12490 = vcombine.low %v12482, %v12489
    %v12491 = vcombine.low %v12469, %v12473
    %v12493 = vunpack.c.l.s4 1983009808
    %v12494 = vunpack.c.0.s8 %v12493
    %v12495 = vlaneseq
    %v12496 = vshrl.u32 %v12495, 7
    %v12497 = vsub.s32 %v12494, %v12496
    %v12498 = vrot.slane %v12491, %v12497
    %v12501 = vadd.f32 %v12446, %v12490
    %v12502 = vadd.f32 %v12447, %v12498
    %v12505 = vcombine.high %v12501, %v12501
    %v12507 = vunpack.c.l.s4 1983009808
    %v12508 = vunpack.c.0.s8 %v12507
    %v12509 = vlaneseq
    %v12510 = vshrl.u32 %v12509, 7
    %v12511 = vsub.s32 %v12508, %v12510
    %v12512 = vrot.slane %v12501, %v12511
    %v12514 = vunpack.c.l.s4 1983009808
    %v12515 = vunpack.c.0.s8 %v12514
    %v12516 = vlaneseq
    %v12517 = vshrl.u32 %v12516, 7
    %v12518 = vsub.s32 %v12515, %v12517
    %v12519 = vrot.slane %v12505, %v12518
    %v12520 = vcombine.high %v12512, %v12512
    %v12521 = vcombine.high %v12519, %v12519
    %v12523 = vunpack.c.l.s4 1983009808
    %v12524 = vunpack.c.0.s8 %v12523
    %v12525 = vlaneseq
    %v12526 = vshrl.u32 %v12525, 7
    %v12527 = vsub.s32 %v12524, %v12526
    %v12528 = vrot.slane %v12502, %v12527
    %v12529 = vcombine.high %v12528, %v12528
    %v12536 = vpack.c.bf16 %v12512, %v12512
    %v12537 = vpack.c.bf16 %v12520, %v12520
    %v12538 = vpack.c.bf16 %v12519, %v12519
    %v12539 = vpack.c.bf16 %v12521, %v12521
    %v12540 = vpack.c.bf16 %v12528, %v12528
    %v12541 = vpack.c.bf16 %v12529, %v12529
    %v12542 = vld [vmem:[#allocation22] sm:$0xff]
    %v12543 = vld [vmem:[#allocation22 + $0x8] sm:$0xff]
    %v12544 = vld [vmem:[#allocation22 + $0x10] sm:$0xff]
    %v12545 = vld [vmem:[#allocation22 + $0x18] sm:$0xff]
    %v12546 = vld [vmem:[#allocation22 + $0x20] sm:$0xff]
    %v12547 = vld [vmem:[#allocation22 + $0x28] sm:$0xff]
    %v12548 = vld [vmem:[#allocation22 + $0x30] sm:$0xff]
    %v12549 = vld [vmem:[#allocation22 + $0x38] sm:$0xff]
    %v12550 = vld [vmem:[#allocation22 + $0x40] sm:$0xff]
    %v12551 = vld [vmem:[#allocation22 + $0x48] sm:$0xff]
    %v12552 = vld [vmem:[#allocation22 + $0x50] sm:$0xff]
    %v12553 = vld [vmem:[#allocation22 + $0x58] sm:$0xff]
    %v12554 = vld [vmem:[#allocation22 + $0x60] sm:$0xff]
    %v12555 = vld [vmem:[#allocation22 + $0x68] sm:$0xff]
    %v12556 = vld [vmem:[#allocation22 + $0x70] sm:$0xff]
    %v12557 = vld [vmem:[#allocation22 + $0x78] sm:$0xff]
    %v12558 = vld [vmem:[#allocation22 + $0x80] sm:$0xff]
    %v12559 = vld [vmem:[#allocation22 + $0x88] sm:$0xff]
    %v12560 = vld [vmem:[#allocation22 + $0x90] sm:$0xff]
    %v12561 = vld [vmem:[#allocation22 + $0x98] sm:$0xff]
    %v12562 = vld [vmem:[#allocation22 + $0xa0] sm:$0xff]
    %v12563 = vld [vmem:[#allocation22 + $0xa8] sm:$0xff]
    %v12564 = vld [vmem:[#allocation22 + $0xb0] sm:$0xff]
    %v12565 = vld [vmem:[#allocation22 + $0xb8] sm:$0xff]
    %v12566 = vld [vmem:[#allocation22 + $0xc0] sm:$0xff]
    %v12567 = vld [vmem:[#allocation22 + $0xc8] sm:$0xff]
    %v12568 = vld [vmem:[#allocation22 + $0xd0] sm:$0xff]
    %v12569 = vld [vmem:[#allocation22 + $0xd8] sm:$0xff]
    %v12570 = vld [vmem:[#allocation22 + $0xe0] sm:$0xff]
    %v12571 = vld [vmem:[#allocation22 + $0xe8] sm:$0xff]
    %v12572 = vld [vmem:[#allocation22 + $0xf0] sm:$0xff]
    %v12573 = vld [vmem:[#allocation22 + $0xf8] sm:$0xff]
    %v12574 = vld [vmem:[#allocation22 + $0x100] sm:$0xff]
    %v12575 = vld [vmem:[#allocation22 + $0x108] sm:$0xff]
    %v12576 = vld [vmem:[#allocation22 + $0x110] sm:$0xff]
    %v12577 = vld [vmem:[#allocation22 + $0x118] sm:$0xff]
    %v12578 = vld [vmem:[#allocation22 + $0x120] sm:$0xff]
    %v12579 = vld [vmem:[#allocation22 + $0x128] sm:$0xff]
    %v12580 = vld [vmem:[#allocation22 + $0x130] sm:$0xff]
    %v12581 = vld [vmem:[#allocation22 + $0x138] sm:$0xff]
    %v12582 = vld [vmem:[#allocation22 + $0x140] sm:$0xff]
    %v12583 = vld [vmem:[#allocation22 + $0x148] sm:$0xff]
    %v12584 = vld [vmem:[#allocation22 + $0x150] sm:$0xff]
    %v12585 = vld [vmem:[#allocation22 + $0x158] sm:$0xff]
    %v12586 = vld [vmem:[#allocation22 + $0x160] sm:$0xff]
    %v12587 = vld [vmem:[#allocation22 + $0x168] sm:$0xff]
    %v12588 = vld [vmem:[#allocation22 + $0x170] sm:$0xff]
    %v12589 = vld [vmem:[#allocation22 + $0x178] sm:$0xff]
    %v12590 = vld [vmem:[#allocation22 + $0x180] sm:$0xff]
    %v12591 = vld [vmem:[#allocation22 + $0x188] sm:$0xff]
    %v12592 = vld [vmem:[#allocation22 + $0x190] sm:$0xff]
    %v12593 = vld [vmem:[#allocation22 + $0x198] sm:$0xff]
    %v12594 = vld [vmem:[#allocation22 + $0x1a0] sm:$0xff]
    %v12595 = vld [vmem:[#allocation22 + $0x1a8] sm:$0xff]
    %v12596 = vld [vmem:[#allocation22 + $0x1b0] sm:$0xff]
    %v12597 = vld [vmem:[#allocation22 + $0x1b8] sm:$0xff]
    %v12598 = vld [vmem:[#allocation22 + $0x1c0] sm:$0xff]
    %v12599 = vld [vmem:[#allocation22 + $0x1c8] sm:$0xff]
    %v12600 = vld [vmem:[#allocation22 + $0x1d0] sm:$0xff]
    %v12601 = vld [vmem:[#allocation22 + $0x1d8] sm:$0xff]
    %v12602 = vld [vmem:[#allocation22 + $0x1e0] sm:$0xff]
    %v12603 = vld [vmem:[#allocation22 + $0x1e8] sm:$0xff]
    %v12604 = vld [vmem:[#allocation22 + $0x1f0] sm:$0xff]
    %v12605 = vld [vmem:[#allocation22 + $0x1f8] sm:$0xff]
    %v12606 = vld [vmem:[#allocation22 + $0x200] sm:$0xff]
    %v12607 = vld [vmem:[#allocation22 + $0x208] sm:$0xff]
    %v12608 = vld [vmem:[#allocation22 + $0x210] sm:$0xff]
    %v12609 = vld [vmem:[#allocation22 + $0x218] sm:$0xff]
    %v12610 = vld [vmem:[#allocation22 + $0x220] sm:$0xff]
    %v12611 = vld [vmem:[#allocation22 + $0x228] sm:$0xff]
    %v12612 = vld [vmem:[#allocation22 + $0x230] sm:$0xff]
    %v12613 = vld [vmem:[#allocation22 + $0x238] sm:$0xff]
    %v12614 = vld [vmem:[#allocation22 + $0x240] sm:$0xff]
    %v12615 = vld [vmem:[#allocation22 + $0x248] sm:$0xff]
    %v12616 = vld [vmem:[#allocation22 + $0x250] sm:$0xff]
    %v12617 = vld [vmem:[#allocation22 + $0x258] sm:$0xff]
    %v12618 = vld [vmem:[#allocation22 + $0x260] sm:$0xff]
    %v12619 = vld [vmem:[#allocation22 + $0x268] sm:$0xff]
    %v12620 = vld [vmem:[#allocation22 + $0x270] sm:$0xff]
    %v12621 = vld [vmem:[#allocation22 + $0x278] sm:$0xff]
    %v12622 = vld [vmem:[#allocation22 + $0x280] sm:$0xff]
    %v12623 = vld [vmem:[#allocation22 + $0x288] sm:$0xff]
    %v12624 = vld [vmem:[#allocation22 + $0x290] sm:$0xff]
    %v12625 = vld [vmem:[#allocation22 + $0x298] sm:$0xff]
    %v12626 = vld [vmem:[#allocation22 + $0x2a0] sm:$0xff]
    %v12627 = vld [vmem:[#allocation22 + $0x2a8] sm:$0xff]
    %v12628 = vld [vmem:[#allocation22 + $0x2b0] sm:$0xff]
    %v12629 = vld [vmem:[#allocation22 + $0x2b8] sm:$0xff]
    %v12630 = vld [vmem:[#allocation22 + $0x2c0] sm:$0xff]
    %v12631 = vld [vmem:[#allocation22 + $0x2c8] sm:$0xff]
    %v12632 = vld [vmem:[#allocation22 + $0x2d0] sm:$0xff]
    %v12633 = vld [vmem:[#allocation22 + $0x2d8] sm:$0xff]
    %v12634 = vld [vmem:[#allocation22 + $0x2e0] sm:$0xff]
    %v12635 = vld [vmem:[#allocation22 + $0x2e8] sm:$0xff]
    %v12636 = vld [vmem:[#allocation22 + $0x2f0] sm:$0xff]
    %v12637 = vld [vmem:[#allocation22 + $0x2f8] sm:$0xff]
    %v12638 = vld [vmem:[#allocation23] sm:$0x3]
    %v12640 = vlaneseq
    %v12641 = vshrl.u32 %v12640, 7
    %v12642 = vsub.s32 0, %v12641
    %v12643 = vrot.slane %v12638, %v12642
    %v12644 = vlaneseq
    %v12645 = vshrl.u32 %v12644, 7
    %v12646 = vsub.s32 1, %v12645
    %v12647 = vrot.slane %v12638, %v12646
    %v12746 = vunpack.c.l.b16 %v12542
    %v12747 = vunpack.c.h.b16 %v12542
    %v12748 = vunpack.c.l.b16 %v12543
    %v12749 = vunpack.c.h.b16 %v12543
    %v12750 = vunpack.c.l.b16 %v12544
    %v12751 = vunpack.c.h.b16 %v12544
    %v12752 = vunpack.c.l.b16 %v12545
    %v12753 = vunpack.c.h.b16 %v12545
    %v12754 = vunpack.c.l.b16 %v12546
    %v12755 = vunpack.c.h.b16 %v12546
    %v12756 = vunpack.c.l.b16 %v12547
    %v12757 = vunpack.c.h.b16 %v12547
    %v12758 = vunpack.c.l.b16 %v12548
    %v12759 = vunpack.c.h.b16 %v12548
    %v12760 = vunpack.c.l.b16 %v12549
    %v12761 = vunpack.c.h.b16 %v12549
    %v12762 = vunpack.c.l.b16 %v12550
    %v12763 = vunpack.c.h.b16 %v12550
    %v12764 = vunpack.c.l.b16 %v12551
    %v12765 = vunpack.c.h.b16 %v12551
    %v12766 = vunpack.c.l.b16 %v12552
    %v12767 = vunpack.c.h.b16 %v12552
    %v12768 = vunpack.c.l.b16 %v12553
    %v12769 = vunpack.c.h.b16 %v12553
    %v12770 = vunpack.c.l.b16 %v12554
    %v12771 = vunpack.c.h.b16 %v12554
    %v12772 = vunpack.c.l.b16 %v12555
    %v12773 = vunpack.c.h.b16 %v12555
    %v12774 = vunpack.c.l.b16 %v12556
    %v12775 = vunpack.c.h.b16 %v12556
    %v12776 = vunpack.c.l.b16 %v12557
    %v12777 = vunpack.c.h.b16 %v12557
    %v12778 = vunpack.c.l.b16 %v12558
    %v12779 = vunpack.c.h.b16 %v12558
    %v12780 = vunpack.c.l.b16 %v12559
    %v12781 = vunpack.c.h.b16 %v12559
    %v12782 = vunpack.c.l.b16 %v12560
    %v12783 = vunpack.c.h.b16 %v12560
    %v12784 = vunpack.c.l.b16 %v12561
    %v12785 = vunpack.c.h.b16 %v12561
    %v12786 = vunpack.c.l.b16 %v12562
    %v12787 = vunpack.c.h.b16 %v12562
    %v12788 = vunpack.c.l.b16 %v12563
    %v12789 = vunpack.c.h.b16 %v12563
    %v12790 = vunpack.c.l.b16 %v12564
    %v12791 = vunpack.c.h.b16 %v12564
    %v12792 = vunpack.c.l.b16 %v12565
    %v12793 = vunpack.c.h.b16 %v12565
    %v12794 = vunpack.c.l.b16 %v12566
    %v12795 = vunpack.c.h.b16 %v12566
    %v12796 = vunpack.c.l.b16 %v12567
    %v12797 = vunpack.c.h.b16 %v12567
    %v12798 = vunpack.c.l.b16 %v12568
    %v12799 = vunpack.c.h.b16 %v12568
    %v12800 = vunpack.c.l.b16 %v12569
    %v12801 = vunpack.c.h.b16 %v12569
    %v12802 = vunpack.c.l.b16 %v12570
    %v12803 = vunpack.c.h.b16 %v12570
    %v12804 = vunpack.c.l.b16 %v12571
    %v12805 = vunpack.c.h.b16 %v12571
    %v12806 = vunpack.c.l.b16 %v12572
    %v12807 = vunpack.c.h.b16 %v12572
    %v12808 = vunpack.c.l.b16 %v12573
    %v12809 = vunpack.c.h.b16 %v12573
    %v12810 = vunpack.c.l.b16 %v12574
    %v12811 = vunpack.c.h.b16 %v12574
    %v12812 = vunpack.c.l.b16 %v12575
    %v12813 = vunpack.c.h.b16 %v12575
    %v12814 = vunpack.c.l.b16 %v12576
    %v12815 = vunpack.c.h.b16 %v12576
    %v12816 = vunpack.c.l.b16 %v12577
    %v12817 = vunpack.c.h.b16 %v12577
    %v12818 = vunpack.c.l.b16 %v12578
    %v12819 = vunpack.c.h.b16 %v12578
    %v12820 = vunpack.c.l.b16 %v12579
    %v12821 = vunpack.c.h.b16 %v12579
    %v12822 = vunpack.c.l.b16 %v12580
    %v12823 = vunpack.c.h.b16 %v12580
    %v12824 = vunpack.c.l.b16 %v12581
    %v12825 = vunpack.c.h.b16 %v12581
    %v12826 = vunpack.c.l.b16 %v12582
    %v12827 = vunpack.c.h.b16 %v12582
    %v12828 = vunpack.c.l.b16 %v12583
    %v12829 = vunpack.c.h.b16 %v12583
    %v12830 = vunpack.c.l.b16 %v12584
    %v12831 = vunpack.c.h.b16 %v12584
    %v12832 = vunpack.c.l.b16 %v12585
    %v12833 = vunpack.c.h.b16 %v12585
    %v12834 = vunpack.c.l.b16 %v12586
    %v12835 = vunpack.c.h.b16 %v12586
    %v12836 = vunpack.c.l.b16 %v12587
    %v12837 = vunpack.c.h.b16 %v12587
    %v12838 = vunpack.c.l.b16 %v12588
    %v12839 = vunpack.c.h.b16 %v12588
    %v12840 = vunpack.c.l.b16 %v12589
    %v12841 = vunpack.c.h.b16 %v12589
    %v12842 = vunpack.c.l.b16 %v12590
    %v12843 = vunpack.c.h.b16 %v12590
    %v12844 = vunpack.c.l.b16 %v12591
    %v12845 = vunpack.c.h.b16 %v12591
    %v12846 = vunpack.c.l.b16 %v12592
    %v12847 = vunpack.c.h.b16 %v12592
    %v12848 = vunpack.c.l.b16 %v12593
    %v12849 = vunpack.c.h.b16 %v12593
    %v12850 = vunpack.c.l.b16 %v12594
    %v12851 = vunpack.c.h.b16 %v12594
    %v12852 = vunpack.c.l.b16 %v12595
    %v12853 = vunpack.c.h.b16 %v12595
    %v12854 = vunpack.c.l.b16 %v12596
    %v12855 = vunpack.c.h.b16 %v12596
    %v12856 = vunpack.c.l.b16 %v12597
    %v12857 = vunpack.c.h.b16 %v12597
    %v12858 = vunpack.c.l.b16 %v12598
    %v12859 = vunpack.c.h.b16 %v12598
    %v12860 = vunpack.c.l.b16 %v12599
    %v12861 = vunpack.c.h.b16 %v12599
    %v12862 = vunpack.c.l.b16 %v12600
    %v12863 = vunpack.c.h.b16 %v12600
    %v12864 = vunpack.c.l.b16 %v12601
    %v12865 = vunpack.c.h.b16 %v12601
    %v12866 = vunpack.c.l.b16 %v12602
    %v12867 = vunpack.c.h.b16 %v12602
    %v12868 = vunpack.c.l.b16 %v12603
    %v12869 = vunpack.c.h.b16 %v12603
    %v12870 = vunpack.c.l.b16 %v12604
    %v12871 = vunpack.c.h.b16 %v12604
    %v12872 = vunpack.c.l.b16 %v12605
    %v12873 = vunpack.c.h.b16 %v12605
    %v12874 = vunpack.c.l.b16 %v12606
    %v12875 = vunpack.c.h.b16 %v12606
    %v12876 = vunpack.c.l.b16 %v12607
    %v12877 = vunpack.c.h.b16 %v12607
    %v12878 = vunpack.c.l.b16 %v12608
    %v12879 = vunpack.c.h.b16 %v12608
    %v12880 = vunpack.c.l.b16 %v12609
    %v12881 = vunpack.c.h.b16 %v12609
    %v12882 = vunpack.c.l.b16 %v12610
    %v12883 = vunpack.c.h.b16 %v12610
    %v12884 = vunpack.c.l.b16 %v12611
    %v12885 = vunpack.c.h.b16 %v12611
    %v12886 = vunpack.c.l.b16 %v12612
    %v12887 = vunpack.c.h.b16 %v12612
    %v12888 = vunpack.c.l.b16 %v12613
    %v12889 = vunpack.c.h.b16 %v12613
    %v12890 = vunpack.c.l.b16 %v12614
    %v12891 = vunpack.c.h.b16 %v12614
    %v12892 = vunpack.c.l.b16 %v12615
    %v12893 = vunpack.c.h.b16 %v12615
    %v12894 = vunpack.c.l.b16 %v12616
    %v12895 = vunpack.c.h.b16 %v12616
    %v12896 = vunpack.c.l.b16 %v12617
    %v12897 = vunpack.c.h.b16 %v12617
    %v12898 = vunpack.c.l.b16 %v12618
    %v12899 = vunpack.c.h.b16 %v12618
    %v12900 = vunpack.c.l.b16 %v12619
    %v12901 = vunpack.c.h.b16 %v12619
    %v12902 = vunpack.c.l.b16 %v12620
    %v12903 = vunpack.c.h.b16 %v12620
    %v12904 = vunpack.c.l.b16 %v12621
    %v12905 = vunpack.c.h.b16 %v12621
    %v12906 = vunpack.c.l.b16 %v12622
    %v12907 = vunpack.c.h.b16 %v12622
    %v12908 = vunpack.c.l.b16 %v12623
    %v12909 = vunpack.c.h.b16 %v12623
    %v12910 = vunpack.c.l.b16 %v12624
    %v12911 = vunpack.c.h.b16 %v12624
    %v12912 = vunpack.c.l.b16 %v12625
    %v12913 = vunpack.c.h.b16 %v12625
    %v12914 = vunpack.c.l.b16 %v12626
    %v12915 = vunpack.c.h.b16 %v12626
    %v12916 = vunpack.c.l.b16 %v12627
    %v12917 = vunpack.c.h.b16 %v12627
    %v12918 = vunpack.c.l.b16 %v12628
    %v12919 = vunpack.c.h.b16 %v12628
    %v12920 = vunpack.c.l.b16 %v12629
    %v12921 = vunpack.c.h.b16 %v12629
    %v12922 = vunpack.c.l.b16 %v12630
    %v12923 = vunpack.c.h.b16 %v12630
    %v12924 = vunpack.c.l.b16 %v12631
    %v12925 = vunpack.c.h.b16 %v12631
    %v12926 = vunpack.c.l.b16 %v12632
    %v12927 = vunpack.c.h.b16 %v12632
    %v12928 = vunpack.c.l.b16 %v12633
    %v12929 = vunpack.c.h.b16 %v12633
    %v12930 = vunpack.c.l.b16 %v12634
    %v12931 = vunpack.c.h.b16 %v12634
    %v12932 = vunpack.c.l.b16 %v12635
    %v12933 = vunpack.c.h.b16 %v12635
    %v12934 = vunpack.c.l.b16 %v12636
    %v12935 = vunpack.c.h.b16 %v12636
    %v12936 = vunpack.c.l.b16 %v12637
    %v12937 = vunpack.c.h.b16 %v12637
    %v12938 = vpack.c.b16 %v12748, %v12746
    %v12939 = vpack.c.b16 %v12749, %v12747
    %v12940 = vpack.c.b16 %v12752, %v12750
    %v12941 = vpack.c.b16 %v12753, %v12751
    %v12942 = vpack.c.b16 %v12756, %v12754
    %v12943 = vpack.c.b16 %v12757, %v12755
    %v12944 = vpack.c.b16 %v12760, %v12758
    %v12945 = vpack.c.b16 %v12761, %v12759
    %v12946 = vpack.c.b16 %v12764, %v12762
    %v12947 = vpack.c.b16 %v12765, %v12763
    %v12948 = vpack.c.b16 %v12768, %v12766
    %v12949 = vpack.c.b16 %v12769, %v12767
    %v12950 = vpack.c.b16 %v12772, %v12770
    %v12951 = vpack.c.b16 %v12773, %v12771
    %v12952 = vpack.c.b16 %v12776, %v12774
    %v12953 = vpack.c.b16 %v12777, %v12775
    %v12954 = vpack.c.b16 %v12780, %v12778
    %v12955 = vpack.c.b16 %v12781, %v12779
    %v12956 = vpack.c.b16 %v12784, %v12782
    %v12957 = vpack.c.b16 %v12785, %v12783
    %v12958 = vpack.c.b16 %v12788, %v12786
    %v12959 = vpack.c.b16 %v12789, %v12787
    %v12960 = vpack.c.b16 %v12792, %v12790
    %v12961 = vpack.c.b16 %v12793, %v12791
    %v12962 = vpack.c.b16 %v12796, %v12794
    %v12963 = vpack.c.b16 %v12797, %v12795
    %v12964 = vpack.c.b16 %v12800, %v12798
    %v12965 = vpack.c.b16 %v12801, %v12799
    %v12966 = vpack.c.b16 %v12804, %v12802
    %v12967 = vpack.c.b16 %v12805, %v12803
    %v12968 = vpack.c.b16 %v12808, %v12806
    %v12969 = vpack.c.b16 %v12809, %v12807
    %v12970 = vpack.c.b16 %v12812, %v12810
    %v12971 = vpack.c.b16 %v12813, %v12811
    %v12972 = vpack.c.b16 %v12816, %v12814
    %v12973 = vpack.c.b16 %v12817, %v12815
    %v12974 = vpack.c.b16 %v12820, %v12818
    %v12975 = vpack.c.b16 %v12821, %v12819
    %v12976 = vpack.c.b16 %v12824, %v12822
    %v12977 = vpack.c.b16 %v12825, %v12823
    %v12978 = vpack.c.b16 %v12828, %v12826
    %v12979 = vpack.c.b16 %v12829, %v12827
    %v12980 = vpack.c.b16 %v12832, %v12830
    %v12981 = vpack.c.b16 %v12833, %v12831
    %v12982 = vpack.c.b16 %v12836, %v12834
    %v12983 = vpack.c.b16 %v12837, %v12835
    %v12984 = vpack.c.b16 %v12840, %v12838
    %v12985 = vpack.c.b16 %v12841, %v12839
    %v12986 = vpack.c.b16 %v12844, %v12842
    %v12987 = vpack.c.b16 %v12845, %v12843
    %v12988 = vpack.c.b16 %v12848, %v12846
    %v12989 = vpack.c.b16 %v12849, %v12847
    %v12990 = vpack.c.b16 %v12852, %v12850
    %v12991 = vpack.c.b16 %v12853, %v12851
    %v12992 = vpack.c.b16 %v12856, %v12854
    %v12993 = vpack.c.b16 %v12857, %v12855
    %v12994 = vpack.c.b16 %v12860, %v12858
    %v12995 = vpack.c.b16 %v12861, %v12859
    %v12996 = vpack.c.b16 %v12864, %v12862
    %v12997 = vpack.c.b16 %v12865, %v12863
    %v12998 = vpack.c.b16 %v12868, %v12866
    %v12999 = vpack.c.b16 %v12869, %v12867
    %v13000 = vpack.c.b16 %v12872, %v12870
    %v13001 = vpack.c.b16 %v12873, %v12871
    %v13002 = vpack.c.b16 %v12876, %v12874
    %v13003 = vpack.c.b16 %v12877, %v12875
    %v13004 = vpack.c.b16 %v12880, %v12878
    %v13005 = vpack.c.b16 %v12881, %v12879
    %v13006 = vpack.c.b16 %v12884, %v12882
    %v13007 = vpack.c.b16 %v12885, %v12883
    %v13008 = vpack.c.b16 %v12888, %v12886
    %v13009 = vpack.c.b16 %v12889, %v12887
    %v13010 = vpack.c.b16 %v12892, %v12890
    %v13011 = vpack.c.b16 %v12893, %v12891
    %v13012 = vpack.c.b16 %v12896, %v12894
    %v13013 = vpack.c.b16 %v12897, %v12895
    %v13014 = vpack.c.b16 %v12900, %v12898
    %v13015 = vpack.c.b16 %v12901, %v12899
    %v13016 = vpack.c.b16 %v12904, %v12902
    %v13017 = vpack.c.b16 %v12905, %v12903
    %v13018 = vpack.c.b16 %v12908, %v12906
    %v13019 = vpack.c.b16 %v12909, %v12907
    %v13020 = vpack.c.b16 %v12912, %v12910
    %v13021 = vpack.c.b16 %v12913, %v12911
    %v13022 = vpack.c.b16 %v12916, %v12914
    %v13023 = vpack.c.b16 %v12917, %v12915
    %v13024 = vpack.c.b16 %v12920, %v12918
    %v13025 = vpack.c.b16 %v12921, %v12919
    %v13026 = vpack.c.b16 %v12924, %v12922
    %v13027 = vpack.c.b16 %v12925, %v12923
    %v13028 = vpack.c.b16 %v12928, %v12926
    %v13029 = vpack.c.b16 %v12929, %v12927
    %v13030 = vpack.c.b16 %v12932, %v12930
    %v13031 = vpack.c.b16 %v12933, %v12931
    %v13032 = vpack.c.b16 %v12936, %v12934
    %v13033 = vpack.c.b16 %v12937, %v12935
    %13130 = vmatprep.subr.bf16.mxu0 %v12939
    %13131 = vmatpush1.bf16.msra.mxu0 %v12938
    %13132 = vmatprep.subr.bf16.mxu0 %v12941
    %13133 = vmatpush1.bf16.msra.mxu0 %v12940
    %13134 = vmatprep.subr.bf16.mxu0 %v12943
    %13135 = vmatpush1.bf16.msra.mxu0 %v12942
    %13136 = vmatprep.subr.bf16.mxu0 %v12945
    %13137 = vmatpush1.bf16.msra.mxu0 %v12944
    %13138 = vmatprep.subr.bf16.mxu0 %v12947
    %13139 = vmatpush1.bf16.msra.mxu0 %v12946
    %13140 = vmatprep.subr.bf16.mxu0 %v12949
    %13141 = vmatpush1.bf16.msra.mxu0 %v12948
    %13142 = vmatprep.subr.bf16.mxu0 %v12951
    %13143 = vmatpush1.bf16.msra.mxu0 %v12950
    %13144 = vmatprep.subr.bf16.mxu0 %v12953
    %13145 = vmatpush1.bf16.msra.mxu0 %v12952
    %13146 = vmatprep.subr.bf16.mxu0 %v12955
    %13147 = vmatpush1.bf16.msra.mxu0 %v12954
    %13148 = vmatprep.subr.bf16.mxu0 %v12957
    %13149 = vmatpush1.bf16.msra.mxu0 %v12956
    %13150 = vmatprep.subr.bf16.mxu0 %v12959
    %13151 = vmatpush1.bf16.msra.mxu0 %v12958
    %13152 = vmatprep.subr.bf16.mxu0 %v12961
    %13153 = vmatpush1.bf16.msra.mxu0 %v12960
    %13154 = vmatprep.subr.bf16.mxu0 %v12963
    %13155 = vmatpush1.bf16.msra.mxu0 %v12962
    %13156 = vmatprep.subr.bf16.mxu0 %v12965
    %13157 = vmatpush1.bf16.msra.mxu0 %v12964
    %13158 = vmatprep.subr.bf16.mxu0 %v12967
    %13159 = vmatpush1.bf16.msra.mxu0 %v12966
    %13160 = vmatprep.subr.bf16.mxu0 %v12969
    %13161 = vmatpush1.bf16.msra.mxu0 %v12968
    %13162 = vmatprep.mubr.bf16.mxu0 %v12537
    %13163 = vmatmul.mubr.bf16.gmra.mrb[0].mxu0 %v12536
    %v13164 = vpop.f32.mrb[0].mxu0
    %v13165 = vadd.f32 %v12643, %v13164
    %v13166 = vpop.f32.mrb[0].mxu0
    %v13167 = vadd.f32 %v12647, %v13166
    %v13168 = vpop.f32.mrb[0].mxu0
    %v13169 = vpop.f32.mrb[0].mxu0
    %13170 = vdwg.mxu0
    %13171 = vmatprep.subr.bf16.mxu0 %v12971
    %13172 = vmatpush1.bf16.msra.mxu0 %v12970
    %13173 = vmatprep.subr.bf16.mxu0 %v12973
    %13174 = vmatpush1.bf16.msra.mxu0 %v12972
    %13175 = vmatprep.subr.bf16.mxu0 %v12975
    %13176 = vmatpush1.bf16.msra.mxu0 %v12974
    %13177 = vmatprep.subr.bf16.mxu0 %v12977
    %13178 = vmatpush1.bf16.msra.mxu0 %v12976
    %13179 = vmatprep.subr.bf16.mxu0 %v12979
    %13180 = vmatpush1.bf16.msra.mxu0 %v12978
    %13181 = vmatprep.subr.bf16.mxu0 %v12981
    %13182 = vmatpush1.bf16.msra.mxu0 %v12980
    %13183 = vmatprep.subr.bf16.mxu0 %v12983
    %13184 = vmatpush1.bf16.msra.mxu0 %v12982
    %13185 = vmatprep.subr.bf16.mxu0 %v12985
    %13186 = vmatpush1.bf16.msra.mxu0 %v12984
    %13187 = vmatprep.subr.bf16.mxu0 %v12987
    %13188 = vmatpush1.bf16.msra.mxu0 %v12986
    %13189 = vmatprep.subr.bf16.mxu0 %v12989
    %13190 = vmatpush1.bf16.msra.mxu0 %v12988
    %13191 = vmatprep.subr.bf16.mxu0 %v12991
    %13192 = vmatpush1.bf16.msra.mxu0 %v12990
    %13193 = vmatprep.subr.bf16.mxu0 %v12993
    %13194 = vmatpush1.bf16.msra.mxu0 %v12992
    %13195 = vmatprep.subr.bf16.mxu0 %v12995
    %13196 = vmatpush1.bf16.msra.mxu0 %v12994
    %13197 = vmatprep.subr.bf16.mxu0 %v12997
    %13198 = vmatpush1.bf16.msra.mxu0 %v12996
    %13199 = vmatprep.subr.bf16.mxu0 %v12999
    %13200 = vmatpush1.bf16.msra.mxu0 %v12998
    %13201 = vmatprep.subr.bf16.mxu0 %v13001
    %13202 = vmatpush1.bf16.msra.mxu0 %v13000
    %13203 = vmatprep.mubr.bf16.mxu0 %v12539
    %13204 = vmatmul.mubr.bf16.gmra.mrb[0].mxu0 %v12538
    %v13205 = vpop.f32.mrb[0].mxu0
    %v13206 = vadd.f32 %v13165, %v13205
    %v13207 = vpop.f32.mrb[0].mxu0
    %v13208 = vadd.f32 %v13167, %v13207
    %v13209 = vpop.f32.mrb[0].mxu0
    %v13210 = vpop.f32.mrb[0].mxu0
    %13211 = vdwg.mxu0
    %13212 = vmatprep.subr.bf16.mxu0 %v13003
    %13213 = vmatpush1.bf16.msra.mxu0 %v13002
    %13214 = vmatprep.subr.bf16.mxu0 %v13005
    %13215 = vmatpush1.bf16.msra.mxu0 %v13004
    %13216 = vmatprep.subr.bf16.mxu0 %v13007
    %13217 = vmatpush1.bf16.msra.mxu0 %v13006
    %13218 = vmatprep.subr.bf16.mxu0 %v13009
    %13219 = vmatpush1.bf16.msra.mxu0 %v13008
    %13220 = vmatprep.subr.bf16.mxu0 %v13011
    %13221 = vmatpush1.bf16.msra.mxu0 %v13010
    %13222 = vmatprep.subr.bf16.mxu0 %v13013
    %13223 = vmatpush1.bf16.msra.mxu0 %v13012
    %13224 = vmatprep.subr.bf16.mxu0 %v13015
    %13225 = vmatpush1.bf16.msra.mxu0 %v13014
    %13226 = vmatprep.subr.bf16.mxu0 %v13017
    %13227 = vmatpush1.bf16.msra.mxu0 %v13016
    %13228 = vmatprep.subr.bf16.mxu0 %v13019
    %13229 = vmatpush1.bf16.msra.mxu0 %v13018
    %13230 = vmatprep.subr.bf16.mxu0 %v13021
    %13231 = vmatpush1.bf16.msra.mxu0 %v13020
    %13232 = vmatprep.subr.bf16.mxu0 %v13023
    %13233 = vmatpush1.bf16.msra.mxu0 %v13022
    %13234 = vmatprep.subr.bf16.mxu0 %v13025
    %13235 = vmatpush1.bf16.msra.mxu0 %v13024
    %13236 = vmatprep.subr.bf16.mxu0 %v13027
    %13237 = vmatpush1.bf16.msra.mxu0 %v13026
    %13238 = vmatprep.subr.bf16.mxu0 %v13029
    %13239 = vmatpush1.bf16.msra.mxu0 %v13028
    %13240 = vmatprep.subr.bf16.mxu0 %v13031
    %13241 = vmatpush1.bf16.msra.mxu0 %v13030
    %13242 = vmatprep.subr.bf16.mxu0 %v13033
    %13243 = vmatpush1.bf16.msra.mxu0 %v13032
    %13244 = vmatprep.mubr.bf16.mxu0 %v12541
    %13245 = vmatmul.mubr.bf16.gmra.mrb[0].mxu0 %v12540
    %v13246 = vpop.f32.mrb[0].mxu0
    %v13247 = vadd.f32 %v13206, %v13246
    %v13248 = vpop.f32.mrb[0].mxu0
    %v13249 = vadd.f32 %v13208, %v13248
    %v13250 = vpop.f32.mrb[0].mxu0
    %v13251 = vpop.f32.mrb[0].mxu0
    %13252 = vdwg.mxu0
    %v13253 = vmax.f32 %v13247, 0.0
    %v13254 = vmax.f32 %v13249, 0.0
    %v13255 = vpack.c.bf16 %v13253, %v13253
    %v13256 = vpack.c.bf16 %v13254, %v13254
    %v13257 = vld [vmem:[#allocation25] sm:$0xff]
    %v13258 = vld [vmem:[#allocation25 + $0x8] sm:$0xff]
    %v13259 = vld [vmem:[#allocation25 + $0x10] sm:$0xff]
    %v13260 = vld [vmem:[#allocation25 + $0x18] sm:$0xff]
    %v13261 = vld [vmem:[#allocation25 + $0x20] sm:$0xff]
    %v13262 = vld [vmem:[#allocation25 + $0x28] sm:$0xff]
    %v13263 = vld [vmem:[#allocation25 + $0x30] sm:$0xff]
    %v13264 = vld [vmem:[#allocation25 + $0x38] sm:$0xff]
    %v13265 = vld [vmem:[#allocation25 + $0x40] sm:$0xff]
    %v13266 = vld [vmem:[#allocation25 + $0x48] sm:$0xff]
    %v13267 = vld [vmem:[#allocation25 + $0x50] sm:$0xff]
    %v13268 = vld [vmem:[#allocation25 + $0x58] sm:$0xff]
    %v13269 = vld [vmem:[#allocation25 + $0x60] sm:$0xff]
    %v13270 = vld [vmem:[#allocation25 + $0x68] sm:$0xff]
    %v13271 = vld [vmem:[#allocation25 + $0x70] sm:$0xff]
    %v13272 = vld [vmem:[#allocation25 + $0x78] sm:$0xff]
    %v13273 = vld [vmem:[#allocation25 + $0x80] sm:$0xff]
    %v13274 = vld [vmem:[#allocation25 + $0x88] sm:$0xff]
    %v13275 = vld [vmem:[#allocation25 + $0x90] sm:$0xff]
    %v13276 = vld [vmem:[#allocation25 + $0x98] sm:$0xff]
    %v13277 = vld [vmem:[#allocation25 + $0xa0] sm:$0xff]
    %v13278 = vld [vmem:[#allocation25 + $0xa8] sm:$0xff]
    %v13279 = vld [vmem:[#allocation25 + $0xb0] sm:$0xff]
    %v13280 = vld [vmem:[#allocation25 + $0xb8] sm:$0xff]
    %v13281 = vld [vmem:[#allocation25 + $0xc0] sm:$0xff]
    %v13282 = vld [vmem:[#allocation25 + $0xc8] sm:$0xff]
    %v13283 = vld [vmem:[#allocation25 + $0xd0] sm:$0xff]
    %v13284 = vld [vmem:[#allocation25 + $0xd8] sm:$0xff]
    %v13285 = vld [vmem:[#allocation25 + $0xe0] sm:$0xff]
    %v13286 = vld [vmem:[#allocation25 + $0xe8] sm:$0xff]
    %v13287 = vld [vmem:[#allocation25 + $0xf0] sm:$0xff]
    %v13288 = vld [vmem:[#allocation25 + $0xf8] sm:$0xff]
    %v13289 = vld [vmem:[#allocation26] sm:$0x3]
    %v13291 = vlaneseq
    %v13292 = vshrl.u32 %v13291, 7
    %v13293 = vsub.s32 0, %v13292
    %v13294 = vrot.slane %v13289, %v13293
    %v13295 = vlaneseq
    %v13296 = vshrl.u32 %v13295, 7
    %v13297 = vsub.s32 1, %v13296
    %v13298 = vrot.slane %v13289, %v13297
    %v13333 = vunpack.c.l.b16 %v13257
    %v13334 = vunpack.c.h.b16 %v13257
    %v13335 = vunpack.c.l.b16 %v13258
    %v13336 = vunpack.c.h.b16 %v13258
    %v13337 = vunpack.c.l.b16 %v13259
    %v13338 = vunpack.c.h.b16 %v13259
    %v13339 = vunpack.c.l.b16 %v13260
    %v13340 = vunpack.c.h.b16 %v13260
    %v13341 = vunpack.c.l.b16 %v13261
    %v13342 = vunpack.c.h.b16 %v13261
    %v13343 = vunpack.c.l.b16 %v13262
    %v13344 = vunpack.c.h.b16 %v13262
    %v13345 = vunpack.c.l.b16 %v13263
    %v13346 = vunpack.c.h.b16 %v13263
    %v13347 = vunpack.c.l.b16 %v13264
    %v13348 = vunpack.c.h.b16 %v13264
    %v13349 = vunpack.c.l.b16 %v13265
    %v13350 = vunpack.c.h.b16 %v13265
    %v13351 = vunpack.c.l.b16 %v13266
    %v13352 = vunpack.c.h.b16 %v13266
    %v13353 = vunpack.c.l.b16 %v13267
    %v13354 = vunpack.c.h.b16 %v13267
    %v13355 = vunpack.c.l.b16 %v13268
    %v13356 = vunpack.c.h.b16 %v13268
    %v13357 = vunpack.c.l.b16 %v13269
    %v13358 = vunpack.c.h.b16 %v13269
    %v13359 = vunpack.c.l.b16 %v13270
    %v13360 = vunpack.c.h.b16 %v13270
    %v13361 = vunpack.c.l.b16 %v13271
    %v13362 = vunpack.c.h.b16 %v13271
    %v13363 = vunpack.c.l.b16 %v13272
    %v13364 = vunpack.c.h.b16 %v13272
    %v13365 = vunpack.c.l.b16 %v13273
    %v13366 = vunpack.c.h.b16 %v13273
    %v13367 = vunpack.c.l.b16 %v13274
    %v13368 = vunpack.c.h.b16 %v13274
    %v13369 = vunpack.c.l.b16 %v13275
    %v13370 = vunpack.c.h.b16 %v13275
    %v13371 = vunpack.c.l.b16 %v13276
    %v13372 = vunpack.c.h.b16 %v13276
    %v13373 = vunpack.c.l.b16 %v13277
    %v13374 = vunpack.c.h.b16 %v13277
    %v13375 = vunpack.c.l.b16 %v13278
    %v13376 = vunpack.c.h.b16 %v13278
    %v13377 = vunpack.c.l.b16 %v13279
    %v13378 = vunpack.c.h.b16 %v13279
    %v13379 = vunpack.c.l.b16 %v13280
    %v13380 = vunpack.c.h.b16 %v13280
    %v13381 = vunpack.c.l.b16 %v13281
    %v13382 = vunpack.c.h.b16 %v13281
    %v13383 = vunpack.c.l.b16 %v13282
    %v13384 = vunpack.c.h.b16 %v13282
    %v13385 = vunpack.c.l.b16 %v13283
    %v13386 = vunpack.c.h.b16 %v13283
    %v13387 = vunpack.c.l.b16 %v13284
    %v13388 = vunpack.c.h.b16 %v13284
    %v13389 = vunpack.c.l.b16 %v13285
    %v13390 = vunpack.c.h.b16 %v13285
    %v13391 = vunpack.c.l.b16 %v13286
    %v13392 = vunpack.c.h.b16 %v13286
    %v13393 = vunpack.c.l.b16 %v13287
    %v13394 = vunpack.c.h.b16 %v13287
    %v13395 = vunpack.c.l.b16 %v13288
    %v13396 = vunpack.c.h.b16 %v13288
    %v13397 = vpack.c.b16 %v13335, %v13333
    %v13398 = vpack.c.b16 %v13336, %v13334
    %v13399 = vpack.c.b16 %v13339, %v13337
    %v13400 = vpack.c.b16 %v13340, %v13338
    %v13401 = vpack.c.b16 %v13343, %v13341
    %v13402 = vpack.c.b16 %v13344, %v13342
    %v13403 = vpack.c.b16 %v13347, %v13345
    %v13404 = vpack.c.b16 %v13348, %v13346
    %v13405 = vpack.c.b16 %v13351, %v13349
    %v13406 = vpack.c.b16 %v13352, %v13350
    %v13407 = vpack.c.b16 %v13355, %v13353
    %v13408 = vpack.c.b16 %v13356, %v13354
    %v13409 = vpack.c.b16 %v13359, %v13357
    %v13410 = vpack.c.b16 %v13360, %v13358
    %v13411 = vpack.c.b16 %v13363, %v13361
    %v13412 = vpack.c.b16 %v13364, %v13362
    %v13413 = vpack.c.b16 %v13367, %v13365
    %v13414 = vpack.c.b16 %v13368, %v13366
    %v13415 = vpack.c.b16 %v13371, %v13369
    %v13416 = vpack.c.b16 %v13372, %v13370
    %v13417 = vpack.c.b16 %v13375, %v13373
    %v13418 = vpack.c.b16 %v13376, %v13374
    %v13419 = vpack.c.b16 %v13379, %v13377
    %v13420 = vpack.c.b16 %v13380, %v13378
    %v13421 = vpack.c.b16 %v13383, %v13381
    %v13422 = vpack.c.b16 %v13384, %v13382
    %v13423 = vpack.c.b16 %v13387, %v13385
    %v13424 = vpack.c.b16 %v13388, %v13386
    %v13425 = vpack.c.b16 %v13391, %v13389
    %v13426 = vpack.c.b16 %v13392, %v13390
    %v13427 = vpack.c.b16 %v13395, %v13393
    %v13428 = vpack.c.b16 %v13396, %v13394
    %13461 = vmatprep.subr.bf16.mxu0 %v13398
    %13462 = vmatpush1.bf16.msra.mxu0 %v13397
    %13463 = vmatprep.subr.bf16.mxu0 %v13400
    %13464 = vmatpush1.bf16.msra.mxu0 %v13399
    %13465 = vmatprep.subr.bf16.mxu0 %v13402
    %13466 = vmatpush1.bf16.msra.mxu0 %v13401
    %13467 = vmatprep.subr.bf16.mxu0 %v13404
    %13468 = vmatpush1.bf16.msra.mxu0 %v13403
    %13469 = vmatprep.subr.bf16.mxu0 %v13406
    %13470 = vmatpush1.bf16.msra.mxu0 %v13405
    %13471 = vmatprep.subr.bf16.mxu0 %v13408
    %13472 = vmatpush1.bf16.msra.mxu0 %v13407
    %13473 = vmatprep.subr.bf16.mxu0 %v13410
    %13474 = vmatpush1.bf16.msra.mxu0 %v13409
    %13475 = vmatprep.subr.bf16.mxu0 %v13412
    %13476 = vmatpush1.bf16.msra.mxu0 %v13411
    %13477 = vmatprep.subr.bf16.mxu0 %v13414
    %13478 = vmatpush1.bf16.msra.mxu0 %v13413
    %13479 = vmatprep.subr.bf16.mxu0 %v13416
    %13480 = vmatpush1.bf16.msra.mxu0 %v13415
    %13481 = vmatprep.subr.bf16.mxu0 %v13418
    %13482 = vmatpush1.bf16.msra.mxu0 %v13417
    %13483 = vmatprep.subr.bf16.mxu0 %v13420
    %13484 = vmatpush1.bf16.msra.mxu0 %v13419
    %13485 = vmatprep.subr.bf16.mxu0 %v13422
    %13486 = vmatpush1.bf16.msra.mxu0 %v13421
    %13487 = vmatprep.subr.bf16.mxu0 %v13424
    %13488 = vmatpush1.bf16.msra.mxu0 %v13423
    %13489 = vmatprep.subr.bf16.mxu0 %v13426
    %13490 = vmatpush1.bf16.msra.mxu0 %v13425
    %13491 = vmatprep.subr.bf16.mxu0 %v13428
    %13492 = vmatpush1.bf16.msra.mxu0 %v13427
    %13493 = vmatprep.mubr.bf16.mxu0 %v13256
    %13494 = vmatmul.mubr.bf16.gmra.mrb[0].mxu0 %v13255
    %v13495 = vpop.f32.mrb[0].mxu0
    %v13496 = vadd.f32 %v13294, %v13495
    %v13497 = vpop.f32.mrb[0].mxu0
    %v13498 = vadd.f32 %v13298, %v13497
    %v13499 = vpop.f32.mrb[0].mxu0
    %v13500 = vpop.f32.mrb[0].mxu0
    %13501 = vdwg.mxu0
    %v13502 = vmax.f32 %v13496, 0.0
    %v13503 = vmax.f32 %v13498, 0.0
    %v13504 = vpack.c.bf16 %v13502, %v13502
    %v13505 = vpack.c.bf16 %v13503, %v13503
    %v13506 = vld [vmem:[%s16] sm:$0xf]
    %v13507 = vld [vmem:[%s16 + $0x4] sm:$0xf]
    %v13508 = vld [vmem:[%s16 + $0x8] sm:$0xf]
    %v13509 = vld [vmem:[%s16 + $0xc] sm:$0xf]
    %v13510 = vld [vmem:[%s16 + $0x10] sm:$0xf]
    %v13511 = vld [vmem:[%s16 + $0x14] sm:$0xf]
    %v13512 = vld [vmem:[%s16 + $0x18] sm:$0xf]
    %v13513 = vld [vmem:[%s16 + $0x1c] sm:$0xf]
    %v13514 = vld [vmem:[%s16 + $0x20] sm:$0xf]
    %v13515 = vld [vmem:[%s16 + $0x24] sm:$0xf]
    %v13516 = vld [vmem:[%s16 + $0x28] sm:$0xf]
    %v13517 = vld [vmem:[%s16 + $0x2c] sm:$0xf]
    %v13518 = vld [vmem:[%s16 + $0x30] sm:$0xf]
    %v13519 = vld [vmem:[%s16 + $0x34] sm:$0xf]
    %v13520 = vld [vmem:[%s16 + $0x38] sm:$0xf]
    %v13521 = vld [vmem:[%s16 + $0x3c] sm:$0xf]
    %v13522 = vld [vmem:[%s16 + $0x40] sm:$0xf]
    %v13523 = vld [vmem:[%s16 + $0x44] sm:$0xf]
    %v13524 = vld [vmem:[%s16 + $0x48] sm:$0xf]
    %v13525 = vld [vmem:[%s16 + $0x4c] sm:$0xf]
    %v13526 = vld [vmem:[%s16 + $0x50] sm:$0xf]
    %v13527 = vld [vmem:[%s16 + $0x54] sm:$0xf]
    %v13528 = vld [vmem:[%s16 + $0x58] sm:$0xf]
    %v13529 = vld [vmem:[%s16 + $0x5c] sm:$0xf]
    %v13530 = vld [vmem:[%s16 + $0x60] sm:$0xf]
    %v13531 = vld [vmem:[%s16 + $0x64] sm:$0xf]
    %v13532 = vld [vmem:[%s16 + $0x68] sm:$0xf]
    %v13533 = vld [vmem:[%s16 + $0x6c] sm:$0xf]
    %v13534 = vld [vmem:[%s16 + $0x70] sm:$0xf]
    %v13535 = vld [vmem:[%s16 + $0x74] sm:$0xf]
    %v13536 = vld [vmem:[%s16 + $0x78] sm:$0xf]
    %v13537 = vld [vmem:[%s16 + $0x7c] sm:$0xf]
    %v13538 = vld [vmem:[#allocation28] sm:$0x1]
    %v13540 = vlaneseq
    %v13541 = vshrl.u32 %v13540, 7
    %v13542 = vsub.s32 0, %v13541
    %v13543 = vrot.slane %v13538, %v13542
    %v13577 = vunpack.c.l.b16 %v13506
    %v13578 = vunpack.c.l.b16 %v13507
    %v13579 = vunpack.c.l.b16 %v13508
    %v13580 = vunpack.c.l.b16 %v13509
    %v13581 = vunpack.c.l.b16 %v13510
    %v13582 = vunpack.c.l.b16 %v13511
    %v13583 = vunpack.c.l.b16 %v13512
    %v13584 = vunpack.c.l.b16 %v13513
    %v13585 = vunpack.c.l.b16 %v13514
    %v13586 = vunpack.c.l.b16 %v13515
    %v13587 = vunpack.c.l.b16 %v13516
    %v13588 = vunpack.c.l.b16 %v13517
    %v13589 = vunpack.c.l.b16 %v13518
    %v13590 = vunpack.c.l.b16 %v13519
    %v13591 = vunpack.c.l.b16 %v13520
    %v13592 = vunpack.c.l.b16 %v13521
    %v13593 = vunpack.c.l.b16 %v13522
    %v13594 = vunpack.c.l.b16 %v13523
    %v13595 = vunpack.c.l.b16 %v13524
    %v13596 = vunpack.c.l.b16 %v13525
    %v13597 = vunpack.c.l.b16 %v13526
    %v13598 = vunpack.c.l.b16 %v13527
    %v13599 = vunpack.c.l.b16 %v13528
    %v13600 = vunpack.c.l.b16 %v13529
    %v13601 = vunpack.c.l.b16 %v13530
    %v13602 = vunpack.c.l.b16 %v13531
    %v13603 = vunpack.c.l.b16 %v13532
    %v13604 = vunpack.c.l.b16 %v13533
    %v13605 = vunpack.c.l.b16 %v13534
    %v13606 = vunpack.c.l.b16 %v13535
    %v13607 = vunpack.c.l.b16 %v13536
    %v13608 = vunpack.c.l.b16 %v13537
    %v13609 = vpack.c.b16 %v13578, %v13577
    %v13610 = vpack.c.b16 %v13580, %v13579
    %v13611 = vpack.c.b16 %v13582, %v13581
    %v13612 = vpack.c.b16 %v13584, %v13583
    %v13613 = vpack.c.b16 %v13586, %v13585
    %v13614 = vpack.c.b16 %v13588, %v13587
    %v13615 = vpack.c.b16 %v13590, %v13589
    %v13616 = vpack.c.b16 %v13592, %v13591
    %v13617 = vpack.c.b16 %v13594, %v13593
    %v13618 = vpack.c.b16 %v13596, %v13595
    %v13619 = vpack.c.b16 %v13598, %v13597
    %v13620 = vpack.c.b16 %v13600, %v13599
    %v13621 = vpack.c.b16 %v13602, %v13601
    %v13622 = vpack.c.b16 %v13604, %v13603
    %v13623 = vpack.c.b16 %v13606, %v13605
    %v13624 = vpack.c.b16 %v13608, %v13607
    %13641 = vmatprep.subr.bf16.mxu0 0
    %13642 = vmatpush1.bf16.msra.mxu0 %v13609
    %13643 = vmatprep.subr.bf16.mxu0 0
    %13644 = vmatpush1.bf16.msra.mxu0 %v13610
    %13645 = vmatprep.subr.bf16.mxu0 0
    %13646 = vmatpush1.bf16.msra.mxu0 %v13611
    %13647 = vmatprep.subr.bf16.mxu0 0
    %13648 = vmatpush1.bf16.msra.mxu0 %v13612
    %13649 = vmatprep.subr.bf16.mxu0 0
    %13650 = vmatpush1.bf16.msra.mxu0 %v13613
    %13651 = vmatprep.subr.bf16.mxu0 0
    %13652 = vmatpush1.bf16.msra.mxu0 %v13614
    %13653 = vmatprep.subr.bf16.mxu0 0
    %13654 = vmatpush1.bf16.msra.mxu0 %v13615
    %13655 = vmatprep.subr.bf16.mxu0 0
    %13656 = vmatpush1.bf16.msra.mxu0 %v13616
    %13657 = vmatprep.subr.bf16.mxu0 0
    %13658 = vmatpush1.bf16.msra.mxu0 %v13617
    %13659 = vmatprep.subr.bf16.mxu0 0
    %13660 = vmatpush1.bf16.msra.mxu0 %v13618
    %13661 = vmatprep.subr.bf16.mxu0 0
    %13662 = vmatpush1.bf16.msra.mxu0 %v13619
    %13663 = vmatprep.subr.bf16.mxu0 0
    %13664 = vmatpush1.bf16.msra.mxu0 %v13620
    %13665 = vmatprep.subr.bf16.mxu0 0
    %13666 = vmatpush1.bf16.msra.mxu0 %v13621
    %13667 = vmatprep.subr.bf16.mxu0 0
    %13668 = vmatpush1.bf16.msra.mxu0 %v13622
    %13669 = vmatprep.subr.bf16.mxu0 0
    %13670 = vmatpush1.bf16.msra.mxu0 %v13623
    %13671 = vmatprep.subr.bf16.mxu0 0
    %13672 = vmatpush1.bf16.msra.mxu0 %v13624
    %13673 = vmatprep.mubr.bf16.mxu0 %v13505
    %13674 = vmatmul.mubr.bf16.gmra.mrb[0].mxu0 %v13504
    %v13675 = vpop.f32.mrb[0].mxu0
    %v13676 = vadd.f32 %v13543, %v13675
    %v13677 = vpop.f32.mrb[0].mxu0
    %v13678 = vpop.f32.mrb[0].mxu0
    %v13679 = vpop.f32.mrb[0].mxu0
    %13680 = vdwg.mxu0
    %v13681 = vmax.f32 %v13676, 0.0
    %v13682 = vld [vmem:[%s18] sm:$0xff]
    %v13683 = vld [vmem:[%s18 + $0x8] sm:$0xff]
    %v13684 = vld [vmem:[%s18 + $0x10] sm:$0xff]
    %v13685 = vld [vmem:[%s18 + $0x18] sm:$0xff]
    %v13686 = vld [vmem:[%s18 + $0x20] sm:$0xff]
    %v13687 = vld [vmem:[%s18 + $0x28] sm:$0xff]
    %v13688 = vld [vmem:[%s18 + $0x30] sm:$0xff]
    %v13689 = vld [vmem:[%s18 + $0x38] sm:$0xff]
    %v13690 = vld [vmem:[#allocation29] sm:$0x1]
    %v13692 = vlaneseq
    %v13693 = vshrl.u32 %v13692, 7
    %v13694 = vsub.s32 0, %v13693
    %v13695 = vrot.slane %v13690, %v13694
    %vm13697 = vcmask 523264
    %v13699 = vsel %vm13697, %v13681, 0
    %13701 = vmatprep.subr.mxu0 0.0
    %13702 = vmatpush1.msra.mxu0 %v13682
    %13703 = vmatprep.subr.mxu0 0.0
    %13704 = vmatpush1.msra.mxu0 %v13683
    %13705 = vmatprep.subr.mxu0 0.0
    %13706 = vmatpush1.msra.mxu0 %v13684
    %13707 = vmatprep.subr.mxu0 0.0
    %13708 = vmatpush1.msra.mxu0 %v13685
    %13709 = vmatprep.subr.mxu0 0.0
    %13710 = vmatpush1.msra.mxu0 %v13686
    %13711 = vmatprep.subr.mxu0 0.0
    %13712 = vmatpush1.msra.mxu0 %v13687
    %13713 = vmatprep.subr.mxu0 0.0
    %13714 = vmatpush1.msra.mxu0 %v13688
    %13715 = vmatprep.subr.mxu0 0.0
    %13716 = vmatpush1.msra.mxu0 %v13689
    %13717 = vmatprep.subr.mxu0 0.0
    %13718 = vmatpush1.msra.mxu0 0.0
    %13719 = vmatprep.subr.mxu0 0.0
    %13720 = vmatpush1.msra.mxu0 0.0
    %13721 = vmatprep.subr.mxu0 0.0
    %13722 = vmatpush1.msra.mxu0 0.0
    %13723 = vmatprep.subr.mxu0 0.0
    %13724 = vmatpush1.msra.mxu0 0.0
    %13725 = vmatprep.subr.mxu0 0.0
    %13726 = vmatpush1.msra.mxu0 0.0
    %13727 = vmatprep.subr.mxu0 0.0
    %13728 = vmatpush1.msra.mxu0 0.0
    %13729 = vmatprep.subr.mxu0 0.0
    %13730 = vmatpush1.msra.mxu0 0.0
    %13731 = vmatprep.subr.mxu0 0.0
    %13732 = vmatpush1.msra.mxu0 0.0
    %13733 = vmatprep.subr.mxu0 0.0
    %13734 = vmatpush1.msra.mxu0 0.0
    %13735 = vmatprep.subr.mxu0 0.0
    %13736 = vmatpush1.msra.mxu0 0.0
    %13737 = vmatprep.subr.mxu0 0.0
    %13738 = vmatpush1.msra.mxu0 0.0
    %13739 = vmatprep.subr.mxu0 0.0
    %13740 = vmatpush1.msra.mxu0 0.0
    %13741 = vmatprep.subr.mxu0 0.0
    %13742 = vmatpush1.msra.mxu0 0.0
    %13743 = vmatprep.subr.mxu0 0.0
    %13744 = vmatpush1.msra.mxu0 0.0
    %13745 = vmatprep.subr.mxu0 0.0
    %13746 = vmatpush1.msra.mxu0 0.0
    %13747 = vmatprep.subr.mxu0 0.0
    %13748 = vmatpush1.msra.mxu0 0.0
    %13749 = vmatprep.subr.mxu0 0.0
    %13750 = vmatpush1.msra.mxu0 0.0
    %13751 = vmatprep.subr.mxu0 0.0
    %13752 = vmatpush1.msra.mxu0 0.0
    %13753 = vmatprep.subr.mxu0 0.0
    %13754 = vmatpush1.msra.mxu0 0.0
    %13755 = vmatprep.subr.mxu0 0.0
    %13756 = vmatpush1.msra.mxu0 0.0
    %13757 = vmatprep.subr.mxu0 0.0
    %13758 = vmatpush1.msra.mxu0 0.0
    %13759 = vmatprep.subr.mxu0 0.0
    %13760 = vmatpush1.msra.mxu0 0.0
    %13761 = vmatprep.subr.mxu0 0.0
    %13762 = vmatpush1.msra.mxu0 0.0
    %13763 = vmatprep.subr.mxu0 0.0
    %13764 = vmatpush1.msra.mxu0 0.0
    %13765 = vmatprep.mubr.f32.mxu0 0.0
    %13766 = vmatmul.mubr.f32.gmra.mrb[0].mxu0 %v13699
    %v13767 = vpop.f32.mrb[0].mxu0
    %v13768 = vadd.f32 %v13695, %v13767
    %v13769 = vpop.f32.mrb[0].mxu0
    %13770 = vdwg.mxu0
    %v13771 = vld [vmem:[%s20] sm:$0xff]
    %v13772 = vld [vmem:[%s20 + $0x8] sm:$0xff]
    %v13773 = vld [vmem:[%s20 + $0x10] sm:$0xff]
    %v13774 = vld [vmem:[%s20 + $0x18] sm:$0xff]
    %v13775 = vld [vmem:[#allocation2] sm:$0x1]
    %v13777 = vlaneseq
    %v13778 = vshrl.u32 %v13777, 7
    %v13779 = vsub.s32 0, %v13778
    %v13780 = vrot.slane %v13775, %v13779
    %vm13782 = vcmask 261120
    %v13784 = vsel %vm13782, %v13768, 0
    %13786 = vmatprep.subr.mxu0 0.0
    %13787 = vmatpush1.msra.mxu0 %v13771
    %13788 = vmatprep.subr.mxu0 0.0
    %13789 = vmatpush1.msra.mxu0 %v13772
    %13790 = vmatprep.subr.mxu0 0.0
    %13791 = vmatpush1.msra.mxu0 %v13773
    %13792 = vmatprep.subr.mxu0 0.0
    %13793 = vmatpush1.msra.mxu0 %v13774
    %13794 = vmatprep.subr.mxu0 0.0
    %13795 = vmatpush1.msra.mxu0 0.0
    %13796 = vmatprep.subr.mxu0 0.0
    %13797 = vmatpush1.msra.mxu0 0.0
    %13798 = vmatprep.subr.mxu0 0.0
    %13799 = vmatpush1.msra.mxu0 0.0
    %13800 = vmatprep.subr.mxu0 0.0
    %13801 = vmatpush1.msra.mxu0 0.0
    %13802 = vmatprep.subr.mxu0 0.0
    %13803 = vmatpush1.msra.mxu0 0.0
    %13804 = vmatprep.subr.mxu0 0.0
    %13805 = vmatpush1.msra.mxu0 0.0
    %13806 = vmatprep.subr.mxu0 0.0
    %13807 = vmatpush1.msra.mxu0 0.0
    %13808 = vmatprep.subr.mxu0 0.0
    %13809 = vmatpush1.msra.mxu0 0.0
    %13810 = vmatprep.subr.mxu0 0.0
    %13811 = vmatpush1.msra.mxu0 0.0
    %13812 = vmatprep.subr.mxu0 0.0
    %13813 = vmatpush1.msra.mxu0 0.0
    %13814 = vmatprep.subr.mxu0 0.0
    %13815 = vmatpush1.msra.mxu0 0.0
    %13816 = vmatprep.subr.mxu0 0.0
    %13817 = vmatpush1.msra.mxu0 0.0
    %13818 = vmatprep.subr.mxu0 0.0
    %13819 = vmatpush1.msra.mxu0 0.0
    %13820 = vmatprep.subr.mxu0 0.0
    %13821 = vmatpush1.msra.mxu0 0.0
    %13822 = vmatprep.subr.mxu0 0.0
    %13823 = vmatpush1.msra.mxu0 0.0
    %13824 = vmatprep.subr.mxu0 0.0
    %13825 = vmatpush1.msra.mxu0 0.0
    %13826 = vmatprep.subr.mxu0 0.0
    %13827 = vmatpush1.msra.mxu0 0.0
    %13828 = vmatprep.subr.mxu0 0.0
    %13829 = vmatpush1.msra.mxu0 0.0
    %13830 = vmatprep.subr.mxu0 0.0
    %13831 = vmatpush1.msra.mxu0 0.0
    %13832 = vmatprep.subr.mxu0 0.0
    %13833 = vmatpush1.msra.mxu0 0.0
    %13834 = vmatprep.subr.mxu0 0.0
    %13835 = vmatpush1.msra.mxu0 0.0
    %13836 = vmatprep.subr.mxu0 0.0
    %13837 = vmatpush1.msra.mxu0 0.0
    %13838 = vmatprep.subr.mxu0 0.0
    %13839 = vmatpush1.msra.mxu0 0.0
    %13840 = vmatprep.subr.mxu0 0.0
    %13841 = vmatpush1.msra.mxu0 0.0
    %13842 = vmatprep.subr.mxu0 0.0
    %13843 = vmatpush1.msra.mxu0 0.0
    %13844 = vmatprep.subr.mxu0 0.0
    %13845 = vmatpush1.msra.mxu0 0.0
    %13846 = vmatprep.subr.mxu0 0.0
    %13847 = vmatpush1.msra.mxu0 0.0
    %13848 = vmatprep.subr.mxu0 0.0
    %13849 = vmatpush1.msra.mxu0 0.0
    %13850 = vmatprep.mubr.f32.mxu0 0.0
    %13851 = vmatmul.mubr.f32.gmra.mrb[0].mxu0 %v13784
    %v13852 = vpop.f32.mrb[0].mxu0
    %v13853 = vadd.f32 %v13780, %v13852
    %v13854 = vpop.f32.mrb[0].mxu0
    %13855 = vdwg.mxu0
    %vm13856 = vcmask 1024
    %13857 = vst.msk [vmem:[%s22] sm:$0x3] %vm13856, %v13853
    // Predicated region
    $region162: #{tpu_custom_call.1} parent=1 // pred_check
      _
    $region163: #{tpu_custom_call.1} parent=1 // pred_check_branch
      %13859 = sbr.rel (0) target = $region165
    $region164: #{tpu_custom_call.1} parent=1 // pred_region
      _
    $region165: #{tpu_custom_call.1} parent=1 // pred_fallthru
      _
    // Predicated region
    $region166: #{tpu_custom_call.1} parent=1 // pred_check
      _
    $region167: #{tpu_custom_call.1} parent=1 // pred_check_branch
      %13861 = sbr.rel (0) target = $region169
    $region168: #{tpu_custom_call.1} parent=1 // pred_region
      _
    $region169: #{tpu_custom_call.1} parent=1 // pred_fallthru
      _
    %13862 = vsyncpa [#allocation4], 1
    %13863 = vsyncpa [#allocation6], 1
    %13864 = vsyncpa [#allocation9], 1
    %13865 = vsyncpa [#allocation12], 1
    %13866 = vsyncpa [#allocation15], 1
    %13867 = vsyncpa [#allocation18], 1
    %13868 = vsyncpa [#allocation21], 1
    %13869 = vsyncpa [#allocation24], 1
    %13870 = vsyncpa [#allocation27], 1
    %13871 = vsyncpa [#allocation30], 1

</llo_original>
